<compile_context>
chip_gen: v7x
topology: tpu7x:2x2x1
jax: 0.10.0
libtpu: 0.0.40
codegen_flags: <defaults>
</compile_context>

<pallas_src>
import jax
import jax.numpy as jnp
from jax.experimental import pallas as pl
from jax.experimental.pallas import tpu as pltpu

LAYER_DIMS = [784, 512, 256, 128, 64, 10]
MIN_TILE = 128            # minimum batch tile (keeps every MXU issue M >= 128)
PADDED_HID = 128          # lane-dense width for the 64-wide hidden layer
PADDED_OUT = 128          # lane-dense output width (multiple of 128)
NEG_PAD_BIAS = -1e30      # drives padded logits to ~-inf; exp() underflows to 0


def _round_up(x, m):
    return ((x + m - 1) // m) * m


def _mlp_kernel(x_ref,
                w1_ref, b1_ref,
                w2_ref, b2_ref,
                w3_ref, b3_ref,
                w4_ref, b4_ref,
                w5_ref, b5_ref,
                o_ref):
    # Entire forward fused on-chip. x and all weights are bf16; every dot
    # accumulates in f32 on the MXU; biases, ReLU output and softmax are f32.
    def dense_relu(h_bf16, w_ref, b_ref):
        h = jnp.dot(h_bf16, w_ref[...], preferred_element_type=jnp.float32)
        h = h + b_ref[...]
        return jnp.maximum(h, 0.0).astype(jnp.bfloat16)

    h = dense_relu(x_ref[...], w1_ref, b1_ref)
    h = dense_relu(h, w2_ref, b2_ref)
    h = dense_relu(h, w3_ref, b3_ref)
    h = dense_relu(h, w4_ref, b4_ref)   # lane-padded to 128; pad lanes are 0

    # Final layer: 128 lane-dense outputs; pad lanes carry bias -1e30.
    logits = jnp.dot(h, w5_ref[...],
                     preferred_element_type=jnp.float32) + b5_ref[...]

    # Numerically stable log_softmax over the class dimension (f32). Pad lanes
    # contribute exp(-1e30 - m) == 0 exactly, so the lse matches the 10-class one.
    m = jnp.max(logits, axis=1, keepdims=True)
    shifted = logits - m
    lse = jnp.log(jnp.sum(jnp.exp(shifted), axis=1, keepdims=True))
    o_ref[...] = shifted - lse


def fashion_classifier_forward(x_nchw, params, *, tile_m=512):
    """x_nchw: (B, 1, 28, 28) float32 -> (B, 10) float32 log-probabilities."""
    B = x_nchw.shape[0]
    d_in = LAYER_DIMS[0]
    n_cls = LAYER_DIMS[-1]

    # bf16 activations into the MXU (f32 accumulation happens in the kernel).
    x_flat = x_nchw.reshape(B, -1).astype(jnp.bfloat16)
    assert x_flat.shape[1] == d_in

    # --- batch tiling --------------------------------------------------------
    b_pad = _round_up(max(B, MIN_TILE), MIN_TILE)
    tile = min(tile_m, b_pad)
    if b_pad >= 2 * MIN_TILE:
        # Guarantee >= 2 grid steps so the "parallel" batch axis can shard
        # across both v7x TensorCores (harmless on v5e/v6e).
        tile = min(tile, _round_up(b_pad // 2, MIN_TILE))
    tile = _round_up(tile, MIN_TILE)
    b_pad = _round_up(b_pad, tile)
    grid_m = b_pad // tile
    if b_pad != B:
        x_flat = jnp.pad(x_flat, ((0, b_pad - B), (0, 0)))

    # --- parameter padding ---------------------------------------------------
    # Pad the 64-wide hidden layer and the 10-wide output to 128 lanes so every
    # activation / contraction is lane-dense. Zero pads keep the math exact;
    # the -1e30 pad bias drives padded logits to -inf (exp underflows to 0).
    (w1, b1), (w2, b2), (w3, b3), (w4, b4), (w5, b5) = params
    w4p = jnp.pad(w4, ((0, 0), (0, PADDED_HID - w4.shape[1])))
    b4p = jnp.pad(b4, ((0, 0), (0, PADDED_HID - b4.shape[1])))
    w5p = jnp.pad(w5, ((0, PADDED_HID - w5.shape[0]), (0, PADDED_OUT - n_cls)))
    b5p = jnp.pad(b5, ((0, 0), (0, PADDED_OUT - n_cls)),
                  constant_values=NEG_PAD_BIAS)
    padded_params = [(w1, b1), (w2, b2), (w3, b3), (w4p, b4p), (w5p, b5p)]

    flat_params = []
    for (w, b) in padded_params:
        flat_params.append(w.astype(jnp.bfloat16))   # bf16 weights on the MXU
        flat_params.append(b.astype(jnp.float32))    # biases stay f32

    # --- advisory cost estimate ---------------------------------------------
    padded_dims = [d_in, 512, 256, 128, PADDED_HID, PADDED_OUT]
    flops = 2 * b_pad * sum(padded_dims[i] * padded_dims[i + 1]
                            for i in range(len(padded_dims) - 1))
    bytes_accessed = (sum(int(a.size) * a.dtype.itemsize for a in flat_params)
                      + b_pad * d_in * 2            # bf16 input rows
                      + b_pad * PADDED_OUT * 4)     # f32 output rows
    cost = pl.CostEstimate(flops=flops,
                           transcendentals=b_pad * (PADDED_OUT + 1),
                           bytes_accessed=bytes_accessed)

    def build_in_specs(single_buffer_weights):
        specs = [pl.BlockSpec((tile, d_in), lambda i: (i, 0))]
        for arr in flat_params:
            # Constant block index -> weight/bias fetched once, resident in
            # VMEM across all batch-grid steps.
            if single_buffer_weights:
                try:
                    spec = pl.BlockSpec(arr.shape, lambda i: (0, 0),
                                        pipeline_mode=pl.Buffered(1))
                except Exception:
                    spec = pl.BlockSpec(arr.shape, lambda i: (0, 0))
            else:
                spec = pl.BlockSpec(arr.shape, lambda i: (0, 0))
            specs.append(spec)
        return specs

    def run(single_buffer_weights):
        return pl.pallas_call(
            _mlp_kernel,
            out_shape=jax.ShapeDtypeStruct((b_pad, PADDED_OUT), jnp.float32),
            grid=(grid_m,),
            in_specs=build_in_specs(single_buffer_weights),
            out_specs=pl.BlockSpec((tile, PADDED_OUT), lambda i: (i, 0)),
            compiler_params=pltpu.CompilerParams(
                dimension_semantics=("parallel",),  # megacore sharding on v7x
            ),
            cost_estimate=cost,
        )(x_flat, *flat_params)

    try:
        out = run(single_buffer_weights=True)
    except Exception:
        # Resident weights are only ~1.2 MiB in bf16; default double-buffering
        # is a safe fallback if this Pallas build rejects pl.Buffered(1) here.
        out = run(single_buffer_weights=False)

    return out[:B, :n_cls]


def init_params(key):
    """Deterministic Kaiming-uniform-like init matching nn.Linear shapes."""
    params = []
    for i in range(len(LAYER_DIMS) - 1):
        fan_in, fan_out = LAYER_DIMS[i], LAYER_DIMS[i + 1]
        key, kw, kb = jax.random.split(key, 3)
        bound = 1.0 / jnp.sqrt(fan_in)
        # stored as (in, out): kernel computes x @ W, matching torch x @ W.T
        w = jax.random.uniform(kw, (fan_in, fan_out), jnp.float32, -bound, bound)
        b = jax.random.uniform(kb, (1, fan_out), jnp.float32, -bound, bound)
        params.append((w, b))
    return params


def reference_forward(x_nchw, params):
    """Pure-JAX reference using the same bf16-matmul / f32-accumulate recipe."""
    h = x_nchw.reshape(x_nchw.shape[0], -1).astype(jnp.bfloat16)
    for i, (w, b) in enumerate(params):
        h = jnp.dot(h, w.astype(jnp.bfloat16),
                    preferred_element_type=jnp.float32) + b
        if i < len(params) - 1:
            h = jnp.maximum(h, 0.0).astype(jnp.bfloat16)
    return jax.nn.log_softmax(h, axis=1)


if __name__ == "__main__":
    key = jax.random.PRNGKey(0)
    key, kx = jax.random.split(key)

    B = 8
    x = jax.random.normal(kx, (B, 1, 28, 28), jnp.float32)  # NCHW like PyTorch
    params = init_params(key)

    out = fashion_classifier_forward(x, params)
    out = jax.block_until_ready(out)

    ref = reference_forward(x, params)
    assert out.shape == (B, 10)
    assert jnp.allclose(out, ref, atol=5e-3, rtol=5e-3), "mismatch vs reference"
    # Rows must be valid log-probabilities (softmax normalization intact).
    assert jnp.allclose(jnp.sum(jnp.exp(out), axis=1), 1.0, atol=1e-3)

    print("KERNEL_OK")
</pallas_src>

<mosaic_0001>
module attributes {stable_mosaic.version = 11 : i64} {
  func.func @_mlp_kernel(%arg0: i32, %arg1: memref<128x784xbf16, #tpu.memory_space<vmem>>, %arg2: memref<784x512xbf16, #tpu.memory_space<vmem>>, %arg3: memref<1x512xf32, #tpu.memory_space<vmem>>, %arg4: memref<512x256xbf16, #tpu.memory_space<vmem>>, %arg5: memref<1x256xf32, #tpu.memory_space<vmem>>, %arg6: memref<256x128xbf16, #tpu.memory_space<vmem>>, %arg7: memref<1x128xf32, #tpu.memory_space<vmem>>, %arg8: memref<128x128xbf16, #tpu.memory_space<vmem>>, %arg9: memref<1x128xf32, #tpu.memory_space<vmem>>, %arg10: memref<128x128xbf16, #tpu.memory_space<vmem>>, %arg11: memref<1x128xf32, #tpu.memory_space<vmem>>, %arg12: memref<128x128xf32, #tpu.memory_space<vmem>>) attributes {dimension_semantics = [#tpu.dimension_semantics<parallel>], iteration_bounds = array<i64: 1>, scalar_prefetch = 0 : i64, scratch_operands = 0 : i64, tpu.core_type = #tpu.core_type<tc>, window_params = [{transform_indices = @transform_0, window_bounds = array<i64: 128, 784>}, {pipeline_mode = #tpu.pipeline_mode<synchronous>, transform_indices = @transform_1, window_bounds = array<i64: 784, 512>}, {pipeline_mode = #tpu.pipeline_mode<synchronous>, transform_indices = @transform_2, window_bounds = array<i64: 1, 512>}, {pipeline_mode = #tpu.pipeline_mode<synchronous>, transform_indices = @transform_3, window_bounds = array<i64: 512, 256>}, {pipeline_mode = #tpu.pipeline_mode<synchronous>, transform_indices = @transform_4, window_bounds = array<i64: 1, 256>}, {pipeline_mode = #tpu.pipeline_mode<synchronous>, transform_indices = @transform_5, window_bounds = array<i64: 256, 128>}, {pipeline_mode = #tpu.pipeline_mode<synchronous>, transform_indices = @transform_6, window_bounds = array<i64: 1, 128>}, {pipeline_mode = #tpu.pipeline_mode<synchronous>, transform_indices = @transform_7, window_bounds = array<i64: 128, 128>}, {pipeline_mode = #tpu.pipeline_mode<synchronous>, transform_indices = @transform_8, window_bounds = array<i64: 1, 128>}, {pipeline_mode = #tpu.pipeline_mode<synchronous>, transform_indices = @transform_9, window_bounds = array<i64: 128, 128>}, {pipeline_mode = #tpu.pipeline_mode<synchronous>, transform_indices = @transform_10, window_bounds = array<i64: 1, 128>}, {transform_indices = @transform_11, window_bounds = array<i64: 128, 128>}]} {
    %c0 = arith.constant 0 : index
    %c0_0 = arith.constant 0 : index
    %0 = vector.load %arg1[%c0, %c0_0] : memref<128x784xbf16, #tpu.memory_space<vmem>>, vector<128x784xbf16>
    %c0_1 = arith.constant 0 : index
    %c0_2 = arith.constant 0 : index
    %1 = vector.load %arg2[%c0_1, %c0_2] : memref<784x512xbf16, #tpu.memory_space<vmem>>, vector<784x512xbf16>
    %cst = arith.constant dense<0.000000e+00> : vector<128x512xf32>
    %2 = tpu.matmul %0, %1, %cst {dimension_numbers = #tpu.dot_dimension_numbers<[1], [0], [0], [1], [0, 0, 1, 1], [], []>} : vector<128x784xbf16>, vector<784x512xbf16>, vector<128x512xf32> -> vector<128x512xf32>
    %c0_3 = arith.constant 0 : index
    %c0_4 = arith.constant 0 : index
    %3 = vector.load %arg3[%c0_3, %c0_4] : memref<1x512xf32, #tpu.memory_space<vmem>>, vector<1x512xf32>
    %4 = vector.broadcast %3 : vector<1x512xf32> to vector<128x512xf32>
    %5 = arith.addf %2, %4 : vector<128x512xf32>
    %cst_5 = arith.constant 0.000000e+00 : f32
    %6 = vector.broadcast %cst_5 : f32 to vector<128x512xf32>
    %7 = arith.maximumf %5, %6 : vector<128x512xf32>
    %8 = arith.truncf %7 : vector<128x512xf32> to vector<128x512xbf16>
    %c0_6 = arith.constant 0 : index
    %c0_7 = arith.constant 0 : index
    %9 = vector.load %arg4[%c0_6, %c0_7] : memref<512x256xbf16, #tpu.memory_space<vmem>>, vector<512x256xbf16>
    %cst_8 = arith.constant dense<0.000000e+00> : vector<128x256xf32>
    %10 = tpu.matmul %8, %9, %cst_8 {dimension_numbers = #tpu.dot_dimension_numbers<[1], [0], [0], [1], [0, 0, 1, 1], [], []>} : vector<128x512xbf16>, vector<512x256xbf16>, vector<128x256xf32> -> vector<128x256xf32>
    %c0_9 = arith.constant 0 : index
    %c0_10 = arith.constant 0 : index
    %11 = vector.load %arg5[%c0_9, %c0_10] : memref<1x256xf32, #tpu.memory_space<vmem>>, vector<1x256xf32>
    %12 = vector.broadcast %11 : vector<1x256xf32> to vector<128x256xf32>
    %13 = arith.addf %10, %12 : vector<128x256xf32>
    %cst_11 = arith.constant 0.000000e+00 : f32
    %14 = vector.broadcast %cst_11 : f32 to vector<128x256xf32>
    %15 = arith.maximumf %13, %14 : vector<128x256xf32>
    %16 = arith.truncf %15 : vector<128x256xf32> to vector<128x256xbf16>
    %c0_12 = arith.constant 0 : index
    %c0_13 = arith.constant 0 : index
    %17 = vector.load %arg6[%c0_12, %c0_13] : memref<256x128xbf16, #tpu.memory_space<vmem>>, vector<256x128xbf16>
    %cst_14 = arith.constant dense<0.000000e+00> : vector<128x128xf32>
    %18 = tpu.matmul %16, %17, %cst_14 {dimension_numbers = #tpu.dot_dimension_numbers<[1], [0], [0], [1], [0, 0, 1, 1], [], []>} : vector<128x256xbf16>, vector<256x128xbf16>, vector<128x128xf32> -> vector<128x128xf32>
    %c0_15 = arith.constant 0 : index
    %c0_16 = arith.constant 0 : index
    %19 = vector.load %arg7[%c0_15, %c0_16] : memref<1x128xf32, #tpu.memory_space<vmem>>, vector<1x128xf32>
    %20 = vector.broadcast %19 : vector<1x128xf32> to vector<128x128xf32>
    %21 = arith.addf %18, %20 : vector<128x128xf32>
    %cst_17 = arith.constant 0.000000e+00 : f32
    %22 = vector.broadcast %cst_17 : f32 to vector<128x128xf32>
    %23 = arith.maximumf %21, %22 : vector<128x128xf32>
    %24 = arith.truncf %23 : vector<128x128xf32> to vector<128x128xbf16>
    %c0_18 = arith.constant 0 : index
    %c0_19 = arith.constant 0 : index
    %25 = vector.load %arg8[%c0_18, %c0_19] : memref<128x128xbf16, #tpu.memory_space<vmem>>, vector<128x128xbf16>
    %cst_20 = arith.constant dense<0.000000e+00> : vector<128x128xf32>
    %26 = tpu.matmul %24, %25, %cst_20 {dimension_numbers = #tpu.dot_dimension_numbers<[1], [0], [0], [1], [0, 0, 1, 1], [], []>} : vector<128x128xbf16>, vector<128x128xbf16>, vector<128x128xf32> -> vector<128x128xf32>
    %c0_21 = arith.constant 0 : index
    %c0_22 = arith.constant 0 : index
    %27 = vector.load %arg9[%c0_21, %c0_22] : memref<1x128xf32, #tpu.memory_space<vmem>>, vector<1x128xf32>
    %28 = vector.broadcast %27 : vector<1x128xf32> to vector<128x128xf32>
    %29 = arith.addf %26, %28 : vector<128x128xf32>
    %cst_23 = arith.constant 0.000000e+00 : f32
    %30 = vector.broadcast %cst_23 : f32 to vector<128x128xf32>
    %31 = arith.maximumf %29, %30 : vector<128x128xf32>
    %32 = arith.truncf %31 : vector<128x128xf32> to vector<128x128xbf16>
    %c0_24 = arith.constant 0 : index
    %c0_25 = arith.constant 0 : index
    %33 = vector.load %arg10[%c0_24, %c0_25] : memref<128x128xbf16, #tpu.memory_space<vmem>>, vector<128x128xbf16>
    %cst_26 = arith.constant dense<0.000000e+00> : vector<128x128xf32>
    %34 = tpu.matmul %32, %33, %cst_26 {dimension_numbers = #tpu.dot_dimension_numbers<[1], [0], [0], [1], [0, 0, 1, 1], [], []>} : vector<128x128xbf16>, vector<128x128xbf16>, vector<128x128xf32> -> vector<128x128xf32>
    %c0_27 = arith.constant 0 : index
    %c0_28 = arith.constant 0 : index
    %35 = vector.load %arg11[%c0_27, %c0_28] : memref<1x128xf32, #tpu.memory_space<vmem>>, vector<1x128xf32>
    %36 = vector.broadcast %35 : vector<1x128xf32> to vector<128x128xf32>
    %37 = arith.addf %34, %36 : vector<128x128xf32>
    %cst_29 = arith.constant dense<0xFF800000> : vector<128xf32>
    %38 = vector.multi_reduction <maximumf>, %37, %cst_29 [1] : vector<128x128xf32> to vector<128xf32>
    %39 = vector.shape_cast %38 : vector<128xf32> to vector<128x1xf32>
    %40 = vector.broadcast %39 : vector<128x1xf32> to vector<128x128xf32>
    %41 = arith.subf %37, %40 : vector<128x128xf32>
    %42 = math.exp %41 : vector<128x128xf32>
    %cst_30 = arith.constant dense<0.000000e+00> : vector<128xf32>
    %43 = vector.multi_reduction <add>, %42, %cst_30 [1] : vector<128x128xf32> to vector<128xf32>
    %44 = vector.shape_cast %43 : vector<128xf32> to vector<128x1xf32>
    %45 = math.log %44 : vector<128x1xf32>
    %46 = vector.broadcast %45 : vector<128x1xf32> to vector<128x128xf32>
    %47 = arith.subf %41, %46 : vector<128x128xf32>
    %c0_31 = arith.constant 0 : index
    %c0_32 = arith.constant 0 : index
    %48 = vector.load %arg12[%c0_31, %c0_32] : memref<128x128xf32, #tpu.memory_space<vmem>>, vector<128x128xf32>
    tpu.vector_store %arg12[%c0_31, %c0_32], %47 {strides = array<i32>} : memref<128x128xf32, #tpu.memory_space<vmem>>, vector<128x128xf32>,
    return
  }
  func.func @transform_0(%arg0: i32) -> (i32, i32) {
    %c0_i32 = arith.constant 0 : i32
    %c0_i32_0 = arith.constant 0 : i32
    return %arg0, %c0_i32 : i32, i32
  }
  func.func @transform_1(%arg0: i32) -> (i32, i32) {
    %c0_i32 = arith.constant 0 : i32
    %c0_i32_0 = arith.constant 0 : i32
    %c0_i32_1 = arith.constant 0 : i32
    return %c0_i32, %c0_i32_0 : i32, i32
  }
  func.func @transform_2(%arg0: i32) -> (i32, i32) {
    %c0_i32 = arith.constant 0 : i32
    %c0_i32_0 = arith.constant 0 : i32
    %c0_i32_1 = arith.constant 0 : i32
    return %c0_i32, %c0_i32_0 : i32, i32
  }
  func.func @transform_3(%arg0: i32) -> (i32, i32) {
    %c0_i32 = arith.constant 0 : i32
    %c0_i32_0 = arith.constant 0 : i32
    %c0_i32_1 = arith.constant 0 : i32
    return %c0_i32, %c0_i32_0 : i32, i32
  }
  func.func @transform_4(%arg0: i32) -> (i32, i32) {
    %c0_i32 = arith.constant 0 : i32
    %c0_i32_0 = arith.constant 0 : i32
    %c0_i32_1 = arith.constant 0 : i32
    return %c0_i32, %c0_i32_0 : i32, i32
  }
  func.func @transform_5(%arg0: i32) -> (i32, i32) {
    %c0_i32 = arith.constant 0 : i32
    %c0_i32_0 = arith.constant 0 : i32
    %c0_i32_1 = arith.constant 0 : i32
    return %c0_i32, %c0_i32_0 : i32, i32
  }
  func.func @transform_6(%arg0: i32) -> (i32, i32) {
    %c0_i32 = arith.constant 0 : i32
    %c0_i32_0 = arith.constant 0 : i32
    %c0_i32_1 = arith.constant 0 : i32
    return %c0_i32, %c0_i32_0 : i32, i32
  }
  func.func @transform_7(%arg0: i32) -> (i32, i32) {
    %c0_i32 = arith.constant 0 : i32
    %c0_i32_0 = arith.constant 0 : i32
    %c0_i32_1 = arith.constant 0 : i32
    return %c0_i32, %c0_i32_0 : i32, i32
  }
  func.func @transform_8(%arg0: i32) -> (i32, i32) {
    %c0_i32 = arith.constant 0 : i32
    %c0_i32_0 = arith.constant 0 : i32
    %c0_i32_1 = arith.constant 0 : i32
    return %c0_i32, %c0_i32_0 : i32, i32
  }
  func.func @transform_9(%arg0: i32) -> (i32, i32) {
    %c0_i32 = arith.constant 0 : i32
    %c0_i32_0 = arith.constant 0 : i32
    %c0_i32_1 = arith.constant 0 : i32
    return %c0_i32, %c0_i32_0 : i32, i32
  }
  func.func @transform_10(%arg0: i32) -> (i32, i32) {
    %c0_i32 = arith.constant 0 : i32
    %c0_i32_0 = arith.constant 0 : i32
    %c0_i32_1 = arith.constant 0 : i32
    return %c0_i32, %c0_i32_0 : i32, i32
  }
  func.func @transform_11(%arg0: i32) -> (i32, i32) {
    %c0_i32 = arith.constant 0 : i32
    %c0_i32_0 = arith.constant 0 : i32
    return %arg0, %c0_i32 : i32, i32
  }
}

module attributes {stable_mosaic.version = 11 : i64} {
  func.func @_mlp_kernel(%arg0: i32, %arg1: memref<128x784xbf16, #tpu.memory_space<vmem>>, %arg2: memref<784x512xbf16, #tpu.memory_space<vmem>>, %arg3: memref<1x512xf32, #tpu.memory_space<vmem>>, %arg4: memref<512x256xbf16, #tpu.memory_space<vmem>>, %arg5: memref<1x256xf32, #tpu.memory_space<vmem>>, %arg6: memref<256x128xbf16, #tpu.memory_space<vmem>>, %arg7: memref<1x128xf32, #tpu.memory_space<vmem>>, %arg8: memref<128x128xbf16, #tpu.memory_space<vmem>>, %arg9: memref<1x128xf32, #tpu.memory_space<vmem>>, %arg10: memref<128x128xbf16, #tpu.memory_space<vmem>>, %arg11: memref<1x128xf32, #tpu.memory_space<vmem>>, %arg12: memref<128x128xf32, #tpu.memory_space<vmem>>) attributes {dimension_semantics = [#tpu.dimension_semantics<parallel>], iteration_bounds = array<i64: 1>, scalar_prefetch = 0 : i64, scratch_operands = 0 : i64, tpu.core_type = #tpu.core_type<tc>, window_params = [{transform_indices = @transform_0, window_bounds = array<i64: 128, 784>}, {pipeline_mode = #tpu.pipeline_mode<synchronous>, transform_indices = @transform_1, window_bounds = array<i64: 784, 512>}, {pipeline_mode = #tpu.pipeline_mode<synchronous>, transform_indices = @transform_2, window_bounds = array<i64: 1, 512>}, {pipeline_mode = #tpu.pipeline_mode<synchronous>, transform_indices = @transform_3, window_bounds = array<i64: 512, 256>}, {pipeline_mode = #tpu.pipeline_mode<synchronous>, transform_indices = @transform_4, window_bounds = array<i64: 1, 256>}, {pipeline_mode = #tpu.pipeline_mode<synchronous>, transform_indices = @transform_5, window_bounds = array<i64: 256, 128>}, {pipeline_mode = #tpu.pipeline_mode<synchronous>, transform_indices = @transform_6, window_bounds = array<i64: 1, 128>}, {pipeline_mode = #tpu.pipeline_mode<synchronous>, transform_indices = @transform_7, window_bounds = array<i64: 128, 128>}, {pipeline_mode = #tpu.pipeline_mode<synchronous>, transform_indices = @transform_8, window_bounds = array<i64: 1, 128>}, {pipeline_mode = #tpu.pipeline_mode<synchronous>, transform_indices = @transform_9, window_bounds = array<i64: 128, 128>}, {pipeline_mode = #tpu.pipeline_mode<synchronous>, transform_indices = @transform_10, window_bounds = array<i64: 1, 128>}, {transform_indices = @transform_11, window_bounds = array<i64: 128, 128>}]} {
    %c0 = arith.constant 0 : index
    %c0_0 = arith.constant 0 : index
    %0 = vector.load %arg1[%c0, %c0_0] : memref<128x784xbf16, #tpu.memory_space<vmem>>, vector<128x784xbf16>
    %c0_1 = arith.constant 0 : index
    %c0_2 = arith.constant 0 : index
    %1 = vector.load %arg2[%c0_1, %c0_2] : memref<784x512xbf16, #tpu.memory_space<vmem>>, vector<784x512xbf16>
    %cst = arith.constant dense<0.000000e+00> : vector<128x512xf32>
    %2 = tpu.matmul %0, %1, %cst {dimension_numbers = #tpu.dot_dimension_numbers<[1], [0], [0], [1], [0, 0, 1, 1], [], []>} : vector<128x784xbf16>, vector<784x512xbf16>, vector<128x512xf32> -> vector<128x512xf32>
    %c0_3 = arith.constant 0 : index
    %c0_4 = arith.constant 0 : index
    %3 = vector.load %arg3[%c0_3, %c0_4] : memref<1x512xf32, #tpu.memory_space<vmem>>, vector<1x512xf32>
    %4 = vector.broadcast %3 : vector<1x512xf32> to vector<128x512xf32>
    %5 = arith.addf %2, %4 : vector<128x512xf32>
    %cst_5 = arith.constant 0.000000e+00 : f32
    %6 = vector.broadcast %cst_5 : f32 to vector<128x512xf32>
    %7 = arith.maximumf %5, %6 : vector<128x512xf32>
    %8 = arith.truncf %7 : vector<128x512xf32> to vector<128x512xbf16>
    %c0_6 = arith.constant 0 : index
    %c0_7 = arith.constant 0 : index
    %9 = vector.load %arg4[%c0_6, %c0_7] : memref<512x256xbf16, #tpu.memory_space<vmem>>, vector<512x256xbf16>
    %cst_8 = arith.constant dense<0.000000e+00> : vector<128x256xf32>
    %10 = tpu.matmul %8, %9, %cst_8 {dimension_numbers = #tpu.dot_dimension_numbers<[1], [0], [0], [1], [0, 0, 1, 1], [], []>} : vector<128x512xbf16>, vector<512x256xbf16>, vector<128x256xf32> -> vector<128x256xf32>
    %c0_9 = arith.constant 0 : index
    %c0_10 = arith.constant 0 : index
    %11 = vector.load %arg5[%c0_9, %c0_10] : memref<1x256xf32, #tpu.memory_space<vmem>>, vector<1x256xf32>
    %12 = vector.broadcast %11 : vector<1x256xf32> to vector<128x256xf32>
    %13 = arith.addf %10, %12 : vector<128x256xf32>
    %cst_11 = arith.constant 0.000000e+00 : f32
    %14 = vector.broadcast %cst_11 : f32 to vector<128x256xf32>
    %15 = arith.maximumf %13, %14 : vector<128x256xf32>
    %16 = arith.truncf %15 : vector<128x256xf32> to vector<128x256xbf16>
    %c0_12 = arith.constant 0 : index
    %c0_13 = arith.constant 0 : index
    %17 = vector.load %arg6[%c0_12, %c0_13] : memref<256x128xbf16, #tpu.memory_space<vmem>>, vector<256x128xbf16>
    %cst_14 = arith.constant dense<0.000000e+00> : vector<128x128xf32>
    %18 = tpu.matmul %16, %17, %cst_14 {dimension_numbers = #tpu.dot_dimension_numbers<[1], [0], [0], [1], [0, 0, 1, 1], [], []>} : vector<128x256xbf16>, vector<256x128xbf16>, vector<128x128xf32> -> vector<128x128xf32>
    %c0_15 = arith.constant 0 : index
    %c0_16 = arith.constant 0 : index
    %19 = vector.load %arg7[%c0_15, %c0_16] : memref<1x128xf32, #tpu.memory_space<vmem>>, vector<1x128xf32>
    %20 = vector.broadcast %19 : vector<1x128xf32> to vector<128x128xf32>
    %21 = arith.addf %18, %20 : vector<128x128xf32>
    %cst_17 = arith.constant 0.000000e+00 : f32
    %22 = vector.broadcast %cst_17 : f32 to vector<128x128xf32>
    %23 = arith.maximumf %21, %22 : vector<128x128xf32>
    %24 = arith.truncf %23 : vector<128x128xf32> to vector<128x128xbf16>
    %c0_18 = arith.constant 0 : index
    %c0_19 = arith.constant 0 : index
    %25 = vector.load %arg8[%c0_18, %c0_19] : memref<128x128xbf16, #tpu.memory_space<vmem>>, vector<128x128xbf16>
    %cst_20 = arith.constant dense<0.000000e+00> : vector<128x128xf32>
    %26 = tpu.matmul %24, %25, %cst_20 {dimension_numbers = #tpu.dot_dimension_numbers<[1], [0], [0], [1], [0, 0, 1, 1], [], []>} : vector<128x128xbf16>, vector<128x128xbf16>, vector<128x128xf32> -> vector<128x128xf32>
    %c0_21 = arith.constant 0 : index
    %c0_22 = arith.constant 0 : index
    %27 = vector.load %arg9[%c0_21, %c0_22] : memref<1x128xf32, #tpu.memory_space<vmem>>, vector<1x128xf32>
    %28 = vector.broadcast %27 : vector<1x128xf32> to vector<128x128xf32>
    %29 = arith.addf %26, %28 : vector<128x128xf32>
    %cst_23 = arith.constant 0.000000e+00 : f32
    %30 = vector.broadcast %cst_23 : f32 to vector<128x128xf32>
    %31 = arith.maximumf %29, %30 : vector<128x128xf32>
    %32 = arith.truncf %31 : vector<128x128xf32> to vector<128x128xbf16>
    %c0_24 = arith.constant 0 : index
    %c0_25 = arith.constant 0 : index
    %33 = vector.load %arg10[%c0_24, %c0_25] : memref<128x128xbf16, #tpu.memory_space<vmem>>, vector<128x128xbf16>
    %cst_26 = arith.constant dense<0.000000e+00> : vector<128x128xf32>
    %34 = tpu.matmul %32, %33, %cst_26 {dimension_numbers = #tpu.dot_dimension_numbers<[1], [0], [0], [1], [0, 0, 1, 1], [], []>} : vector<128x128xbf16>, vector<128x128xbf16>, vector<128x128xf32> -> vector<128x128xf32>
    %c0_27 = arith.constant 0 : index
    %c0_28 = arith.constant 0 : index
    %35 = vector.load %arg11[%c0_27, %c0_28] : memref<1x128xf32, #tpu.memory_space<vmem>>, vector<1x128xf32>
    %36 = vector.broadcast %35 : vector<1x128xf32> to vector<128x128xf32>
    %37 = arith.addf %34, %36 : vector<128x128xf32>
    %cst_29 = arith.constant dense<0xFF800000> : vector<128xf32>
    %38 = vector.multi_reduction <maximumf>, %37, %cst_29 [1] : vector<128x128xf32> to vector<128xf32>
    %39 = vector.shape_cast %38 : vector<128xf32> to vector<128x1xf32>
    %40 = vector.broadcast %39 : vector<128x1xf32> to vector<128x128xf32>
    %41 = arith.subf %37, %40 : vector<128x128xf32>
    %42 = math.exp %41 : vector<128x128xf32>
    %cst_30 = arith.constant dense<0.000000e+00> : vector<128xf32>
    %43 = vector.multi_reduction <add>, %42, %cst_30 [1] : vector<128x128xf32> to vector<128xf32>
    %44 = vector.shape_cast %43 : vector<128xf32> to vector<128x1xf32>
    %45 = math.log %44 : vector<128x1xf32>
    %46 = vector.broadcast %45 : vector<128x1xf32> to vector<128x128xf32>
    %47 = arith.subf %41, %46 : vector<128x128xf32>
    %c0_31 = arith.constant 0 : index
    %c0_32 = arith.constant 0 : index
    %48 = vector.load %arg12[%c0_31, %c0_32] : memref<128x128xf32, #tpu.memory_space<vmem>>, vector<128x128xf32>
    tpu.vector_store %arg12[%c0_31, %c0_32], %47 {strides = array<i32>} : memref<128x128xf32, #tpu.memory_space<vmem>>, vector<128x128xf32>,
    return
  }
  func.func @transform_0(%arg0: i32) -> (i32, i32) {
    %c0_i32 = arith.constant 0 : i32
    %c0_i32_0 = arith.constant 0 : i32
    return %arg0, %c0_i32 : i32, i32
  }
  func.func @transform_1(%arg0: i32) -> (i32, i32) {
    %c0_i32 = arith.constant 0 : i32
    %c0_i32_0 = arith.constant 0 : i32
    %c0_i32_1 = arith.constant 0 : i32
    return %c0_i32, %c0_i32_0 : i32, i32
  }
  func.func @transform_2(%arg0: i32) -> (i32, i32) {
    %c0_i32 = arith.constant 0 : i32
    %c0_i32_0 = arith.constant 0 : i32
    %c0_i32_1 = arith.constant 0 : i32
    return %c0_i32, %c0_i32_0 : i32, i32
  }
  func.func @transform_3(%arg0: i32) -> (i32, i32) {
    %c0_i32 = arith.constant 0 : i32
    %c0_i32_0 = arith.constant 0 : i32
    %c0_i32_1 = arith.constant 0 : i32
    return %c0_i32, %c0_i32_0 : i32, i32
  }
  func.func @transform_4(%arg0: i32) -> (i32, i32) {
    %c0_i32 = arith.constant 0 : i32
    %c0_i32_0 = arith.constant 0 : i32
    %c0_i32_1 = arith.constant 0 : i32
    return %c0_i32, %c0_i32_0 : i32, i32
  }
  func.func @transform_5(%arg0: i32) -> (i32, i32) {
    %c0_i32 = arith.constant 0 : i32
    %c0_i32_0 = arith.constant 0 : i32
    %c0_i32_1 = arith.constant 0 : i32
    return %c0_i32, %c0_i32_0 : i32, i32
  }
  func.func @transform_6(%arg0: i32) -> (i32, i32) {
    %c0_i32 = arith.constant 0 : i32
    %c0_i32_0 = arith.constant 0 : i32
    %c0_i32_1 = arith.constant 0 : i32
    return %c0_i32, %c0_i32_0 : i32, i32
  }
  func.func @transform_7(%arg0: i32) -> (i32, i32) {
    %c0_i32 = arith.constant 0 : i32
    %c0_i32_0 = arith.constant 0 : i32
    %c0_i32_1 = arith.constant 0 : i32
    return %c0_i32, %c0_i32_0 : i32, i32
  }
  func.func @transform_8(%arg0: i32) -> (i32, i32) {
    %c0_i32 = arith.constant 0 : i32
    %c0_i32_0 = arith.constant 0 : i32
    %c0_i32_1 = arith.constant 0 : i32
    return %c0_i32, %c0_i32_0 : i32, i32
  }
  func.func @transform_9(%arg0: i32) -> (i32, i32) {
    %c0_i32 = arith.constant 0 : i32
    %c0_i32_0 = arith.constant 0 : i32
    %c0_i32_1 = arith.constant 0 : i32
    return %c0_i32, %c0_i32_0 : i32, i32
  }
  func.func @transform_10(%arg0: i32) -> (i32, i32) {
    %c0_i32 = arith.constant 0 : i32
    %c0_i32_0 = arith.constant 0 : i32
    %c0_i32_1 = arith.constant 0 : i32
    return %c0_i32, %c0_i32_0 : i32, i32
  }
  func.func @transform_11(%arg0: i32) -> (i32, i32) {
    %c0_i32 = arith.constant 0 : i32
    %c0_i32_0 = arith.constant 0 : i32
    return %arg0, %c0_i32 : i32, i32
  }
}

</mosaic_0001>

<llo_original>
// kernel: tpu_custom_call.1
$region0: #{tpu_custom_call.1}
  #allocation0 [shape = 'u32[]', space=smem, size = 0x4, offset = 0x4, fixed_abs, tag = 'smem constant byte address 0x4 - core index']
  #allocation1 [shape = 'u32[144,128]{1,0:T(1,128)}', space=vmem, size = 0x12000, scoped, tag = 'internal scratch']
  %s0 = inlined_call_operand.vmem [shape: bf16[128,784], index: 0, kind: input, shape index: {}]
  %s1 = inlined_call_operand.hbm [shape: bf16[784,512], index: 1, kind: input, shape index: {}]
  %s2 = inlined_call_operand.vmem [shape: f32[1,512], index: 2, kind: input, shape index: {}]
  %s3 = inlined_call_operand.vmem [shape: bf16[512,256], index: 3, kind: input, shape index: {}]
  %s4 = inlined_call_operand.vmem [shape: f32[1,256], index: 4, kind: input, shape index: {}]
  %s5 = inlined_call_operand.vmem [shape: bf16[256,128], index: 5, kind: input, shape index: {}]
  %s6 = inlined_call_operand.vmem [shape: f32[1,128], index: 6, kind: input, shape index: {}]
  %s7 = inlined_call_operand.vmem [shape: bf16[128,128], index: 7, kind: input, shape index: {}]
  %s8 = inlined_call_operand.vmem [shape: f32[1,128], index: 8, kind: input, shape index: {}]
  %s9 = inlined_call_operand.vmem [shape: bf16[128,128], index: 9, kind: input, shape index: {}]
  %s10 = inlined_call_operand.vmem [shape: f32[1,128], index: 10, kind: input, shape index: {}]
  %s11 = inlined_call_operand.hbm [shape: f32[128,128], index: 11, kind: output, shape index: {}]
  %s12 = sld [smem:[#allocation0]]
  $region58: #{tpu_custom_call.1} parent=0
    _
  %s14 = ssub.s32 1, %s12
  %s15 = scalar_select 0, %s14, %s12
  $region1: #{tpu_custom_call.1} parent=0
    #allocation2 [shape = 'u8[802816]{0}', space=vmem, size = 0xc4000, scoped, tag = 'input window, operand 1, single buffered']
    #allocation3 [shape = 's32[1]{0}', space=sflag, size = 0x4, scoped, tag = 'scoped memory for tpu_custom_call.1']
    #allocation4 [shape = 's32[1]{0}', space=sflag, size = 0x4, scoped, tag = 'scoped memory for tpu_custom_call.1']
    #allocation5 [shape = 'u8[65536]{0}', space=vmem, size = 0x10000, scoped, tag = 'output window, operand 0, single buffered']
    %16 = vsyncpa [#allocation3], 0
    %17 = vsyncpa [#allocation4], 0
    // Predicated region
    $region2: #{tpu_custom_call.1} parent=1 // pred_check
      _
    $region3: #{tpu_custom_call.1} parent=1 // pred_check_branch
      %19 = sbr.rel (0) target = $region5
    $region4: #{tpu_custom_call.1} parent=1 // pred_region
      _
    $region5: #{tpu_custom_call.1} parent=1 // pred_fallthru
      _
    // Predicated region
    $region6: #{tpu_custom_call.1} parent=1 // pred_check
      _
    $region7: #{tpu_custom_call.1} parent=1 // pred_check_branch
      %21 = sbr.rel (0) target = $region9
    $region8: #{tpu_custom_call.1} parent=1 // pred_region
      %s23 = ssub.s32 25088, 25088
      %24 = vsyncadd [#allocation3], %s23
      %s25 = sshll.u32 [#allocation2], 4
      %s26 = int_to_ptr.vmem [resolvable:$true] %s25
      %31 = dma.hbm_to_vmem [thread:$0]  %s1, 25088, %s26, [#allocation3], 256, 256, 16
    $region9: #{tpu_custom_call.1} parent=1 // pred_fallthru
      _
    // Predicated region
    $region10: #{tpu_custom_call.1} parent=1 // pred_check
      _
    $region11: #{tpu_custom_call.1} parent=1 // pred_check_branch
      %33 = sbr.rel (0) target = $region13
    $region12: #{tpu_custom_call.1} parent=1 // pred_region
      _
    $region13: #{tpu_custom_call.1} parent=1 // pred_fallthru
      _
    // Predicated region
    $region14: #{tpu_custom_call.1} parent=1 // pred_check
      _
    $region15: #{tpu_custom_call.1} parent=1 // pred_check_branch
      %35 = sbr.rel (0) target = $region17
    $region16: #{tpu_custom_call.1} parent=1 // pred_region
      _
    $region17: #{tpu_custom_call.1} parent=1 // pred_fallthru
      _
    // Predicated region
    $region18: #{tpu_custom_call.1} parent=1 // pred_check
      _
    $region19: #{tpu_custom_call.1} parent=1 // pred_check_branch
      %37 = sbr.rel (0) target = $region21
    $region20: #{tpu_custom_call.1} parent=1 // pred_region
      _
    $region21: #{tpu_custom_call.1} parent=1 // pred_fallthru
      _
    // Predicated region
    $region22: #{tpu_custom_call.1} parent=1 // pred_check
      _
    $region23: #{tpu_custom_call.1} parent=1 // pred_check_branch
      %39 = sbr.rel (0) target = $region25
    $region24: #{tpu_custom_call.1} parent=1 // pred_region
      _
    $region25: #{tpu_custom_call.1} parent=1 // pred_fallthru
      _
    // Predicated region
    $region26: #{tpu_custom_call.1} parent=1 // pred_check
      _
    $region27: #{tpu_custom_call.1} parent=1 // pred_check_branch
      %41 = sbr.rel (0) target = $region29
    $region28: #{tpu_custom_call.1} parent=1 // pred_region
      _
    $region29: #{tpu_custom_call.1} parent=1 // pred_fallthru
      _
    // Predicated region
    $region30: #{tpu_custom_call.1} parent=1 // pred_check
      _
    $region31: #{tpu_custom_call.1} parent=1 // pred_check_branch
      %43 = sbr.rel (0) target = $region33
    $region32: #{tpu_custom_call.1} parent=1 // pred_region
      _
    $region33: #{tpu_custom_call.1} parent=1 // pred_fallthru
      _
    // Predicated region
    $region34: #{tpu_custom_call.1} parent=1 // pred_check
      _
    $region35: #{tpu_custom_call.1} parent=1 // pred_check_branch
      %45 = sbr.rel (0) target = $region37
    $region36: #{tpu_custom_call.1} parent=1 // pred_region
      _
    $region37: #{tpu_custom_call.1} parent=1 // pred_fallthru
      _
    // Predicated region
    $region38: #{tpu_custom_call.1} parent=1 // pred_check
      _
    $region39: #{tpu_custom_call.1} parent=1 // pred_check_branch
      %47 = sbr.rel (0) target = $region41
    $region40: #{tpu_custom_call.1} parent=1 // pred_region
      _
    $region41: #{tpu_custom_call.1} parent=1 // pred_fallthru
      _
    // Predicated region
    $region42: #{tpu_custom_call.1} parent=1 // pred_check
      _
    $region43: #{tpu_custom_call.1} parent=1 // pred_check_branch
      %49 = sbr.rel (0) target = $region45
    $region44: #{tpu_custom_call.1} parent=1 // pred_region
      _
    $region45: #{tpu_custom_call.1} parent=1 // pred_fallthru
      _
    // Predicated region
    $region46: #{tpu_custom_call.1} parent=1 // pred_check
      _
    $region47: #{tpu_custom_call.1} parent=1 // pred_check_branch
      %51 = sbr.rel (0) target = $region49
    $region48: #{tpu_custom_call.1} parent=1 // pred_region
      %52 = dma.done [#allocation3], 25088
    $region49: #{tpu_custom_call.1} parent=1 // pred_fallthru
      _
    %v54 = vld [vmem:[%s0] sm:$0xff]
    %v55 = vld [vmem:[%s0 + $0x8] sm:$0xff]
    %v56 = vld [vmem:[%s0 + $0x10] sm:$0xff]
    %v57 = vld [vmem:[%s0 + $0x18] sm:$0xf]
    %v58 = vld [vmem:[%s0 + $0x1c] sm:$0xff]
    %v59 = vld [vmem:[%s0 + $0x24] sm:$0xff]
    %v60 = vld [vmem:[%s0 + $0x2c] sm:$0xff]
    %v61 = vld [vmem:[%s0 + $0x34] sm:$0xf]
    %v62 = vld [vmem:[%s0 + $0x38] sm:$0xff]
    %v63 = vld [vmem:[%s0 + $0x40] sm:$0xff]
    %v64 = vld [vmem:[%s0 + $0x48] sm:$0xff]
    %v65 = vld [vmem:[%s0 + $0x50] sm:$0xf]
    %v66 = vld [vmem:[%s0 + $0x54] sm:$0xff]
    %v67 = vld [vmem:[%s0 + $0x5c] sm:$0xff]
    %v68 = vld [vmem:[%s0 + $0x64] sm:$0xff]
    %v69 = vld [vmem:[%s0 + $0x6c] sm:$0xf]
    %v70 = vld [vmem:[%s0 + $0x70] sm:$0xff]
    %v71 = vld [vmem:[%s0 + $0x78] sm:$0xff]
    %v72 = vld [vmem:[%s0 + $0x80] sm:$0xff]
    %v73 = vld [vmem:[%s0 + $0x88] sm:$0xf]
    %v74 = vld [vmem:[%s0 + $0x8c] sm:$0xff]
    %v75 = vld [vmem:[%s0 + $0x94] sm:$0xff]
    %v76 = vld [vmem:[%s0 + $0x9c] sm:$0xff]
    %v77 = vld [vmem:[%s0 + $0xa4] sm:$0xf]
    %v78 = vld [vmem:[%s0 + $0xa8] sm:$0xff]
    %v79 = vld [vmem:[%s0 + $0xb0] sm:$0xff]
    %v80 = vld [vmem:[%s0 + $0xb8] sm:$0xff]
    %v81 = vld [vmem:[%s0 + $0xc0] sm:$0xf]
    %v82 = vld [vmem:[%s0 + $0xc4] sm:$0xff]
    %v83 = vld [vmem:[%s0 + $0xcc] sm:$0xff]
    %v84 = vld [vmem:[%s0 + $0xd4] sm:$0xff]
    %v85 = vld [vmem:[%s0 + $0xdc] sm:$0xf]
    %v86 = vld [vmem:[%s0 + $0xe0] sm:$0xff]
    %v87 = vld [vmem:[%s0 + $0xe8] sm:$0xff]
    %v88 = vld [vmem:[%s0 + $0xf0] sm:$0xff]
    %v89 = vld [vmem:[%s0 + $0xf8] sm:$0xf]
    %v90 = vld [vmem:[%s0 + $0xfc] sm:$0xff]
    %v91 = vld [vmem:[%s0 + $0x104] sm:$0xff]
    %v92 = vld [vmem:[%s0 + $0x10c] sm:$0xff]
    %v93 = vld [vmem:[%s0 + $0x114] sm:$0xf]
    %v94 = vld [vmem:[%s0 + $0x118] sm:$0xff]
    %v95 = vld [vmem:[%s0 + $0x120] sm:$0xff]
    %v96 = vld [vmem:[%s0 + $0x128] sm:$0xff]
    %v97 = vld [vmem:[%s0 + $0x130] sm:$0xf]
    %v98 = vld [vmem:[%s0 + $0x134] sm:$0xff]
    %v99 = vld [vmem:[%s0 + $0x13c] sm:$0xff]
    %v100 = vld [vmem:[%s0 + $0x144] sm:$0xff]
    %v101 = vld [vmem:[%s0 + $0x14c] sm:$0xf]
    %v102 = vld [vmem:[%s0 + $0x150] sm:$0xff]
    %v103 = vld [vmem:[%s0 + $0x158] sm:$0xff]
    %v104 = vld [vmem:[%s0 + $0x160] sm:$0xff]
    %v105 = vld [vmem:[%s0 + $0x168] sm:$0xf]
    %v106 = vld [vmem:[%s0 + $0x16c] sm:$0xff]
    %v107 = vld [vmem:[%s0 + $0x174] sm:$0xff]
    %v108 = vld [vmem:[%s0 + $0x17c] sm:$0xff]
    %v109 = vld [vmem:[%s0 + $0x184] sm:$0xf]
    %v110 = vld [vmem:[%s0 + $0x188] sm:$0xff]
    %v111 = vld [vmem:[%s0 + $0x190] sm:$0xff]
    %v112 = vld [vmem:[%s0 + $0x198] sm:$0xff]
    %v113 = vld [vmem:[%s0 + $0x1a0] sm:$0xf]
    %v114 = vld [vmem:[%s0 + $0x1a4] sm:$0xff]
    %v115 = vld [vmem:[%s0 + $0x1ac] sm:$0xff]
    %v116 = vld [vmem:[%s0 + $0x1b4] sm:$0xff]
    %v117 = vld [vmem:[%s0 + $0x1bc] sm:$0xf]
    %v118 = vld [vmem:[#allocation2] sm:$0xff]
    %v119 = vld [vmem:[#allocation2 + $0x8] sm:$0xff]
    %v120 = vld [vmem:[#allocation2 + $0x10] sm:$0xff]
    %v121 = vld [vmem:[#allocation2 + $0x18] sm:$0xff]
    %v122 = vld [vmem:[#allocation2 + $0x20] sm:$0xff]
    %v123 = vld [vmem:[#allocation2 + $0x28] sm:$0xff]
    %v124 = vld [vmem:[#allocation2 + $0x30] sm:$0xff]
    %v125 = vld [vmem:[#allocation2 + $0x38] sm:$0xff]
    %v126 = vld [vmem:[#allocation2 + $0x40] sm:$0xff]
    %v127 = vld [vmem:[#allocation2 + $0x48] sm:$0xff]
    %v128 = vld [vmem:[#allocation2 + $0x50] sm:$0xff]
    %v129 = vld [vmem:[#allocation2 + $0x58] sm:$0xff]
    %v130 = vld [vmem:[#allocation2 + $0x60] sm:$0xff]
    %v131 = vld [vmem:[#allocation2 + $0x68] sm:$0xff]
    %v132 = vld [vmem:[#allocation2 + $0x70] sm:$0xff]
    %v133 = vld [vmem:[#allocation2 + $0x78] sm:$0xff]
    %v134 = vld [vmem:[#allocation2 + $0x80] sm:$0xff]
    %v135 = vld [vmem:[#allocation2 + $0x88] sm:$0xff]
    %v136 = vld [vmem:[#allocation2 + $0x90] sm:$0xff]
    %v137 = vld [vmem:[#allocation2 + $0x98] sm:$0xff]
    %v138 = vld [vmem:[#allocation2 + $0xa0] sm:$0xff]
    %v139 = vld [vmem:[#allocation2 + $0xa8] sm:$0xff]
    %v140 = vld [vmem:[#allocation2 + $0xb0] sm:$0xff]
    %v141 = vld [vmem:[#allocation2 + $0xb8] sm:$0xff]
    %v142 = vld [vmem:[#allocation2 + $0xc0] sm:$0xff]
    %v143 = vld [vmem:[#allocation2 + $0xc8] sm:$0xff]
    %v144 = vld [vmem:[#allocation2 + $0xd0] sm:$0xff]
    %v145 = vld [vmem:[#allocation2 + $0xd8] sm:$0xff]
    %v146 = vld [vmem:[#allocation2 + $0xe0] sm:$0xff]
    %v147 = vld [vmem:[#allocation2 + $0xe8] sm:$0xff]
    %v148 = vld [vmem:[#allocation2 + $0xf0] sm:$0xff]
    %v149 = vld [vmem:[#allocation2 + $0xf8] sm:$0xff]
    %v150 = vld [vmem:[#allocation2 + $0x100] sm:$0xff]
    %v151 = vld [vmem:[#allocation2 + $0x108] sm:$0xff]
    %v152 = vld [vmem:[#allocation2 + $0x110] sm:$0xff]
    %v153 = vld [vmem:[#allocation2 + $0x118] sm:$0xff]
    %v154 = vld [vmem:[#allocation2 + $0x120] sm:$0xff]
    %v155 = vld [vmem:[#allocation2 + $0x128] sm:$0xff]
    %v156 = vld [vmem:[#allocation2 + $0x130] sm:$0xff]
    %v157 = vld [vmem:[#allocation2 + $0x138] sm:$0xff]
    %v158 = vld [vmem:[#allocation2 + $0x140] sm:$0xff]
    %v159 = vld [vmem:[#allocation2 + $0x148] sm:$0xff]
    %v160 = vld [vmem:[#allocation2 + $0x150] sm:$0xff]
    %v161 = vld [vmem:[#allocation2 + $0x158] sm:$0xff]
    %v162 = vld [vmem:[#allocation2 + $0x160] sm:$0xff]
    %v163 = vld [vmem:[#allocation2 + $0x168] sm:$0xff]
    %v164 = vld [vmem:[#allocation2 + $0x170] sm:$0xff]
    %v165 = vld [vmem:[#allocation2 + $0x178] sm:$0xff]
    %v166 = vld [vmem:[#allocation2 + $0x180] sm:$0xff]
    %v167 = vld [vmem:[#allocation2 + $0x188] sm:$0xff]
    %v168 = vld [vmem:[#allocation2 + $0x190] sm:$0xff]
    %v169 = vld [vmem:[#allocation2 + $0x198] sm:$0xff]
    %v170 = vld [vmem:[#allocation2 + $0x1a0] sm:$0xff]
    %v171 = vld [vmem:[#allocation2 + $0x1a8] sm:$0xff]
    %v172 = vld [vmem:[#allocation2 + $0x1b0] sm:$0xff]
    %v173 = vld [vmem:[#allocation2 + $0x1b8] sm:$0xff]
    %v174 = vld [vmem:[#allocation2 + $0x1c0] sm:$0xff]
    %v175 = vld [vmem:[#allocation2 + $0x1c8] sm:$0xff]
    %v176 = vld [vmem:[#allocation2 + $0x1d0] sm:$0xff]
    %v177 = vld [vmem:[#allocation2 + $0x1d8] sm:$0xff]
    %v178 = vld [vmem:[#allocation2 + $0x1e0] sm:$0xff]
    %v179 = vld [vmem:[#allocation2 + $0x1e8] sm:$0xff]
    %v180 = vld [vmem:[#allocation2 + $0x1f0] sm:$0xff]
    %v181 = vld [vmem:[#allocation2 + $0x1f8] sm:$0xff]
    %v182 = vld [vmem:[#allocation2 + $0x200] sm:$0xff]
    %v183 = vld [vmem:[#allocation2 + $0x208] sm:$0xff]
    %v184 = vld [vmem:[#allocation2 + $0x210] sm:$0xff]
    %v185 = vld [vmem:[#allocation2 + $0x218] sm:$0xff]
    %v186 = vld [vmem:[#allocation2 + $0x220] sm:$0xff]
    %v187 = vld [vmem:[#allocation2 + $0x228] sm:$0xff]
    %v188 = vld [vmem:[#allocation2 + $0x230] sm:$0xff]
    %v189 = vld [vmem:[#allocation2 + $0x238] sm:$0xff]
    %v190 = vld [vmem:[#allocation2 + $0x240] sm:$0xff]
    %v191 = vld [vmem:[#allocation2 + $0x248] sm:$0xff]
    %v192 = vld [vmem:[#allocation2 + $0x250] sm:$0xff]
    %v193 = vld [vmem:[#allocation2 + $0x258] sm:$0xff]
    %v194 = vld [vmem:[#allocation2 + $0x260] sm:$0xff]
    %v195 = vld [vmem:[#allocation2 + $0x268] sm:$0xff]
    %v196 = vld [vmem:[#allocation2 + $0x270] sm:$0xff]
    %v197 = vld [vmem:[#allocation2 + $0x278] sm:$0xff]
    %v198 = vld [vmem:[#allocation2 + $0x280] sm:$0xff]
    %v199 = vld [vmem:[#allocation2 + $0x288] sm:$0xff]
    %v200 = vld [vmem:[#allocation2 + $0x290] sm:$0xff]
    %v201 = vld [vmem:[#allocation2 + $0x298] sm:$0xff]
    %v202 = vld [vmem:[#allocation2 + $0x2a0] sm:$0xff]
    %v203 = vld [vmem:[#allocation2 + $0x2a8] sm:$0xff]
    %v204 = vld [vmem:[#allocation2 + $0x2b0] sm:$0xff]
    %v205 = vld [vmem:[#allocation2 + $0x2b8] sm:$0xff]
    %v206 = vld [vmem:[#allocation2 + $0x2c0] sm:$0xff]
    %v207 = vld [vmem:[#allocation2 + $0x2c8] sm:$0xff]
    %v208 = vld [vmem:[#allocation2 + $0x2d0] sm:$0xff]
    %v209 = vld [vmem:[#allocation2 + $0x2d8] sm:$0xff]
    %v210 = vld [vmem:[#allocation2 + $0x2e0] sm:$0xff]
    %v211 = vld [vmem:[#allocation2 + $0x2e8] sm:$0xff]
    %v212 = vld [vmem:[#allocation2 + $0x2f0] sm:$0xff]
    %v213 = vld [vmem:[#allocation2 + $0x2f8] sm:$0xff]
    %v214 = vld [vmem:[#allocation2 + $0x300] sm:$0xff]
    %v215 = vld [vmem:[#allocation2 + $0x308] sm:$0xff]
    %v216 = vld [vmem:[#allocation2 + $0x310] sm:$0xff]
    %v217 = vld [vmem:[#allocation2 + $0x318] sm:$0xff]
    %v218 = vld [vmem:[#allocation2 + $0x320] sm:$0xff]
    %v219 = vld [vmem:[#allocation2 + $0x328] sm:$0xff]
    %v220 = vld [vmem:[#allocation2 + $0x330] sm:$0xff]
    %v221 = vld [vmem:[#allocation2 + $0x338] sm:$0xff]
    %v222 = vld [vmem:[#allocation2 + $0x340] sm:$0xff]
    %v223 = vld [vmem:[#allocation2 + $0x348] sm:$0xff]
    %v224 = vld [vmem:[#allocation2 + $0x350] sm:$0xff]
    %v225 = vld [vmem:[#allocation2 + $0x358] sm:$0xff]
    %v226 = vld [vmem:[#allocation2 + $0x360] sm:$0xff]
    %v227 = vld [vmem:[#allocation2 + $0x368] sm:$0xff]
    %v228 = vld [vmem:[#allocation2 + $0x370] sm:$0xff]
    %v229 = vld [vmem:[#allocation2 + $0x378] sm:$0xff]
    %v230 = vld [vmem:[#allocation2 + $0x380] sm:$0xff]
    %v231 = vld [vmem:[#allocation2 + $0x388] sm:$0xff]
    %v232 = vld [vmem:[#allocation2 + $0x390] sm:$0xff]
    %v233 = vld [vmem:[#allocation2 + $0x398] sm:$0xff]
    %v234 = vld [vmem:[#allocation2 + $0x3a0] sm:$0xff]
    %v235 = vld [vmem:[#allocation2 + $0x3a8] sm:$0xff]
    %v236 = vld [vmem:[#allocation2 + $0x3b0] sm:$0xff]
    %v237 = vld [vmem:[#allocation2 + $0x3b8] sm:$0xff]
    %v238 = vld [vmem:[#allocation2 + $0x3c0] sm:$0xff]
    %v239 = vld [vmem:[#allocation2 + $0x3c8] sm:$0xff]
    %v240 = vld [vmem:[#allocation2 + $0x3d0] sm:$0xff]
    %v241 = vld [vmem:[#allocation2 + $0x3d8] sm:$0xff]
    %v242 = vld [vmem:[#allocation2 + $0x3e0] sm:$0xff]
    %v243 = vld [vmem:[#allocation2 + $0x3e8] sm:$0xff]
    %v244 = vld [vmem:[#allocation2 + $0x3f0] sm:$0xff]
    %v245 = vld [vmem:[#allocation2 + $0x3f8] sm:$0xff]
    %v246 = vld [vmem:[#allocation2 + $0x400] sm:$0xff]
    %v247 = vld [vmem:[#allocation2 + $0x408] sm:$0xff]
    %v248 = vld [vmem:[#allocation2 + $0x410] sm:$0xff]
    %v249 = vld [vmem:[#allocation2 + $0x418] sm:$0xff]
    %v250 = vld [vmem:[#allocation2 + $0x420] sm:$0xff]
    %v251 = vld [vmem:[#allocation2 + $0x428] sm:$0xff]
    %v252 = vld [vmem:[#allocation2 + $0x430] sm:$0xff]
    %v253 = vld [vmem:[#allocation2 + $0x438] sm:$0xff]
    %v254 = vld [vmem:[#allocation2 + $0x440] sm:$0xff]
    %v255 = vld [vmem:[#allocation2 + $0x448] sm:$0xff]
    %v256 = vld [vmem:[#allocation2 + $0x450] sm:$0xff]
    %v257 = vld [vmem:[#allocation2 + $0x458] sm:$0xff]
    %v258 = vld [vmem:[#allocation2 + $0x460] sm:$0xff]
    %v259 = vld [vmem:[#allocation2 + $0x468] sm:$0xff]
    %v260 = vld [vmem:[#allocation2 + $0x470] sm:$0xff]
    %v261 = vld [vmem:[#allocation2 + $0x478] sm:$0xff]
    %v262 = vld [vmem:[#allocation2 + $0x480] sm:$0xff]
    %v263 = vld [vmem:[#allocation2 + $0x488] sm:$0xff]
    %v264 = vld [vmem:[#allocation2 + $0x490] sm:$0xff]
    %v265 = vld [vmem:[#allocation2 + $0x498] sm:$0xff]
    %v266 = vld [vmem:[#allocation2 + $0x4a0] sm:$0xff]
    %v267 = vld [vmem:[#allocation2 + $0x4a8] sm:$0xff]
    %v268 = vld [vmem:[#allocation2 + $0x4b0] sm:$0xff]
    %v269 = vld [vmem:[#allocation2 + $0x4b8] sm:$0xff]
    %v270 = vld [vmem:[#allocation2 + $0x4c0] sm:$0xff]
    %v271 = vld [vmem:[#allocation2 + $0x4c8] sm:$0xff]
    %v272 = vld [vmem:[#allocation2 + $0x4d0] sm:$0xff]
    %v273 = vld [vmem:[#allocation2 + $0x4d8] sm:$0xff]
    %v274 = vld [vmem:[#allocation2 + $0x4e0] sm:$0xff]
    %v275 = vld [vmem:[#allocation2 + $0x4e8] sm:$0xff]
    %v276 = vld [vmem:[#allocation2 + $0x4f0] sm:$0xff]
    %v277 = vld [vmem:[#allocation2 + $0x4f8] sm:$0xff]
    %v278 = vld [vmem:[#allocation2 + $0x500] sm:$0xff]
    %v279 = vld [vmem:[#allocation2 + $0x508] sm:$0xff]
    %v280 = vld [vmem:[#allocation2 + $0x510] sm:$0xff]
    %v281 = vld [vmem:[#allocation2 + $0x518] sm:$0xff]
    %v282 = vld [vmem:[#allocation2 + $0x520] sm:$0xff]
    %v283 = vld [vmem:[#allocation2 + $0x528] sm:$0xff]
    %v284 = vld [vmem:[#allocation2 + $0x530] sm:$0xff]
    %v285 = vld [vmem:[#allocation2 + $0x538] sm:$0xff]
    %v286 = vld [vmem:[#allocation2 + $0x540] sm:$0xff]
    %v287 = vld [vmem:[#allocation2 + $0x548] sm:$0xff]
    %v288 = vld [vmem:[#allocation2 + $0x550] sm:$0xff]
    %v289 = vld [vmem:[#allocation2 + $0x558] sm:$0xff]
    %v290 = vld [vmem:[#allocation2 + $0x560] sm:$0xff]
    %v291 = vld [vmem:[#allocation2 + $0x568] sm:$0xff]
    %v292 = vld [vmem:[#allocation2 + $0x570] sm:$0xff]
    %v293 = vld [vmem:[#allocation2 + $0x578] sm:$0xff]
    %v294 = vld [vmem:[#allocation2 + $0x580] sm:$0xff]
    %v295 = vld [vmem:[#allocation2 + $0x588] sm:$0xff]
    %v296 = vld [vmem:[#allocation2 + $0x590] sm:$0xff]
    %v297 = vld [vmem:[#allocation2 + $0x598] sm:$0xff]
    %v298 = vld [vmem:[#allocation2 + $0x5a0] sm:$0xff]
    %v299 = vld [vmem:[#allocation2 + $0x5a8] sm:$0xff]
    %v300 = vld [vmem:[#allocation2 + $0x5b0] sm:$0xff]
    %v301 = vld [vmem:[#allocation2 + $0x5b8] sm:$0xff]
    %v302 = vld [vmem:[#allocation2 + $0x5c0] sm:$0xff]
    %v303 = vld [vmem:[#allocation2 + $0x5c8] sm:$0xff]
    %v304 = vld [vmem:[#allocation2 + $0x5d0] sm:$0xff]
    %v305 = vld [vmem:[#allocation2 + $0x5d8] sm:$0xff]
    %v306 = vld [vmem:[#allocation2 + $0x5e0] sm:$0xff]
    %v307 = vld [vmem:[#allocation2 + $0x5e8] sm:$0xff]
    %v308 = vld [vmem:[#allocation2 + $0x5f0] sm:$0xff]
    %v309 = vld [vmem:[#allocation2 + $0x5f8] sm:$0xff]
    %v310 = vld [vmem:[#allocation2 + $0x600] sm:$0xff]
    %v311 = vld [vmem:[#allocation2 + $0x608] sm:$0xff]
    %v312 = vld [vmem:[#allocation2 + $0x610] sm:$0xff]
    %v313 = vld [vmem:[#allocation2 + $0x618] sm:$0xff]
    %v314 = vld [vmem:[%s2] sm:$0xf]
    %v316 = vlaneseq
    %v317 = vshrl.u32 %v316, 7
    %v318 = vsub.s32 0, %v317
    %v319 = vrot.slane %v314, %v318
    %v320 = vlaneseq
    %v321 = vshrl.u32 %v320, 7
    %v322 = vsub.s32 1, %v321
    %v323 = vrot.slane %v314, %v322
    %v324 = vlaneseq
    %v325 = vshrl.u32 %v324, 7
    %v326 = vsub.s32 2, %v325
    %v327 = vrot.slane %v314, %v326
    %v328 = vlaneseq
    %v329 = vshrl.u32 %v328, 7
    %v330 = vsub.s32 3, %v329
    %v331 = vrot.slane %v314, %v330
    %v400 = vunpack.c.l.b16 %v54
    %v401 = vunpack.c.h.b16 %v54
    %v402 = vunpack.c.l.b16 %v55
    %v403 = vunpack.c.h.b16 %v55
    %v404 = vunpack.c.l.b16 %v56
    %v405 = vunpack.c.h.b16 %v56
    %v406 = vunpack.c.l.b16 %v57
    %v407 = vunpack.c.l.b16 %v58
    %v408 = vunpack.c.h.b16 %v58
    %v409 = vunpack.c.l.b16 %v59
    %v410 = vunpack.c.h.b16 %v59
    %v411 = vunpack.c.l.b16 %v60
    %v412 = vunpack.c.h.b16 %v60
    %v413 = vunpack.c.l.b16 %v61
    %v414 = vunpack.c.l.b16 %v62
    %v415 = vunpack.c.h.b16 %v62
    %v416 = vunpack.c.l.b16 %v63
    %v417 = vunpack.c.h.b16 %v63
    %v418 = vunpack.c.l.b16 %v64
    %v419 = vunpack.c.h.b16 %v64
    %v420 = vunpack.c.l.b16 %v65
    %v421 = vunpack.c.l.b16 %v66
    %v422 = vunpack.c.h.b16 %v66
    %v423 = vunpack.c.l.b16 %v67
    %v424 = vunpack.c.h.b16 %v67
    %v425 = vunpack.c.l.b16 %v68
    %v426 = vunpack.c.h.b16 %v68
    %v427 = vunpack.c.l.b16 %v69
    %v428 = vunpack.c.l.b16 %v70
    %v429 = vunpack.c.h.b16 %v70
    %v430 = vunpack.c.l.b16 %v71
    %v431 = vunpack.c.h.b16 %v71
    %v432 = vunpack.c.l.b16 %v72
    %v433 = vunpack.c.h.b16 %v72
    %v434 = vunpack.c.l.b16 %v73
    %v435 = vunpack.c.l.b16 %v74
    %v436 = vunpack.c.h.b16 %v74
    %v437 = vunpack.c.l.b16 %v75
    %v438 = vunpack.c.h.b16 %v75
    %v439 = vunpack.c.l.b16 %v76
    %v440 = vunpack.c.h.b16 %v76
    %v441 = vunpack.c.l.b16 %v77
    %v442 = vunpack.c.l.b16 %v78
    %v443 = vunpack.c.h.b16 %v78
    %v444 = vunpack.c.l.b16 %v79
    %v445 = vunpack.c.h.b16 %v79
    %v446 = vunpack.c.l.b16 %v80
    %v447 = vunpack.c.h.b16 %v80
    %v448 = vunpack.c.l.b16 %v81
    %v449 = vunpack.c.l.b16 %v82
    %v450 = vunpack.c.h.b16 %v82
    %v451 = vunpack.c.l.b16 %v83
    %v452 = vunpack.c.h.b16 %v83
    %v453 = vunpack.c.l.b16 %v84
    %v454 = vunpack.c.h.b16 %v84
    %v455 = vunpack.c.l.b16 %v85
    %v456 = vunpack.c.l.b16 %v86
    %v457 = vunpack.c.h.b16 %v86
    %v458 = vunpack.c.l.b16 %v87
    %v459 = vunpack.c.h.b16 %v87
    %v460 = vunpack.c.l.b16 %v88
    %v461 = vunpack.c.h.b16 %v88
    %v462 = vunpack.c.l.b16 %v89
    %v463 = vunpack.c.l.b16 %v90
    %v464 = vunpack.c.h.b16 %v90
    %v465 = vunpack.c.l.b16 %v91
    %v466 = vunpack.c.h.b16 %v91
    %v467 = vunpack.c.l.b16 %v92
    %v468 = vunpack.c.h.b16 %v92
    %v469 = vunpack.c.l.b16 %v93
    %v470 = vunpack.c.l.b16 %v94
    %v471 = vunpack.c.h.b16 %v94
    %v472 = vunpack.c.l.b16 %v95
    %v473 = vunpack.c.h.b16 %v95
    %v474 = vunpack.c.l.b16 %v96
    %v475 = vunpack.c.h.b16 %v96
    %v476 = vunpack.c.l.b16 %v97
    %v477 = vunpack.c.l.b16 %v98
    %v478 = vunpack.c.h.b16 %v98
    %v479 = vunpack.c.l.b16 %v99
    %v480 = vunpack.c.h.b16 %v99
    %v481 = vunpack.c.l.b16 %v100
    %v482 = vunpack.c.h.b16 %v100
    %v483 = vunpack.c.l.b16 %v101
    %v484 = vunpack.c.l.b16 %v102
    %v485 = vunpack.c.h.b16 %v102
    %v486 = vunpack.c.l.b16 %v103
    %v487 = vunpack.c.h.b16 %v103
    %v488 = vunpack.c.l.b16 %v104
    %v489 = vunpack.c.h.b16 %v104
    %v490 = vunpack.c.l.b16 %v105
    %v491 = vunpack.c.l.b16 %v106
    %v492 = vunpack.c.h.b16 %v106
    %v493 = vunpack.c.l.b16 %v107
    %v494 = vunpack.c.h.b16 %v107
    %v495 = vunpack.c.l.b16 %v108
    %v496 = vunpack.c.h.b16 %v108
    %v497 = vunpack.c.l.b16 %v109
    %v498 = vunpack.c.l.b16 %v110
    %v499 = vunpack.c.h.b16 %v110
    %v500 = vunpack.c.l.b16 %v111
    %v501 = vunpack.c.h.b16 %v111
    %v502 = vunpack.c.l.b16 %v112
    %v503 = vunpack.c.h.b16 %v112
    %v504 = vunpack.c.l.b16 %v113
    %v505 = vunpack.c.l.b16 %v114
    %v506 = vunpack.c.h.b16 %v114
    %v507 = vunpack.c.l.b16 %v115
    %v508 = vunpack.c.h.b16 %v115
    %v509 = vunpack.c.l.b16 %v116
    %v510 = vunpack.c.h.b16 %v116
    %v511 = vunpack.c.l.b16 %v117
    %v512 = vpack.c.b16 %v407, %v400
    %v513 = vpack.c.b16 %v408, %v401
    %v514 = vpack.c.b16 %v409, %v402
    %v515 = vpack.c.b16 %v410, %v403
    %v516 = vpack.c.b16 %v411, %v404
    %v517 = vpack.c.b16 %v412, %v405
    %v518 = vpack.c.b16 %v413, %v406
    %v519 = vpack.c.b16 %v421, %v414
    %v520 = vpack.c.b16 %v422, %v415
    %v521 = vpack.c.b16 %v423, %v416
    %v522 = vpack.c.b16 %v424, %v417
    %v523 = vpack.c.b16 %v425, %v418
    %v524 = vpack.c.b16 %v426, %v419
    %v525 = vpack.c.b16 %v427, %v420
    %v526 = vpack.c.b16 %v435, %v428
    %v527 = vpack.c.b16 %v436, %v429
    %v528 = vpack.c.b16 %v437, %v430
    %v529 = vpack.c.b16 %v438, %v431
    %v530 = vpack.c.b16 %v439, %v432
    %v531 = vpack.c.b16 %v440, %v433
    %v532 = vpack.c.b16 %v441, %v434
    %v533 = vpack.c.b16 %v449, %v442
    %v534 = vpack.c.b16 %v450, %v443
    %v535 = vpack.c.b16 %v451, %v444
    %v536 = vpack.c.b16 %v452, %v445
    %v537 = vpack.c.b16 %v453, %v446
    %v538 = vpack.c.b16 %v454, %v447
    %v539 = vpack.c.b16 %v455, %v448
    %v540 = vpack.c.b16 %v463, %v456
    %v541 = vpack.c.b16 %v464, %v457
    %v542 = vpack.c.b16 %v465, %v458
    %v543 = vpack.c.b16 %v466, %v459
    %v544 = vpack.c.b16 %v467, %v460
    %v545 = vpack.c.b16 %v468, %v461
    %v546 = vpack.c.b16 %v469, %v462
    %v547 = vpack.c.b16 %v477, %v470
    %v548 = vpack.c.b16 %v478, %v471
    %v549 = vpack.c.b16 %v479, %v472
    %v550 = vpack.c.b16 %v480, %v473
    %v551 = vpack.c.b16 %v481, %v474
    %v552 = vpack.c.b16 %v482, %v475
    %v553 = vpack.c.b16 %v483, %v476
    %v554 = vpack.c.b16 %v491, %v484
    %v555 = vpack.c.b16 %v492, %v485
    %v556 = vpack.c.b16 %v493, %v486
    %v557 = vpack.c.b16 %v494, %v487
    %v558 = vpack.c.b16 %v495, %v488
    %v559 = vpack.c.b16 %v496, %v489
    %v560 = vpack.c.b16 %v497, %v490
    %v561 = vpack.c.b16 %v505, %v498
    %v562 = vpack.c.b16 %v506, %v499
    %v563 = vpack.c.b16 %v507, %v500
    %v564 = vpack.c.b16 %v508, %v501
    %v565 = vpack.c.b16 %v509, %v502
    %v566 = vpack.c.b16 %v510, %v503
    %v567 = vpack.c.b16 %v511, %v504
    %v812 = vunpack.c.l.b16 %v118
    %v813 = vunpack.c.h.b16 %v118
    %v814 = vunpack.c.l.b16 %v119
    %v815 = vunpack.c.h.b16 %v119
    %v816 = vunpack.c.l.b16 %v120
    %v817 = vunpack.c.h.b16 %v120
    %v818 = vunpack.c.l.b16 %v121
    %v819 = vunpack.c.h.b16 %v121
    %v820 = vunpack.c.l.b16 %v122
    %v821 = vunpack.c.h.b16 %v122
    %v822 = vunpack.c.l.b16 %v123
    %v823 = vunpack.c.h.b16 %v123
    %v824 = vunpack.c.l.b16 %v124
    %v825 = vunpack.c.h.b16 %v124
    %v826 = vunpack.c.l.b16 %v125
    %v827 = vunpack.c.h.b16 %v125
    %v828 = vunpack.c.l.b16 %v126
    %v829 = vunpack.c.h.b16 %v126
    %v830 = vunpack.c.l.b16 %v127
    %v831 = vunpack.c.h.b16 %v127
    %v832 = vunpack.c.l.b16 %v128
    %v833 = vunpack.c.h.b16 %v128
    %v834 = vunpack.c.l.b16 %v129
    %v835 = vunpack.c.h.b16 %v129
    %v836 = vunpack.c.l.b16 %v130
    %v837 = vunpack.c.h.b16 %v130
    %v838 = vunpack.c.l.b16 %v131
    %v839 = vunpack.c.h.b16 %v131
    %v840 = vunpack.c.l.b16 %v132
    %v841 = vunpack.c.h.b16 %v132
    %v842 = vunpack.c.l.b16 %v133
    %v843 = vunpack.c.h.b16 %v133
    %v844 = vunpack.c.l.b16 %v134
    %v845 = vunpack.c.h.b16 %v134
    %v846 = vunpack.c.l.b16 %v135
    %v847 = vunpack.c.h.b16 %v135
    %v848 = vunpack.c.l.b16 %v136
    %v849 = vunpack.c.h.b16 %v136
    %v850 = vunpack.c.l.b16 %v137
    %v851 = vunpack.c.h.b16 %v137
    %v852 = vunpack.c.l.b16 %v138
    %v853 = vunpack.c.h.b16 %v138
    %v854 = vunpack.c.l.b16 %v139
    %v855 = vunpack.c.h.b16 %v139
    %v856 = vunpack.c.l.b16 %v140
    %v857 = vunpack.c.h.b16 %v140
    %v858 = vunpack.c.l.b16 %v141
    %v859 = vunpack.c.h.b16 %v141
    %v860 = vunpack.c.l.b16 %v142
    %v861 = vunpack.c.h.b16 %v142
    %v862 = vunpack.c.l.b16 %v143
    %v863 = vunpack.c.h.b16 %v143
    %v864 = vunpack.c.l.b16 %v144
    %v865 = vunpack.c.h.b16 %v144
    %v866 = vunpack.c.l.b16 %v145
    %v867 = vunpack.c.h.b16 %v145
    %v868 = vunpack.c.l.b16 %v146
    %v869 = vunpack.c.h.b16 %v146
    %v870 = vunpack.c.l.b16 %v147
    %v871 = vunpack.c.h.b16 %v147
    %v872 = vunpack.c.l.b16 %v148
    %v873 = vunpack.c.h.b16 %v148
    %v874 = vunpack.c.l.b16 %v149
    %v875 = vunpack.c.h.b16 %v149
    %v876 = vunpack.c.l.b16 %v150
    %v877 = vunpack.c.h.b16 %v150
    %v878 = vunpack.c.l.b16 %v151
    %v879 = vunpack.c.h.b16 %v151
    %v880 = vunpack.c.l.b16 %v152
    %v881 = vunpack.c.h.b16 %v152
    %v882 = vunpack.c.l.b16 %v153
    %v883 = vunpack.c.h.b16 %v153
    %v884 = vunpack.c.l.b16 %v154
    %v885 = vunpack.c.h.b16 %v154
    %v886 = vunpack.c.l.b16 %v155
    %v887 = vunpack.c.h.b16 %v155
    %v888 = vunpack.c.l.b16 %v156
    %v889 = vunpack.c.h.b16 %v156
    %v890 = vunpack.c.l.b16 %v157
    %v891 = vunpack.c.h.b16 %v157
    %v892 = vunpack.c.l.b16 %v158
    %v893 = vunpack.c.h.b16 %v158
    %v894 = vunpack.c.l.b16 %v159
    %v895 = vunpack.c.h.b16 %v159
    %v896 = vunpack.c.l.b16 %v160
    %v897 = vunpack.c.h.b16 %v160
    %v898 = vunpack.c.l.b16 %v161
    %v899 = vunpack.c.h.b16 %v161
    %v900 = vunpack.c.l.b16 %v162
    %v901 = vunpack.c.h.b16 %v162
    %v902 = vunpack.c.l.b16 %v163
    %v903 = vunpack.c.h.b16 %v163
    %v904 = vunpack.c.l.b16 %v164
    %v905 = vunpack.c.h.b16 %v164
    %v906 = vunpack.c.l.b16 %v165
    %v907 = vunpack.c.h.b16 %v165
    %v908 = vunpack.c.l.b16 %v166
    %v909 = vunpack.c.h.b16 %v166
    %v910 = vunpack.c.l.b16 %v167
    %v911 = vunpack.c.h.b16 %v167
    %v912 = vunpack.c.l.b16 %v168
    %v913 = vunpack.c.h.b16 %v168
    %v914 = vunpack.c.l.b16 %v169
    %v915 = vunpack.c.h.b16 %v169
    %v916 = vunpack.c.l.b16 %v170
    %v917 = vunpack.c.h.b16 %v170
    %v918 = vunpack.c.l.b16 %v171
    %v919 = vunpack.c.h.b16 %v171
    %v920 = vunpack.c.l.b16 %v172
    %v921 = vunpack.c.h.b16 %v172
    %v922 = vunpack.c.l.b16 %v173
    %v923 = vunpack.c.h.b16 %v173
    %v924 = vunpack.c.l.b16 %v174
    %v925 = vunpack.c.h.b16 %v174
    %v926 = vunpack.c.l.b16 %v175
    %v927 = vunpack.c.h.b16 %v175
    %v928 = vunpack.c.l.b16 %v176
    %v929 = vunpack.c.h.b16 %v176
    %v930 = vunpack.c.l.b16 %v177
    %v931 = vunpack.c.h.b16 %v177
    %v932 = vunpack.c.l.b16 %v178
    %v933 = vunpack.c.h.b16 %v178
    %v934 = vunpack.c.l.b16 %v179
    %v935 = vunpack.c.h.b16 %v179
    %v936 = vunpack.c.l.b16 %v180
    %v937 = vunpack.c.h.b16 %v180
    %v938 = vunpack.c.l.b16 %v181
    %v939 = vunpack.c.h.b16 %v181
    %v940 = vunpack.c.l.b16 %v182
    %v941 = vunpack.c.h.b16 %v182
    %v942 = vunpack.c.l.b16 %v183
    %v943 = vunpack.c.h.b16 %v183
    %v944 = vunpack.c.l.b16 %v184
    %v945 = vunpack.c.h.b16 %v184
    %v946 = vunpack.c.l.b16 %v185
    %v947 = vunpack.c.h.b16 %v185
    %v948 = vunpack.c.l.b16 %v186
    %v949 = vunpack.c.h.b16 %v186
    %v950 = vunpack.c.l.b16 %v187
    %v951 = vunpack.c.h.b16 %v187
    %v952 = vunpack.c.l.b16 %v188
    %v953 = vunpack.c.h.b16 %v188
    %v954 = vunpack.c.l.b16 %v189
    %v955 = vunpack.c.h.b16 %v189
    %v956 = vunpack.c.l.b16 %v190
    %v957 = vunpack.c.h.b16 %v190
    %v958 = vunpack.c.l.b16 %v191
    %v959 = vunpack.c.h.b16 %v191
    %v960 = vunpack.c.l.b16 %v192
    %v961 = vunpack.c.h.b16 %v192
    %v962 = vunpack.c.l.b16 %v193
    %v963 = vunpack.c.h.b16 %v193
    %v964 = vunpack.c.l.b16 %v194
    %v965 = vunpack.c.h.b16 %v194
    %v966 = vunpack.c.l.b16 %v195
    %v967 = vunpack.c.h.b16 %v195
    %v968 = vunpack.c.l.b16 %v196
    %v969 = vunpack.c.h.b16 %v196
    %v970 = vunpack.c.l.b16 %v197
    %v971 = vunpack.c.h.b16 %v197
    %v972 = vunpack.c.l.b16 %v198
    %v973 = vunpack.c.h.b16 %v198
    %v974 = vunpack.c.l.b16 %v199
    %v975 = vunpack.c.h.b16 %v199
    %v976 = vunpack.c.l.b16 %v200
    %v977 = vunpack.c.h.b16 %v200
    %v978 = vunpack.c.l.b16 %v201
    %v979 = vunpack.c.h.b16 %v201
    %v980 = vunpack.c.l.b16 %v202
    %v981 = vunpack.c.h.b16 %v202
    %v982 = vunpack.c.l.b16 %v203
    %v983 = vunpack.c.h.b16 %v203
    %v984 = vunpack.c.l.b16 %v204
    %v985 = vunpack.c.h.b16 %v204
    %v986 = vunpack.c.l.b16 %v205
    %v987 = vunpack.c.h.b16 %v205
    %v988 = vunpack.c.l.b16 %v206
    %v989 = vunpack.c.h.b16 %v206
    %v990 = vunpack.c.l.b16 %v207
    %v991 = vunpack.c.h.b16 %v207
    %v992 = vunpack.c.l.b16 %v208
    %v993 = vunpack.c.h.b16 %v208
    %v994 = vunpack.c.l.b16 %v209
    %v995 = vunpack.c.h.b16 %v209
    %v996 = vunpack.c.l.b16 %v210
    %v997 = vunpack.c.h.b16 %v210
    %v998 = vunpack.c.l.b16 %v211
    %v999 = vunpack.c.h.b16 %v211
    %v1000 = vunpack.c.l.b16 %v212
    %v1001 = vunpack.c.h.b16 %v212
    %v1002 = vunpack.c.l.b16 %v213
    %v1003 = vunpack.c.h.b16 %v213
    %v1004 = vunpack.c.l.b16 %v214
    %v1005 = vunpack.c.h.b16 %v214
    %v1006 = vunpack.c.l.b16 %v215
    %v1007 = vunpack.c.h.b16 %v215
    %v1008 = vunpack.c.l.b16 %v216
    %v1009 = vunpack.c.h.b16 %v216
    %v1010 = vunpack.c.l.b16 %v217
    %v1011 = vunpack.c.h.b16 %v217
    %v1012 = vunpack.c.l.b16 %v218
    %v1013 = vunpack.c.h.b16 %v218
    %v1014 = vunpack.c.l.b16 %v219
    %v1015 = vunpack.c.h.b16 %v219
    %v1016 = vunpack.c.l.b16 %v220
    %v1017 = vunpack.c.h.b16 %v220
    %v1018 = vunpack.c.l.b16 %v221
    %v1019 = vunpack.c.h.b16 %v221
    %v1020 = vunpack.c.l.b16 %v222
    %v1021 = vunpack.c.h.b16 %v222
    %v1022 = vunpack.c.l.b16 %v223
    %v1023 = vunpack.c.h.b16 %v223
    %v1024 = vunpack.c.l.b16 %v224
    %v1025 = vunpack.c.h.b16 %v224
    %v1026 = vunpack.c.l.b16 %v225
    %v1027 = vunpack.c.h.b16 %v225
    %v1028 = vunpack.c.l.b16 %v226
    %v1029 = vunpack.c.h.b16 %v226
    %v1030 = vunpack.c.l.b16 %v227
    %v1031 = vunpack.c.h.b16 %v227
    %v1032 = vunpack.c.l.b16 %v228
    %v1033 = vunpack.c.h.b16 %v228
    %v1034 = vunpack.c.l.b16 %v229
    %v1035 = vunpack.c.h.b16 %v229
    %v1036 = vunpack.c.l.b16 %v230
    %v1037 = vunpack.c.h.b16 %v230
    %v1038 = vunpack.c.l.b16 %v231
    %v1039 = vunpack.c.h.b16 %v231
    %v1040 = vunpack.c.l.b16 %v232
    %v1041 = vunpack.c.h.b16 %v232
    %v1042 = vunpack.c.l.b16 %v233
    %v1043 = vunpack.c.h.b16 %v233
    %v1044 = vunpack.c.l.b16 %v234
    %v1045 = vunpack.c.h.b16 %v234
    %v1046 = vunpack.c.l.b16 %v235
    %v1047 = vunpack.c.h.b16 %v235
    %v1048 = vunpack.c.l.b16 %v236
    %v1049 = vunpack.c.h.b16 %v236
    %v1050 = vunpack.c.l.b16 %v237
    %v1051 = vunpack.c.h.b16 %v237
    %v1052 = vunpack.c.l.b16 %v238
    %v1053 = vunpack.c.h.b16 %v238
    %v1054 = vunpack.c.l.b16 %v239
    %v1055 = vunpack.c.h.b16 %v239
    %v1056 = vunpack.c.l.b16 %v240
    %v1057 = vunpack.c.h.b16 %v240
    %v1058 = vunpack.c.l.b16 %v241
    %v1059 = vunpack.c.h.b16 %v241
    %v1060 = vunpack.c.l.b16 %v242
    %v1061 = vunpack.c.h.b16 %v242
    %v1062 = vunpack.c.l.b16 %v243
    %v1063 = vunpack.c.h.b16 %v243
    %v1064 = vunpack.c.l.b16 %v244
    %v1065 = vunpack.c.h.b16 %v244
    %v1066 = vunpack.c.l.b16 %v245
    %v1067 = vunpack.c.h.b16 %v245
    %v1068 = vunpack.c.l.b16 %v246
    %v1069 = vunpack.c.h.b16 %v246
    %v1070 = vunpack.c.l.b16 %v247
    %v1071 = vunpack.c.h.b16 %v247
    %v1072 = vunpack.c.l.b16 %v248
    %v1073 = vunpack.c.h.b16 %v248
    %v1074 = vunpack.c.l.b16 %v249
    %v1075 = vunpack.c.h.b16 %v249
    %v1076 = vunpack.c.l.b16 %v250
    %v1077 = vunpack.c.h.b16 %v250
    %v1078 = vunpack.c.l.b16 %v251
    %v1079 = vunpack.c.h.b16 %v251
    %v1080 = vunpack.c.l.b16 %v252
    %v1081 = vunpack.c.h.b16 %v252
    %v1082 = vunpack.c.l.b16 %v253
    %v1083 = vunpack.c.h.b16 %v253
    %v1084 = vunpack.c.l.b16 %v254
    %v1085 = vunpack.c.h.b16 %v254
    %v1086 = vunpack.c.l.b16 %v255
    %v1087 = vunpack.c.h.b16 %v255
    %v1088 = vunpack.c.l.b16 %v256
    %v1089 = vunpack.c.h.b16 %v256
    %v1090 = vunpack.c.l.b16 %v257
    %v1091 = vunpack.c.h.b16 %v257
    %v1092 = vunpack.c.l.b16 %v258
    %v1093 = vunpack.c.h.b16 %v258
    %v1094 = vunpack.c.l.b16 %v259
    %v1095 = vunpack.c.h.b16 %v259
    %v1096 = vunpack.c.l.b16 %v260
    %v1097 = vunpack.c.h.b16 %v260
    %v1098 = vunpack.c.l.b16 %v261
    %v1099 = vunpack.c.h.b16 %v261
    %v1100 = vunpack.c.l.b16 %v262
    %v1101 = vunpack.c.h.b16 %v262
    %v1102 = vunpack.c.l.b16 %v263
    %v1103 = vunpack.c.h.b16 %v263
    %v1104 = vunpack.c.l.b16 %v264
    %v1105 = vunpack.c.h.b16 %v264
    %v1106 = vunpack.c.l.b16 %v265
    %v1107 = vunpack.c.h.b16 %v265
    %v1108 = vunpack.c.l.b16 %v266
    %v1109 = vunpack.c.h.b16 %v266
    %v1110 = vunpack.c.l.b16 %v267
    %v1111 = vunpack.c.h.b16 %v267
    %v1112 = vunpack.c.l.b16 %v268
    %v1113 = vunpack.c.h.b16 %v268
    %v1114 = vunpack.c.l.b16 %v269
    %v1115 = vunpack.c.h.b16 %v269
    %v1116 = vunpack.c.l.b16 %v270
    %v1117 = vunpack.c.h.b16 %v270
    %v1118 = vunpack.c.l.b16 %v271
    %v1119 = vunpack.c.h.b16 %v271
    %v1120 = vunpack.c.l.b16 %v272
    %v1121 = vunpack.c.h.b16 %v272
    %v1122 = vunpack.c.l.b16 %v273
    %v1123 = vunpack.c.h.b16 %v273
    %v1124 = vunpack.c.l.b16 %v274
    %v1125 = vunpack.c.h.b16 %v274
    %v1126 = vunpack.c.l.b16 %v275
    %v1127 = vunpack.c.h.b16 %v275
    %v1128 = vunpack.c.l.b16 %v276
    %v1129 = vunpack.c.h.b16 %v276
    %v1130 = vunpack.c.l.b16 %v277
    %v1131 = vunpack.c.h.b16 %v277
    %v1132 = vunpack.c.l.b16 %v278
    %v1133 = vunpack.c.h.b16 %v278
    %v1134 = vunpack.c.l.b16 %v279
    %v1135 = vunpack.c.h.b16 %v279
    %v1136 = vunpack.c.l.b16 %v280
    %v1137 = vunpack.c.h.b16 %v280
    %v1138 = vunpack.c.l.b16 %v281
    %v1139 = vunpack.c.h.b16 %v281
    %v1140 = vunpack.c.l.b16 %v282
    %v1141 = vunpack.c.h.b16 %v282
    %v1142 = vunpack.c.l.b16 %v283
    %v1143 = vunpack.c.h.b16 %v283
    %v1144 = vunpack.c.l.b16 %v284
    %v1145 = vunpack.c.h.b16 %v284
    %v1146 = vunpack.c.l.b16 %v285
    %v1147 = vunpack.c.h.b16 %v285
    %v1148 = vunpack.c.l.b16 %v286
    %v1149 = vunpack.c.h.b16 %v286
    %v1150 = vunpack.c.l.b16 %v287
    %v1151 = vunpack.c.h.b16 %v287
    %v1152 = vunpack.c.l.b16 %v288
    %v1153 = vunpack.c.h.b16 %v288
    %v1154 = vunpack.c.l.b16 %v289
    %v1155 = vunpack.c.h.b16 %v289
    %v1156 = vunpack.c.l.b16 %v290
    %v1157 = vunpack.c.h.b16 %v290
    %v1158 = vunpack.c.l.b16 %v291
    %v1159 = vunpack.c.h.b16 %v291
    %v1160 = vunpack.c.l.b16 %v292
    %v1161 = vunpack.c.h.b16 %v292
    %v1162 = vunpack.c.l.b16 %v293
    %v1163 = vunpack.c.h.b16 %v293
    %v1164 = vunpack.c.l.b16 %v294
    %v1165 = vunpack.c.h.b16 %v294
    %v1166 = vunpack.c.l.b16 %v295
    %v1167 = vunpack.c.h.b16 %v295
    %v1168 = vunpack.c.l.b16 %v296
    %v1169 = vunpack.c.h.b16 %v296
    %v1170 = vunpack.c.l.b16 %v297
    %v1171 = vunpack.c.h.b16 %v297
    %v1172 = vunpack.c.l.b16 %v298
    %v1173 = vunpack.c.h.b16 %v298
    %v1174 = vunpack.c.l.b16 %v299
    %v1175 = vunpack.c.h.b16 %v299
    %v1176 = vunpack.c.l.b16 %v300
    %v1177 = vunpack.c.h.b16 %v300
    %v1178 = vunpack.c.l.b16 %v301
    %v1179 = vunpack.c.h.b16 %v301
    %v1180 = vunpack.c.l.b16 %v302
    %v1181 = vunpack.c.h.b16 %v302
    %v1182 = vunpack.c.l.b16 %v303
    %v1183 = vunpack.c.h.b16 %v303
    %v1184 = vunpack.c.l.b16 %v304
    %v1185 = vunpack.c.h.b16 %v304
    %v1186 = vunpack.c.l.b16 %v305
    %v1187 = vunpack.c.h.b16 %v305
    %v1188 = vunpack.c.l.b16 %v306
    %v1189 = vunpack.c.h.b16 %v306
    %v1190 = vunpack.c.l.b16 %v307
    %v1191 = vunpack.c.h.b16 %v307
    %v1192 = vunpack.c.l.b16 %v308
    %v1193 = vunpack.c.h.b16 %v308
    %v1194 = vunpack.c.l.b16 %v309
    %v1195 = vunpack.c.h.b16 %v309
    %v1196 = vunpack.c.l.b16 %v310
    %v1197 = vunpack.c.h.b16 %v310
    %v1198 = vunpack.c.l.b16 %v311
    %v1199 = vunpack.c.h.b16 %v311
    %v1200 = vunpack.c.l.b16 %v312
    %v1201 = vunpack.c.h.b16 %v312
    %v1202 = vunpack.c.l.b16 %v313
    %v1203 = vunpack.c.h.b16 %v313
    %v1204 = vpack.c.b16 %v816, %v812
    %v1205 = vpack.c.b16 %v817, %v813
    %v1206 = vpack.c.b16 %v818, %v814
    %v1207 = vpack.c.b16 %v819, %v815
    %v1208 = vpack.c.b16 %v824, %v820
    %v1209 = vpack.c.b16 %v825, %v821
    %v1210 = vpack.c.b16 %v826, %v822
    %v1211 = vpack.c.b16 %v827, %v823
    %v1212 = vpack.c.b16 %v832, %v828
    %v1213 = vpack.c.b16 %v833, %v829
    %v1214 = vpack.c.b16 %v834, %v830
    %v1215 = vpack.c.b16 %v835, %v831
    %v1216 = vpack.c.b16 %v840, %v836
    %v1217 = vpack.c.b16 %v841, %v837
    %v1218 = vpack.c.b16 %v842, %v838
    %v1219 = vpack.c.b16 %v843, %v839
    %v1220 = vpack.c.b16 %v848, %v844
    %v1221 = vpack.c.b16 %v849, %v845
    %v1222 = vpack.c.b16 %v850, %v846
    %v1223 = vpack.c.b16 %v851, %v847
    %v1224 = vpack.c.b16 %v856, %v852
    %v1225 = vpack.c.b16 %v857, %v853
    %v1226 = vpack.c.b16 %v858, %v854
    %v1227 = vpack.c.b16 %v859, %v855
    %v1228 = vpack.c.b16 %v864, %v860
    %v1229 = vpack.c.b16 %v865, %v861
    %v1230 = vpack.c.b16 %v866, %v862
    %v1231 = vpack.c.b16 %v867, %v863
    %v1232 = vpack.c.b16 %v872, %v868
    %v1233 = vpack.c.b16 %v873, %v869
    %v1234 = vpack.c.b16 %v874, %v870
    %v1235 = vpack.c.b16 %v875, %v871
    %v1236 = vpack.c.b16 %v880, %v876
    %v1237 = vpack.c.b16 %v881, %v877
    %v1238 = vpack.c.b16 %v882, %v878
    %v1239 = vpack.c.b16 %v883, %v879
    %v1240 = vpack.c.b16 %v888, %v884
    %v1241 = vpack.c.b16 %v889, %v885
    %v1242 = vpack.c.b16 %v890, %v886
    %v1243 = vpack.c.b16 %v891, %v887
    %v1244 = vpack.c.b16 %v896, %v892
    %v1245 = vpack.c.b16 %v897, %v893
    %v1246 = vpack.c.b16 %v898, %v894
    %v1247 = vpack.c.b16 %v899, %v895
    %v1248 = vpack.c.b16 %v904, %v900
    %v1249 = vpack.c.b16 %v905, %v901
    %v1250 = vpack.c.b16 %v906, %v902
    %v1251 = vpack.c.b16 %v907, %v903
    %v1252 = vpack.c.b16 %v912, %v908
    %v1253 = vpack.c.b16 %v913, %v909
    %v1254 = vpack.c.b16 %v914, %v910
    %v1255 = vpack.c.b16 %v915, %v911
    %v1256 = vpack.c.b16 %v920, %v916
    %v1257 = vpack.c.b16 %v921, %v917
    %v1258 = vpack.c.b16 %v922, %v918
    %v1259 = vpack.c.b16 %v923, %v919
    %v1260 = vpack.c.b16 %v928, %v924
    %v1261 = vpack.c.b16 %v929, %v925
    %v1262 = vpack.c.b16 %v930, %v926
    %v1263 = vpack.c.b16 %v931, %v927
    %v1264 = vpack.c.b16 %v936, %v932
    %v1265 = vpack.c.b16 %v937, %v933
    %v1266 = vpack.c.b16 %v938, %v934
    %v1267 = vpack.c.b16 %v939, %v935
    %v1268 = vpack.c.b16 %v944, %v940
    %v1269 = vpack.c.b16 %v945, %v941
    %v1270 = vpack.c.b16 %v946, %v942
    %v1271 = vpack.c.b16 %v947, %v943
    %v1272 = vpack.c.b16 %v952, %v948
    %v1273 = vpack.c.b16 %v953, %v949
    %v1274 = vpack.c.b16 %v954, %v950
    %v1275 = vpack.c.b16 %v955, %v951
    %v1276 = vpack.c.b16 %v960, %v956
    %v1277 = vpack.c.b16 %v961, %v957
    %v1278 = vpack.c.b16 %v962, %v958
    %v1279 = vpack.c.b16 %v963, %v959
    %v1280 = vpack.c.b16 %v968, %v964
    %v1281 = vpack.c.b16 %v969, %v965
    %v1282 = vpack.c.b16 %v970, %v966
    %v1283 = vpack.c.b16 %v971, %v967
    %v1284 = vpack.c.b16 %v976, %v972
    %v1285 = vpack.c.b16 %v977, %v973
    %v1286 = vpack.c.b16 %v978, %v974
    %v1287 = vpack.c.b16 %v979, %v975
    %v1288 = vpack.c.b16 %v984, %v980
    %v1289 = vpack.c.b16 %v985, %v981
    %v1290 = vpack.c.b16 %v986, %v982
    %v1291 = vpack.c.b16 %v987, %v983
    %v1292 = vpack.c.b16 %v992, %v988
    %v1293 = vpack.c.b16 %v993, %v989
    %v1294 = vpack.c.b16 %v994, %v990
    %v1295 = vpack.c.b16 %v995, %v991
    %v1296 = vpack.c.b16 %v1000, %v996
    %v1297 = vpack.c.b16 %v1001, %v997
    %v1298 = vpack.c.b16 %v1002, %v998
    %v1299 = vpack.c.b16 %v1003, %v999
    %v1300 = vpack.c.b16 %v1008, %v1004
    %v1301 = vpack.c.b16 %v1009, %v1005
    %v1302 = vpack.c.b16 %v1010, %v1006
    %v1303 = vpack.c.b16 %v1011, %v1007
    %v1304 = vpack.c.b16 %v1016, %v1012
    %v1305 = vpack.c.b16 %v1017, %v1013
    %v1306 = vpack.c.b16 %v1018, %v1014
    %v1307 = vpack.c.b16 %v1019, %v1015
    %v1308 = vpack.c.b16 %v1024, %v1020
    %v1309 = vpack.c.b16 %v1025, %v1021
    %v1310 = vpack.c.b16 %v1026, %v1022
    %v1311 = vpack.c.b16 %v1027, %v1023
    %v1312 = vpack.c.b16 %v1032, %v1028
    %v1313 = vpack.c.b16 %v1033, %v1029
    %v1314 = vpack.c.b16 %v1034, %v1030
    %v1315 = vpack.c.b16 %v1035, %v1031
    %v1316 = vpack.c.b16 %v1040, %v1036
    %v1317 = vpack.c.b16 %v1041, %v1037
    %v1318 = vpack.c.b16 %v1042, %v1038
    %v1319 = vpack.c.b16 %v1043, %v1039
    %v1320 = vpack.c.b16 %v1048, %v1044
    %v1321 = vpack.c.b16 %v1049, %v1045
    %v1322 = vpack.c.b16 %v1050, %v1046
    %v1323 = vpack.c.b16 %v1051, %v1047
    %v1324 = vpack.c.b16 %v1056, %v1052
    %v1325 = vpack.c.b16 %v1057, %v1053
    %v1326 = vpack.c.b16 %v1058, %v1054
    %v1327 = vpack.c.b16 %v1059, %v1055
    %v1328 = vpack.c.b16 %v1064, %v1060
    %v1329 = vpack.c.b16 %v1065, %v1061
    %v1330 = vpack.c.b16 %v1066, %v1062
    %v1331 = vpack.c.b16 %v1067, %v1063
    %v1332 = vpack.c.b16 %v1072, %v1068
    %v1333 = vpack.c.b16 %v1073, %v1069
    %v1334 = vpack.c.b16 %v1074, %v1070
    %v1335 = vpack.c.b16 %v1075, %v1071
    %v1336 = vpack.c.b16 %v1080, %v1076
    %v1337 = vpack.c.b16 %v1081, %v1077
    %v1338 = vpack.c.b16 %v1082, %v1078
    %v1339 = vpack.c.b16 %v1083, %v1079
    %v1340 = vpack.c.b16 %v1088, %v1084
    %v1341 = vpack.c.b16 %v1089, %v1085
    %v1342 = vpack.c.b16 %v1090, %v1086
    %v1343 = vpack.c.b16 %v1091, %v1087
    %v1344 = vpack.c.b16 %v1096, %v1092
    %v1345 = vpack.c.b16 %v1097, %v1093
    %v1346 = vpack.c.b16 %v1098, %v1094
    %v1347 = vpack.c.b16 %v1099, %v1095
    %v1348 = vpack.c.b16 %v1104, %v1100
    %v1349 = vpack.c.b16 %v1105, %v1101
    %v1350 = vpack.c.b16 %v1106, %v1102
    %v1351 = vpack.c.b16 %v1107, %v1103
    %v1352 = vpack.c.b16 %v1112, %v1108
    %v1353 = vpack.c.b16 %v1113, %v1109
    %v1354 = vpack.c.b16 %v1114, %v1110
    %v1355 = vpack.c.b16 %v1115, %v1111
    %v1356 = vpack.c.b16 %v1120, %v1116
    %v1357 = vpack.c.b16 %v1121, %v1117
    %v1358 = vpack.c.b16 %v1122, %v1118
    %v1359 = vpack.c.b16 %v1123, %v1119
    %v1360 = vpack.c.b16 %v1128, %v1124
    %v1361 = vpack.c.b16 %v1129, %v1125
    %v1362 = vpack.c.b16 %v1130, %v1126
    %v1363 = vpack.c.b16 %v1131, %v1127
    %v1364 = vpack.c.b16 %v1136, %v1132
    %v1365 = vpack.c.b16 %v1137, %v1133
    %v1366 = vpack.c.b16 %v1138, %v1134
    %v1367 = vpack.c.b16 %v1139, %v1135
    %v1368 = vpack.c.b16 %v1144, %v1140
    %v1369 = vpack.c.b16 %v1145, %v1141
    %v1370 = vpack.c.b16 %v1146, %v1142
    %v1371 = vpack.c.b16 %v1147, %v1143
    %v1372 = vpack.c.b16 %v1152, %v1148
    %v1373 = vpack.c.b16 %v1153, %v1149
    %v1374 = vpack.c.b16 %v1154, %v1150
    %v1375 = vpack.c.b16 %v1155, %v1151
    %v1376 = vpack.c.b16 %v1160, %v1156
    %v1377 = vpack.c.b16 %v1161, %v1157
    %v1378 = vpack.c.b16 %v1162, %v1158
    %v1379 = vpack.c.b16 %v1163, %v1159
    %v1380 = vpack.c.b16 %v1168, %v1164
    %v1381 = vpack.c.b16 %v1169, %v1165
    %v1382 = vpack.c.b16 %v1170, %v1166
    %v1383 = vpack.c.b16 %v1171, %v1167
    %v1384 = vpack.c.b16 %v1176, %v1172
    %v1385 = vpack.c.b16 %v1177, %v1173
    %v1386 = vpack.c.b16 %v1178, %v1174
    %v1387 = vpack.c.b16 %v1179, %v1175
    %v1388 = vpack.c.b16 %v1184, %v1180
    %v1389 = vpack.c.b16 %v1185, %v1181
    %v1390 = vpack.c.b16 %v1186, %v1182
    %v1391 = vpack.c.b16 %v1187, %v1183
    %v1392 = vpack.c.b16 %v1192, %v1188
    %v1393 = vpack.c.b16 %v1193, %v1189
    %v1394 = vpack.c.b16 %v1194, %v1190
    %v1395 = vpack.c.b16 %v1195, %v1191
    %v1396 = vpack.c.b16 %v1200, %v1196
    %v1397 = vpack.c.b16 %v1201, %v1197
    %v1398 = vpack.c.b16 %v1202, %v1198
    %v1399 = vpack.c.b16 %v1203, %v1199
    %vm1596 = vcmask 130048
    %v1598 = vsel %vm1596, %v518, 0
    %v1601 = vsel %vm1596, %v525, 0
    %v1604 = vsel %vm1596, %v532, 0
    %v1607 = vsel %vm1596, %v539, 0
    %v1610 = vsel %vm1596, %v546, 0
    %v1613 = vsel %vm1596, %v553, 0
    %v1616 = vsel %vm1596, %v560, 0
    %v1619 = vsel %vm1596, %v567, 0
    %1621 = vmatprep.subr.bf16.mxu0 %v1205
    %1622 = vmatpush1.bf16.msra.mxu0 %v1204
    %1623 = vmatprep.subr.bf16.mxu0 %v1209
    %1624 = vmatpush1.bf16.msra.mxu0 %v1208
    %1625 = vmatprep.subr.bf16.mxu0 %v1213
    %1626 = vmatpush1.bf16.msra.mxu0 %v1212
    %1627 = vmatprep.subr.bf16.mxu0 %v1217
    %1628 = vmatpush1.bf16.msra.mxu0 %v1216
    %1629 = vmatprep.subr.bf16.mxu0 %v1221
    %1630 = vmatpush1.bf16.msra.mxu0 %v1220
    %1631 = vmatprep.subr.bf16.mxu0 %v1225
    %1632 = vmatpush1.bf16.msra.mxu0 %v1224
    %1633 = vmatprep.subr.bf16.mxu0 %v1229
    %1634 = vmatpush1.bf16.msra.mxu0 %v1228
    %1635 = vmatprep.subr.bf16.mxu0 %v1233
    %1636 = vmatpush1.bf16.msra.mxu0 %v1232
    %1637 = vmatprep.subr.bf16.mxu0 %v1237
    %1638 = vmatpush1.bf16.msra.mxu0 %v1236
    %1639 = vmatprep.subr.bf16.mxu0 %v1241
    %1640 = vmatpush1.bf16.msra.mxu0 %v1240
    %1641 = vmatprep.subr.bf16.mxu0 %v1245
    %1642 = vmatpush1.bf16.msra.mxu0 %v1244
    %1643 = vmatprep.subr.bf16.mxu0 %v1249
    %1644 = vmatpush1.bf16.msra.mxu0 %v1248
    %1645 = vmatprep.subr.bf16.mxu0 %v1253
    %1646 = vmatpush1.bf16.msra.mxu0 %v1252
    %1647 = vmatprep.subr.bf16.mxu0 %v1257
    %1648 = vmatpush1.bf16.msra.mxu0 %v1256
    %1649 = vmatprep.subr.bf16.mxu0 %v1261
    %1650 = vmatpush1.bf16.msra.mxu0 %v1260
    %1651 = vmatprep.subr.bf16.mxu0 %v1265
    %1652 = vmatpush1.bf16.msra.mxu0 %v1264
    %1653 = vmatprep.mubr.bf16.mxu0 %v513
    %1654 = vmatmul.mubr.bf16.gmra.mrb[0].mxu0 %v512
    %v1655 = vpop.f32.mrb[0].mxu0
    %v1656 = vadd.f32 %v319, %v1655
    %v1657 = vpop.f32.mrb[0].mxu0
    %v1658 = vadd.f32 %v323, %v1657
    %v1659 = vpop.f32.mrb[0].mxu0
    %v1660 = vadd.f32 %v319, %v1659
    %v1661 = vpop.f32.mrb[0].mxu0
    %v1662 = vadd.f32 %v323, %v1661
    %1663 = vmatprep.mubr.bf16.mxu0 %v520
    %1664 = vmatmul.mubr.bf16.gmra.mrb[0].mxu0 %v519
    %v1665 = vpop.f32.mrb[0].mxu0
    %v1666 = vadd.f32 %v319, %v1665
    %v1667 = vpop.f32.mrb[0].mxu0
    %v1668 = vadd.f32 %v323, %v1667
    %v1669 = vpop.f32.mrb[0].mxu0
    %v1670 = vadd.f32 %v319, %v1669
    %v1671 = vpop.f32.mrb[0].mxu0
    %v1672 = vadd.f32 %v323, %v1671
    %1673 = vmatprep.mubr.bf16.mxu0 %v527
    %1674 = vmatmul.mubr.bf16.gmra.mrb[0].mxu0 %v526
    %v1675 = vpop.f32.mrb[0].mxu0
    %v1676 = vadd.f32 %v319, %v1675
    %v1677 = vpop.f32.mrb[0].mxu0
    %v1678 = vadd.f32 %v323, %v1677
    %v1679 = vpop.f32.mrb[0].mxu0
    %v1680 = vadd.f32 %v319, %v1679
    %v1681 = vpop.f32.mrb[0].mxu0
    %v1682 = vadd.f32 %v323, %v1681
    %1683 = vmatprep.mubr.bf16.mxu0 %v534
    %1684 = vmatmul.mubr.bf16.gmra.mrb[0].mxu0 %v533
    %v1685 = vpop.f32.mrb[0].mxu0
    %v1686 = vadd.f32 %v319, %v1685
    %v1687 = vpop.f32.mrb[0].mxu0
    %v1688 = vadd.f32 %v323, %v1687
    %v1689 = vpop.f32.mrb[0].mxu0
    %v1690 = vadd.f32 %v319, %v1689
    %v1691 = vpop.f32.mrb[0].mxu0
    %v1692 = vadd.f32 %v323, %v1691
    %1693 = vmatprep.mubr.bf16.mxu0 %v541
    %1694 = vmatmul.mubr.bf16.gmra.mrb[0].mxu0 %v540
    %v1695 = vpop.f32.mrb[0].mxu0
    %v1696 = vadd.f32 %v319, %v1695
    %v1697 = vpop.f32.mrb[0].mxu0
    %v1698 = vadd.f32 %v323, %v1697
    %v1699 = vpop.f32.mrb[0].mxu0
    %v1700 = vadd.f32 %v319, %v1699
    %v1701 = vpop.f32.mrb[0].mxu0
    %v1702 = vadd.f32 %v323, %v1701
    %1703 = vmatprep.mubr.bf16.mxu0 %v548
    %1704 = vmatmul.mubr.bf16.gmra.mrb[0].mxu0 %v547
    %v1705 = vpop.f32.mrb[0].mxu0
    %v1706 = vadd.f32 %v319, %v1705
    %v1707 = vpop.f32.mrb[0].mxu0
    %v1708 = vadd.f32 %v323, %v1707
    %v1709 = vpop.f32.mrb[0].mxu0
    %v1710 = vadd.f32 %v319, %v1709
    %v1711 = vpop.f32.mrb[0].mxu0
    %v1712 = vadd.f32 %v323, %v1711
    %1713 = vmatprep.mubr.bf16.mxu0 %v555
    %1714 = vmatmul.mubr.bf16.gmra.mrb[0].mxu0 %v554
    %v1715 = vpop.f32.mrb[0].mxu0
    %v1716 = vadd.f32 %v319, %v1715
    %v1717 = vpop.f32.mrb[0].mxu0
    %v1718 = vadd.f32 %v323, %v1717
    %v1719 = vpop.f32.mrb[0].mxu0
    %v1720 = vadd.f32 %v319, %v1719
    %v1721 = vpop.f32.mrb[0].mxu0
    %v1722 = vadd.f32 %v323, %v1721
    %1723 = vmatprep.mubr.bf16.mxu0 %v562
    %1724 = vmatmul.mubr.bf16.gmra.mrb[0].mxu0 %v561
    %v1725 = vpop.f32.mrb[0].mxu0
    %v1726 = vadd.f32 %v319, %v1725
    %v1727 = vpop.f32.mrb[0].mxu0
    %v1728 = vadd.f32 %v323, %v1727
    %v1729 = vpop.f32.mrb[0].mxu0
    %v1730 = vadd.f32 %v319, %v1729
    %v1731 = vpop.f32.mrb[0].mxu0
    %v1732 = vadd.f32 %v323, %v1731
    %1733 = vdwg.mxu0
    %1734 = vmatprep.subr.bf16.mxu0 %v1269
    %1735 = vmatpush1.bf16.msra.mxu0 %v1268
    %1736 = vmatprep.subr.bf16.mxu0 %v1273
    %1737 = vmatpush1.bf16.msra.mxu0 %v1272
    %1738 = vmatprep.subr.bf16.mxu0 %v1277
    %1739 = vmatpush1.bf16.msra.mxu0 %v1276
    %1740 = vmatprep.subr.bf16.mxu0 %v1281
    %1741 = vmatpush1.bf16.msra.mxu0 %v1280
    %1742 = vmatprep.subr.bf16.mxu0 %v1285
    %1743 = vmatpush1.bf16.msra.mxu0 %v1284
    %1744 = vmatprep.subr.bf16.mxu0 %v1289
    %1745 = vmatpush1.bf16.msra.mxu0 %v1288
    %1746 = vmatprep.subr.bf16.mxu0 %v1293
    %1747 = vmatpush1.bf16.msra.mxu0 %v1292
    %1748 = vmatprep.subr.bf16.mxu0 %v1297
    %1749 = vmatpush1.bf16.msra.mxu0 %v1296
    %1750 = vmatprep.subr.bf16.mxu0 %v1301
    %1751 = vmatpush1.bf16.msra.mxu0 %v1300
    %1752 = vmatprep.subr.bf16.mxu0 %v1305
    %1753 = vmatpush1.bf16.msra.mxu0 %v1304
    %1754 = vmatprep.subr.bf16.mxu0 %v1309
    %1755 = vmatpush1.bf16.msra.mxu0 %v1308
    %1756 = vmatprep.subr.bf16.mxu0 %v1313
    %1757 = vmatpush1.bf16.msra.mxu0 %v1312
    %1758 = vmatprep.subr.bf16.mxu0 %v1317
    %1759 = vmatpush1.bf16.msra.mxu0 %v1316
    %1760 = vmatprep.subr.bf16.mxu0 %v1321
    %1761 = vmatpush1.bf16.msra.mxu0 %v1320
    %1762 = vmatprep.subr.bf16.mxu0 %v1325
    %1763 = vmatpush1.bf16.msra.mxu0 %v1324
    %1764 = vmatprep.subr.bf16.mxu0 %v1329
    %1765 = vmatpush1.bf16.msra.mxu0 %v1328
    %1766 = vmatprep.mubr.bf16.mxu0 %v515
    %1767 = vmatmul.mubr.bf16.gmra.mrb[0].mxu0 %v514
    %v1768 = vpop.f32.mrb[0].mxu0
    %v1769 = vadd.f32 %v1656, %v1768
    %v1770 = vpop.f32.mrb[0].mxu0
    %v1771 = vadd.f32 %v1658, %v1770
    %v1772 = vpop.f32.mrb[0].mxu0
    %v1773 = vadd.f32 %v1660, %v1772
    %v1774 = vpop.f32.mrb[0].mxu0
    %v1775 = vadd.f32 %v1662, %v1774
    %1776 = vmatprep.mubr.bf16.mxu0 %v522
    %1777 = vmatmul.mubr.bf16.gmra.mrb[0].mxu0 %v521
    %v1778 = vpop.f32.mrb[0].mxu0
    %v1779 = vadd.f32 %v1666, %v1778
    %v1780 = vpop.f32.mrb[0].mxu0
    %v1781 = vadd.f32 %v1668, %v1780
    %v1782 = vpop.f32.mrb[0].mxu0
    %v1783 = vadd.f32 %v1670, %v1782
    %v1784 = vpop.f32.mrb[0].mxu0
    %v1785 = vadd.f32 %v1672, %v1784
    %1786 = vmatprep.mubr.bf16.mxu0 %v529
    %1787 = vmatmul.mubr.bf16.gmra.mrb[0].mxu0 %v528
    %v1788 = vpop.f32.mrb[0].mxu0
    %v1789 = vadd.f32 %v1676, %v1788
    %v1790 = vpop.f32.mrb[0].mxu0
    %v1791 = vadd.f32 %v1678, %v1790
    %v1792 = vpop.f32.mrb[0].mxu0
    %v1793 = vadd.f32 %v1680, %v1792
    %v1794 = vpop.f32.mrb[0].mxu0
    %v1795 = vadd.f32 %v1682, %v1794
    %1796 = vmatprep.mubr.bf16.mxu0 %v536
    %1797 = vmatmul.mubr.bf16.gmra.mrb[0].mxu0 %v535
    %v1798 = vpop.f32.mrb[0].mxu0
    %v1799 = vadd.f32 %v1686, %v1798
    %v1800 = vpop.f32.mrb[0].mxu0
    %v1801 = vadd.f32 %v1688, %v1800
    %v1802 = vpop.f32.mrb[0].mxu0
    %v1803 = vadd.f32 %v1690, %v1802
    %v1804 = vpop.f32.mrb[0].mxu0
    %v1805 = vadd.f32 %v1692, %v1804
    %1806 = vmatprep.mubr.bf16.mxu0 %v543
    %1807 = vmatmul.mubr.bf16.gmra.mrb[0].mxu0 %v542
    %v1808 = vpop.f32.mrb[0].mxu0
    %v1809 = vadd.f32 %v1696, %v1808
    %v1810 = vpop.f32.mrb[0].mxu0
    %v1811 = vadd.f32 %v1698, %v1810
    %v1812 = vpop.f32.mrb[0].mxu0
    %v1813 = vadd.f32 %v1700, %v1812
    %v1814 = vpop.f32.mrb[0].mxu0
    %v1815 = vadd.f32 %v1702, %v1814
    %1816 = vmatprep.mubr.bf16.mxu0 %v550
    %1817 = vmatmul.mubr.bf16.gmra.mrb[0].mxu0 %v549
    %v1818 = vpop.f32.mrb[0].mxu0
    %v1819 = vadd.f32 %v1706, %v1818
    %v1820 = vpop.f32.mrb[0].mxu0
    %v1821 = vadd.f32 %v1708, %v1820
    %v1822 = vpop.f32.mrb[0].mxu0
    %v1823 = vadd.f32 %v1710, %v1822
    %v1824 = vpop.f32.mrb[0].mxu0
    %v1825 = vadd.f32 %v1712, %v1824
    %1826 = vmatprep.mubr.bf16.mxu0 %v557
    %1827 = vmatmul.mubr.bf16.gmra.mrb[0].mxu0 %v556
    %v1828 = vpop.f32.mrb[0].mxu0
    %v1829 = vadd.f32 %v1716, %v1828
    %v1830 = vpop.f32.mrb[0].mxu0
    %v1831 = vadd.f32 %v1718, %v1830
    %v1832 = vpop.f32.mrb[0].mxu0
    %v1833 = vadd.f32 %v1720, %v1832
    %v1834 = vpop.f32.mrb[0].mxu0
    %v1835 = vadd.f32 %v1722, %v1834
    %1836 = vmatprep.mubr.bf16.mxu0 %v564
    %1837 = vmatmul.mubr.bf16.gmra.mrb[0].mxu0 %v563
    %v1838 = vpop.f32.mrb[0].mxu0
    %v1839 = vadd.f32 %v1726, %v1838
    %v1840 = vpop.f32.mrb[0].mxu0
    %v1841 = vadd.f32 %v1728, %v1840
    %v1842 = vpop.f32.mrb[0].mxu0
    %v1843 = vadd.f32 %v1730, %v1842
    %v1844 = vpop.f32.mrb[0].mxu0
    %v1845 = vadd.f32 %v1732, %v1844
    %1846 = vdwg.mxu0
    %1847 = vmatprep.subr.bf16.mxu0 %v1333
    %1848 = vmatpush1.bf16.msra.mxu0 %v1332
    %1849 = vmatprep.subr.bf16.mxu0 %v1337
    %1850 = vmatpush1.bf16.msra.mxu0 %v1336
    %1851 = vmatprep.subr.bf16.mxu0 %v1341
    %1852 = vmatpush1.bf16.msra.mxu0 %v1340
    %1853 = vmatprep.subr.bf16.mxu0 %v1345
    %1854 = vmatpush1.bf16.msra.mxu0 %v1344
    %1855 = vmatprep.subr.bf16.mxu0 %v1349
    %1856 = vmatpush1.bf16.msra.mxu0 %v1348
    %1857 = vmatprep.subr.bf16.mxu0 %v1353
    %1858 = vmatpush1.bf16.msra.mxu0 %v1352
    %1859 = vmatprep.subr.bf16.mxu0 %v1357
    %1860 = vmatpush1.bf16.msra.mxu0 %v1356
    %1861 = vmatprep.subr.bf16.mxu0 %v1361
    %1862 = vmatpush1.bf16.msra.mxu0 %v1360
    %1863 = vmatprep.subr.bf16.mxu0 %v1365
    %1864 = vmatpush1.bf16.msra.mxu0 %v1364
    %1865 = vmatprep.subr.bf16.mxu0 %v1369
    %1866 = vmatpush1.bf16.msra.mxu0 %v1368
    %1867 = vmatprep.subr.bf16.mxu0 %v1373
    %1868 = vmatpush1.bf16.msra.mxu0 %v1372
    %1869 = vmatprep.subr.bf16.mxu0 %v1377
    %1870 = vmatpush1.bf16.msra.mxu0 %v1376
    %1871 = vmatprep.subr.bf16.mxu0 %v1381
    %1872 = vmatpush1.bf16.msra.mxu0 %v1380
    %1873 = vmatprep.subr.bf16.mxu0 %v1385
    %1874 = vmatpush1.bf16.msra.mxu0 %v1384
    %1875 = vmatprep.subr.bf16.mxu0 %v1389
    %1876 = vmatpush1.bf16.msra.mxu0 %v1388
    %1877 = vmatprep.subr.bf16.mxu0 %v1393
    %1878 = vmatpush1.bf16.msra.mxu0 %v1392
    %1879 = vmatprep.mubr.bf16.mxu0 %v517
    %1880 = vmatmul.mubr.bf16.gmra.mrb[0].mxu0 %v516
    %v1881 = vpop.f32.mrb[0].mxu0
    %v1882 = vadd.f32 %v1769, %v1881
    %v1883 = vpop.f32.mrb[0].mxu0
    %v1884 = vadd.f32 %v1771, %v1883
    %v1885 = vpop.f32.mrb[0].mxu0
    %v1886 = vadd.f32 %v1773, %v1885
    %v1887 = vpop.f32.mrb[0].mxu0
    %v1888 = vadd.f32 %v1775, %v1887
    %1889 = vmatprep.mubr.bf16.mxu0 %v524
    %1890 = vmatmul.mubr.bf16.gmra.mrb[0].mxu0 %v523
    %v1891 = vpop.f32.mrb[0].mxu0
    %v1892 = vadd.f32 %v1779, %v1891
    %v1893 = vpop.f32.mrb[0].mxu0
    %v1894 = vadd.f32 %v1781, %v1893
    %v1895 = vpop.f32.mrb[0].mxu0
    %v1896 = vadd.f32 %v1783, %v1895
    %v1897 = vpop.f32.mrb[0].mxu0
    %v1898 = vadd.f32 %v1785, %v1897
    %1899 = vmatprep.mubr.bf16.mxu0 %v531
    %1900 = vmatmul.mubr.bf16.gmra.mrb[0].mxu0 %v530
    %v1901 = vpop.f32.mrb[0].mxu0
    %v1902 = vadd.f32 %v1789, %v1901
    %v1903 = vpop.f32.mrb[0].mxu0
    %v1904 = vadd.f32 %v1791, %v1903
    %v1905 = vpop.f32.mrb[0].mxu0
    %v1906 = vadd.f32 %v1793, %v1905
    %v1907 = vpop.f32.mrb[0].mxu0
    %v1908 = vadd.f32 %v1795, %v1907
    %1909 = vmatprep.mubr.bf16.mxu0 %v538
    %1910 = vmatmul.mubr.bf16.gmra.mrb[0].mxu0 %v537
    %v1911 = vpop.f32.mrb[0].mxu0
    %v1912 = vadd.f32 %v1799, %v1911
    %v1913 = vpop.f32.mrb[0].mxu0
    %v1914 = vadd.f32 %v1801, %v1913
    %v1915 = vpop.f32.mrb[0].mxu0
    %v1916 = vadd.f32 %v1803, %v1915
    %v1917 = vpop.f32.mrb[0].mxu0
    %v1918 = vadd.f32 %v1805, %v1917
    %1919 = vmatprep.mubr.bf16.mxu0 %v545
    %1920 = vmatmul.mubr.bf16.gmra.mrb[0].mxu0 %v544
    %v1921 = vpop.f32.mrb[0].mxu0
    %v1922 = vadd.f32 %v1809, %v1921
    %v1923 = vpop.f32.mrb[0].mxu0
    %v1924 = vadd.f32 %v1811, %v1923
    %v1925 = vpop.f32.mrb[0].mxu0
    %v1926 = vadd.f32 %v1813, %v1925
    %v1927 = vpop.f32.mrb[0].mxu0
    %v1928 = vadd.f32 %v1815, %v1927
    %1929 = vmatprep.mubr.bf16.mxu0 %v552
    %1930 = vmatmul.mubr.bf16.gmra.mrb[0].mxu0 %v551
    %v1931 = vpop.f32.mrb[0].mxu0
    %v1932 = vadd.f32 %v1819, %v1931
    %v1933 = vpop.f32.mrb[0].mxu0
    %v1934 = vadd.f32 %v1821, %v1933
    %v1935 = vpop.f32.mrb[0].mxu0
    %v1936 = vadd.f32 %v1823, %v1935
    %v1937 = vpop.f32.mrb[0].mxu0
    %v1938 = vadd.f32 %v1825, %v1937
    %1939 = vmatprep.mubr.bf16.mxu0 %v559
    %1940 = vmatmul.mubr.bf16.gmra.mrb[0].mxu0 %v558
    %v1941 = vpop.f32.mrb[0].mxu0
    %v1942 = vadd.f32 %v1829, %v1941
    %v1943 = vpop.f32.mrb[0].mxu0
    %v1944 = vadd.f32 %v1831, %v1943
    %v1945 = vpop.f32.mrb[0].mxu0
    %v1946 = vadd.f32 %v1833, %v1945
    %v1947 = vpop.f32.mrb[0].mxu0
    %v1948 = vadd.f32 %v1835, %v1947
    %1949 = vmatprep.mubr.bf16.mxu0 %v566
    %1950 = vmatmul.mubr.bf16.gmra.mrb[0].mxu0 %v565
    %v1951 = vpop.f32.mrb[0].mxu0
    %v1952 = vadd.f32 %v1839, %v1951
    %v1953 = vpop.f32.mrb[0].mxu0
    %v1954 = vadd.f32 %v1841, %v1953
    %v1955 = vpop.f32.mrb[0].mxu0
    %v1956 = vadd.f32 %v1843, %v1955
    %v1957 = vpop.f32.mrb[0].mxu0
    %v1958 = vadd.f32 %v1845, %v1957
    %1959 = vdwg.mxu0
    %1960 = vmatprep.subr.bf16.mxu0 %v1397
    %1961 = vmatpush1.bf16.msra.mxu0 %v1396
    %1962 = vmatprep.subr.bf16.mxu0 0
    %1963 = vmatpush1.bf16.msra.mxu0 0
    %1964 = vmatprep.subr.bf16.mxu0 0
    %1965 = vmatpush1.bf16.msra.mxu0 0
    %1966 = vmatprep.subr.bf16.mxu0 0
    %1967 = vmatpush1.bf16.msra.mxu0 0
    %1968 = vmatprep.subr.bf16.mxu0 0
    %1969 = vmatpush1.bf16.msra.mxu0 0
    %1970 = vmatprep.subr.bf16.mxu0 0
    %1971 = vmatpush1.bf16.msra.mxu0 0
    %1972 = vmatprep.subr.bf16.mxu0 0
    %1973 = vmatpush1.bf16.msra.mxu0 0
    %1974 = vmatprep.subr.bf16.mxu0 0
    %1975 = vmatpush1.bf16.msra.mxu0 0
    %1976 = vmatprep.subr.bf16.mxu0 0
    %1977 = vmatpush1.bf16.msra.mxu0 0
    %1978 = vmatprep.subr.bf16.mxu0 0
    %1979 = vmatpush1.bf16.msra.mxu0 0
    %1980 = vmatprep.subr.bf16.mxu0 0
    %1981 = vmatpush1.bf16.msra.mxu0 0
    %1982 = vmatprep.subr.bf16.mxu0 0
    %1983 = vmatpush1.bf16.msra.mxu0 0
    %1984 = vmatprep.subr.bf16.mxu0 0
    %1985 = vmatpush1.bf16.msra.mxu0 0
    %1986 = vmatprep.subr.bf16.mxu0 0
    %1987 = vmatpush1.bf16.msra.mxu0 0
    %1988 = vmatprep.subr.bf16.mxu0 0
    %1989 = vmatpush1.bf16.msra.mxu0 0
    %1990 = vmatprep.subr.bf16.mxu0 0
    %1991 = vmatpush1.bf16.msra.mxu0 0
    %1992 = vmatprep.mubr.bf16.mxu0 0
    %1993 = vmatmul.mubr.bf16.gmra.mrb[0].mxu0 %v1598
    %v1994 = vpop.f32.mrb[0].mxu0
    %v1995 = vadd.f32 %v1882, %v1994
    %v1996 = vpop.f32.mrb[0].mxu0
    %v1997 = vadd.f32 %v1884, %v1996
    %v1998 = vpop.f32.mrb[0].mxu0
    %v1999 = vadd.f32 %v1886, %v1998
    %v2000 = vpop.f32.mrb[0].mxu0
    %v2001 = vadd.f32 %v1888, %v2000
    %2002 = vmatprep.mubr.bf16.mxu0 0
    %2003 = vmatmul.mubr.bf16.gmra.mrb[0].mxu0 %v1601
    %v2004 = vpop.f32.mrb[0].mxu0
    %v2005 = vadd.f32 %v1892, %v2004
    %v2006 = vpop.f32.mrb[0].mxu0
    %v2007 = vadd.f32 %v1894, %v2006
    %v2008 = vpop.f32.mrb[0].mxu0
    %v2009 = vadd.f32 %v1896, %v2008
    %v2010 = vpop.f32.mrb[0].mxu0
    %v2011 = vadd.f32 %v1898, %v2010
    %2012 = vmatprep.mubr.bf16.mxu0 0
    %2013 = vmatmul.mubr.bf16.gmra.mrb[0].mxu0 %v1604
    %v2014 = vpop.f32.mrb[0].mxu0
    %v2015 = vadd.f32 %v1902, %v2014
    %v2016 = vpop.f32.mrb[0].mxu0
    %v2017 = vadd.f32 %v1904, %v2016
    %v2018 = vpop.f32.mrb[0].mxu0
    %v2019 = vadd.f32 %v1906, %v2018
    %v2020 = vpop.f32.mrb[0].mxu0
    %v2021 = vadd.f32 %v1908, %v2020
    %2022 = vmatprep.mubr.bf16.mxu0 0
    %2023 = vmatmul.mubr.bf16.gmra.mrb[0].mxu0 %v1607
    %v2024 = vpop.f32.mrb[0].mxu0
    %v2025 = vadd.f32 %v1912, %v2024
    %v2026 = vpop.f32.mrb[0].mxu0
    %v2027 = vadd.f32 %v1914, %v2026
    %v2028 = vpop.f32.mrb[0].mxu0
    %v2029 = vadd.f32 %v1916, %v2028
    %v2030 = vpop.f32.mrb[0].mxu0
    %v2031 = vadd.f32 %v1918, %v2030
    %2032 = vmatprep.mubr.bf16.mxu0 0
    %2033 = vmatmul.mubr.bf16.gmra.mrb[0].mxu0 %v1610
    %v2034 = vpop.f32.mrb[0].mxu0
    %v2035 = vadd.f32 %v1922, %v2034
    %v2036 = vpop.f32.mrb[0].mxu0
    %v2037 = vadd.f32 %v1924, %v2036
    %v2038 = vpop.f32.mrb[0].mxu0
    %v2039 = vadd.f32 %v1926, %v2038
    %v2040 = vpop.f32.mrb[0].mxu0
    %v2041 = vadd.f32 %v1928, %v2040
    %2042 = vmatprep.mubr.bf16.mxu0 0
    %2043 = vmatmul.mubr.bf16.gmra.mrb[0].mxu0 %v1613
    %v2044 = vpop.f32.mrb[0].mxu0
    %v2045 = vadd.f32 %v1932, %v2044
    %v2046 = vpop.f32.mrb[0].mxu0
    %v2047 = vadd.f32 %v1934, %v2046
    %v2048 = vpop.f32.mrb[0].mxu0
    %v2049 = vadd.f32 %v1936, %v2048
    %v2050 = vpop.f32.mrb[0].mxu0
    %v2051 = vadd.f32 %v1938, %v2050
    %2052 = vmatprep.mubr.bf16.mxu0 0
    %2053 = vmatmul.mubr.bf16.gmra.mrb[0].mxu0 %v1616
    %v2054 = vpop.f32.mrb[0].mxu0
    %v2055 = vadd.f32 %v1942, %v2054
    %v2056 = vpop.f32.mrb[0].mxu0
    %v2057 = vadd.f32 %v1944, %v2056
    %v2058 = vpop.f32.mrb[0].mxu0
    %v2059 = vadd.f32 %v1946, %v2058
    %v2060 = vpop.f32.mrb[0].mxu0
    %v2061 = vadd.f32 %v1948, %v2060
    %2062 = vmatprep.mubr.bf16.mxu0 0
    %2063 = vmatmul.mubr.bf16.gmra.mrb[0].mxu0 %v1619
    %v2064 = vpop.f32.mrb[0].mxu0
    %v2065 = vadd.f32 %v1952, %v2064
    %v2066 = vpop.f32.mrb[0].mxu0
    %v2067 = vadd.f32 %v1954, %v2066
    %v2068 = vpop.f32.mrb[0].mxu0
    %v2069 = vadd.f32 %v1956, %v2068
    %v2070 = vpop.f32.mrb[0].mxu0
    %v2071 = vadd.f32 %v1958, %v2070
    %2072 = vdwg.mxu0
    %2073 = vmatprep.subr.bf16.mxu0 %v1207
    %2074 = vmatpush1.bf16.msra.mxu0 %v1206
    %2075 = vmatprep.subr.bf16.mxu0 %v1211
    %2076 = vmatpush1.bf16.msra.mxu0 %v1210
    %2077 = vmatprep.subr.bf16.mxu0 %v1215
    %2078 = vmatpush1.bf16.msra.mxu0 %v1214
    %2079 = vmatprep.subr.bf16.mxu0 %v1219
    %2080 = vmatpush1.bf16.msra.mxu0 %v1218
    %2081 = vmatprep.subr.bf16.mxu0 %v1223
    %2082 = vmatpush1.bf16.msra.mxu0 %v1222
    %2083 = vmatprep.subr.bf16.mxu0 %v1227
    %2084 = vmatpush1.bf16.msra.mxu0 %v1226
    %2085 = vmatprep.subr.bf16.mxu0 %v1231
    %2086 = vmatpush1.bf16.msra.mxu0 %v1230
    %2087 = vmatprep.subr.bf16.mxu0 %v1235
    %2088 = vmatpush1.bf16.msra.mxu0 %v1234
    %2089 = vmatprep.subr.bf16.mxu0 %v1239
    %2090 = vmatpush1.bf16.msra.mxu0 %v1238
    %2091 = vmatprep.subr.bf16.mxu0 %v1243
    %2092 = vmatpush1.bf16.msra.mxu0 %v1242
    %2093 = vmatprep.subr.bf16.mxu0 %v1247
    %2094 = vmatpush1.bf16.msra.mxu0 %v1246
    %2095 = vmatprep.subr.bf16.mxu0 %v1251
    %2096 = vmatpush1.bf16.msra.mxu0 %v1250
    %2097 = vmatprep.subr.bf16.mxu0 %v1255
    %2098 = vmatpush1.bf16.msra.mxu0 %v1254
    %2099 = vmatprep.subr.bf16.mxu0 %v1259
    %2100 = vmatpush1.bf16.msra.mxu0 %v1258
    %2101 = vmatprep.subr.bf16.mxu0 %v1263
    %2102 = vmatpush1.bf16.msra.mxu0 %v1262
    %2103 = vmatprep.subr.bf16.mxu0 %v1267
    %2104 = vmatpush1.bf16.msra.mxu0 %v1266
    %2105 = vmatprep.mubr.bf16.mxu0 %v513
    %2106 = vmatmul.mubr.bf16.gmra.mrb[0].mxu0 %v512
    %v2107 = vpop.f32.mrb[0].mxu0
    %v2108 = vadd.f32 %v327, %v2107
    %v2109 = vpop.f32.mrb[0].mxu0
    %v2110 = vadd.f32 %v331, %v2109
    %v2111 = vpop.f32.mrb[0].mxu0
    %v2112 = vadd.f32 %v327, %v2111
    %v2113 = vpop.f32.mrb[0].mxu0
    %v2114 = vadd.f32 %v331, %v2113
    %2115 = vmatprep.mubr.bf16.mxu0 %v520
    %2116 = vmatmul.mubr.bf16.gmra.mrb[0].mxu0 %v519
    %v2117 = vpop.f32.mrb[0].mxu0
    %v2118 = vadd.f32 %v327, %v2117
    %v2119 = vpop.f32.mrb[0].mxu0
    %v2120 = vadd.f32 %v331, %v2119
    %v2121 = vpop.f32.mrb[0].mxu0
    %v2122 = vadd.f32 %v327, %v2121
    %v2123 = vpop.f32.mrb[0].mxu0
    %v2124 = vadd.f32 %v331, %v2123
    %2125 = vmatprep.mubr.bf16.mxu0 %v527
    %2126 = vmatmul.mubr.bf16.gmra.mrb[0].mxu0 %v526
    %v2127 = vpop.f32.mrb[0].mxu0
    %v2128 = vadd.f32 %v327, %v2127
    %v2129 = vpop.f32.mrb[0].mxu0
    %v2130 = vadd.f32 %v331, %v2129
    %v2131 = vpop.f32.mrb[0].mxu0
    %v2132 = vadd.f32 %v327, %v2131
    %v2133 = vpop.f32.mrb[0].mxu0
    %v2134 = vadd.f32 %v331, %v2133
    %2135 = vmatprep.mubr.bf16.mxu0 %v534
    %2136 = vmatmul.mubr.bf16.gmra.mrb[0].mxu0 %v533
    %v2137 = vpop.f32.mrb[0].mxu0
    %v2138 = vadd.f32 %v327, %v2137
    %v2139 = vpop.f32.mrb[0].mxu0
    %v2140 = vadd.f32 %v331, %v2139
    %v2141 = vpop.f32.mrb[0].mxu0
    %v2142 = vadd.f32 %v327, %v2141
    %v2143 = vpop.f32.mrb[0].mxu0
    %v2144 = vadd.f32 %v331, %v2143
    %2145 = vmatprep.mubr.bf16.mxu0 %v541
    %2146 = vmatmul.mubr.bf16.gmra.mrb[0].mxu0 %v540
    %v2147 = vpop.f32.mrb[0].mxu0
    %v2148 = vadd.f32 %v327, %v2147
    %v2149 = vpop.f32.mrb[0].mxu0
    %v2150 = vadd.f32 %v331, %v2149
    %v2151 = vpop.f32.mrb[0].mxu0
    %v2152 = vadd.f32 %v327, %v2151
    %v2153 = vpop.f32.mrb[0].mxu0
    %v2154 = vadd.f32 %v331, %v2153
    %2155 = vmatprep.mubr.bf16.mxu0 %v548
    %2156 = vmatmul.mubr.bf16.gmra.mrb[0].mxu0 %v547
    %v2157 = vpop.f32.mrb[0].mxu0
    %v2158 = vadd.f32 %v327, %v2157
    %v2159 = vpop.f32.mrb[0].mxu0
    %v2160 = vadd.f32 %v331, %v2159
    %v2161 = vpop.f32.mrb[0].mxu0
    %v2162 = vadd.f32 %v327, %v2161
    %v2163 = vpop.f32.mrb[0].mxu0
    %v2164 = vadd.f32 %v331, %v2163
    %2165 = vmatprep.mubr.bf16.mxu0 %v555
    %2166 = vmatmul.mubr.bf16.gmra.mrb[0].mxu0 %v554
    %v2167 = vpop.f32.mrb[0].mxu0
    %v2168 = vadd.f32 %v327, %v2167
    %v2169 = vpop.f32.mrb[0].mxu0
    %v2170 = vadd.f32 %v331, %v2169
    %v2171 = vpop.f32.mrb[0].mxu0
    %v2172 = vadd.f32 %v327, %v2171
    %v2173 = vpop.f32.mrb[0].mxu0
    %v2174 = vadd.f32 %v331, %v2173
    %2175 = vmatprep.mubr.bf16.mxu0 %v562
    %2176 = vmatmul.mubr.bf16.gmra.mrb[0].mxu0 %v561
    %v2177 = vpop.f32.mrb[0].mxu0
    %v2178 = vadd.f32 %v327, %v2177
    %v2179 = vpop.f32.mrb[0].mxu0
    %v2180 = vadd.f32 %v331, %v2179
    %v2181 = vpop.f32.mrb[0].mxu0
    %v2182 = vadd.f32 %v327, %v2181
    %v2183 = vpop.f32.mrb[0].mxu0
    %v2184 = vadd.f32 %v331, %v2183
    %2185 = vdwg.mxu0
    %2186 = vmatprep.subr.bf16.mxu0 %v1271
    %2187 = vmatpush1.bf16.msra.mxu0 %v1270
    %2188 = vmatprep.subr.bf16.mxu0 %v1275
    %2189 = vmatpush1.bf16.msra.mxu0 %v1274
    %2190 = vmatprep.subr.bf16.mxu0 %v1279
    %2191 = vmatpush1.bf16.msra.mxu0 %v1278
    %2192 = vmatprep.subr.bf16.mxu0 %v1283
    %2193 = vmatpush1.bf16.msra.mxu0 %v1282
    %2194 = vmatprep.subr.bf16.mxu0 %v1287
    %2195 = vmatpush1.bf16.msra.mxu0 %v1286
    %2196 = vmatprep.subr.bf16.mxu0 %v1291
    %2197 = vmatpush1.bf16.msra.mxu0 %v1290
    %2198 = vmatprep.subr.bf16.mxu0 %v1295
    %2199 = vmatpush1.bf16.msra.mxu0 %v1294
    %2200 = vmatprep.subr.bf16.mxu0 %v1299
    %2201 = vmatpush1.bf16.msra.mxu0 %v1298
    %2202 = vmatprep.subr.bf16.mxu0 %v1303
    %2203 = vmatpush1.bf16.msra.mxu0 %v1302
    %2204 = vmatprep.subr.bf16.mxu0 %v1307
    %2205 = vmatpush1.bf16.msra.mxu0 %v1306
    %2206 = vmatprep.subr.bf16.mxu0 %v1311
    %2207 = vmatpush1.bf16.msra.mxu0 %v1310
    %2208 = vmatprep.subr.bf16.mxu0 %v1315
    %2209 = vmatpush1.bf16.msra.mxu0 %v1314
    %2210 = vmatprep.subr.bf16.mxu0 %v1319
    %2211 = vmatpush1.bf16.msra.mxu0 %v1318
    %2212 = vmatprep.subr.bf16.mxu0 %v1323
    %2213 = vmatpush1.bf16.msra.mxu0 %v1322
    %2214 = vmatprep.subr.bf16.mxu0 %v1327
    %2215 = vmatpush1.bf16.msra.mxu0 %v1326
    %2216 = vmatprep.subr.bf16.mxu0 %v1331
    %2217 = vmatpush1.bf16.msra.mxu0 %v1330
    %2218 = vmatprep.mubr.bf16.mxu0 %v515
    %2219 = vmatmul.mubr.bf16.gmra.mrb[0].mxu0 %v514
    %v2220 = vpop.f32.mrb[0].mxu0
    %v2221 = vadd.f32 %v2108, %v2220
    %v2222 = vpop.f32.mrb[0].mxu0
    %v2223 = vadd.f32 %v2110, %v2222
    %v2224 = vpop.f32.mrb[0].mxu0
    %v2225 = vadd.f32 %v2112, %v2224
    %v2226 = vpop.f32.mrb[0].mxu0
    %v2227 = vadd.f32 %v2114, %v2226
    %2228 = vmatprep.mubr.bf16.mxu0 %v522
    %2229 = vmatmul.mubr.bf16.gmra.mrb[0].mxu0 %v521
    %v2230 = vpop.f32.mrb[0].mxu0
    %v2231 = vadd.f32 %v2118, %v2230
    %v2232 = vpop.f32.mrb[0].mxu0
    %v2233 = vadd.f32 %v2120, %v2232
    %v2234 = vpop.f32.mrb[0].mxu0
    %v2235 = vadd.f32 %v2122, %v2234
    %v2236 = vpop.f32.mrb[0].mxu0
    %v2237 = vadd.f32 %v2124, %v2236
    %2238 = vmatprep.mubr.bf16.mxu0 %v529
    %2239 = vmatmul.mubr.bf16.gmra.mrb[0].mxu0 %v528
    %v2240 = vpop.f32.mrb[0].mxu0
    %v2241 = vadd.f32 %v2128, %v2240
    %v2242 = vpop.f32.mrb[0].mxu0
    %v2243 = vadd.f32 %v2130, %v2242
    %v2244 = vpop.f32.mrb[0].mxu0
    %v2245 = vadd.f32 %v2132, %v2244
    %v2246 = vpop.f32.mrb[0].mxu0
    %v2247 = vadd.f32 %v2134, %v2246
    %2248 = vmatprep.mubr.bf16.mxu0 %v536
    %2249 = vmatmul.mubr.bf16.gmra.mrb[0].mxu0 %v535
    %v2250 = vpop.f32.mrb[0].mxu0
    %v2251 = vadd.f32 %v2138, %v2250
    %v2252 = vpop.f32.mrb[0].mxu0
    %v2253 = vadd.f32 %v2140, %v2252
    %v2254 = vpop.f32.mrb[0].mxu0
    %v2255 = vadd.f32 %v2142, %v2254
    %v2256 = vpop.f32.mrb[0].mxu0
    %v2257 = vadd.f32 %v2144, %v2256
    %2258 = vmatprep.mubr.bf16.mxu0 %v543
    %2259 = vmatmul.mubr.bf16.gmra.mrb[0].mxu0 %v542
    %v2260 = vpop.f32.mrb[0].mxu0
    %v2261 = vadd.f32 %v2148, %v2260
    %v2262 = vpop.f32.mrb[0].mxu0
    %v2263 = vadd.f32 %v2150, %v2262
    %v2264 = vpop.f32.mrb[0].mxu0
    %v2265 = vadd.f32 %v2152, %v2264
    %v2266 = vpop.f32.mrb[0].mxu0
    %v2267 = vadd.f32 %v2154, %v2266
    %2268 = vmatprep.mubr.bf16.mxu0 %v550
    %2269 = vmatmul.mubr.bf16.gmra.mrb[0].mxu0 %v549
    %v2270 = vpop.f32.mrb[0].mxu0
    %v2271 = vadd.f32 %v2158, %v2270
    %v2272 = vpop.f32.mrb[0].mxu0
    %v2273 = vadd.f32 %v2160, %v2272
    %v2274 = vpop.f32.mrb[0].mxu0
    %v2275 = vadd.f32 %v2162, %v2274
    %v2276 = vpop.f32.mrb[0].mxu0
    %v2277 = vadd.f32 %v2164, %v2276
    %2278 = vmatprep.mubr.bf16.mxu0 %v557
    %2279 = vmatmul.mubr.bf16.gmra.mrb[0].mxu0 %v556
    %v2280 = vpop.f32.mrb[0].mxu0
    %v2281 = vadd.f32 %v2168, %v2280
    %v2282 = vpop.f32.mrb[0].mxu0
    %v2283 = vadd.f32 %v2170, %v2282
    %v2284 = vpop.f32.mrb[0].mxu0
    %v2285 = vadd.f32 %v2172, %v2284
    %v2286 = vpop.f32.mrb[0].mxu0
    %v2287 = vadd.f32 %v2174, %v2286
    %2288 = vmatprep.mubr.bf16.mxu0 %v564
    %2289 = vmatmul.mubr.bf16.gmra.mrb[0].mxu0 %v563
    %v2290 = vpop.f32.mrb[0].mxu0
    %v2291 = vadd.f32 %v2178, %v2290
    %v2292 = vpop.f32.mrb[0].mxu0
    %v2293 = vadd.f32 %v2180, %v2292
    %v2294 = vpop.f32.mrb[0].mxu0
    %v2295 = vadd.f32 %v2182, %v2294
    %v2296 = vpop.f32.mrb[0].mxu0
    %v2297 = vadd.f32 %v2184, %v2296
    %2298 = vdwg.mxu0
    %2299 = vmatprep.subr.bf16.mxu0 %v1335
    %2300 = vmatpush1.bf16.msra.mxu0 %v1334
    %2301 = vmatprep.subr.bf16.mxu0 %v1339
    %2302 = vmatpush1.bf16.msra.mxu0 %v1338
    %2303 = vmatprep.subr.bf16.mxu0 %v1343
    %2304 = vmatpush1.bf16.msra.mxu0 %v1342
    %2305 = vmatprep.subr.bf16.mxu0 %v1347
    %2306 = vmatpush1.bf16.msra.mxu0 %v1346
    %2307 = vmatprep.subr.bf16.mxu0 %v1351
    %2308 = vmatpush1.bf16.msra.mxu0 %v1350
    %2309 = vmatprep.subr.bf16.mxu0 %v1355
    %2310 = vmatpush1.bf16.msra.mxu0 %v1354
    %2311 = vmatprep.subr.bf16.mxu0 %v1359
    %2312 = vmatpush1.bf16.msra.mxu0 %v1358
    %2313 = vmatprep.subr.bf16.mxu0 %v1363
    %2314 = vmatpush1.bf16.msra.mxu0 %v1362
    %2315 = vmatprep.subr.bf16.mxu0 %v1367
    %2316 = vmatpush1.bf16.msra.mxu0 %v1366
    %2317 = vmatprep.subr.bf16.mxu0 %v1371
    %2318 = vmatpush1.bf16.msra.mxu0 %v1370
    %2319 = vmatprep.subr.bf16.mxu0 %v1375
    %2320 = vmatpush1.bf16.msra.mxu0 %v1374
    %2321 = vmatprep.subr.bf16.mxu0 %v1379
    %2322 = vmatpush1.bf16.msra.mxu0 %v1378
    %2323 = vmatprep.subr.bf16.mxu0 %v1383
    %2324 = vmatpush1.bf16.msra.mxu0 %v1382
    %2325 = vmatprep.subr.bf16.mxu0 %v1387
    %2326 = vmatpush1.bf16.msra.mxu0 %v1386
    %2327 = vmatprep.subr.bf16.mxu0 %v1391
    %2328 = vmatpush1.bf16.msra.mxu0 %v1390
    %2329 = vmatprep.subr.bf16.mxu0 %v1395
    %2330 = vmatpush1.bf16.msra.mxu0 %v1394
    %2331 = vmatprep.mubr.bf16.mxu0 %v517
    %2332 = vmatmul.mubr.bf16.gmra.mrb[0].mxu0 %v516
    %v2333 = vpop.f32.mrb[0].mxu0
    %v2334 = vadd.f32 %v2221, %v2333
    %v2335 = vpop.f32.mrb[0].mxu0
    %v2336 = vadd.f32 %v2223, %v2335
    %v2337 = vpop.f32.mrb[0].mxu0
    %v2338 = vadd.f32 %v2225, %v2337
    %v2339 = vpop.f32.mrb[0].mxu0
    %v2340 = vadd.f32 %v2227, %v2339
    %2341 = vmatprep.mubr.bf16.mxu0 %v524
    %2342 = vmatmul.mubr.bf16.gmra.mrb[0].mxu0 %v523
    %v2343 = vpop.f32.mrb[0].mxu0
    %v2344 = vadd.f32 %v2231, %v2343
    %v2345 = vpop.f32.mrb[0].mxu0
    %v2346 = vadd.f32 %v2233, %v2345
    %v2347 = vpop.f32.mrb[0].mxu0
    %v2348 = vadd.f32 %v2235, %v2347
    %v2349 = vpop.f32.mrb[0].mxu0
    %v2350 = vadd.f32 %v2237, %v2349
    %2351 = vmatprep.mubr.bf16.mxu0 %v531
    %2352 = vmatmul.mubr.bf16.gmra.mrb[0].mxu0 %v530
    %v2353 = vpop.f32.mrb[0].mxu0
    %v2354 = vadd.f32 %v2241, %v2353
    %v2355 = vpop.f32.mrb[0].mxu0
    %v2356 = vadd.f32 %v2243, %v2355
    %v2357 = vpop.f32.mrb[0].mxu0
    %v2358 = vadd.f32 %v2245, %v2357
    %v2359 = vpop.f32.mrb[0].mxu0
    %v2360 = vadd.f32 %v2247, %v2359
    %2361 = vmatprep.mubr.bf16.mxu0 %v538
    %2362 = vmatmul.mubr.bf16.gmra.mrb[0].mxu0 %v537
    %v2363 = vpop.f32.mrb[0].mxu0
    %v2364 = vadd.f32 %v2251, %v2363
    %v2365 = vpop.f32.mrb[0].mxu0
    %v2366 = vadd.f32 %v2253, %v2365
    %v2367 = vpop.f32.mrb[0].mxu0
    %v2368 = vadd.f32 %v2255, %v2367
    %v2369 = vpop.f32.mrb[0].mxu0
    %v2370 = vadd.f32 %v2257, %v2369
    %2371 = vmatprep.mubr.bf16.mxu0 %v545
    %2372 = vmatmul.mubr.bf16.gmra.mrb[0].mxu0 %v544
    %v2373 = vpop.f32.mrb[0].mxu0
    %v2374 = vadd.f32 %v2261, %v2373
    %v2375 = vpop.f32.mrb[0].mxu0
    %v2376 = vadd.f32 %v2263, %v2375
    %v2377 = vpop.f32.mrb[0].mxu0
    %v2378 = vadd.f32 %v2265, %v2377
    %v2379 = vpop.f32.mrb[0].mxu0
    %v2380 = vadd.f32 %v2267, %v2379
    %2381 = vmatprep.mubr.bf16.mxu0 %v552
    %2382 = vmatmul.mubr.bf16.gmra.mrb[0].mxu0 %v551
    %v2383 = vpop.f32.mrb[0].mxu0
    %v2384 = vadd.f32 %v2271, %v2383
    %v2385 = vpop.f32.mrb[0].mxu0
    %v2386 = vadd.f32 %v2273, %v2385
    %v2387 = vpop.f32.mrb[0].mxu0
    %v2388 = vadd.f32 %v2275, %v2387
    %v2389 = vpop.f32.mrb[0].mxu0
    %v2390 = vadd.f32 %v2277, %v2389
    %2391 = vmatprep.mubr.bf16.mxu0 %v559
    %2392 = vmatmul.mubr.bf16.gmra.mrb[0].mxu0 %v558
    %v2393 = vpop.f32.mrb[0].mxu0
    %v2394 = vadd.f32 %v2281, %v2393
    %v2395 = vpop.f32.mrb[0].mxu0
    %v2396 = vadd.f32 %v2283, %v2395
    %v2397 = vpop.f32.mrb[0].mxu0
    %v2398 = vadd.f32 %v2285, %v2397
    %v2399 = vpop.f32.mrb[0].mxu0
    %v2400 = vadd.f32 %v2287, %v2399
    %2401 = vmatprep.mubr.bf16.mxu0 %v566
    %2402 = vmatmul.mubr.bf16.gmra.mrb[0].mxu0 %v565
    %v2403 = vpop.f32.mrb[0].mxu0
    %v2404 = vadd.f32 %v2291, %v2403
    %v2405 = vpop.f32.mrb[0].mxu0
    %v2406 = vadd.f32 %v2293, %v2405
    %v2407 = vpop.f32.mrb[0].mxu0
    %v2408 = vadd.f32 %v2295, %v2407
    %v2409 = vpop.f32.mrb[0].mxu0
    %v2410 = vadd.f32 %v2297, %v2409
    %2411 = vdwg.mxu0
    %2412 = vmatprep.subr.bf16.mxu0 %v1399
    %2413 = vmatpush1.bf16.msra.mxu0 %v1398
    %2414 = vmatprep.subr.bf16.mxu0 0
    %2415 = vmatpush1.bf16.msra.mxu0 0
    %2416 = vmatprep.subr.bf16.mxu0 0
    %2417 = vmatpush1.bf16.msra.mxu0 0
    %2418 = vmatprep.subr.bf16.mxu0 0
    %2419 = vmatpush1.bf16.msra.mxu0 0
    %2420 = vmatprep.subr.bf16.mxu0 0
    %2421 = vmatpush1.bf16.msra.mxu0 0
    %2422 = vmatprep.subr.bf16.mxu0 0
    %2423 = vmatpush1.bf16.msra.mxu0 0
    %2424 = vmatprep.subr.bf16.mxu0 0
    %2425 = vmatpush1.bf16.msra.mxu0 0
    %2426 = vmatprep.subr.bf16.mxu0 0
    %2427 = vmatpush1.bf16.msra.mxu0 0
    %2428 = vmatprep.subr.bf16.mxu0 0
    %2429 = vmatpush1.bf16.msra.mxu0 0
    %2430 = vmatprep.subr.bf16.mxu0 0
    %2431 = vmatpush1.bf16.msra.mxu0 0
    %2432 = vmatprep.subr.bf16.mxu0 0
    %2433 = vmatpush1.bf16.msra.mxu0 0
    %2434 = vmatprep.subr.bf16.mxu0 0
    %2435 = vmatpush1.bf16.msra.mxu0 0
    %2436 = vmatprep.subr.bf16.mxu0 0
    %2437 = vmatpush1.bf16.msra.mxu0 0
    %2438 = vmatprep.subr.bf16.mxu0 0
    %2439 = vmatpush1.bf16.msra.mxu0 0
    %2440 = vmatprep.subr.bf16.mxu0 0
    %2441 = vmatpush1.bf16.msra.mxu0 0
    %2442 = vmatprep.subr.bf16.mxu0 0
    %2443 = vmatpush1.bf16.msra.mxu0 0
    %2444 = vmatprep.mubr.bf16.mxu0 0
    %2445 = vmatmul.mubr.bf16.gmra.mrb[0].mxu0 %v1598
    %v2446 = vpop.f32.mrb[0].mxu0
    %v2447 = vadd.f32 %v2334, %v2446
    %v2448 = vpop.f32.mrb[0].mxu0
    %v2449 = vadd.f32 %v2336, %v2448
    %v2450 = vpop.f32.mrb[0].mxu0
    %v2451 = vadd.f32 %v2338, %v2450
    %v2452 = vpop.f32.mrb[0].mxu0
    %v2453 = vadd.f32 %v2340, %v2452
    %2454 = vmatprep.mubr.bf16.mxu0 0
    %2455 = vmatmul.mubr.bf16.gmra.mrb[0].mxu0 %v1601
    %v2456 = vpop.f32.mrb[0].mxu0
    %v2457 = vadd.f32 %v2344, %v2456
    %v2458 = vpop.f32.mrb[0].mxu0
    %v2459 = vadd.f32 %v2346, %v2458
    %v2460 = vpop.f32.mrb[0].mxu0
    %v2461 = vadd.f32 %v2348, %v2460
    %v2462 = vpop.f32.mrb[0].mxu0
    %v2463 = vadd.f32 %v2350, %v2462
    %2464 = vmatprep.mubr.bf16.mxu0 0
    %2465 = vmatmul.mubr.bf16.gmra.mrb[0].mxu0 %v1604
    %v2466 = vpop.f32.mrb[0].mxu0
    %v2467 = vadd.f32 %v2354, %v2466
    %v2468 = vpop.f32.mrb[0].mxu0
    %v2469 = vadd.f32 %v2356, %v2468
    %v2470 = vpop.f32.mrb[0].mxu0
    %v2471 = vadd.f32 %v2358, %v2470
    %v2472 = vpop.f32.mrb[0].mxu0
    %v2473 = vadd.f32 %v2360, %v2472
    %2474 = vmatprep.mubr.bf16.mxu0 0
    %2475 = vmatmul.mubr.bf16.gmra.mrb[0].mxu0 %v1607
    %v2476 = vpop.f32.mrb[0].mxu0
    %v2477 = vadd.f32 %v2364, %v2476
    %v2478 = vpop.f32.mrb[0].mxu0
    %v2479 = vadd.f32 %v2366, %v2478
    %v2480 = vpop.f32.mrb[0].mxu0
    %v2481 = vadd.f32 %v2368, %v2480
    %v2482 = vpop.f32.mrb[0].mxu0
    %v2483 = vadd.f32 %v2370, %v2482
    %2484 = vmatprep.mubr.bf16.mxu0 0
    %2485 = vmatmul.mubr.bf16.gmra.mrb[0].mxu0 %v1610
    %v2486 = vpop.f32.mrb[0].mxu0
    %v2487 = vadd.f32 %v2374, %v2486
    %v2488 = vpop.f32.mrb[0].mxu0
    %v2489 = vadd.f32 %v2376, %v2488
    %v2490 = vpop.f32.mrb[0].mxu0
    %v2491 = vadd.f32 %v2378, %v2490
    %v2492 = vpop.f32.mrb[0].mxu0
    %v2493 = vadd.f32 %v2380, %v2492
    %2494 = vmatprep.mubr.bf16.mxu0 0
    %2495 = vmatmul.mubr.bf16.gmra.mrb[0].mxu0 %v1613
    %v2496 = vpop.f32.mrb[0].mxu0
    %v2497 = vadd.f32 %v2384, %v2496
    %v2498 = vpop.f32.mrb[0].mxu0
    %v2499 = vadd.f32 %v2386, %v2498
    %v2500 = vpop.f32.mrb[0].mxu0
    %v2501 = vadd.f32 %v2388, %v2500
    %v2502 = vpop.f32.mrb[0].mxu0
    %v2503 = vadd.f32 %v2390, %v2502
    %2504 = vmatprep.mubr.bf16.mxu0 0
    %2505 = vmatmul.mubr.bf16.gmra.mrb[0].mxu0 %v1616
    %v2506 = vpop.f32.mrb[0].mxu0
    %v2507 = vadd.f32 %v2394, %v2506
    %v2508 = vpop.f32.mrb[0].mxu0
    %v2509 = vadd.f32 %v2396, %v2508
    %v2510 = vpop.f32.mrb[0].mxu0
    %v2511 = vadd.f32 %v2398, %v2510
    %v2512 = vpop.f32.mrb[0].mxu0
    %v2513 = vadd.f32 %v2400, %v2512
    %2514 = vmatprep.mubr.bf16.mxu0 0
    %2515 = vmatmul.mubr.bf16.gmra.mrb[0].mxu0 %v1619
    %v2516 = vpop.f32.mrb[0].mxu0
    %v2517 = vadd.f32 %v2404, %v2516
    %v2518 = vpop.f32.mrb[0].mxu0
    %v2519 = vadd.f32 %v2406, %v2518
    %v2520 = vpop.f32.mrb[0].mxu0
    %v2521 = vadd.f32 %v2408, %v2520
    %v2522 = vpop.f32.mrb[0].mxu0
    %v2523 = vadd.f32 %v2410, %v2522
    %2524 = vdwg.mxu0
    %v2525 = vmax.f32 %v1995, 0.0
    %v2526 = vmax.f32 %v1997, 0.0
    %v2527 = vmax.f32 %v2447, 0.0
    %v2528 = vmax.f32 %v2449, 0.0
    %v2529 = vmax.f32 %v1999, 0.0
    %v2530 = vmax.f32 %v2001, 0.0
    %v2531 = vmax.f32 %v2451, 0.0
    %v2532 = vmax.f32 %v2453, 0.0
    %v2533 = vmax.f32 %v2005, 0.0
    %v2534 = vmax.f32 %v2007, 0.0
    %v2535 = vmax.f32 %v2457, 0.0
    %v2536 = vmax.f32 %v2459, 0.0
    %v2537 = vmax.f32 %v2009, 0.0
    %v2538 = vmax.f32 %v2011, 0.0
    %v2539 = vmax.f32 %v2461, 0.0
    %v2540 = vmax.f32 %v2463, 0.0
    %v2541 = vmax.f32 %v2015, 0.0
    %v2542 = vmax.f32 %v2017, 0.0
    %v2543 = vmax.f32 %v2467, 0.0
    %v2544 = vmax.f32 %v2469, 0.0
    %v2545 = vmax.f32 %v2019, 0.0
    %v2546 = vmax.f32 %v2021, 0.0
    %v2547 = vmax.f32 %v2471, 0.0
    %v2548 = vmax.f32 %v2473, 0.0
    %v2549 = vmax.f32 %v2025, 0.0
    %v2550 = vmax.f32 %v2027, 0.0
    %v2551 = vmax.f32 %v2477, 0.0
    %v2552 = vmax.f32 %v2479, 0.0
    %v2553 = vmax.f32 %v2029, 0.0
    %v2554 = vmax.f32 %v2031, 0.0
    %v2555 = vmax.f32 %v2481, 0.0
    %v2556 = vmax.f32 %v2483, 0.0
    %v2557 = vmax.f32 %v2035, 0.0
    %v2558 = vmax.f32 %v2037, 0.0
    %v2559 = vmax.f32 %v2487, 0.0
    %v2560 = vmax.f32 %v2489, 0.0
    %v2561 = vmax.f32 %v2039, 0.0
    %v2562 = vmax.f32 %v2041, 0.0
    %v2563 = vmax.f32 %v2491, 0.0
    %v2564 = vmax.f32 %v2493, 0.0
    %v2565 = vmax.f32 %v2045, 0.0
    %v2566 = vmax.f32 %v2047, 0.0
    %v2567 = vmax.f32 %v2497, 0.0
    %v2568 = vmax.f32 %v2499, 0.0
    %v2569 = vmax.f32 %v2049, 0.0
    %v2570 = vmax.f32 %v2051, 0.0
    %v2571 = vmax.f32 %v2501, 0.0
    %v2572 = vmax.f32 %v2503, 0.0
    %v2573 = vmax.f32 %v2055, 0.0
    %v2574 = vmax.f32 %v2057, 0.0
    %v2575 = vmax.f32 %v2507, 0.0
    %v2576 = vmax.f32 %v2509, 0.0
    %v2577 = vmax.f32 %v2059, 0.0
    %v2578 = vmax.f32 %v2061, 0.0
    %v2579 = vmax.f32 %v2511, 0.0
    %v2580 = vmax.f32 %v2513, 0.0
    %v2581 = vmax.f32 %v2065, 0.0
    %v2582 = vmax.f32 %v2067, 0.0
    %v2583 = vmax.f32 %v2517, 0.0
    %v2584 = vmax.f32 %v2519, 0.0
    %v2585 = vmax.f32 %v2069, 0.0
    %v2586 = vmax.f32 %v2071, 0.0
    %v2587 = vmax.f32 %v2521, 0.0
    %v2588 = vmax.f32 %v2523, 0.0
    %v2589 = vpack.c.bf16 %v2529, %v2525
    %v2590 = vpack.c.bf16 %v2530, %v2526
    %v2591 = vpack.c.bf16 %v2531, %v2527
    %v2592 = vpack.c.bf16 %v2532, %v2528
    %v2593 = vpack.c.bf16 %v2537, %v2533
    %v2594 = vpack.c.bf16 %v2538, %v2534
    %v2595 = vpack.c.bf16 %v2539, %v2535
    %v2596 = vpack.c.bf16 %v2540, %v2536
    %v2597 = vpack.c.bf16 %v2545, %v2541
    %v2598 = vpack.c.bf16 %v2546, %v2542
    %v2599 = vpack.c.bf16 %v2547, %v2543
    %v2600 = vpack.c.bf16 %v2548, %v2544
    %v2601 = vpack.c.bf16 %v2553, %v2549
    %v2602 = vpack.c.bf16 %v2554, %v2550
    %v2603 = vpack.c.bf16 %v2555, %v2551
    %v2604 = vpack.c.bf16 %v2556, %v2552
    %v2605 = vpack.c.bf16 %v2561, %v2557
    %v2606 = vpack.c.bf16 %v2562, %v2558
    %v2607 = vpack.c.bf16 %v2563, %v2559
    %v2608 = vpack.c.bf16 %v2564, %v2560
    %v2609 = vpack.c.bf16 %v2569, %v2565
    %v2610 = vpack.c.bf16 %v2570, %v2566
    %v2611 = vpack.c.bf16 %v2571, %v2567
    %v2612 = vpack.c.bf16 %v2572, %v2568
    %v2613 = vpack.c.bf16 %v2577, %v2573
    %v2614 = vpack.c.bf16 %v2578, %v2574
    %v2615 = vpack.c.bf16 %v2579, %v2575
    %v2616 = vpack.c.bf16 %v2580, %v2576
    %v2617 = vpack.c.bf16 %v2585, %v2581
    %v2618 = vpack.c.bf16 %v2586, %v2582
    %v2619 = vpack.c.bf16 %v2587, %v2583
    %v2620 = vpack.c.bf16 %v2588, %v2584
    %v2621 = vld [vmem:[%s3] sm:$0xff]
    %v2622 = vld [vmem:[%s3 + $0x8] sm:$0xff]
    %v2623 = vld [vmem:[%s3 + $0x10] sm:$0xff]
    %v2624 = vld [vmem:[%s3 + $0x18] sm:$0xff]
    %v2625 = vld [vmem:[%s3 + $0x20] sm:$0xff]
    %v2626 = vld [vmem:[%s3 + $0x28] sm:$0xff]
    %v2627 = vld [vmem:[%s3 + $0x30] sm:$0xff]
    %v2628 = vld [vmem:[%s3 + $0x38] sm:$0xff]
    %v2629 = vld [vmem:[%s3 + $0x40] sm:$0xff]
    %v2630 = vld [vmem:[%s3 + $0x48] sm:$0xff]
    %v2631 = vld [vmem:[%s3 + $0x50] sm:$0xff]
    %v2632 = vld [vmem:[%s3 + $0x58] sm:$0xff]
    %v2633 = vld [vmem:[%s3 + $0x60] sm:$0xff]
    %v2634 = vld [vmem:[%s3 + $0x68] sm:$0xff]
    %v2635 = vld [vmem:[%s3 + $0x70] sm:$0xff]
    %v2636 = vld [vmem:[%s3 + $0x78] sm:$0xff]
    %v2637 = vld [vmem:[%s3 + $0x80] sm:$0xff]
    %v2638 = vld [vmem:[%s3 + $0x88] sm:$0xff]
    %v2639 = vld [vmem:[%s3 + $0x90] sm:$0xff]
    %v2640 = vld [vmem:[%s3 + $0x98] sm:$0xff]
    %v2641 = vld [vmem:[%s3 + $0xa0] sm:$0xff]
    %v2642 = vld [vmem:[%s3 + $0xa8] sm:$0xff]
    %v2643 = vld [vmem:[%s3 + $0xb0] sm:$0xff]
    %v2644 = vld [vmem:[%s3 + $0xb8] sm:$0xff]
    %v2645 = vld [vmem:[%s3 + $0xc0] sm:$0xff]
    %v2646 = vld [vmem:[%s3 + $0xc8] sm:$0xff]
    %v2647 = vld [vmem:[%s3 + $0xd0] sm:$0xff]
    %v2648 = vld [vmem:[%s3 + $0xd8] sm:$0xff]
    %v2649 = vld [vmem:[%s3 + $0xe0] sm:$0xff]
    %v2650 = vld [vmem:[%s3 + $0xe8] sm:$0xff]
    %v2651 = vld [vmem:[%s3 + $0xf0] sm:$0xff]
    %v2652 = vld [vmem:[%s3 + $0xf8] sm:$0xff]
    %v2653 = vld [vmem:[%s3 + $0x100] sm:$0xff]
    %v2654 = vld [vmem:[%s3 + $0x108] sm:$0xff]
    %v2655 = vld [vmem:[%s3 + $0x110] sm:$0xff]
    %v2656 = vld [vmem:[%s3 + $0x118] sm:$0xff]
    %v2657 = vld [vmem:[%s3 + $0x120] sm:$0xff]
    %v2658 = vld [vmem:[%s3 + $0x128] sm:$0xff]
    %v2659 = vld [vmem:[%s3 + $0x130] sm:$0xff]
    %v2660 = vld [vmem:[%s3 + $0x138] sm:$0xff]
    %v2661 = vld [vmem:[%s3 + $0x140] sm:$0xff]
    %v2662 = vld [vmem:[%s3 + $0x148] sm:$0xff]
    %v2663 = vld [vmem:[%s3 + $0x150] sm:$0xff]
    %v2664 = vld [vmem:[%s3 + $0x158] sm:$0xff]
    %v2665 = vld [vmem:[%s3 + $0x160] sm:$0xff]
    %v2666 = vld [vmem:[%s3 + $0x168] sm:$0xff]
    %v2667 = vld [vmem:[%s3 + $0x170] sm:$0xff]
    %v2668 = vld [vmem:[%s3 + $0x178] sm:$0xff]
    %v2669 = vld [vmem:[%s3 + $0x180] sm:$0xff]
    %v2670 = vld [vmem:[%s3 + $0x188] sm:$0xff]
    %v2671 = vld [vmem:[%s3 + $0x190] sm:$0xff]
    %v2672 = vld [vmem:[%s3 + $0x198] sm:$0xff]
    %v2673 = vld [vmem:[%s3 + $0x1a0] sm:$0xff]
    %v2674 = vld [vmem:[%s3 + $0x1a8] sm:$0xff]
    %v2675 = vld [vmem:[%s3 + $0x1b0] sm:$0xff]
    %v2676 = vld [vmem:[%s3 + $0x1b8] sm:$0xff]
    %v2677 = vld [vmem:[%s3 + $0x1c0] sm:$0xff]
    %v2678 = vld [vmem:[%s3 + $0x1c8] sm:$0xff]
    %v2679 = vld [vmem:[%s3 + $0x1d0] sm:$0xff]
    %v2680 = vld [vmem:[%s3 + $0x1d8] sm:$0xff]
    %v2681 = vld [vmem:[%s3 + $0x1e0] sm:$0xff]
    %v2682 = vld [vmem:[%s3 + $0x1e8] sm:$0xff]
    %v2683 = vld [vmem:[%s3 + $0x1f0] sm:$0xff]
    %v2684 = vld [vmem:[%s3 + $0x1f8] sm:$0xff]
    %v2685 = vld [vmem:[%s4] sm:$0x3]
    %v2687 = vlaneseq
    %v2688 = vshrl.u32 %v2687, 7
    %v2689 = vsub.s32 0, %v2688
    %v2690 = vrot.slane %v2685, %v2689
    %v2691 = vlaneseq
    %v2692 = vshrl.u32 %v2691, 7
    %v2693 = vsub.s32 1, %v2692
    %v2694 = vrot.slane %v2685, %v2693
    %v2761 = vunpack.c.l.b16 %v2621
    %v2762 = vunpack.c.h.b16 %v2621
    %v2763 = vunpack.c.l.b16 %v2622
    %v2764 = vunpack.c.h.b16 %v2622
    %v2765 = vunpack.c.l.b16 %v2623
    %v2766 = vunpack.c.h.b16 %v2623
    %v2767 = vunpack.c.l.b16 %v2624
    %v2768 = vunpack.c.h.b16 %v2624
    %v2769 = vunpack.c.l.b16 %v2625
    %v2770 = vunpack.c.h.b16 %v2625
    %v2771 = vunpack.c.l.b16 %v2626
    %v2772 = vunpack.c.h.b16 %v2626
    %v2773 = vunpack.c.l.b16 %v2627
    %v2774 = vunpack.c.h.b16 %v2627
    %v2775 = vunpack.c.l.b16 %v2628
    %v2776 = vunpack.c.h.b16 %v2628
    %v2777 = vunpack.c.l.b16 %v2629
    %v2778 = vunpack.c.h.b16 %v2629
    %v2779 = vunpack.c.l.b16 %v2630
    %v2780 = vunpack.c.h.b16 %v2630
    %v2781 = vunpack.c.l.b16 %v2631
    %v2782 = vunpack.c.h.b16 %v2631
    %v2783 = vunpack.c.l.b16 %v2632
    %v2784 = vunpack.c.h.b16 %v2632
    %v2785 = vunpack.c.l.b16 %v2633
    %v2786 = vunpack.c.h.b16 %v2633
    %v2787 = vunpack.c.l.b16 %v2634
    %v2788 = vunpack.c.h.b16 %v2634
    %v2789 = vunpack.c.l.b16 %v2635
    %v2790 = vunpack.c.h.b16 %v2635
    %v2791 = vunpack.c.l.b16 %v2636
    %v2792 = vunpack.c.h.b16 %v2636
    %v2793 = vunpack.c.l.b16 %v2637
    %v2794 = vunpack.c.h.b16 %v2637
    %v2795 = vunpack.c.l.b16 %v2638
    %v2796 = vunpack.c.h.b16 %v2638
    %v2797 = vunpack.c.l.b16 %v2639
    %v2798 = vunpack.c.h.b16 %v2639
    %v2799 = vunpack.c.l.b16 %v2640
    %v2800 = vunpack.c.h.b16 %v2640
    %v2801 = vunpack.c.l.b16 %v2641
    %v2802 = vunpack.c.h.b16 %v2641
    %v2803 = vunpack.c.l.b16 %v2642
    %v2804 = vunpack.c.h.b16 %v2642
    %v2805 = vunpack.c.l.b16 %v2643
    %v2806 = vunpack.c.h.b16 %v2643
    %v2807 = vunpack.c.l.b16 %v2644
    %v2808 = vunpack.c.h.b16 %v2644
    %v2809 = vunpack.c.l.b16 %v2645
    %v2810 = vunpack.c.h.b16 %v2645
    %v2811 = vunpack.c.l.b16 %v2646
    %v2812 = vunpack.c.h.b16 %v2646
    %v2813 = vunpack.c.l.b16 %v2647
    %v2814 = vunpack.c.h.b16 %v2647
    %v2815 = vunpack.c.l.b16 %v2648
    %v2816 = vunpack.c.h.b16 %v2648
    %v2817 = vunpack.c.l.b16 %v2649
    %v2818 = vunpack.c.h.b16 %v2649
    %v2819 = vunpack.c.l.b16 %v2650
    %v2820 = vunpack.c.h.b16 %v2650
    %v2821 = vunpack.c.l.b16 %v2651
    %v2822 = vunpack.c.h.b16 %v2651
    %v2823 = vunpack.c.l.b16 %v2652
    %v2824 = vunpack.c.h.b16 %v2652
    %v2825 = vunpack.c.l.b16 %v2653
    %v2826 = vunpack.c.h.b16 %v2653
    %v2827 = vunpack.c.l.b16 %v2654
    %v2828 = vunpack.c.h.b16 %v2654
    %v2829 = vunpack.c.l.b16 %v2655
    %v2830 = vunpack.c.h.b16 %v2655
    %v2831 = vunpack.c.l.b16 %v2656
    %v2832 = vunpack.c.h.b16 %v2656
    %v2833 = vunpack.c.l.b16 %v2657
    %v2834 = vunpack.c.h.b16 %v2657
    %v2835 = vunpack.c.l.b16 %v2658
    %v2836 = vunpack.c.h.b16 %v2658
    %v2837 = vunpack.c.l.b16 %v2659
    %v2838 = vunpack.c.h.b16 %v2659
    %v2839 = vunpack.c.l.b16 %v2660
    %v2840 = vunpack.c.h.b16 %v2660
    %v2841 = vunpack.c.l.b16 %v2661
    %v2842 = vunpack.c.h.b16 %v2661
    %v2843 = vunpack.c.l.b16 %v2662
    %v2844 = vunpack.c.h.b16 %v2662
    %v2845 = vunpack.c.l.b16 %v2663
    %v2846 = vunpack.c.h.b16 %v2663
    %v2847 = vunpack.c.l.b16 %v2664
    %v2848 = vunpack.c.h.b16 %v2664
    %v2849 = vunpack.c.l.b16 %v2665
    %v2850 = vunpack.c.h.b16 %v2665
    %v2851 = vunpack.c.l.b16 %v2666
    %v2852 = vunpack.c.h.b16 %v2666
    %v2853 = vunpack.c.l.b16 %v2667
    %v2854 = vunpack.c.h.b16 %v2667
    %v2855 = vunpack.c.l.b16 %v2668
    %v2856 = vunpack.c.h.b16 %v2668
    %v2857 = vunpack.c.l.b16 %v2669
    %v2858 = vunpack.c.h.b16 %v2669
    %v2859 = vunpack.c.l.b16 %v2670
    %v2860 = vunpack.c.h.b16 %v2670
    %v2861 = vunpack.c.l.b16 %v2671
    %v2862 = vunpack.c.h.b16 %v2671
    %v2863 = vunpack.c.l.b16 %v2672
    %v2864 = vunpack.c.h.b16 %v2672
    %v2865 = vunpack.c.l.b16 %v2673
    %v2866 = vunpack.c.h.b16 %v2673
    %v2867 = vunpack.c.l.b16 %v2674
    %v2868 = vunpack.c.h.b16 %v2674
    %v2869 = vunpack.c.l.b16 %v2675
    %v2870 = vunpack.c.h.b16 %v2675
    %v2871 = vunpack.c.l.b16 %v2676
    %v2872 = vunpack.c.h.b16 %v2676
    %v2873 = vunpack.c.l.b16 %v2677
    %v2874 = vunpack.c.h.b16 %v2677
    %v2875 = vunpack.c.l.b16 %v2678
    %v2876 = vunpack.c.h.b16 %v2678
    %v2877 = vunpack.c.l.b16 %v2679
    %v2878 = vunpack.c.h.b16 %v2679
    %v2879 = vunpack.c.l.b16 %v2680
    %v2880 = vunpack.c.h.b16 %v2680
    %v2881 = vunpack.c.l.b16 %v2681
    %v2882 = vunpack.c.h.b16 %v2681
    %v2883 = vunpack.c.l.b16 %v2682
    %v2884 = vunpack.c.h.b16 %v2682
    %v2885 = vunpack.c.l.b16 %v2683
    %v2886 = vunpack.c.h.b16 %v2683
    %v2887 = vunpack.c.l.b16 %v2684
    %v2888 = vunpack.c.h.b16 %v2684
    %v2889 = vpack.c.b16 %v2763, %v2761
    %v2890 = vpack.c.b16 %v2764, %v2762
    %v2891 = vpack.c.b16 %v2767, %v2765
    %v2892 = vpack.c.b16 %v2768, %v2766
    %v2893 = vpack.c.b16 %v2771, %v2769
    %v2894 = vpack.c.b16 %v2772, %v2770
    %v2895 = vpack.c.b16 %v2775, %v2773
    %v2896 = vpack.c.b16 %v2776, %v2774
    %v2897 = vpack.c.b16 %v2779, %v2777
    %v2898 = vpack.c.b16 %v2780, %v2778
    %v2899 = vpack.c.b16 %v2783, %v2781
    %v2900 = vpack.c.b16 %v2784, %v2782
    %v2901 = vpack.c.b16 %v2787, %v2785
    %v2902 = vpack.c.b16 %v2788, %v2786
    %v2903 = vpack.c.b16 %v2791, %v2789
    %v2904 = vpack.c.b16 %v2792, %v2790
    %v2905 = vpack.c.b16 %v2795, %v2793
    %v2906 = vpack.c.b16 %v2796, %v2794
    %v2907 = vpack.c.b16 %v2799, %v2797
    %v2908 = vpack.c.b16 %v2800, %v2798
    %v2909 = vpack.c.b16 %v2803, %v2801
    %v2910 = vpack.c.b16 %v2804, %v2802
    %v2911 = vpack.c.b16 %v2807, %v2805
    %v2912 = vpack.c.b16 %v2808, %v2806
    %v2913 = vpack.c.b16 %v2811, %v2809
    %v2914 = vpack.c.b16 %v2812, %v2810
    %v2915 = vpack.c.b16 %v2815, %v2813
    %v2916 = vpack.c.b16 %v2816, %v2814
    %v2917 = vpack.c.b16 %v2819, %v2817
    %v2918 = vpack.c.b16 %v2820, %v2818
    %v2919 = vpack.c.b16 %v2823, %v2821
    %v2920 = vpack.c.b16 %v2824, %v2822
    %v2921 = vpack.c.b16 %v2827, %v2825
    %v2922 = vpack.c.b16 %v2828, %v2826
    %v2923 = vpack.c.b16 %v2831, %v2829
    %v2924 = vpack.c.b16 %v2832, %v2830
    %v2925 = vpack.c.b16 %v2835, %v2833
    %v2926 = vpack.c.b16 %v2836, %v2834
    %v2927 = vpack.c.b16 %v2839, %v2837
    %v2928 = vpack.c.b16 %v2840, %v2838
    %v2929 = vpack.c.b16 %v2843, %v2841
    %v2930 = vpack.c.b16 %v2844, %v2842
    %v2931 = vpack.c.b16 %v2847, %v2845
    %v2932 = vpack.c.b16 %v2848, %v2846
    %v2933 = vpack.c.b16 %v2851, %v2849
    %v2934 = vpack.c.b16 %v2852, %v2850
    %v2935 = vpack.c.b16 %v2855, %v2853
    %v2936 = vpack.c.b16 %v2856, %v2854
    %v2937 = vpack.c.b16 %v2859, %v2857
    %v2938 = vpack.c.b16 %v2860, %v2858
    %v2939 = vpack.c.b16 %v2863, %v2861
    %v2940 = vpack.c.b16 %v2864, %v2862
    %v2941 = vpack.c.b16 %v2867, %v2865
    %v2942 = vpack.c.b16 %v2868, %v2866
    %v2943 = vpack.c.b16 %v2871, %v2869
    %v2944 = vpack.c.b16 %v2872, %v2870
    %v2945 = vpack.c.b16 %v2875, %v2873
    %v2946 = vpack.c.b16 %v2876, %v2874
    %v2947 = vpack.c.b16 %v2879, %v2877
    %v2948 = vpack.c.b16 %v2880, %v2878
    %v2949 = vpack.c.b16 %v2883, %v2881
    %v2950 = vpack.c.b16 %v2884, %v2882
    %v2951 = vpack.c.b16 %v2887, %v2885
    %v2952 = vpack.c.b16 %v2888, %v2886
    %3017 = vmatprep.subr.bf16.mxu0 %v2890
    %3018 = vmatpush1.bf16.msra.mxu0 %v2889
    %3019 = vmatprep.subr.bf16.mxu0 %v2892
    %3020 = vmatpush1.bf16.msra.mxu0 %v2891
    %3021 = vmatprep.subr.bf16.mxu0 %v2894
    %3022 = vmatpush1.bf16.msra.mxu0 %v2893
    %3023 = vmatprep.subr.bf16.mxu0 %v2896
    %3024 = vmatpush1.bf16.msra.mxu0 %v2895
    %3025 = vmatprep.subr.bf16.mxu0 %v2898
    %3026 = vmatpush1.bf16.msra.mxu0 %v2897
    %3027 = vmatprep.subr.bf16.mxu0 %v2900
    %3028 = vmatpush1.bf16.msra.mxu0 %v2899
    %3029 = vmatprep.subr.bf16.mxu0 %v2902
    %3030 = vmatpush1.bf16.msra.mxu0 %v2901
    %3031 = vmatprep.subr.bf16.mxu0 %v2904
    %3032 = vmatpush1.bf16.msra.mxu0 %v2903
    %3033 = vmatprep.subr.bf16.mxu0 %v2906
    %3034 = vmatpush1.bf16.msra.mxu0 %v2905
    %3035 = vmatprep.subr.bf16.mxu0 %v2908
    %3036 = vmatpush1.bf16.msra.mxu0 %v2907
    %3037 = vmatprep.subr.bf16.mxu0 %v2910
    %3038 = vmatpush1.bf16.msra.mxu0 %v2909
    %3039 = vmatprep.subr.bf16.mxu0 %v2912
    %3040 = vmatpush1.bf16.msra.mxu0 %v2911
    %3041 = vmatprep.subr.bf16.mxu0 %v2914
    %3042 = vmatpush1.bf16.msra.mxu0 %v2913
    %3043 = vmatprep.subr.bf16.mxu0 %v2916
    %3044 = vmatpush1.bf16.msra.mxu0 %v2915
    %3045 = vmatprep.subr.bf16.mxu0 %v2918
    %3046 = vmatpush1.bf16.msra.mxu0 %v2917
    %3047 = vmatprep.subr.bf16.mxu0 %v2920
    %3048 = vmatpush1.bf16.msra.mxu0 %v2919
    %3049 = vmatprep.mubr.bf16.mxu0 %v2590
    %3050 = vmatmul.mubr.bf16.gmra.mrb[0].mxu0 %v2589
    %v3051 = vpop.f32.mrb[0].mxu0
    %v3052 = vadd.f32 %v2690, %v3051
    %v3053 = vpop.f32.mrb[0].mxu0
    %v3054 = vadd.f32 %v2694, %v3053
    %v3055 = vpop.f32.mrb[0].mxu0
    %v3056 = vadd.f32 %v2690, %v3055
    %v3057 = vpop.f32.mrb[0].mxu0
    %v3058 = vadd.f32 %v2694, %v3057
    %3059 = vmatprep.mubr.bf16.mxu0 %v2594
    %3060 = vmatmul.mubr.bf16.gmra.mrb[0].mxu0 %v2593
    %v3061 = vpop.f32.mrb[0].mxu0
    %v3062 = vadd.f32 %v2690, %v3061
    %v3063 = vpop.f32.mrb[0].mxu0
    %v3064 = vadd.f32 %v2694, %v3063
    %v3065 = vpop.f32.mrb[0].mxu0
    %v3066 = vadd.f32 %v2690, %v3065
    %v3067 = vpop.f32.mrb[0].mxu0
    %v3068 = vadd.f32 %v2694, %v3067
    %3069 = vmatprep.mubr.bf16.mxu0 %v2598
    %3070 = vmatmul.mubr.bf16.gmra.mrb[0].mxu0 %v2597
    %v3071 = vpop.f32.mrb[0].mxu0
    %v3072 = vadd.f32 %v2690, %v3071
    %v3073 = vpop.f32.mrb[0].mxu0
    %v3074 = vadd.f32 %v2694, %v3073
    %v3075 = vpop.f32.mrb[0].mxu0
    %v3076 = vadd.f32 %v2690, %v3075
    %v3077 = vpop.f32.mrb[0].mxu0
    %v3078 = vadd.f32 %v2694, %v3077
    %3079 = vmatprep.mubr.bf16.mxu0 %v2602
    %3080 = vmatmul.mubr.bf16.gmra.mrb[0].mxu0 %v2601
    %v3081 = vpop.f32.mrb[0].mxu0
    %v3082 = vadd.f32 %v2690, %v3081
    %v3083 = vpop.f32.mrb[0].mxu0
    %v3084 = vadd.f32 %v2694, %v3083
    %v3085 = vpop.f32.mrb[0].mxu0
    %v3086 = vadd.f32 %v2690, %v3085
    %v3087 = vpop.f32.mrb[0].mxu0
    %v3088 = vadd.f32 %v2694, %v3087
    %3089 = vmatprep.mubr.bf16.mxu0 %v2606
    %3090 = vmatmul.mubr.bf16.gmra.mrb[0].mxu0 %v2605
    %v3091 = vpop.f32.mrb[0].mxu0
    %v3092 = vadd.f32 %v2690, %v3091
    %v3093 = vpop.f32.mrb[0].mxu0
    %v3094 = vadd.f32 %v2694, %v3093
    %v3095 = vpop.f32.mrb[0].mxu0
    %v3096 = vadd.f32 %v2690, %v3095
    %v3097 = vpop.f32.mrb[0].mxu0
    %v3098 = vadd.f32 %v2694, %v3097
    %3099 = vmatprep.mubr.bf16.mxu0 %v2610
    %3100 = vmatmul.mubr.bf16.gmra.mrb[0].mxu0 %v2609
    %v3101 = vpop.f32.mrb[0].mxu0
    %v3102 = vadd.f32 %v2690, %v3101
    %v3103 = vpop.f32.mrb[0].mxu0
    %v3104 = vadd.f32 %v2694, %v3103
    %v3105 = vpop.f32.mrb[0].mxu0
    %v3106 = vadd.f32 %v2690, %v3105
    %v3107 = vpop.f32.mrb[0].mxu0
    %v3108 = vadd.f32 %v2694, %v3107
    %3109 = vmatprep.mubr.bf16.mxu0 %v2614
    %3110 = vmatmul.mubr.bf16.gmra.mrb[0].mxu0 %v2613
    %v3111 = vpop.f32.mrb[0].mxu0
    %v3112 = vadd.f32 %v2690, %v3111
    %v3113 = vpop.f32.mrb[0].mxu0
    %v3114 = vadd.f32 %v2694, %v3113
    %v3115 = vpop.f32.mrb[0].mxu0
    %v3116 = vadd.f32 %v2690, %v3115
    %v3117 = vpop.f32.mrb[0].mxu0
    %v3118 = vadd.f32 %v2694, %v3117
    %3119 = vmatprep.mubr.bf16.mxu0 %v2618
    %3120 = vmatmul.mubr.bf16.gmra.mrb[0].mxu0 %v2617
    %v3121 = vpop.f32.mrb[0].mxu0
    %v3122 = vadd.f32 %v2690, %v3121
    %v3123 = vpop.f32.mrb[0].mxu0
    %v3124 = vadd.f32 %v2694, %v3123
    %v3125 = vpop.f32.mrb[0].mxu0
    %v3126 = vadd.f32 %v2690, %v3125
    %v3127 = vpop.f32.mrb[0].mxu0
    %v3128 = vadd.f32 %v2694, %v3127
    %3129 = vdwg.mxu0
    %3130 = vmatprep.subr.bf16.mxu0 %v2922
    %3131 = vmatpush1.bf16.msra.mxu0 %v2921
    %3132 = vmatprep.subr.bf16.mxu0 %v2924
    %3133 = vmatpush1.bf16.msra.mxu0 %v2923
    %3134 = vmatprep.subr.bf16.mxu0 %v2926
    %3135 = vmatpush1.bf16.msra.mxu0 %v2925
    %3136 = vmatprep.subr.bf16.mxu0 %v2928
    %3137 = vmatpush1.bf16.msra.mxu0 %v2927
    %3138 = vmatprep.subr.bf16.mxu0 %v2930
    %3139 = vmatpush1.bf16.msra.mxu0 %v2929
    %3140 = vmatprep.subr.bf16.mxu0 %v2932
    %3141 = vmatpush1.bf16.msra.mxu0 %v2931
    %3142 = vmatprep.subr.bf16.mxu0 %v2934
    %3143 = vmatpush1.bf16.msra.mxu0 %v2933
    %3144 = vmatprep.subr.bf16.mxu0 %v2936
    %3145 = vmatpush1.bf16.msra.mxu0 %v2935
    %3146 = vmatprep.subr.bf16.mxu0 %v2938
    %3147 = vmatpush1.bf16.msra.mxu0 %v2937
    %3148 = vmatprep.subr.bf16.mxu0 %v2940
    %3149 = vmatpush1.bf16.msra.mxu0 %v2939
    %3150 = vmatprep.subr.bf16.mxu0 %v2942
    %3151 = vmatpush1.bf16.msra.mxu0 %v2941
    %3152 = vmatprep.subr.bf16.mxu0 %v2944
    %3153 = vmatpush1.bf16.msra.mxu0 %v2943
    %3154 = vmatprep.subr.bf16.mxu0 %v2946
    %3155 = vmatpush1.bf16.msra.mxu0 %v2945
    %3156 = vmatprep.subr.bf16.mxu0 %v2948
    %3157 = vmatpush1.bf16.msra.mxu0 %v2947
    %3158 = vmatprep.subr.bf16.mxu0 %v2950
    %3159 = vmatpush1.bf16.msra.mxu0 %v2949
    %3160 = vmatprep.subr.bf16.mxu0 %v2952
    %3161 = vmatpush1.bf16.msra.mxu0 %v2951
    %3162 = vmatprep.mubr.bf16.mxu0 %v2592
    %3163 = vmatmul.mubr.bf16.gmra.mrb[0].mxu0 %v2591
    %v3164 = vpop.f32.mrb[0].mxu0
    %v3165 = vadd.f32 %v3052, %v3164
    %v3166 = vpop.f32.mrb[0].mxu0
    %v3167 = vadd.f32 %v3054, %v3166
    %v3168 = vpop.f32.mrb[0].mxu0
    %v3169 = vadd.f32 %v3056, %v3168
    %v3170 = vpop.f32.mrb[0].mxu0
    %v3171 = vadd.f32 %v3058, %v3170
    %3172 = vmatprep.mubr.bf16.mxu0 %v2596
    %3173 = vmatmul.mubr.bf16.gmra.mrb[0].mxu0 %v2595
    %v3174 = vpop.f32.mrb[0].mxu0
    %v3175 = vadd.f32 %v3062, %v3174
    %v3176 = vpop.f32.mrb[0].mxu0
    %v3177 = vadd.f32 %v3064, %v3176
    %v3178 = vpop.f32.mrb[0].mxu0
    %v3179 = vadd.f32 %v3066, %v3178
    %v3180 = vpop.f32.mrb[0].mxu0
    %v3181 = vadd.f32 %v3068, %v3180
    %3182 = vmatprep.mubr.bf16.mxu0 %v2600
    %3183 = vmatmul.mubr.bf16.gmra.mrb[0].mxu0 %v2599
    %v3184 = vpop.f32.mrb[0].mxu0
    %v3185 = vadd.f32 %v3072, %v3184
    %v3186 = vpop.f32.mrb[0].mxu0
    %v3187 = vadd.f32 %v3074, %v3186
    %v3188 = vpop.f32.mrb[0].mxu0
    %v3189 = vadd.f32 %v3076, %v3188
    %v3190 = vpop.f32.mrb[0].mxu0
    %v3191 = vadd.f32 %v3078, %v3190
    %3192 = vmatprep.mubr.bf16.mxu0 %v2604
    %3193 = vmatmul.mubr.bf16.gmra.mrb[0].mxu0 %v2603
    %v3194 = vpop.f32.mrb[0].mxu0
    %v3195 = vadd.f32 %v3082, %v3194
    %v3196 = vpop.f32.mrb[0].mxu0
    %v3197 = vadd.f32 %v3084, %v3196
    %v3198 = vpop.f32.mrb[0].mxu0
    %v3199 = vadd.f32 %v3086, %v3198
    %v3200 = vpop.f32.mrb[0].mxu0
    %v3201 = vadd.f32 %v3088, %v3200
    %3202 = vmatprep.mubr.bf16.mxu0 %v2608
    %3203 = vmatmul.mubr.bf16.gmra.mrb[0].mxu0 %v2607
    %v3204 = vpop.f32.mrb[0].mxu0
    %v3205 = vadd.f32 %v3092, %v3204
    %v3206 = vpop.f32.mrb[0].mxu0
    %v3207 = vadd.f32 %v3094, %v3206
    %v3208 = vpop.f32.mrb[0].mxu0
    %v3209 = vadd.f32 %v3096, %v3208
    %v3210 = vpop.f32.mrb[0].mxu0
    %v3211 = vadd.f32 %v3098, %v3210
    %3212 = vmatprep.mubr.bf16.mxu0 %v2612
    %3213 = vmatmul.mubr.bf16.gmra.mrb[0].mxu0 %v2611
    %v3214 = vpop.f32.mrb[0].mxu0
    %v3215 = vadd.f32 %v3102, %v3214
    %v3216 = vpop.f32.mrb[0].mxu0
    %v3217 = vadd.f32 %v3104, %v3216
    %v3218 = vpop.f32.mrb[0].mxu0
    %v3219 = vadd.f32 %v3106, %v3218
    %v3220 = vpop.f32.mrb[0].mxu0
    %v3221 = vadd.f32 %v3108, %v3220
    %3222 = vmatprep.mubr.bf16.mxu0 %v2616
    %3223 = vmatmul.mubr.bf16.gmra.mrb[0].mxu0 %v2615
    %v3224 = vpop.f32.mrb[0].mxu0
    %v3225 = vadd.f32 %v3112, %v3224
    %v3226 = vpop.f32.mrb[0].mxu0
    %v3227 = vadd.f32 %v3114, %v3226
    %v3228 = vpop.f32.mrb[0].mxu0
    %v3229 = vadd.f32 %v3116, %v3228
    %v3230 = vpop.f32.mrb[0].mxu0
    %v3231 = vadd.f32 %v3118, %v3230
    %3232 = vmatprep.mubr.bf16.mxu0 %v2620
    %3233 = vmatmul.mubr.bf16.gmra.mrb[0].mxu0 %v2619
    %v3234 = vpop.f32.mrb[0].mxu0
    %v3235 = vadd.f32 %v3122, %v3234
    %v3236 = vpop.f32.mrb[0].mxu0
    %v3237 = vadd.f32 %v3124, %v3236
    %v3238 = vpop.f32.mrb[0].mxu0
    %v3239 = vadd.f32 %v3126, %v3238
    %v3240 = vpop.f32.mrb[0].mxu0
    %v3241 = vadd.f32 %v3128, %v3240
    %3242 = vdwg.mxu0
    %v3243 = vmax.f32 %v3165, 0.0
    %v3244 = vmax.f32 %v3167, 0.0
    %v3245 = vmax.f32 %v3169, 0.0
    %v3246 = vmax.f32 %v3171, 0.0
    %v3247 = vmax.f32 %v3175, 0.0
    %v3248 = vmax.f32 %v3177, 0.0
    %v3249 = vmax.f32 %v3179, 0.0
    %v3250 = vmax.f32 %v3181, 0.0
    %v3251 = vmax.f32 %v3185, 0.0
    %v3252 = vmax.f32 %v3187, 0.0
    %v3253 = vmax.f32 %v3189, 0.0
    %v3254 = vmax.f32 %v3191, 0.0
    %v3255 = vmax.f32 %v3195, 0.0
    %v3256 = vmax.f32 %v3197, 0.0
    %v3257 = vmax.f32 %v3199, 0.0
    %v3258 = vmax.f32 %v3201, 0.0
    %v3259 = vmax.f32 %v3205, 0.0
    %v3260 = vmax.f32 %v3207, 0.0
    %v3261 = vmax.f32 %v3209, 0.0
    %v3262 = vmax.f32 %v3211, 0.0
    %v3263 = vmax.f32 %v3215, 0.0
    %v3264 = vmax.f32 %v3217, 0.0
    %v3265 = vmax.f32 %v3219, 0.0
    %v3266 = vmax.f32 %v3221, 0.0
    %v3267 = vmax.f32 %v3225, 0.0
    %v3268 = vmax.f32 %v3227, 0.0
    %v3269 = vmax.f32 %v3229, 0.0
    %v3270 = vmax.f32 %v3231, 0.0
    %v3271 = vmax.f32 %v3235, 0.0
    %v3272 = vmax.f32 %v3237, 0.0
    %v3273 = vmax.f32 %v3239, 0.0
    %v3274 = vmax.f32 %v3241, 0.0
    %v3275 = vpack.c.bf16 %v3245, %v3243
    %v3276 = vpack.c.bf16 %v3246, %v3244
    %v3277 = vpack.c.bf16 %v3249, %v3247
    %v3278 = vpack.c.bf16 %v3250, %v3248
    %v3279 = vpack.c.bf16 %v3253, %v3251
    %v3280 = vpack.c.bf16 %v3254, %v3252
    %v3281 = vpack.c.bf16 %v3257, %v3255
    %v3282 = vpack.c.bf16 %v3258, %v3256
    %v3283 = vpack.c.bf16 %v3261, %v3259
    %v3284 = vpack.c.bf16 %v3262, %v3260
    %v3285 = vpack.c.bf16 %v3265, %v3263
    %v3286 = vpack.c.bf16 %v3266, %v3264
    %v3287 = vpack.c.bf16 %v3269, %v3267
    %v3288 = vpack.c.bf16 %v3270, %v3268
    %v3289 = vpack.c.bf16 %v3273, %v3271
    %v3290 = vpack.c.bf16 %v3274, %v3272
    %v3291 = vld [vmem:[%s5] sm:$0xf]
    %v3292 = vld [vmem:[%s5 + $0x4] sm:$0xf]
    %v3293 = vld [vmem:[%s5 + $0x8] sm:$0xf]
    %v3294 = vld [vmem:[%s5 + $0xc] sm:$0xf]
    %v3295 = vld [vmem:[%s5 + $0x10] sm:$0xf]
    %v3296 = vld [vmem:[%s5 + $0x14] sm:$0xf]
    %v3297 = vld [vmem:[%s5 + $0x18] sm:$0xf]
    %v3298 = vld [vmem:[%s5 + $0x1c] sm:$0xf]
    %v3299 = vld [vmem:[%s5 + $0x20] sm:$0xf]
    %v3300 = vld [vmem:[%s5 + $0x24] sm:$0xf]
    %v3301 = vld [vmem:[%s5 + $0x28] sm:$0xf]
    %v3302 = vld [vmem:[%s5 + $0x2c] sm:$0xf]
    %v3303 = vld [vmem:[%s5 + $0x30] sm:$0xf]
    %v3304 = vld [vmem:[%s5 + $0x34] sm:$0xf]
    %v3305 = vld [vmem:[%s5 + $0x38] sm:$0xf]
    %v3306 = vld [vmem:[%s5 + $0x3c] sm:$0xf]
    %v3307 = vld [vmem:[%s5 + $0x40] sm:$0xf]
    %v3308 = vld [vmem:[%s5 + $0x44] sm:$0xf]
    %v3309 = vld [vmem:[%s5 + $0x48] sm:$0xf]
    %v3310 = vld [vmem:[%s5 + $0x4c] sm:$0xf]
    %v3311 = vld [vmem:[%s5 + $0x50] sm:$0xf]
    %v3312 = vld [vmem:[%s5 + $0x54] sm:$0xf]
    %v3313 = vld [vmem:[%s5 + $0x58] sm:$0xf]
    %v3314 = vld [vmem:[%s5 + $0x5c] sm:$0xf]
    %v3315 = vld [vmem:[%s5 + $0x60] sm:$0xf]
    %v3316 = vld [vmem:[%s5 + $0x64] sm:$0xf]
    %v3317 = vld [vmem:[%s5 + $0x68] sm:$0xf]
    %v3318 = vld [vmem:[%s5 + $0x6c] sm:$0xf]
    %v3319 = vld [vmem:[%s5 + $0x70] sm:$0xf]
    %v3320 = vld [vmem:[%s5 + $0x74] sm:$0xf]
    %v3321 = vld [vmem:[%s5 + $0x78] sm:$0xf]
    %v3322 = vld [vmem:[%s5 + $0x7c] sm:$0xf]
    %v3323 = vld [vmem:[%s6] sm:$0x1]
    %v3325 = vlaneseq
    %v3326 = vshrl.u32 %v3325, 7
    %v3327 = vsub.s32 0, %v3326
    %v3328 = vrot.slane %v3323, %v3327
    %v3362 = vunpack.c.l.b16 %v3291
    %v3363 = vunpack.c.l.b16 %v3292
    %v3364 = vunpack.c.l.b16 %v3293
    %v3365 = vunpack.c.l.b16 %v3294
    %v3366 = vunpack.c.l.b16 %v3295
    %v3367 = vunpack.c.l.b16 %v3296
    %v3368 = vunpack.c.l.b16 %v3297
    %v3369 = vunpack.c.l.b16 %v3298
    %v3370 = vunpack.c.l.b16 %v3299
    %v3371 = vunpack.c.l.b16 %v3300
    %v3372 = vunpack.c.l.b16 %v3301
    %v3373 = vunpack.c.l.b16 %v3302
    %v3374 = vunpack.c.l.b16 %v3303
    %v3375 = vunpack.c.l.b16 %v3304
    %v3376 = vunpack.c.l.b16 %v3305
    %v3377 = vunpack.c.l.b16 %v3306
    %v3378 = vunpack.c.l.b16 %v3307
    %v3379 = vunpack.c.l.b16 %v3308
    %v3380 = vunpack.c.l.b16 %v3309
    %v3381 = vunpack.c.l.b16 %v3310
    %v3382 = vunpack.c.l.b16 %v3311
    %v3383 = vunpack.c.l.b16 %v3312
    %v3384 = vunpack.c.l.b16 %v3313
    %v3385 = vunpack.c.l.b16 %v3314
    %v3386 = vunpack.c.l.b16 %v3315
    %v3387 = vunpack.c.l.b16 %v3316
    %v3388 = vunpack.c.l.b16 %v3317
    %v3389 = vunpack.c.l.b16 %v3318
    %v3390 = vunpack.c.l.b16 %v3319
    %v3391 = vunpack.c.l.b16 %v3320
    %v3392 = vunpack.c.l.b16 %v3321
    %v3393 = vunpack.c.l.b16 %v3322
    %v3394 = vpack.c.b16 %v3363, %v3362
    %v3395 = vpack.c.b16 %v3365, %v3364
    %v3396 = vpack.c.b16 %v3367, %v3366
    %v3397 = vpack.c.b16 %v3369, %v3368
    %v3398 = vpack.c.b16 %v3371, %v3370
    %v3399 = vpack.c.b16 %v3373, %v3372
    %v3400 = vpack.c.b16 %v3375, %v3374
    %v3401 = vpack.c.b16 %v3377, %v3376
    %v3402 = vpack.c.b16 %v3379, %v3378
    %v3403 = vpack.c.b16 %v3381, %v3380
    %v3404 = vpack.c.b16 %v3383, %v3382
    %v3405 = vpack.c.b16 %v3385, %v3384
    %v3406 = vpack.c.b16 %v3387, %v3386
    %v3407 = vpack.c.b16 %v3389, %v3388
    %v3408 = vpack.c.b16 %v3391, %v3390
    %v3409 = vpack.c.b16 %v3393, %v3392
    %3426 = vmatprep.subr.bf16.mxu0 0
    %3427 = vmatpush1.bf16.msra.mxu0 %v3394
    %3428 = vmatprep.subr.bf16.mxu0 0
    %3429 = vmatpush1.bf16.msra.mxu0 %v3395
    %3430 = vmatprep.subr.bf16.mxu0 0
    %3431 = vmatpush1.bf16.msra.mxu0 %v3396
    %3432 = vmatprep.subr.bf16.mxu0 0
    %3433 = vmatpush1.bf16.msra.mxu0 %v3397
    %3434 = vmatprep.subr.bf16.mxu0 0
    %3435 = vmatpush1.bf16.msra.mxu0 %v3398
    %3436 = vmatprep.subr.bf16.mxu0 0
    %3437 = vmatpush1.bf16.msra.mxu0 %v3399
    %3438 = vmatprep.subr.bf16.mxu0 0
    %3439 = vmatpush1.bf16.msra.mxu0 %v3400
    %3440 = vmatprep.subr.bf16.mxu0 0
    %3441 = vmatpush1.bf16.msra.mxu0 %v3401
    %3442 = vmatprep.subr.bf16.mxu0 0
    %3443 = vmatpush1.bf16.msra.mxu0 %v3402
    %3444 = vmatprep.subr.bf16.mxu0 0
    %3445 = vmatpush1.bf16.msra.mxu0 %v3403
    %3446 = vmatprep.subr.bf16.mxu0 0
    %3447 = vmatpush1.bf16.msra.mxu0 %v3404
    %3448 = vmatprep.subr.bf16.mxu0 0
    %3449 = vmatpush1.bf16.msra.mxu0 %v3405
    %3450 = vmatprep.subr.bf16.mxu0 0
    %3451 = vmatpush1.bf16.msra.mxu0 %v3406
    %3452 = vmatprep.subr.bf16.mxu0 0
    %3453 = vmatpush1.bf16.msra.mxu0 %v3407
    %3454 = vmatprep.subr.bf16.mxu0 0
    %3455 = vmatpush1.bf16.msra.mxu0 %v3408
    %3456 = vmatprep.subr.bf16.mxu0 0
    %3457 = vmatpush1.bf16.msra.mxu0 %v3409
    %3458 = vmatprep.mubr.bf16.mxu0 %v3276
    %3459 = vmatmul.mubr.bf16.gmra.mrb[0].mxu0 %v3275
    %v3460 = vpop.f32.mrb[0].mxu0
    %v3461 = vadd.f32 %v3328, %v3460
    %v3462 = vpop.f32.mrb[0].mxu0
    %v3463 = vpop.f32.mrb[0].mxu0
    %v3464 = vadd.f32 %v3328, %v3463
    %v3465 = vpop.f32.mrb[0].mxu0
    %3466 = vmatprep.mubr.bf16.mxu0 %v3278
    %3467 = vmatmul.mubr.bf16.gmra.mrb[0].mxu0 %v3277
    %v3468 = vpop.f32.mrb[0].mxu0
    %v3469 = vadd.f32 %v3328, %v3468
    %v3470 = vpop.f32.mrb[0].mxu0
    %v3471 = vpop.f32.mrb[0].mxu0
    %v3472 = vadd.f32 %v3328, %v3471
    %v3473 = vpop.f32.mrb[0].mxu0
    %3474 = vmatprep.mubr.bf16.mxu0 %v3280
    %3475 = vmatmul.mubr.bf16.gmra.mrb[0].mxu0 %v3279
    %v3476 = vpop.f32.mrb[0].mxu0
    %v3477 = vadd.f32 %v3328, %v3476
    %v3478 = vpop.f32.mrb[0].mxu0
    %v3479 = vpop.f32.mrb[0].mxu0
    %v3480 = vadd.f32 %v3328, %v3479
    %v3481 = vpop.f32.mrb[0].mxu0
    %3482 = vmatprep.mubr.bf16.mxu0 %v3282
    %3483 = vmatmul.mubr.bf16.gmra.mrb[0].mxu0 %v3281
    %v3484 = vpop.f32.mrb[0].mxu0
    %v3485 = vadd.f32 %v3328, %v3484
    %v3486 = vpop.f32.mrb[0].mxu0
    %v3487 = vpop.f32.mrb[0].mxu0
    %v3488 = vadd.f32 %v3328, %v3487
    %v3489 = vpop.f32.mrb[0].mxu0
    %3490 = vmatprep.mubr.bf16.mxu0 %v3284
    %3491 = vmatmul.mubr.bf16.gmra.mrb[0].mxu0 %v3283
    %v3492 = vpop.f32.mrb[0].mxu0
    %v3493 = vadd.f32 %v3328, %v3492
    %v3494 = vpop.f32.mrb[0].mxu0
    %v3495 = vpop.f32.mrb[0].mxu0
    %v3496 = vadd.f32 %v3328, %v3495
    %v3497 = vpop.f32.mrb[0].mxu0
    %3498 = vmatprep.mubr.bf16.mxu0 %v3286
    %3499 = vmatmul.mubr.bf16.gmra.mrb[0].mxu0 %v3285
    %v3500 = vpop.f32.mrb[0].mxu0
    %v3501 = vadd.f32 %v3328, %v3500
    %v3502 = vpop.f32.mrb[0].mxu0
    %v3503 = vpop.f32.mrb[0].mxu0
    %v3504 = vadd.f32 %v3328, %v3503
    %v3505 = vpop.f32.mrb[0].mxu0
    %3506 = vmatprep.mubr.bf16.mxu0 %v3288
    %3507 = vmatmul.mubr.bf16.gmra.mrb[0].mxu0 %v3287
    %v3508 = vpop.f32.mrb[0].mxu0
    %v3509 = vadd.f32 %v3328, %v3508
    %v3510 = vpop.f32.mrb[0].mxu0
    %v3511 = vpop.f32.mrb[0].mxu0
    %v3512 = vadd.f32 %v3328, %v3511
    %v3513 = vpop.f32.mrb[0].mxu0
    %3514 = vmatprep.mubr.bf16.mxu0 %v3290
    %3515 = vmatmul.mubr.bf16.gmra.mrb[0].mxu0 %v3289
    %v3516 = vpop.f32.mrb[0].mxu0
    %v3517 = vadd.f32 %v3328, %v3516
    %v3518 = vpop.f32.mrb[0].mxu0
    %v3519 = vpop.f32.mrb[0].mxu0
    %v3520 = vadd.f32 %v3328, %v3519
    %v3521 = vpop.f32.mrb[0].mxu0
    %3522 = vdwg.mxu0
    %v3523 = vmax.f32 %v3461, 0.0
    %v3524 = vmax.f32 %v3464, 0.0
    %v3525 = vmax.f32 %v3469, 0.0
    %v3526 = vmax.f32 %v3472, 0.0
    %v3527 = vmax.f32 %v3477, 0.0
    %v3528 = vmax.f32 %v3480, 0.0
    %v3529 = vmax.f32 %v3485, 0.0
    %v3530 = vmax.f32 %v3488, 0.0
    %v3531 = vmax.f32 %v3493, 0.0
    %v3532 = vmax.f32 %v3496, 0.0
    %v3533 = vmax.f32 %v3501, 0.0
    %v3534 = vmax.f32 %v3504, 0.0
    %v3535 = vmax.f32 %v3509, 0.0
    %v3536 = vmax.f32 %v3512, 0.0
    %v3537 = vmax.f32 %v3517, 0.0
    %v3538 = vmax.f32 %v3520, 0.0
    %v3539 = vpack.c.bf16 %v3524, %v3523
    %v3540 = vpack.c.bf16 %v3526, %v3525
    %v3541 = vpack.c.bf16 %v3528, %v3527
    %v3542 = vpack.c.bf16 %v3530, %v3529
    %v3543 = vpack.c.bf16 %v3532, %v3531
    %v3544 = vpack.c.bf16 %v3534, %v3533
    %v3545 = vpack.c.bf16 %v3536, %v3535
    %v3546 = vpack.c.bf16 %v3538, %v3537
    %v3547 = vld [vmem:[%s7] sm:$0xf]
    %v3548 = vld [vmem:[%s7 + $0x4] sm:$0xf]
    %v3549 = vld [vmem:[%s7 + $0x8] sm:$0xf]
    %v3550 = vld [vmem:[%s7 + $0xc] sm:$0xf]
    %v3551 = vld [vmem:[%s7 + $0x10] sm:$0xf]
    %v3552 = vld [vmem:[%s7 + $0x14] sm:$0xf]
    %v3553 = vld [vmem:[%s7 + $0x18] sm:$0xf]
    %v3554 = vld [vmem:[%s7 + $0x1c] sm:$0xf]
    %v3555 = vld [vmem:[%s7 + $0x20] sm:$0xf]
    %v3556 = vld [vmem:[%s7 + $0x24] sm:$0xf]
    %v3557 = vld [vmem:[%s7 + $0x28] sm:$0xf]
    %v3558 = vld [vmem:[%s7 + $0x2c] sm:$0xf]
    %v3559 = vld [vmem:[%s7 + $0x30] sm:$0xf]
    %v3560 = vld [vmem:[%s7 + $0x34] sm:$0xf]
    %v3561 = vld [vmem:[%s7 + $0x38] sm:$0xf]
    %v3562 = vld [vmem:[%s7 + $0x3c] sm:$0xf]
    %v3563 = vld [vmem:[%s8] sm:$0x1]
    %v3565 = vlaneseq
    %v3566 = vshrl.u32 %v3565, 7
    %v3567 = vsub.s32 0, %v3566
    %v3568 = vrot.slane %v3563, %v3567
    %v3586 = vunpack.c.l.b16 %v3547
    %v3587 = vunpack.c.l.b16 %v3548
    %v3588 = vunpack.c.l.b16 %v3549
    %v3589 = vunpack.c.l.b16 %v3550
    %v3590 = vunpack.c.l.b16 %v3551
    %v3591 = vunpack.c.l.b16 %v3552
    %v3592 = vunpack.c.l.b16 %v3553
    %v3593 = vunpack.c.l.b16 %v3554
    %v3594 = vunpack.c.l.b16 %v3555
    %v3595 = vunpack.c.l.b16 %v3556
    %v3596 = vunpack.c.l.b16 %v3557
    %v3597 = vunpack.c.l.b16 %v3558
    %v3598 = vunpack.c.l.b16 %v3559
    %v3599 = vunpack.c.l.b16 %v3560
    %v3600 = vunpack.c.l.b16 %v3561
    %v3601 = vunpack.c.l.b16 %v3562
    %v3602 = vpack.c.b16 %v3587, %v3586
    %v3603 = vpack.c.b16 %v3589, %v3588
    %v3604 = vpack.c.b16 %v3591, %v3590
    %v3605 = vpack.c.b16 %v3593, %v3592
    %v3606 = vpack.c.b16 %v3595, %v3594
    %v3607 = vpack.c.b16 %v3597, %v3596
    %v3608 = vpack.c.b16 %v3599, %v3598
    %v3609 = vpack.c.b16 %v3601, %v3600
    %3618 = vmatprep.subr.bf16.mxu0 0
    %3619 = vmatpush1.bf16.msra.mxu0 %v3602
    %3620 = vmatprep.subr.bf16.mxu0 0
    %3621 = vmatpush1.bf16.msra.mxu0 %v3603
    %3622 = vmatprep.subr.bf16.mxu0 0
    %3623 = vmatpush1.bf16.msra.mxu0 %v3604
    %3624 = vmatprep.subr.bf16.mxu0 0
    %3625 = vmatpush1.bf16.msra.mxu0 %v3605
    %3626 = vmatprep.subr.bf16.mxu0 0
    %3627 = vmatpush1.bf16.msra.mxu0 %v3606
    %3628 = vmatprep.subr.bf16.mxu0 0
    %3629 = vmatpush1.bf16.msra.mxu0 %v3607
    %3630 = vmatprep.subr.bf16.mxu0 0
    %3631 = vmatpush1.bf16.msra.mxu0 %v3608
    %3632 = vmatprep.subr.bf16.mxu0 0
    %3633 = vmatpush1.bf16.msra.mxu0 %v3609
    %3634 = vmatprep.subr.bf16.mxu0 0
    %3635 = vmatpush1.bf16.msra.mxu0 0
    %3636 = vmatprep.subr.bf16.mxu0 0
    %3637 = vmatpush1.bf16.msra.mxu0 0
    %3638 = vmatprep.subr.bf16.mxu0 0
    %3639 = vmatpush1.bf16.msra.mxu0 0
    %3640 = vmatprep.subr.bf16.mxu0 0
    %3641 = vmatpush1.bf16.msra.mxu0 0
    %3642 = vmatprep.subr.bf16.mxu0 0
    %3643 = vmatpush1.bf16.msra.mxu0 0
    %3644 = vmatprep.subr.bf16.mxu0 0
    %3645 = vmatpush1.bf16.msra.mxu0 0
    %3646 = vmatprep.subr.bf16.mxu0 0
    %3647 = vmatpush1.bf16.msra.mxu0 0
    %3648 = vmatprep.subr.bf16.mxu0 0
    %3649 = vmatpush1.bf16.msra.mxu0 0
    %3650 = vmatprep.mubr.bf16.mxu0 0
    %3651 = vmatmul.mubr.bf16.gmra.mrb[0].mxu0 %v3539
    %v3652 = vpop.f32.mrb[0].mxu0
    %v3653 = vadd.f32 %v3568, %v3652
    %v3654 = vpop.f32.mrb[0].mxu0
    %v3655 = vpop.f32.mrb[0].mxu0
    %v3656 = vadd.f32 %v3568, %v3655
    %v3657 = vpop.f32.mrb[0].mxu0
    %3658 = vmatprep.mubr.bf16.mxu0 0
    %3659 = vmatmul.mubr.bf16.gmra.mrb[0].mxu0 %v3540
    %v3660 = vpop.f32.mrb[0].mxu0
    %v3661 = vadd.f32 %v3568, %v3660
    %v3662 = vpop.f32.mrb[0].mxu0
    %v3663 = vpop.f32.mrb[0].mxu0
    %v3664 = vadd.f32 %v3568, %v3663
    %v3665 = vpop.f32.mrb[0].mxu0
    %3666 = vmatprep.mubr.bf16.mxu0 0
    %3667 = vmatmul.mubr.bf16.gmra.mrb[0].mxu0 %v3541
    %v3668 = vpop.f32.mrb[0].mxu0
    %v3669 = vadd.f32 %v3568, %v3668
    %v3670 = vpop.f32.mrb[0].mxu0
    %v3671 = vpop.f32.mrb[0].mxu0
    %v3672 = vadd.f32 %v3568, %v3671
    %v3673 = vpop.f32.mrb[0].mxu0
    %3674 = vmatprep.mubr.bf16.mxu0 0
    %3675 = vmatmul.mubr.bf16.gmra.mrb[0].mxu0 %v3542
    %v3676 = vpop.f32.mrb[0].mxu0
    %v3677 = vadd.f32 %v3568, %v3676
    %v3678 = vpop.f32.mrb[0].mxu0
    %v3679 = vpop.f32.mrb[0].mxu0
    %v3680 = vadd.f32 %v3568, %v3679
    %v3681 = vpop.f32.mrb[0].mxu0
    %3682 = vmatprep.mubr.bf16.mxu0 0
    %3683 = vmatmul.mubr.bf16.gmra.mrb[0].mxu0 %v3543
    %v3684 = vpop.f32.mrb[0].mxu0
    %v3685 = vadd.f32 %v3568, %v3684
    %v3686 = vpop.f32.mrb[0].mxu0
    %v3687 = vpop.f32.mrb[0].mxu0
    %v3688 = vadd.f32 %v3568, %v3687
    %v3689 = vpop.f32.mrb[0].mxu0
    %3690 = vmatprep.mubr.bf16.mxu0 0
    %3691 = vmatmul.mubr.bf16.gmra.mrb[0].mxu0 %v3544
    %v3692 = vpop.f32.mrb[0].mxu0
    %v3693 = vadd.f32 %v3568, %v3692
    %v3694 = vpop.f32.mrb[0].mxu0
    %v3695 = vpop.f32.mrb[0].mxu0
    %v3696 = vadd.f32 %v3568, %v3695
    %v3697 = vpop.f32.mrb[0].mxu0
    %3698 = vmatprep.mubr.bf16.mxu0 0
    %3699 = vmatmul.mubr.bf16.gmra.mrb[0].mxu0 %v3545
    %v3700 = vpop.f32.mrb[0].mxu0
    %v3701 = vadd.f32 %v3568, %v3700
    %v3702 = vpop.f32.mrb[0].mxu0
    %v3703 = vpop.f32.mrb[0].mxu0
    %v3704 = vadd.f32 %v3568, %v3703
    %v3705 = vpop.f32.mrb[0].mxu0
    %3706 = vmatprep.mubr.bf16.mxu0 0
    %3707 = vmatmul.mubr.bf16.gmra.mrb[0].mxu0 %v3546
    %v3708 = vpop.f32.mrb[0].mxu0
    %v3709 = vadd.f32 %v3568, %v3708
    %v3710 = vpop.f32.mrb[0].mxu0
    %v3711 = vpop.f32.mrb[0].mxu0
    %v3712 = vadd.f32 %v3568, %v3711
    %v3713 = vpop.f32.mrb[0].mxu0
    %3714 = vdwg.mxu0
    %v3715 = vmax.f32 %v3653, 0.0
    %v3716 = vmax.f32 %v3656, 0.0
    %v3717 = vmax.f32 %v3661, 0.0
    %v3718 = vmax.f32 %v3664, 0.0
    %v3719 = vmax.f32 %v3669, 0.0
    %v3720 = vmax.f32 %v3672, 0.0
    %v3721 = vmax.f32 %v3677, 0.0
    %v3722 = vmax.f32 %v3680, 0.0
    %v3723 = vmax.f32 %v3685, 0.0
    %v3724 = vmax.f32 %v3688, 0.0
    %v3725 = vmax.f32 %v3693, 0.0
    %v3726 = vmax.f32 %v3696, 0.0
    %v3727 = vmax.f32 %v3701, 0.0
    %v3728 = vmax.f32 %v3704, 0.0
    %v3729 = vmax.f32 %v3709, 0.0
    %v3730 = vmax.f32 %v3712, 0.0
    %v3731 = vpack.c.bf16 %v3716, %v3715
    %v3732 = vpack.c.bf16 %v3718, %v3717
    %v3733 = vpack.c.bf16 %v3720, %v3719
    %v3734 = vpack.c.bf16 %v3722, %v3721
    %v3735 = vpack.c.bf16 %v3724, %v3723
    %v3736 = vpack.c.bf16 %v3726, %v3725
    %v3737 = vpack.c.bf16 %v3728, %v3727
    %v3738 = vpack.c.bf16 %v3730, %v3729
    %v3739 = vld [vmem:[%s9] sm:$0xf]
    %v3740 = vld [vmem:[%s9 + $0x4] sm:$0xf]
    %v3741 = vld [vmem:[%s9 + $0x8] sm:$0xf]
    %v3742 = vld [vmem:[%s9 + $0xc] sm:$0xf]
    %v3743 = vld [vmem:[%s9 + $0x10] sm:$0xf]
    %v3744 = vld [vmem:[%s9 + $0x14] sm:$0xf]
    %v3745 = vld [vmem:[%s9 + $0x18] sm:$0xf]
    %v3746 = vld [vmem:[%s9 + $0x1c] sm:$0xf]
    %v3747 = vld [vmem:[%s9 + $0x20] sm:$0xf]
    %v3748 = vld [vmem:[%s9 + $0x24] sm:$0xf]
    %v3749 = vld [vmem:[%s9 + $0x28] sm:$0xf]
    %v3750 = vld [vmem:[%s9 + $0x2c] sm:$0xf]
    %v3751 = vld [vmem:[%s9 + $0x30] sm:$0xf]
    %v3752 = vld [vmem:[%s9 + $0x34] sm:$0xf]
    %v3753 = vld [vmem:[%s9 + $0x38] sm:$0xf]
    %v3754 = vld [vmem:[%s9 + $0x3c] sm:$0xf]
    %v3755 = vld [vmem:[%s10] sm:$0x1]
    %v3757 = vlaneseq
    %v3758 = vshrl.u32 %v3757, 7
    %v3759 = vsub.s32 0, %v3758
    %v3760 = vrot.slane %v3755, %v3759
    %v3778 = vunpack.c.l.b16 %v3739
    %v3779 = vunpack.c.l.b16 %v3740
    %v3780 = vunpack.c.l.b16 %v3741
    %v3781 = vunpack.c.l.b16 %v3742
    %v3782 = vunpack.c.l.b16 %v3743
    %v3783 = vunpack.c.l.b16 %v3744
    %v3784 = vunpack.c.l.b16 %v3745
    %v3785 = vunpack.c.l.b16 %v3746
    %v3786 = vunpack.c.l.b16 %v3747
    %v3787 = vunpack.c.l.b16 %v3748
    %v3788 = vunpack.c.l.b16 %v3749
    %v3789 = vunpack.c.l.b16 %v3750
    %v3790 = vunpack.c.l.b16 %v3751
    %v3791 = vunpack.c.l.b16 %v3752
    %v3792 = vunpack.c.l.b16 %v3753
    %v3793 = vunpack.c.l.b16 %v3754
    %v3794 = vpack.c.b16 %v3779, %v3778
    %v3795 = vpack.c.b16 %v3781, %v3780
    %v3796 = vpack.c.b16 %v3783, %v3782
    %v3797 = vpack.c.b16 %v3785, %v3784
    %v3798 = vpack.c.b16 %v3787, %v3786
    %v3799 = vpack.c.b16 %v3789, %v3788
    %v3800 = vpack.c.b16 %v3791, %v3790
    %v3801 = vpack.c.b16 %v3793, %v3792
    %3810 = vmatprep.subr.bf16.mxu0 0
    %3811 = vmatpush1.bf16.msra.mxu0 %v3794
    %3812 = vmatprep.subr.bf16.mxu0 0
    %3813 = vmatpush1.bf16.msra.mxu0 %v3795
    %3814 = vmatprep.subr.bf16.mxu0 0
    %3815 = vmatpush1.bf16.msra.mxu0 %v3796
    %3816 = vmatprep.subr.bf16.mxu0 0
    %3817 = vmatpush1.bf16.msra.mxu0 %v3797
    %3818 = vmatprep.subr.bf16.mxu0 0
    %3819 = vmatpush1.bf16.msra.mxu0 %v3798
    %3820 = vmatprep.subr.bf16.mxu0 0
    %3821 = vmatpush1.bf16.msra.mxu0 %v3799
    %3822 = vmatprep.subr.bf16.mxu0 0
    %3823 = vmatpush1.bf16.msra.mxu0 %v3800
    %3824 = vmatprep.subr.bf16.mxu0 0
    %3825 = vmatpush1.bf16.msra.mxu0 %v3801
    %3826 = vmatprep.subr.bf16.mxu0 0
    %3827 = vmatpush1.bf16.msra.mxu0 0
    %3828 = vmatprep.subr.bf16.mxu0 0
    %3829 = vmatpush1.bf16.msra.mxu0 0
    %3830 = vmatprep.subr.bf16.mxu0 0
    %3831 = vmatpush1.bf16.msra.mxu0 0
    %3832 = vmatprep.subr.bf16.mxu0 0
    %3833 = vmatpush1.bf16.msra.mxu0 0
    %3834 = vmatprep.subr.bf16.mxu0 0
    %3835 = vmatpush1.bf16.msra.mxu0 0
    %3836 = vmatprep.subr.bf16.mxu0 0
    %3837 = vmatpush1.bf16.msra.mxu0 0
    %3838 = vmatprep.subr.bf16.mxu0 0
    %3839 = vmatpush1.bf16.msra.mxu0 0
    %3840 = vmatprep.subr.bf16.mxu0 0
    %3841 = vmatpush1.bf16.msra.mxu0 0
    %3842 = vmatprep.mubr.bf16.mxu0 0
    %3843 = vmatmul.mubr.bf16.gmra.mrb[0].mxu0 %v3731
    %v3844 = vpop.f32.mrb[0].mxu0
    %v3845 = vadd.f32 %v3760, %v3844
    %v3846 = vpop.f32.mrb[0].mxu0
    %v3847 = vpop.f32.mrb[0].mxu0
    %v3848 = vadd.f32 %v3760, %v3847
    %v3849 = vpop.f32.mrb[0].mxu0
    %3850 = vmatprep.mubr.bf16.mxu0 0
    %3851 = vmatmul.mubr.bf16.gmra.mrb[0].mxu0 %v3732
    %v3852 = vpop.f32.mrb[0].mxu0
    %v3853 = vadd.f32 %v3760, %v3852
    %v3854 = vpop.f32.mrb[0].mxu0
    %v3855 = vpop.f32.mrb[0].mxu0
    %v3856 = vadd.f32 %v3760, %v3855
    %v3857 = vpop.f32.mrb[0].mxu0
    %3858 = vmatprep.mubr.bf16.mxu0 0
    %3859 = vmatmul.mubr.bf16.gmra.mrb[0].mxu0 %v3733
    %v3860 = vpop.f32.mrb[0].mxu0
    %v3861 = vadd.f32 %v3760, %v3860
    %v3862 = vpop.f32.mrb[0].mxu0
    %v3863 = vpop.f32.mrb[0].mxu0
    %v3864 = vadd.f32 %v3760, %v3863
    %v3865 = vpop.f32.mrb[0].mxu0
    %3866 = vmatprep.mubr.bf16.mxu0 0
    %3867 = vmatmul.mubr.bf16.gmra.mrb[0].mxu0 %v3734
    %v3868 = vpop.f32.mrb[0].mxu0
    %v3869 = vadd.f32 %v3760, %v3868
    %v3870 = vpop.f32.mrb[0].mxu0
    %v3871 = vpop.f32.mrb[0].mxu0
    %v3872 = vadd.f32 %v3760, %v3871
    %v3873 = vpop.f32.mrb[0].mxu0
    %3874 = vmatprep.mubr.bf16.mxu0 0
    %3875 = vmatmul.mubr.bf16.gmra.mrb[0].mxu0 %v3735
    %v3876 = vpop.f32.mrb[0].mxu0
    %v3877 = vadd.f32 %v3760, %v3876
    %v3878 = vpop.f32.mrb[0].mxu0
    %v3879 = vpop.f32.mrb[0].mxu0
    %v3880 = vadd.f32 %v3760, %v3879
    %v3881 = vpop.f32.mrb[0].mxu0
    %3882 = vmatprep.mubr.bf16.mxu0 0
    %3883 = vmatmul.mubr.bf16.gmra.mrb[0].mxu0 %v3736
    %v3884 = vpop.f32.mrb[0].mxu0
    %v3885 = vadd.f32 %v3760, %v3884
    %v3886 = vpop.f32.mrb[0].mxu0
    %v3887 = vpop.f32.mrb[0].mxu0
    %v3888 = vadd.f32 %v3760, %v3887
    %v3889 = vpop.f32.mrb[0].mxu0
    %3890 = vmatprep.mubr.bf16.mxu0 0
    %3891 = vmatmul.mubr.bf16.gmra.mrb[0].mxu0 %v3737
    %v3892 = vpop.f32.mrb[0].mxu0
    %v3893 = vadd.f32 %v3760, %v3892
    %v3894 = vpop.f32.mrb[0].mxu0
    %v3895 = vpop.f32.mrb[0].mxu0
    %v3896 = vadd.f32 %v3760, %v3895
    %v3897 = vpop.f32.mrb[0].mxu0
    %3898 = vmatprep.mubr.bf16.mxu0 0
    %3899 = vmatmul.mubr.bf16.gmra.mrb[0].mxu0 %v3738
    %v3900 = vpop.f32.mrb[0].mxu0
    %v3901 = vadd.f32 %v3760, %v3900
    %v3902 = vpop.f32.mrb[0].mxu0
    %v3903 = vpop.f32.mrb[0].mxu0
    %v3904 = vadd.f32 %v3760, %v3903
    %v3905 = vpop.f32.mrb[0].mxu0
    %3906 = vdwg.mxu0
    %3907 = vmax.xlane.f32.xlu0 %v3845
    %v3908 = vpop.xlane.xlu0 %3907
    %3909 = vmax.xlane.f32.xlu0 %v3848
    %v3910 = vpop.xlane.xlu0 %3909
    %3911 = vmax.xlane.f32.xlu0 %v3853
    %v3912 = vpop.xlane.xlu0 %3911
    %3913 = vmax.xlane.f32.xlu0 %v3856
    %v3914 = vpop.xlane.xlu0 %3913
    %3915 = vmax.xlane.f32.xlu0 %v3861
    %v3916 = vpop.xlane.xlu0 %3915
    %3917 = vmax.xlane.f32.xlu0 %v3864
    %v3918 = vpop.xlane.xlu0 %3917
    %3919 = vmax.xlane.f32.xlu0 %v3869
    %v3920 = vpop.xlane.xlu0 %3919
    %3921 = vmax.xlane.f32.xlu0 %v3872
    %v3922 = vpop.xlane.xlu0 %3921
    %3923 = vmax.xlane.f32.xlu0 %v3877
    %v3924 = vpop.xlane.xlu0 %3923
    %3925 = vmax.xlane.f32.xlu0 %v3880
    %v3926 = vpop.xlane.xlu0 %3925
    %3927 = vmax.xlane.f32.xlu0 %v3885
    %v3928 = vpop.xlane.xlu0 %3927
    %3929 = vmax.xlane.f32.xlu0 %v3888
    %v3930 = vpop.xlane.xlu0 %3929
    %3931 = vmax.xlane.f32.xlu0 %v3893
    %v3932 = vpop.xlane.xlu0 %3931
    %3933 = vmax.xlane.f32.xlu0 %v3896
    %v3934 = vpop.xlane.xlu0 %3933
    %3935 = vmax.xlane.f32.xlu0 %v3901
    %v3936 = vpop.xlane.xlu0 %3935
    %3937 = vmax.xlane.f32.xlu0 %v3904
    %v3938 = vpop.xlane.xlu0 %3937
    %v3939 = vsub.f32 %v3845, %v3908
    %v3940 = vsub.f32 %v3848, %v3910
    %v3941 = vsub.f32 %v3853, %v3912
    %v3942 = vsub.f32 %v3856, %v3914
    %v3943 = vsub.f32 %v3861, %v3916
    %v3944 = vsub.f32 %v3864, %v3918
    %v3945 = vsub.f32 %v3869, %v3920
    %v3946 = vsub.f32 %v3872, %v3922
    %v3947 = vsub.f32 %v3877, %v3924
    %v3948 = vsub.f32 %v3880, %v3926
    %v3949 = vsub.f32 %v3885, %v3928
    %v3950 = vsub.f32 %v3888, %v3930
    %v3951 = vsub.f32 %v3893, %v3932
    %v3952 = vsub.f32 %v3896, %v3934
    %v3953 = vsub.f32 %v3901, %v3936
    %v3954 = vsub.f32 %v3904, %v3938
    %v3955 = vmul.f32 %v3939, 1.442695
    %v3956 = vpow.pop %v3955
    %v3957 = vmul.f32 %v3940, 1.442695
    %v3958 = vpow.pop %v3957
    %v3959 = vmul.f32 %v3941, 1.442695
    %v3960 = vpow.pop %v3959
    %v3961 = vmul.f32 %v3942, 1.442695
    %v3962 = vpow.pop %v3961
    %v3963 = vmul.f32 %v3943, 1.442695
    %v3964 = vpow.pop %v3963
    %v3965 = vmul.f32 %v3944, 1.442695
    %v3966 = vpow.pop %v3965
    %v3967 = vmul.f32 %v3945, 1.442695
    %v3968 = vpow.pop %v3967
    %v3969 = vmul.f32 %v3946, 1.442695
    %v3970 = vpow.pop %v3969
    %v3971 = vmul.f32 %v3947, 1.442695
    %v3972 = vpow.pop %v3971
    %v3973 = vmul.f32 %v3948, 1.442695
    %v3974 = vpow.pop %v3973
    %v3975 = vmul.f32 %v3949, 1.442695
    %v3976 = vpow.pop %v3975
    %v3977 = vmul.f32 %v3950, 1.442695
    %v3978 = vpow.pop %v3977
    %v3979 = vmul.f32 %v3951, 1.442695
    %v3980 = vpow.pop %v3979
    %v3981 = vmul.f32 %v3952, 1.442695
    %v3982 = vpow.pop %v3981
    %v3983 = vmul.f32 %v3953, 1.442695
    %v3984 = vpow.pop %v3983
    %v3985 = vmul.f32 %v3954, 1.442695
    %v3986 = vpow.pop %v3985
    %3987 = vadd.xlane.f32.xlu0 %v3956
    %v3988 = vpop.xlane.xlu0 %3987
    %3989 = vadd.xlane.f32.xlu0 %v3958
    %v3990 = vpop.xlane.xlu0 %3989
    %3991 = vadd.xlane.f32.xlu0 %v3960
    %v3992 = vpop.xlane.xlu0 %3991
    %3993 = vadd.xlane.f32.xlu0 %v3962
    %v3994 = vpop.xlane.xlu0 %3993
    %3995 = vadd.xlane.f32.xlu0 %v3964
    %v3996 = vpop.xlane.xlu0 %3995
    %3997 = vadd.xlane.f32.xlu0 %v3966
    %v3998 = vpop.xlane.xlu0 %3997
    %3999 = vadd.xlane.f32.xlu0 %v3968
    %v4000 = vpop.xlane.xlu0 %3999
    %4001 = vadd.xlane.f32.xlu0 %v3970
    %v4002 = vpop.xlane.xlu0 %4001
    %4003 = vadd.xlane.f32.xlu0 %v3972
    %v4004 = vpop.xlane.xlu0 %4003
    %4005 = vadd.xlane.f32.xlu0 %v3974
    %v4006 = vpop.xlane.xlu0 %4005
    %4007 = vadd.xlane.f32.xlu0 %v3976
    %v4008 = vpop.xlane.xlu0 %4007
    %4009 = vadd.xlane.f32.xlu0 %v3978
    %v4010 = vpop.xlane.xlu0 %4009
    %4011 = vadd.xlane.f32.xlu0 %v3980
    %v4012 = vpop.xlane.xlu0 %4011
    %4013 = vadd.xlane.f32.xlu0 %v3982
    %v4014 = vpop.xlane.xlu0 %4013
    %4015 = vadd.xlane.f32.xlu0 %v3984
    %v4016 = vpop.xlane.xlu0 %4015
    %4017 = vadd.xlane.f32.xlu0 %v3986
    %v4018 = vpop.xlane.xlu0 %4017
    %v4019 = vlog2.pop %v3988
    %v4020 = vmul.f32 %v4019, 0.6931472
    %v4021 = vlog2.pop %v3990
    %v4022 = vmul.f32 %v4021, 0.6931472
    %v4023 = vlog2.pop %v3992
    %v4024 = vmul.f32 %v4023, 0.6931472
    %v4025 = vlog2.pop %v3994
    %v4026 = vmul.f32 %v4025, 0.6931472
    %v4027 = vlog2.pop %v3996
    %v4028 = vmul.f32 %v4027, 0.6931472
    %v4029 = vlog2.pop %v3998
    %v4030 = vmul.f32 %v4029, 0.6931472
    %v4031 = vlog2.pop %v4000
    %v4032 = vmul.f32 %v4031, 0.6931472
    %v4033 = vlog2.pop %v4002
    %v4034 = vmul.f32 %v4033, 0.6931472
    %v4035 = vlog2.pop %v4004
    %v4036 = vmul.f32 %v4035, 0.6931472
    %v4037 = vlog2.pop %v4006
    %v4038 = vmul.f32 %v4037, 0.6931472
    %v4039 = vlog2.pop %v4008
    %v4040 = vmul.f32 %v4039, 0.6931472
    %v4041 = vlog2.pop %v4010
    %v4042 = vmul.f32 %v4041, 0.6931472
    %v4043 = vlog2.pop %v4012
    %v4044 = vmul.f32 %v4043, 0.6931472
    %v4045 = vlog2.pop %v4014
    %v4046 = vmul.f32 %v4045, 0.6931472
    %v4047 = vlog2.pop %v4016
    %v4048 = vmul.f32 %v4047, 0.6931472
    %v4049 = vlog2.pop %v4018
    %v4050 = vmul.f32 %v4049, 0.6931472
    %v4051 = vsub.f32 %v3939, %v4020
    %v4052 = vsub.f32 %v3940, %v4022
    %v4053 = vsub.f32 %v3941, %v4024
    %v4054 = vsub.f32 %v3942, %v4026
    %v4055 = vsub.f32 %v3943, %v4028
    %v4056 = vsub.f32 %v3944, %v4030
    %v4057 = vsub.f32 %v3945, %v4032
    %v4058 = vsub.f32 %v3946, %v4034
    %v4059 = vsub.f32 %v3947, %v4036
    %v4060 = vsub.f32 %v3948, %v4038
    %v4061 = vsub.f32 %v3949, %v4040
    %v4062 = vsub.f32 %v3950, %v4042
    %v4063 = vsub.f32 %v3951, %v4044
    %v4064 = vsub.f32 %v3952, %v4046
    %v4065 = vsub.f32 %v3953, %v4048
    %v4066 = vsub.f32 %v3954, %v4050
    %4067 = vst [vmem:[#allocation5] sm:$0xff] %v4051
    %4068 = vst [vmem:[#allocation5 + $0x8] sm:$0xff] %v4052
    %4069 = vst [vmem:[#allocation5 + $0x10] sm:$0xff] %v4053
    %4070 = vst [vmem:[#allocation5 + $0x18] sm:$0xff] %v4054
    %4071 = vst [vmem:[#allocation5 + $0x20] sm:$0xff] %v4055
    %4072 = vst [vmem:[#allocation5 + $0x28] sm:$0xff] %v4056
    %4073 = vst [vmem:[#allocation5 + $0x30] sm:$0xff] %v4057
    %4074 = vst [vmem:[#allocation5 + $0x38] sm:$0xff] %v4058
    %4075 = vst [vmem:[#allocation5 + $0x40] sm:$0xff] %v4059
    %4076 = vst [vmem:[#allocation5 + $0x48] sm:$0xff] %v4060
    %4077 = vst [vmem:[#allocation5 + $0x50] sm:$0xff] %v4061
    %4078 = vst [vmem:[#allocation5 + $0x58] sm:$0xff] %v4062
    %4079 = vst [vmem:[#allocation5 + $0x60] sm:$0xff] %v4063
    %4080 = vst [vmem:[#allocation5 + $0x68] sm:$0xff] %v4064
    %4081 = vst [vmem:[#allocation5 + $0x70] sm:$0xff] %v4065
    %4082 = vst [vmem:[#allocation5 + $0x78] sm:$0xff] %v4066
    // Predicated region
    $region50: #{tpu_custom_call.1} parent=1 // pred_check
      _
    $region51: #{tpu_custom_call.1} parent=1 // pred_check_branch
      %4084 = sbr.rel (0) target = $region53
    $region52: #{tpu_custom_call.1} parent=1 // pred_region
      %s4086 = ssub.s32 2048, 2048
      %4087 = vsyncadd [#allocation4], %s4086
      %s4088 = sshll.u32 [#allocation5], 4
      %s4089 = int_to_ptr.vmem [resolvable:$true] %s4088
      %4094 = dma.vmem_to_hbm [thread:$0]  %s4089, 2048, %s11, [#allocation4], 128, 128, 8
    $region53: #{tpu_custom_call.1} parent=1 // pred_fallthru
      _
    // Predicated region
    $region54: #{tpu_custom_call.1} parent=1 // pred_check
      _
    $region55: #{tpu_custom_call.1} parent=1 // pred_check_branch
      %4096 = sbr.rel (0) target = $region57
    $region56: #{tpu_custom_call.1} parent=1 // pred_region
      %4097 = dma.done [#allocation4], 2048
    $region57: #{tpu_custom_call.1} parent=1 // pred_fallthru
      _
    %4098 = vsyncpa [#allocation3], 1
    %4099 = vsyncpa [#allocation4], 1

// kernel: tpu_custom_call.1
$region0: #{tpu_custom_call.1}
  #allocation0 [shape = 'u32[]', space=smem, size = 0x4, offset = 0x4, fixed_abs, tag = 'smem constant byte address 0x4 - core index']
  #allocation1 [shape = 'u32[144,128]{1,0:T(1,128)}', space=vmem, size = 0x12000, scoped, tag = 'internal scratch']
  %s0 = inlined_call_operand.vmem [shape: bf16[128,784], index: 0, kind: input, shape index: {}]
  %s1 = inlined_call_operand.hbm [shape: bf16[784,512], index: 1, kind: input, shape index: {}]
  %s2 = inlined_call_operand.vmem [shape: f32[1,512], index: 2, kind: input, shape index: {}]
  %s3 = inlined_call_operand.vmem [shape: bf16[512,256], index: 3, kind: input, shape index: {}]
  %s4 = inlined_call_operand.vmem [shape: f32[1,256], index: 4, kind: input, shape index: {}]
  %s5 = inlined_call_operand.vmem [shape: bf16[256,128], index: 5, kind: input, shape index: {}]
  %s6 = inlined_call_operand.vmem [shape: f32[1,128], index: 6, kind: input, shape index: {}]
  %s7 = inlined_call_operand.vmem [shape: bf16[128,128], index: 7, kind: input, shape index: {}]
  %s8 = inlined_call_operand.vmem [shape: f32[1,128], index: 8, kind: input, shape index: {}]
  %s9 = inlined_call_operand.vmem [shape: bf16[128,128], index: 9, kind: input, shape index: {}]
  %s10 = inlined_call_operand.vmem [shape: f32[1,128], index: 10, kind: input, shape index: {}]
  %s11 = inlined_call_operand.hbm [shape: f32[128,128], index: 11, kind: output, shape index: {}]
  %s12 = sld [smem:[#allocation0]]
  $region58: #{tpu_custom_call.1} parent=0
    _
  %s14 = ssub.s32 1, %s12
  %s15 = scalar_select 0, %s14, %s12
  $region1: #{tpu_custom_call.1} parent=0
    #allocation2 [shape = 'u8[802816]{0}', space=vmem, size = 0xc4000, scoped, tag = 'input window, operand 1, single buffered']
    #allocation3 [shape = 's32[1]{0}', space=sflag, size = 0x4, scoped, tag = 'scoped memory for tpu_custom_call.1']
    #allocation4 [shape = 's32[1]{0}', space=sflag, size = 0x4, scoped, tag = 'scoped memory for tpu_custom_call.1']
    #allocation5 [shape = 'u8[65536]{0}', space=vmem, size = 0x10000, scoped, tag = 'output window, operand 0, single buffered']
    %16 = vsyncpa [#allocation3], 0
    %17 = vsyncpa [#allocation4], 0
    // Predicated region
    $region2: #{tpu_custom_call.1} parent=1 // pred_check
      _
    $region3: #{tpu_custom_call.1} parent=1 // pred_check_branch
      %19 = sbr.rel (0) target = $region5
    $region4: #{tpu_custom_call.1} parent=1 // pred_region
      _
    $region5: #{tpu_custom_call.1} parent=1 // pred_fallthru
      _
    // Predicated region
    $region6: #{tpu_custom_call.1} parent=1 // pred_check
      _
    $region7: #{tpu_custom_call.1} parent=1 // pred_check_branch
      %21 = sbr.rel (0) target = $region9
    $region8: #{tpu_custom_call.1} parent=1 // pred_region
      %s23 = ssub.s32 25088, 25088
      %24 = vsyncadd [#allocation3], %s23
      %s25 = sshll.u32 [#allocation2], 4
      %s26 = int_to_ptr.vmem [resolvable:$true] %s25
      %31 = dma.hbm_to_vmem [thread:$0]  %s1, 25088, %s26, [#allocation3], 256, 256, 16
    $region9: #{tpu_custom_call.1} parent=1 // pred_fallthru
      _
    // Predicated region
    $region10: #{tpu_custom_call.1} parent=1 // pred_check
      _
    $region11: #{tpu_custom_call.1} parent=1 // pred_check_branch
      %33 = sbr.rel (0) target = $region13
    $region12: #{tpu_custom_call.1} parent=1 // pred_region
      _
    $region13: #{tpu_custom_call.1} parent=1 // pred_fallthru
      _
    // Predicated region
    $region14: #{tpu_custom_call.1} parent=1 // pred_check
      _
    $region15: #{tpu_custom_call.1} parent=1 // pred_check_branch
      %35 = sbr.rel (0) target = $region17
    $region16: #{tpu_custom_call.1} parent=1 // pred_region
      _
    $region17: #{tpu_custom_call.1} parent=1 // pred_fallthru
      _
    // Predicated region
    $region18: #{tpu_custom_call.1} parent=1 // pred_check
      _
    $region19: #{tpu_custom_call.1} parent=1 // pred_check_branch
      %37 = sbr.rel (0) target = $region21
    $region20: #{tpu_custom_call.1} parent=1 // pred_region
      _
    $region21: #{tpu_custom_call.1} parent=1 // pred_fallthru
      _
    // Predicated region
    $region22: #{tpu_custom_call.1} parent=1 // pred_check
      _
    $region23: #{tpu_custom_call.1} parent=1 // pred_check_branch
      %39 = sbr.rel (0) target = $region25
    $region24: #{tpu_custom_call.1} parent=1 // pred_region
      _
    $region25: #{tpu_custom_call.1} parent=1 // pred_fallthru
      _
    // Predicated region
    $region26: #{tpu_custom_call.1} parent=1 // pred_check
      _
    $region27: #{tpu_custom_call.1} parent=1 // pred_check_branch
      %41 = sbr.rel (0) target = $region29
    $region28: #{tpu_custom_call.1} parent=1 // pred_region
      _
    $region29: #{tpu_custom_call.1} parent=1 // pred_fallthru
      _
    // Predicated region
    $region30: #{tpu_custom_call.1} parent=1 // pred_check
      _
    $region31: #{tpu_custom_call.1} parent=1 // pred_check_branch
      %43 = sbr.rel (0) target = $region33
    $region32: #{tpu_custom_call.1} parent=1 // pred_region
      _
    $region33: #{tpu_custom_call.1} parent=1 // pred_fallthru
      _
    // Predicated region
    $region34: #{tpu_custom_call.1} parent=1 // pred_check
      _
    $region35: #{tpu_custom_call.1} parent=1 // pred_check_branch
      %45 = sbr.rel (0) target = $region37
    $region36: #{tpu_custom_call.1} parent=1 // pred_region
      _
    $region37: #{tpu_custom_call.1} parent=1 // pred_fallthru
      _
    // Predicated region
    $region38: #{tpu_custom_call.1} parent=1 // pred_check
      _
    $region39: #{tpu_custom_call.1} parent=1 // pred_check_branch
      %47 = sbr.rel (0) target = $region41
    $region40: #{tpu_custom_call.1} parent=1 // pred_region
      _
    $region41: #{tpu_custom_call.1} parent=1 // pred_fallthru
      _
    // Predicated region
    $region42: #{tpu_custom_call.1} parent=1 // pred_check
      _
    $region43: #{tpu_custom_call.1} parent=1 // pred_check_branch
      %49 = sbr.rel (0) target = $region45
    $region44: #{tpu_custom_call.1} parent=1 // pred_region
      _
    $region45: #{tpu_custom_call.1} parent=1 // pred_fallthru
      _
    // Predicated region
    $region46: #{tpu_custom_call.1} parent=1 // pred_check
      _
    $region47: #{tpu_custom_call.1} parent=1 // pred_check_branch
      %51 = sbr.rel (0) target = $region49
    $region48: #{tpu_custom_call.1} parent=1 // pred_region
      %52 = dma.done [#allocation3], 25088
    $region49: #{tpu_custom_call.1} parent=1 // pred_fallthru
      _
    %v54 = vld [vmem:[%s0] sm:$0xff]
    %v55 = vld [vmem:[%s0 + $0x8] sm:$0xff]
    %v56 = vld [vmem:[%s0 + $0x10] sm:$0xff]
    %v57 = vld [vmem:[%s0 + $0x18] sm:$0xf]
    %v58 = vld [vmem:[%s0 + $0x1c] sm:$0xff]
    %v59 = vld [vmem:[%s0 + $0x24] sm:$0xff]
    %v60 = vld [vmem:[%s0 + $0x2c] sm:$0xff]
    %v61 = vld [vmem:[%s0 + $0x34] sm:$0xf]
    %v62 = vld [vmem:[%s0 + $0x38] sm:$0xff]
    %v63 = vld [vmem:[%s0 + $0x40] sm:$0xff]
    %v64 = vld [vmem:[%s0 + $0x48] sm:$0xff]
    %v65 = vld [vmem:[%s0 + $0x50] sm:$0xf]
    %v66 = vld [vmem:[%s0 + $0x54] sm:$0xff]
    %v67 = vld [vmem:[%s0 + $0x5c] sm:$0xff]
    %v68 = vld [vmem:[%s0 + $0x64] sm:$0xff]
    %v69 = vld [vmem:[%s0 + $0x6c] sm:$0xf]
    %v70 = vld [vmem:[%s0 + $0x70] sm:$0xff]
    %v71 = vld [vmem:[%s0 + $0x78] sm:$0xff]
    %v72 = vld [vmem:[%s0 + $0x80] sm:$0xff]
    %v73 = vld [vmem:[%s0 + $0x88] sm:$0xf]
    %v74 = vld [vmem:[%s0 + $0x8c] sm:$0xff]
    %v75 = vld [vmem:[%s0 + $0x94] sm:$0xff]
    %v76 = vld [vmem:[%s0 + $0x9c] sm:$0xff]
    %v77 = vld [vmem:[%s0 + $0xa4] sm:$0xf]
    %v78 = vld [vmem:[%s0 + $0xa8] sm:$0xff]
    %v79 = vld [vmem:[%s0 + $0xb0] sm:$0xff]
    %v80 = vld [vmem:[%s0 + $0xb8] sm:$0xff]
    %v81 = vld [vmem:[%s0 + $0xc0] sm:$0xf]
    %v82 = vld [vmem:[%s0 + $0xc4] sm:$0xff]
    %v83 = vld [vmem:[%s0 + $0xcc] sm:$0xff]
    %v84 = vld [vmem:[%s0 + $0xd4] sm:$0xff]
    %v85 = vld [vmem:[%s0 + $0xdc] sm:$0xf]
    %v86 = vld [vmem:[%s0 + $0xe0] sm:$0xff]
    %v87 = vld [vmem:[%s0 + $0xe8] sm:$0xff]
    %v88 = vld [vmem:[%s0 + $0xf0] sm:$0xff]
    %v89 = vld [vmem:[%s0 + $0xf8] sm:$0xf]
    %v90 = vld [vmem:[%s0 + $0xfc] sm:$0xff]
    %v91 = vld [vmem:[%s0 + $0x104] sm:$0xff]
    %v92 = vld [vmem:[%s0 + $0x10c] sm:$0xff]
    %v93 = vld [vmem:[%s0 + $0x114] sm:$0xf]
    %v94 = vld [vmem:[%s0 + $0x118] sm:$0xff]
    %v95 = vld [vmem:[%s0 + $0x120] sm:$0xff]
    %v96 = vld [vmem:[%s0 + $0x128] sm:$0xff]
    %v97 = vld [vmem:[%s0 + $0x130] sm:$0xf]
    %v98 = vld [vmem:[%s0 + $0x134] sm:$0xff]
    %v99 = vld [vmem:[%s0 + $0x13c] sm:$0xff]
    %v100 = vld [vmem:[%s0 + $0x144] sm:$0xff]
    %v101 = vld [vmem:[%s0 + $0x14c] sm:$0xf]
    %v102 = vld [vmem:[%s0 + $0x150] sm:$0xff]
    %v103 = vld [vmem:[%s0 + $0x158] sm:$0xff]
    %v104 = vld [vmem:[%s0 + $0x160] sm:$0xff]
    %v105 = vld [vmem:[%s0 + $0x168] sm:$0xf]
    %v106 = vld [vmem:[%s0 + $0x16c] sm:$0xff]
    %v107 = vld [vmem:[%s0 + $0x174] sm:$0xff]
    %v108 = vld [vmem:[%s0 + $0x17c] sm:$0xff]
    %v109 = vld [vmem:[%s0 + $0x184] sm:$0xf]
    %v110 = vld [vmem:[%s0 + $0x188] sm:$0xff]
    %v111 = vld [vmem:[%s0 + $0x190] sm:$0xff]
    %v112 = vld [vmem:[%s0 + $0x198] sm:$0xff]
    %v113 = vld [vmem:[%s0 + $0x1a0] sm:$0xf]
    %v114 = vld [vmem:[%s0 + $0x1a4] sm:$0xff]
    %v115 = vld [vmem:[%s0 + $0x1ac] sm:$0xff]
    %v116 = vld [vmem:[%s0 + $0x1b4] sm:$0xff]
    %v117 = vld [vmem:[%s0 + $0x1bc] sm:$0xf]
    %v118 = vld [vmem:[#allocation2] sm:$0xff]
    %v119 = vld [vmem:[#allocation2 + $0x8] sm:$0xff]
    %v120 = vld [vmem:[#allocation2 + $0x10] sm:$0xff]
    %v121 = vld [vmem:[#allocation2 + $0x18] sm:$0xff]
    %v122 = vld [vmem:[#allocation2 + $0x20] sm:$0xff]
    %v123 = vld [vmem:[#allocation2 + $0x28] sm:$0xff]
    %v124 = vld [vmem:[#allocation2 + $0x30] sm:$0xff]
    %v125 = vld [vmem:[#allocation2 + $0x38] sm:$0xff]
    %v126 = vld [vmem:[#allocation2 + $0x40] sm:$0xff]
    %v127 = vld [vmem:[#allocation2 + $0x48] sm:$0xff]
    %v128 = vld [vmem:[#allocation2 + $0x50] sm:$0xff]
    %v129 = vld [vmem:[#allocation2 + $0x58] sm:$0xff]
    %v130 = vld [vmem:[#allocation2 + $0x60] sm:$0xff]
    %v131 = vld [vmem:[#allocation2 + $0x68] sm:$0xff]
    %v132 = vld [vmem:[#allocation2 + $0x70] sm:$0xff]
    %v133 = vld [vmem:[#allocation2 + $0x78] sm:$0xff]
    %v134 = vld [vmem:[#allocation2 + $0x80] sm:$0xff]
    %v135 = vld [vmem:[#allocation2 + $0x88] sm:$0xff]
    %v136 = vld [vmem:[#allocation2 + $0x90] sm:$0xff]
    %v137 = vld [vmem:[#allocation2 + $0x98] sm:$0xff]
    %v138 = vld [vmem:[#allocation2 + $0xa0] sm:$0xff]
    %v139 = vld [vmem:[#allocation2 + $0xa8] sm:$0xff]
    %v140 = vld [vmem:[#allocation2 + $0xb0] sm:$0xff]
    %v141 = vld [vmem:[#allocation2 + $0xb8] sm:$0xff]
    %v142 = vld [vmem:[#allocation2 + $0xc0] sm:$0xff]
    %v143 = vld [vmem:[#allocation2 + $0xc8] sm:$0xff]
    %v144 = vld [vmem:[#allocation2 + $0xd0] sm:$0xff]
    %v145 = vld [vmem:[#allocation2 + $0xd8] sm:$0xff]
    %v146 = vld [vmem:[#allocation2 + $0xe0] sm:$0xff]
    %v147 = vld [vmem:[#allocation2 + $0xe8] sm:$0xff]
    %v148 = vld [vmem:[#allocation2 + $0xf0] sm:$0xff]
    %v149 = vld [vmem:[#allocation2 + $0xf8] sm:$0xff]
    %v150 = vld [vmem:[#allocation2 + $0x100] sm:$0xff]
    %v151 = vld [vmem:[#allocation2 + $0x108] sm:$0xff]
    %v152 = vld [vmem:[#allocation2 + $0x110] sm:$0xff]
    %v153 = vld [vmem:[#allocation2 + $0x118] sm:$0xff]
    %v154 = vld [vmem:[#allocation2 + $0x120] sm:$0xff]
    %v155 = vld [vmem:[#allocation2 + $0x128] sm:$0xff]
    %v156 = vld [vmem:[#allocation2 + $0x130] sm:$0xff]
    %v157 = vld [vmem:[#allocation2 + $0x138] sm:$0xff]
    %v158 = vld [vmem:[#allocation2 + $0x140] sm:$0xff]
    %v159 = vld [vmem:[#allocation2 + $0x148] sm:$0xff]
    %v160 = vld [vmem:[#allocation2 + $0x150] sm:$0xff]
    %v161 = vld [vmem:[#allocation2 + $0x158] sm:$0xff]
    %v162 = vld [vmem:[#allocation2 + $0x160] sm:$0xff]
    %v163 = vld [vmem:[#allocation2 + $0x168] sm:$0xff]
    %v164 = vld [vmem:[#allocation2 + $0x170] sm:$0xff]
    %v165 = vld [vmem:[#allocation2 + $0x178] sm:$0xff]
    %v166 = vld [vmem:[#allocation2 + $0x180] sm:$0xff]
    %v167 = vld [vmem:[#allocation2 + $0x188] sm:$0xff]
    %v168 = vld [vmem:[#allocation2 + $0x190] sm:$0xff]
    %v169 = vld [vmem:[#allocation2 + $0x198] sm:$0xff]
    %v170 = vld [vmem:[#allocation2 + $0x1a0] sm:$0xff]
    %v171 = vld [vmem:[#allocation2 + $0x1a8] sm:$0xff]
    %v172 = vld [vmem:[#allocation2 + $0x1b0] sm:$0xff]
    %v173 = vld [vmem:[#allocation2 + $0x1b8] sm:$0xff]
    %v174 = vld [vmem:[#allocation2 + $0x1c0] sm:$0xff]
    %v175 = vld [vmem:[#allocation2 + $0x1c8] sm:$0xff]
    %v176 = vld [vmem:[#allocation2 + $0x1d0] sm:$0xff]
    %v177 = vld [vmem:[#allocation2 + $0x1d8] sm:$0xff]
    %v178 = vld [vmem:[#allocation2 + $0x1e0] sm:$0xff]
    %v179 = vld [vmem:[#allocation2 + $0x1e8] sm:$0xff]
    %v180 = vld [vmem:[#allocation2 + $0x1f0] sm:$0xff]
    %v181 = vld [vmem:[#allocation2 + $0x1f8] sm:$0xff]
    %v182 = vld [vmem:[#allocation2 + $0x200] sm:$0xff]
    %v183 = vld [vmem:[#allocation2 + $0x208] sm:$0xff]
    %v184 = vld [vmem:[#allocation2 + $0x210] sm:$0xff]
    %v185 = vld [vmem:[#allocation2 + $0x218] sm:$0xff]
    %v186 = vld [vmem:[#allocation2 + $0x220] sm:$0xff]
    %v187 = vld [vmem:[#allocation2 + $0x228] sm:$0xff]
    %v188 = vld [vmem:[#allocation2 + $0x230] sm:$0xff]
    %v189 = vld [vmem:[#allocation2 + $0x238] sm:$0xff]
    %v190 = vld [vmem:[#allocation2 + $0x240] sm:$0xff]
    %v191 = vld [vmem:[#allocation2 + $0x248] sm:$0xff]
    %v192 = vld [vmem:[#allocation2 + $0x250] sm:$0xff]
    %v193 = vld [vmem:[#allocation2 + $0x258] sm:$0xff]
    %v194 = vld [vmem:[#allocation2 + $0x260] sm:$0xff]
    %v195 = vld [vmem:[#allocation2 + $0x268] sm:$0xff]
    %v196 = vld [vmem:[#allocation2 + $0x270] sm:$0xff]
    %v197 = vld [vmem:[#allocation2 + $0x278] sm:$0xff]
    %v198 = vld [vmem:[#allocation2 + $0x280] sm:$0xff]
    %v199 = vld [vmem:[#allocation2 + $0x288] sm:$0xff]
    %v200 = vld [vmem:[#allocation2 + $0x290] sm:$0xff]
    %v201 = vld [vmem:[#allocation2 + $0x298] sm:$0xff]
    %v202 = vld [vmem:[#allocation2 + $0x2a0] sm:$0xff]
    %v203 = vld [vmem:[#allocation2 + $0x2a8] sm:$0xff]
    %v204 = vld [vmem:[#allocation2 + $0x2b0] sm:$0xff]
    %v205 = vld [vmem:[#allocation2 + $0x2b8] sm:$0xff]
    %v206 = vld [vmem:[#allocation2 + $0x2c0] sm:$0xff]
    %v207 = vld [vmem:[#allocation2 + $0x2c8] sm:$0xff]
    %v208 = vld [vmem:[#allocation2 + $0x2d0] sm:$0xff]
    %v209 = vld [vmem:[#allocation2 + $0x2d8] sm:$0xff]
    %v210 = vld [vmem:[#allocation2 + $0x2e0] sm:$0xff]
    %v211 = vld [vmem:[#allocation2 + $0x2e8] sm:$0xff]
    %v212 = vld [vmem:[#allocation2 + $0x2f0] sm:$0xff]
    %v213 = vld [vmem:[#allocation2 + $0x2f8] sm:$0xff]
    %v214 = vld [vmem:[#allocation2 + $0x300] sm:$0xff]
    %v215 = vld [vmem:[#allocation2 + $0x308] sm:$0xff]
    %v216 = vld [vmem:[#allocation2 + $0x310] sm:$0xff]
    %v217 = vld [vmem:[#allocation2 + $0x318] sm:$0xff]
    %v218 = vld [vmem:[#allocation2 + $0x320] sm:$0xff]
    %v219 = vld [vmem:[#allocation2 + $0x328] sm:$0xff]
    %v220 = vld [vmem:[#allocation2 + $0x330] sm:$0xff]
    %v221 = vld [vmem:[#allocation2 + $0x338] sm:$0xff]
    %v222 = vld [vmem:[#allocation2 + $0x340] sm:$0xff]
    %v223 = vld [vmem:[#allocation2 + $0x348] sm:$0xff]
    %v224 = vld [vmem:[#allocation2 + $0x350] sm:$0xff]
    %v225 = vld [vmem:[#allocation2 + $0x358] sm:$0xff]
    %v226 = vld [vmem:[#allocation2 + $0x360] sm:$0xff]
    %v227 = vld [vmem:[#allocation2 + $0x368] sm:$0xff]
    %v228 = vld [vmem:[#allocation2 + $0x370] sm:$0xff]
    %v229 = vld [vmem:[#allocation2 + $0x378] sm:$0xff]
    %v230 = vld [vmem:[#allocation2 + $0x380] sm:$0xff]
    %v231 = vld [vmem:[#allocation2 + $0x388] sm:$0xff]
    %v232 = vld [vmem:[#allocation2 + $0x390] sm:$0xff]
    %v233 = vld [vmem:[#allocation2 + $0x398] sm:$0xff]
    %v234 = vld [vmem:[#allocation2 + $0x3a0] sm:$0xff]
    %v235 = vld [vmem:[#allocation2 + $0x3a8] sm:$0xff]
    %v236 = vld [vmem:[#allocation2 + $0x3b0] sm:$0xff]
    %v237 = vld [vmem:[#allocation2 + $0x3b8] sm:$0xff]
    %v238 = vld [vmem:[#allocation2 + $0x3c0] sm:$0xff]
    %v239 = vld [vmem:[#allocation2 + $0x3c8] sm:$0xff]
    %v240 = vld [vmem:[#allocation2 + $0x3d0] sm:$0xff]
    %v241 = vld [vmem:[#allocation2 + $0x3d8] sm:$0xff]
    %v242 = vld [vmem:[#allocation2 + $0x3e0] sm:$0xff]
    %v243 = vld [vmem:[#allocation2 + $0x3e8] sm:$0xff]
    %v244 = vld [vmem:[#allocation2 + $0x3f0] sm:$0xff]
    %v245 = vld [vmem:[#allocation2 + $0x3f8] sm:$0xff]
    %v246 = vld [vmem:[#allocation2 + $0x400] sm:$0xff]
    %v247 = vld [vmem:[#allocation2 + $0x408] sm:$0xff]
    %v248 = vld [vmem:[#allocation2 + $0x410] sm:$0xff]
    %v249 = vld [vmem:[#allocation2 + $0x418] sm:$0xff]
    %v250 = vld [vmem:[#allocation2 + $0x420] sm:$0xff]
    %v251 = vld [vmem:[#allocation2 + $0x428] sm:$0xff]
    %v252 = vld [vmem:[#allocation2 + $0x430] sm:$0xff]
    %v253 = vld [vmem:[#allocation2 + $0x438] sm:$0xff]
    %v254 = vld [vmem:[#allocation2 + $0x440] sm:$0xff]
    %v255 = vld [vmem:[#allocation2 + $0x448] sm:$0xff]
    %v256 = vld [vmem:[#allocation2 + $0x450] sm:$0xff]
    %v257 = vld [vmem:[#allocation2 + $0x458] sm:$0xff]
    %v258 = vld [vmem:[#allocation2 + $0x460] sm:$0xff]
    %v259 = vld [vmem:[#allocation2 + $0x468] sm:$0xff]
    %v260 = vld [vmem:[#allocation2 + $0x470] sm:$0xff]
    %v261 = vld [vmem:[#allocation2 + $0x478] sm:$0xff]
    %v262 = vld [vmem:[#allocation2 + $0x480] sm:$0xff]
    %v263 = vld [vmem:[#allocation2 + $0x488] sm:$0xff]
    %v264 = vld [vmem:[#allocation2 + $0x490] sm:$0xff]
    %v265 = vld [vmem:[#allocation2 + $0x498] sm:$0xff]
    %v266 = vld [vmem:[#allocation2 + $0x4a0] sm:$0xff]
    %v267 = vld [vmem:[#allocation2 + $0x4a8] sm:$0xff]
    %v268 = vld [vmem:[#allocation2 + $0x4b0] sm:$0xff]
    %v269 = vld [vmem:[#allocation2 + $0x4b8] sm:$0xff]
    %v270 = vld [vmem:[#allocation2 + $0x4c0] sm:$0xff]
    %v271 = vld [vmem:[#allocation2 + $0x4c8] sm:$0xff]
    %v272 = vld [vmem:[#allocation2 + $0x4d0] sm:$0xff]
    %v273 = vld [vmem:[#allocation2 + $0x4d8] sm:$0xff]
    %v274 = vld [vmem:[#allocation2 + $0x4e0] sm:$0xff]
    %v275 = vld [vmem:[#allocation2 + $0x4e8] sm:$0xff]
    %v276 = vld [vmem:[#allocation2 + $0x4f0] sm:$0xff]
    %v277 = vld [vmem:[#allocation2 + $0x4f8] sm:$0xff]
    %v278 = vld [vmem:[#allocation2 + $0x500] sm:$0xff]
    %v279 = vld [vmem:[#allocation2 + $0x508] sm:$0xff]
    %v280 = vld [vmem:[#allocation2 + $0x510] sm:$0xff]
    %v281 = vld [vmem:[#allocation2 + $0x518] sm:$0xff]
    %v282 = vld [vmem:[#allocation2 + $0x520] sm:$0xff]
    %v283 = vld [vmem:[#allocation2 + $0x528] sm:$0xff]
    %v284 = vld [vmem:[#allocation2 + $0x530] sm:$0xff]
    %v285 = vld [vmem:[#allocation2 + $0x538] sm:$0xff]
    %v286 = vld [vmem:[#allocation2 + $0x540] sm:$0xff]
    %v287 = vld [vmem:[#allocation2 + $0x548] sm:$0xff]
    %v288 = vld [vmem:[#allocation2 + $0x550] sm:$0xff]
    %v289 = vld [vmem:[#allocation2 + $0x558] sm:$0xff]
    %v290 = vld [vmem:[#allocation2 + $0x560] sm:$0xff]
    %v291 = vld [vmem:[#allocation2 + $0x568] sm:$0xff]
    %v292 = vld [vmem:[#allocation2 + $0x570] sm:$0xff]
    %v293 = vld [vmem:[#allocation2 + $0x578] sm:$0xff]
    %v294 = vld [vmem:[#allocation2 + $0x580] sm:$0xff]
    %v295 = vld [vmem:[#allocation2 + $0x588] sm:$0xff]
    %v296 = vld [vmem:[#allocation2 + $0x590] sm:$0xff]
    %v297 = vld [vmem:[#allocation2 + $0x598] sm:$0xff]
    %v298 = vld [vmem:[#allocation2 + $0x5a0] sm:$0xff]
    %v299 = vld [vmem:[#allocation2 + $0x5a8] sm:$0xff]
    %v300 = vld [vmem:[#allocation2 + $0x5b0] sm:$0xff]
    %v301 = vld [vmem:[#allocation2 + $0x5b8] sm:$0xff]
    %v302 = vld [vmem:[#allocation2 + $0x5c0] sm:$0xff]
    %v303 = vld [vmem:[#allocation2 + $0x5c8] sm:$0xff]
    %v304 = vld [vmem:[#allocation2 + $0x5d0] sm:$0xff]
    %v305 = vld [vmem:[#allocation2 + $0x5d8] sm:$0xff]
    %v306 = vld [vmem:[#allocation2 + $0x5e0] sm:$0xff]
    %v307 = vld [vmem:[#allocation2 + $0x5e8] sm:$0xff]
    %v308 = vld [vmem:[#allocation2 + $0x5f0] sm:$0xff]
    %v309 = vld [vmem:[#allocation2 + $0x5f8] sm:$0xff]
    %v310 = vld [vmem:[#allocation2 + $0x600] sm:$0xff]
    %v311 = vld [vmem:[#allocation2 + $0x608] sm:$0xff]
    %v312 = vld [vmem:[#allocation2 + $0x610] sm:$0xff]
    %v313 = vld [vmem:[#allocation2 + $0x618] sm:$0xff]
    %v314 = vld [vmem:[%s2] sm:$0xf]
    %v316 = vlaneseq
    %v317 = vshrl.u32 %v316, 7
    %v318 = vsub.s32 0, %v317
    %v319 = vrot.slane %v314, %v318
    %v320 = vlaneseq
    %v321 = vshrl.u32 %v320, 7
    %v322 = vsub.s32 1, %v321
    %v323 = vrot.slane %v314, %v322
    %v324 = vlaneseq
    %v325 = vshrl.u32 %v324, 7
    %v326 = vsub.s32 2, %v325
    %v327 = vrot.slane %v314, %v326
    %v328 = vlaneseq
    %v329 = vshrl.u32 %v328, 7
    %v330 = vsub.s32 3, %v329
    %v331 = vrot.slane %v314, %v330
    %v400 = vunpack.c.l.b16 %v54
    %v401 = vunpack.c.h.b16 %v54
    %v402 = vunpack.c.l.b16 %v55
    %v403 = vunpack.c.h.b16 %v55
    %v404 = vunpack.c.l.b16 %v56
    %v405 = vunpack.c.h.b16 %v56
    %v406 = vunpack.c.l.b16 %v57
    %v407 = vunpack.c.l.b16 %v58
    %v408 = vunpack.c.h.b16 %v58
    %v409 = vunpack.c.l.b16 %v59
    %v410 = vunpack.c.h.b16 %v59
    %v411 = vunpack.c.l.b16 %v60
    %v412 = vunpack.c.h.b16 %v60
    %v413 = vunpack.c.l.b16 %v61
    %v414 = vunpack.c.l.b16 %v62
    %v415 = vunpack.c.h.b16 %v62
    %v416 = vunpack.c.l.b16 %v63
    %v417 = vunpack.c.h.b16 %v63
    %v418 = vunpack.c.l.b16 %v64
    %v419 = vunpack.c.h.b16 %v64
    %v420 = vunpack.c.l.b16 %v65
    %v421 = vunpack.c.l.b16 %v66
    %v422 = vunpack.c.h.b16 %v66
    %v423 = vunpack.c.l.b16 %v67
    %v424 = vunpack.c.h.b16 %v67
    %v425 = vunpack.c.l.b16 %v68
    %v426 = vunpack.c.h.b16 %v68
    %v427 = vunpack.c.l.b16 %v69
    %v428 = vunpack.c.l.b16 %v70
    %v429 = vunpack.c.h.b16 %v70
    %v430 = vunpack.c.l.b16 %v71
    %v431 = vunpack.c.h.b16 %v71
    %v432 = vunpack.c.l.b16 %v72
    %v433 = vunpack.c.h.b16 %v72
    %v434 = vunpack.c.l.b16 %v73
    %v435 = vunpack.c.l.b16 %v74
    %v436 = vunpack.c.h.b16 %v74
    %v437 = vunpack.c.l.b16 %v75
    %v438 = vunpack.c.h.b16 %v75
    %v439 = vunpack.c.l.b16 %v76
    %v440 = vunpack.c.h.b16 %v76
    %v441 = vunpack.c.l.b16 %v77
    %v442 = vunpack.c.l.b16 %v78
    %v443 = vunpack.c.h.b16 %v78
    %v444 = vunpack.c.l.b16 %v79
    %v445 = vunpack.c.h.b16 %v79
    %v446 = vunpack.c.l.b16 %v80
    %v447 = vunpack.c.h.b16 %v80
    %v448 = vunpack.c.l.b16 %v81
    %v449 = vunpack.c.l.b16 %v82
    %v450 = vunpack.c.h.b16 %v82
    %v451 = vunpack.c.l.b16 %v83
    %v452 = vunpack.c.h.b16 %v83
    %v453 = vunpack.c.l.b16 %v84
    %v454 = vunpack.c.h.b16 %v84
    %v455 = vunpack.c.l.b16 %v85
    %v456 = vunpack.c.l.b16 %v86
    %v457 = vunpack.c.h.b16 %v86
    %v458 = vunpack.c.l.b16 %v87
    %v459 = vunpack.c.h.b16 %v87
    %v460 = vunpack.c.l.b16 %v88
    %v461 = vunpack.c.h.b16 %v88
    %v462 = vunpack.c.l.b16 %v89
    %v463 = vunpack.c.l.b16 %v90
    %v464 = vunpack.c.h.b16 %v90
    %v465 = vunpack.c.l.b16 %v91
    %v466 = vunpack.c.h.b16 %v91
    %v467 = vunpack.c.l.b16 %v92
    %v468 = vunpack.c.h.b16 %v92
    %v469 = vunpack.c.l.b16 %v93
    %v470 = vunpack.c.l.b16 %v94
    %v471 = vunpack.c.h.b16 %v94
    %v472 = vunpack.c.l.b16 %v95
    %v473 = vunpack.c.h.b16 %v95
    %v474 = vunpack.c.l.b16 %v96
    %v475 = vunpack.c.h.b16 %v96
    %v476 = vunpack.c.l.b16 %v97
    %v477 = vunpack.c.l.b16 %v98
    %v478 = vunpack.c.h.b16 %v98
    %v479 = vunpack.c.l.b16 %v99
    %v480 = vunpack.c.h.b16 %v99
    %v481 = vunpack.c.l.b16 %v100
    %v482 = vunpack.c.h.b16 %v100
    %v483 = vunpack.c.l.b16 %v101
    %v484 = vunpack.c.l.b16 %v102
    %v485 = vunpack.c.h.b16 %v102
    %v486 = vunpack.c.l.b16 %v103
    %v487 = vunpack.c.h.b16 %v103
    %v488 = vunpack.c.l.b16 %v104
    %v489 = vunpack.c.h.b16 %v104
    %v490 = vunpack.c.l.b16 %v105
    %v491 = vunpack.c.l.b16 %v106
    %v492 = vunpack.c.h.b16 %v106
    %v493 = vunpack.c.l.b16 %v107
    %v494 = vunpack.c.h.b16 %v107
    %v495 = vunpack.c.l.b16 %v108
    %v496 = vunpack.c.h.b16 %v108
    %v497 = vunpack.c.l.b16 %v109
    %v498 = vunpack.c.l.b16 %v110
    %v499 = vunpack.c.h.b16 %v110
    %v500 = vunpack.c.l.b16 %v111
    %v501 = vunpack.c.h.b16 %v111
    %v502 = vunpack.c.l.b16 %v112
    %v503 = vunpack.c.h.b16 %v112
    %v504 = vunpack.c.l.b16 %v113
    %v505 = vunpack.c.l.b16 %v114
    %v506 = vunpack.c.h.b16 %v114
    %v507 = vunpack.c.l.b16 %v115
    %v508 = vunpack.c.h.b16 %v115
    %v509 = vunpack.c.l.b16 %v116
    %v510 = vunpack.c.h.b16 %v116
    %v511 = vunpack.c.l.b16 %v117
    %v512 = vpack.c.b16 %v407, %v400
    %v513 = vpack.c.b16 %v408, %v401
    %v514 = vpack.c.b16 %v409, %v402
    %v515 = vpack.c.b16 %v410, %v403
    %v516 = vpack.c.b16 %v411, %v404
    %v517 = vpack.c.b16 %v412, %v405
    %v518 = vpack.c.b16 %v413, %v406
    %v519 = vpack.c.b16 %v421, %v414
    %v520 = vpack.c.b16 %v422, %v415
    %v521 = vpack.c.b16 %v423, %v416
    %v522 = vpack.c.b16 %v424, %v417
    %v523 = vpack.c.b16 %v425, %v418
    %v524 = vpack.c.b16 %v426, %v419
    %v525 = vpack.c.b16 %v427, %v420
    %v526 = vpack.c.b16 %v435, %v428
    %v527 = vpack.c.b16 %v436, %v429
    %v528 = vpack.c.b16 %v437, %v430
    %v529 = vpack.c.b16 %v438, %v431
    %v530 = vpack.c.b16 %v439, %v432
    %v531 = vpack.c.b16 %v440, %v433
    %v532 = vpack.c.b16 %v441, %v434
    %v533 = vpack.c.b16 %v449, %v442
    %v534 = vpack.c.b16 %v450, %v443
    %v535 = vpack.c.b16 %v451, %v444
    %v536 = vpack.c.b16 %v452, %v445
    %v537 = vpack.c.b16 %v453, %v446
    %v538 = vpack.c.b16 %v454, %v447
    %v539 = vpack.c.b16 %v455, %v448
    %v540 = vpack.c.b16 %v463, %v456
    %v541 = vpack.c.b16 %v464, %v457
    %v542 = vpack.c.b16 %v465, %v458
    %v543 = vpack.c.b16 %v466, %v459
    %v544 = vpack.c.b16 %v467, %v460
    %v545 = vpack.c.b16 %v468, %v461
    %v546 = vpack.c.b16 %v469, %v462
    %v547 = vpack.c.b16 %v477, %v470
    %v548 = vpack.c.b16 %v478, %v471
    %v549 = vpack.c.b16 %v479, %v472
    %v550 = vpack.c.b16 %v480, %v473
    %v551 = vpack.c.b16 %v481, %v474
    %v552 = vpack.c.b16 %v482, %v475
    %v553 = vpack.c.b16 %v483, %v476
    %v554 = vpack.c.b16 %v491, %v484
    %v555 = vpack.c.b16 %v492, %v485
    %v556 = vpack.c.b16 %v493, %v486
    %v557 = vpack.c.b16 %v494, %v487
    %v558 = vpack.c.b16 %v495, %v488
    %v559 = vpack.c.b16 %v496, %v489
    %v560 = vpack.c.b16 %v497, %v490
    %v561 = vpack.c.b16 %v505, %v498
    %v562 = vpack.c.b16 %v506, %v499
    %v563 = vpack.c.b16 %v507, %v500
    %v564 = vpack.c.b16 %v508, %v501
    %v565 = vpack.c.b16 %v509, %v502
    %v566 = vpack.c.b16 %v510, %v503
    %v567 = vpack.c.b16 %v511, %v504
    %v812 = vunpack.c.l.b16 %v118
    %v813 = vunpack.c.h.b16 %v118
    %v814 = vunpack.c.l.b16 %v119
    %v815 = vunpack.c.h.b16 %v119
    %v816 = vunpack.c.l.b16 %v120
    %v817 = vunpack.c.h.b16 %v120
    %v818 = vunpack.c.l.b16 %v121
    %v819 = vunpack.c.h.b16 %v121
    %v820 = vunpack.c.l.b16 %v122
    %v821 = vunpack.c.h.b16 %v122
    %v822 = vunpack.c.l.b16 %v123
    %v823 = vunpack.c.h.b16 %v123
    %v824 = vunpack.c.l.b16 %v124
    %v825 = vunpack.c.h.b16 %v124
    %v826 = vunpack.c.l.b16 %v125
    %v827 = vunpack.c.h.b16 %v125
    %v828 = vunpack.c.l.b16 %v126
    %v829 = vunpack.c.h.b16 %v126
    %v830 = vunpack.c.l.b16 %v127
    %v831 = vunpack.c.h.b16 %v127
    %v832 = vunpack.c.l.b16 %v128
    %v833 = vunpack.c.h.b16 %v128
    %v834 = vunpack.c.l.b16 %v129
    %v835 = vunpack.c.h.b16 %v129
    %v836 = vunpack.c.l.b16 %v130
    %v837 = vunpack.c.h.b16 %v130
    %v838 = vunpack.c.l.b16 %v131
    %v839 = vunpack.c.h.b16 %v131
    %v840 = vunpack.c.l.b16 %v132
    %v841 = vunpack.c.h.b16 %v132
    %v842 = vunpack.c.l.b16 %v133
    %v843 = vunpack.c.h.b16 %v133
    %v844 = vunpack.c.l.b16 %v134
    %v845 = vunpack.c.h.b16 %v134
    %v846 = vunpack.c.l.b16 %v135
    %v847 = vunpack.c.h.b16 %v135
    %v848 = vunpack.c.l.b16 %v136
    %v849 = vunpack.c.h.b16 %v136
    %v850 = vunpack.c.l.b16 %v137
    %v851 = vunpack.c.h.b16 %v137
    %v852 = vunpack.c.l.b16 %v138
    %v853 = vunpack.c.h.b16 %v138
    %v854 = vunpack.c.l.b16 %v139
    %v855 = vunpack.c.h.b16 %v139
    %v856 = vunpack.c.l.b16 %v140
    %v857 = vunpack.c.h.b16 %v140
    %v858 = vunpack.c.l.b16 %v141
    %v859 = vunpack.c.h.b16 %v141
    %v860 = vunpack.c.l.b16 %v142
    %v861 = vunpack.c.h.b16 %v142
    %v862 = vunpack.c.l.b16 %v143
    %v863 = vunpack.c.h.b16 %v143
    %v864 = vunpack.c.l.b16 %v144
    %v865 = vunpack.c.h.b16 %v144
    %v866 = vunpack.c.l.b16 %v145
    %v867 = vunpack.c.h.b16 %v145
    %v868 = vunpack.c.l.b16 %v146
    %v869 = vunpack.c.h.b16 %v146
    %v870 = vunpack.c.l.b16 %v147
    %v871 = vunpack.c.h.b16 %v147
    %v872 = vunpack.c.l.b16 %v148
    %v873 = vunpack.c.h.b16 %v148
    %v874 = vunpack.c.l.b16 %v149
    %v875 = vunpack.c.h.b16 %v149
    %v876 = vunpack.c.l.b16 %v150
    %v877 = vunpack.c.h.b16 %v150
    %v878 = vunpack.c.l.b16 %v151
    %v879 = vunpack.c.h.b16 %v151
    %v880 = vunpack.c.l.b16 %v152
    %v881 = vunpack.c.h.b16 %v152
    %v882 = vunpack.c.l.b16 %v153
    %v883 = vunpack.c.h.b16 %v153
    %v884 = vunpack.c.l.b16 %v154
    %v885 = vunpack.c.h.b16 %v154
    %v886 = vunpack.c.l.b16 %v155
    %v887 = vunpack.c.h.b16 %v155
    %v888 = vunpack.c.l.b16 %v156
    %v889 = vunpack.c.h.b16 %v156
    %v890 = vunpack.c.l.b16 %v157
    %v891 = vunpack.c.h.b16 %v157
    %v892 = vunpack.c.l.b16 %v158
    %v893 = vunpack.c.h.b16 %v158
    %v894 = vunpack.c.l.b16 %v159
    %v895 = vunpack.c.h.b16 %v159
    %v896 = vunpack.c.l.b16 %v160
    %v897 = vunpack.c.h.b16 %v160
    %v898 = vunpack.c.l.b16 %v161
    %v899 = vunpack.c.h.b16 %v161
    %v900 = vunpack.c.l.b16 %v162
    %v901 = vunpack.c.h.b16 %v162
    %v902 = vunpack.c.l.b16 %v163
    %v903 = vunpack.c.h.b16 %v163
    %v904 = vunpack.c.l.b16 %v164
    %v905 = vunpack.c.h.b16 %v164
    %v906 = vunpack.c.l.b16 %v165
    %v907 = vunpack.c.h.b16 %v165
    %v908 = vunpack.c.l.b16 %v166
    %v909 = vunpack.c.h.b16 %v166
    %v910 = vunpack.c.l.b16 %v167
    %v911 = vunpack.c.h.b16 %v167
    %v912 = vunpack.c.l.b16 %v168
    %v913 = vunpack.c.h.b16 %v168
    %v914 = vunpack.c.l.b16 %v169
    %v915 = vunpack.c.h.b16 %v169
    %v916 = vunpack.c.l.b16 %v170
    %v917 = vunpack.c.h.b16 %v170
    %v918 = vunpack.c.l.b16 %v171
    %v919 = vunpack.c.h.b16 %v171
    %v920 = vunpack.c.l.b16 %v172
    %v921 = vunpack.c.h.b16 %v172
    %v922 = vunpack.c.l.b16 %v173
    %v923 = vunpack.c.h.b16 %v173
    %v924 = vunpack.c.l.b16 %v174
    %v925 = vunpack.c.h.b16 %v174
    %v926 = vunpack.c.l.b16 %v175
    %v927 = vunpack.c.h.b16 %v175
    %v928 = vunpack.c.l.b16 %v176
    %v929 = vunpack.c.h.b16 %v176
    %v930 = vunpack.c.l.b16 %v177
    %v931 = vunpack.c.h.b16 %v177
    %v932 = vunpack.c.l.b16 %v178
    %v933 = vunpack.c.h.b16 %v178
    %v934 = vunpack.c.l.b16 %v179
    %v935 = vunpack.c.h.b16 %v179
    %v936 = vunpack.c.l.b16 %v180
    %v937 = vunpack.c.h.b16 %v180
    %v938 = vunpack.c.l.b16 %v181
    %v939 = vunpack.c.h.b16 %v181
    %v940 = vunpack.c.l.b16 %v182
    %v941 = vunpack.c.h.b16 %v182
    %v942 = vunpack.c.l.b16 %v183
    %v943 = vunpack.c.h.b16 %v183
    %v944 = vunpack.c.l.b16 %v184
    %v945 = vunpack.c.h.b16 %v184
    %v946 = vunpack.c.l.b16 %v185
    %v947 = vunpack.c.h.b16 %v185
    %v948 = vunpack.c.l.b16 %v186
    %v949 = vunpack.c.h.b16 %v186
    %v950 = vunpack.c.l.b16 %v187
    %v951 = vunpack.c.h.b16 %v187
    %v952 = vunpack.c.l.b16 %v188
    %v953 = vunpack.c.h.b16 %v188
    %v954 = vunpack.c.l.b16 %v189
    %v955 = vunpack.c.h.b16 %v189
    %v956 = vunpack.c.l.b16 %v190
    %v957 = vunpack.c.h.b16 %v190
    %v958 = vunpack.c.l.b16 %v191
    %v959 = vunpack.c.h.b16 %v191
    %v960 = vunpack.c.l.b16 %v192
    %v961 = vunpack.c.h.b16 %v192
    %v962 = vunpack.c.l.b16 %v193
    %v963 = vunpack.c.h.b16 %v193
    %v964 = vunpack.c.l.b16 %v194
    %v965 = vunpack.c.h.b16 %v194
    %v966 = vunpack.c.l.b16 %v195
    %v967 = vunpack.c.h.b16 %v195
    %v968 = vunpack.c.l.b16 %v196
    %v969 = vunpack.c.h.b16 %v196
    %v970 = vunpack.c.l.b16 %v197
    %v971 = vunpack.c.h.b16 %v197
    %v972 = vunpack.c.l.b16 %v198
    %v973 = vunpack.c.h.b16 %v198
    %v974 = vunpack.c.l.b16 %v199
    %v975 = vunpack.c.h.b16 %v199
    %v976 = vunpack.c.l.b16 %v200
    %v977 = vunpack.c.h.b16 %v200
    %v978 = vunpack.c.l.b16 %v201
    %v979 = vunpack.c.h.b16 %v201
    %v980 = vunpack.c.l.b16 %v202
    %v981 = vunpack.c.h.b16 %v202
    %v982 = vunpack.c.l.b16 %v203
    %v983 = vunpack.c.h.b16 %v203
    %v984 = vunpack.c.l.b16 %v204
    %v985 = vunpack.c.h.b16 %v204
    %v986 = vunpack.c.l.b16 %v205
    %v987 = vunpack.c.h.b16 %v205
    %v988 = vunpack.c.l.b16 %v206
    %v989 = vunpack.c.h.b16 %v206
    %v990 = vunpack.c.l.b16 %v207
    %v991 = vunpack.c.h.b16 %v207
    %v992 = vunpack.c.l.b16 %v208
    %v993 = vunpack.c.h.b16 %v208
    %v994 = vunpack.c.l.b16 %v209
    %v995 = vunpack.c.h.b16 %v209
    %v996 = vunpack.c.l.b16 %v210
    %v997 = vunpack.c.h.b16 %v210
    %v998 = vunpack.c.l.b16 %v211
    %v999 = vunpack.c.h.b16 %v211
    %v1000 = vunpack.c.l.b16 %v212
    %v1001 = vunpack.c.h.b16 %v212
    %v1002 = vunpack.c.l.b16 %v213
    %v1003 = vunpack.c.h.b16 %v213
    %v1004 = vunpack.c.l.b16 %v214
    %v1005 = vunpack.c.h.b16 %v214
    %v1006 = vunpack.c.l.b16 %v215
    %v1007 = vunpack.c.h.b16 %v215
    %v1008 = vunpack.c.l.b16 %v216
    %v1009 = vunpack.c.h.b16 %v216
    %v1010 = vunpack.c.l.b16 %v217
    %v1011 = vunpack.c.h.b16 %v217
    %v1012 = vunpack.c.l.b16 %v218
    %v1013 = vunpack.c.h.b16 %v218
    %v1014 = vunpack.c.l.b16 %v219
    %v1015 = vunpack.c.h.b16 %v219
    %v1016 = vunpack.c.l.b16 %v220
    %v1017 = vunpack.c.h.b16 %v220
    %v1018 = vunpack.c.l.b16 %v221
    %v1019 = vunpack.c.h.b16 %v221
    %v1020 = vunpack.c.l.b16 %v222
    %v1021 = vunpack.c.h.b16 %v222
    %v1022 = vunpack.c.l.b16 %v223
    %v1023 = vunpack.c.h.b16 %v223
    %v1024 = vunpack.c.l.b16 %v224
    %v1025 = vunpack.c.h.b16 %v224
    %v1026 = vunpack.c.l.b16 %v225
    %v1027 = vunpack.c.h.b16 %v225
    %v1028 = vunpack.c.l.b16 %v226
    %v1029 = vunpack.c.h.b16 %v226
    %v1030 = vunpack.c.l.b16 %v227
    %v1031 = vunpack.c.h.b16 %v227
    %v1032 = vunpack.c.l.b16 %v228
    %v1033 = vunpack.c.h.b16 %v228
    %v1034 = vunpack.c.l.b16 %v229
    %v1035 = vunpack.c.h.b16 %v229
    %v1036 = vunpack.c.l.b16 %v230
    %v1037 = vunpack.c.h.b16 %v230
    %v1038 = vunpack.c.l.b16 %v231
    %v1039 = vunpack.c.h.b16 %v231
    %v1040 = vunpack.c.l.b16 %v232
    %v1041 = vunpack.c.h.b16 %v232
    %v1042 = vunpack.c.l.b16 %v233
    %v1043 = vunpack.c.h.b16 %v233
    %v1044 = vunpack.c.l.b16 %v234
    %v1045 = vunpack.c.h.b16 %v234
    %v1046 = vunpack.c.l.b16 %v235
    %v1047 = vunpack.c.h.b16 %v235
    %v1048 = vunpack.c.l.b16 %v236
    %v1049 = vunpack.c.h.b16 %v236
    %v1050 = vunpack.c.l.b16 %v237
    %v1051 = vunpack.c.h.b16 %v237
    %v1052 = vunpack.c.l.b16 %v238
    %v1053 = vunpack.c.h.b16 %v238
    %v1054 = vunpack.c.l.b16 %v239
    %v1055 = vunpack.c.h.b16 %v239
    %v1056 = vunpack.c.l.b16 %v240
    %v1057 = vunpack.c.h.b16 %v240
    %v1058 = vunpack.c.l.b16 %v241
    %v1059 = vunpack.c.h.b16 %v241
    %v1060 = vunpack.c.l.b16 %v242
    %v1061 = vunpack.c.h.b16 %v242
    %v1062 = vunpack.c.l.b16 %v243
    %v1063 = vunpack.c.h.b16 %v243
    %v1064 = vunpack.c.l.b16 %v244
    %v1065 = vunpack.c.h.b16 %v244
    %v1066 = vunpack.c.l.b16 %v245
    %v1067 = vunpack.c.h.b16 %v245
    %v1068 = vunpack.c.l.b16 %v246
    %v1069 = vunpack.c.h.b16 %v246
    %v1070 = vunpack.c.l.b16 %v247
    %v1071 = vunpack.c.h.b16 %v247
    %v1072 = vunpack.c.l.b16 %v248
    %v1073 = vunpack.c.h.b16 %v248
    %v1074 = vunpack.c.l.b16 %v249
    %v1075 = vunpack.c.h.b16 %v249
    %v1076 = vunpack.c.l.b16 %v250
    %v1077 = vunpack.c.h.b16 %v250
    %v1078 = vunpack.c.l.b16 %v251
    %v1079 = vunpack.c.h.b16 %v251
    %v1080 = vunpack.c.l.b16 %v252
    %v1081 = vunpack.c.h.b16 %v252
    %v1082 = vunpack.c.l.b16 %v253
    %v1083 = vunpack.c.h.b16 %v253
    %v1084 = vunpack.c.l.b16 %v254
    %v1085 = vunpack.c.h.b16 %v254
    %v1086 = vunpack.c.l.b16 %v255
    %v1087 = vunpack.c.h.b16 %v255
    %v1088 = vunpack.c.l.b16 %v256
    %v1089 = vunpack.c.h.b16 %v256
    %v1090 = vunpack.c.l.b16 %v257
    %v1091 = vunpack.c.h.b16 %v257
    %v1092 = vunpack.c.l.b16 %v258
    %v1093 = vunpack.c.h.b16 %v258
    %v1094 = vunpack.c.l.b16 %v259
    %v1095 = vunpack.c.h.b16 %v259
    %v1096 = vunpack.c.l.b16 %v260
    %v1097 = vunpack.c.h.b16 %v260
    %v1098 = vunpack.c.l.b16 %v261
    %v1099 = vunpack.c.h.b16 %v261
    %v1100 = vunpack.c.l.b16 %v262
    %v1101 = vunpack.c.h.b16 %v262
    %v1102 = vunpack.c.l.b16 %v263
    %v1103 = vunpack.c.h.b16 %v263
    %v1104 = vunpack.c.l.b16 %v264
    %v1105 = vunpack.c.h.b16 %v264
    %v1106 = vunpack.c.l.b16 %v265
    %v1107 = vunpack.c.h.b16 %v265
    %v1108 = vunpack.c.l.b16 %v266
    %v1109 = vunpack.c.h.b16 %v266
    %v1110 = vunpack.c.l.b16 %v267
    %v1111 = vunpack.c.h.b16 %v267
    %v1112 = vunpack.c.l.b16 %v268
    %v1113 = vunpack.c.h.b16 %v268
    %v1114 = vunpack.c.l.b16 %v269
    %v1115 = vunpack.c.h.b16 %v269
    %v1116 = vunpack.c.l.b16 %v270
    %v1117 = vunpack.c.h.b16 %v270
    %v1118 = vunpack.c.l.b16 %v271
    %v1119 = vunpack.c.h.b16 %v271
    %v1120 = vunpack.c.l.b16 %v272
    %v1121 = vunpack.c.h.b16 %v272
    %v1122 = vunpack.c.l.b16 %v273
    %v1123 = vunpack.c.h.b16 %v273
    %v1124 = vunpack.c.l.b16 %v274
    %v1125 = vunpack.c.h.b16 %v274
    %v1126 = vunpack.c.l.b16 %v275
    %v1127 = vunpack.c.h.b16 %v275
    %v1128 = vunpack.c.l.b16 %v276
    %v1129 = vunpack.c.h.b16 %v276
    %v1130 = vunpack.c.l.b16 %v277
    %v1131 = vunpack.c.h.b16 %v277
    %v1132 = vunpack.c.l.b16 %v278
    %v1133 = vunpack.c.h.b16 %v278
    %v1134 = vunpack.c.l.b16 %v279
    %v1135 = vunpack.c.h.b16 %v279
    %v1136 = vunpack.c.l.b16 %v280
    %v1137 = vunpack.c.h.b16 %v280
    %v1138 = vunpack.c.l.b16 %v281
    %v1139 = vunpack.c.h.b16 %v281
    %v1140 = vunpack.c.l.b16 %v282
    %v1141 = vunpack.c.h.b16 %v282
    %v1142 = vunpack.c.l.b16 %v283
    %v1143 = vunpack.c.h.b16 %v283
    %v1144 = vunpack.c.l.b16 %v284
    %v1145 = vunpack.c.h.b16 %v284
    %v1146 = vunpack.c.l.b16 %v285
    %v1147 = vunpack.c.h.b16 %v285
    %v1148 = vunpack.c.l.b16 %v286
    %v1149 = vunpack.c.h.b16 %v286
    %v1150 = vunpack.c.l.b16 %v287
    %v1151 = vunpack.c.h.b16 %v287
    %v1152 = vunpack.c.l.b16 %v288
    %v1153 = vunpack.c.h.b16 %v288
    %v1154 = vunpack.c.l.b16 %v289
    %v1155 = vunpack.c.h.b16 %v289
    %v1156 = vunpack.c.l.b16 %v290
    %v1157 = vunpack.c.h.b16 %v290
    %v1158 = vunpack.c.l.b16 %v291
    %v1159 = vunpack.c.h.b16 %v291
    %v1160 = vunpack.c.l.b16 %v292
    %v1161 = vunpack.c.h.b16 %v292
    %v1162 = vunpack.c.l.b16 %v293
    %v1163 = vunpack.c.h.b16 %v293
    %v1164 = vunpack.c.l.b16 %v294
    %v1165 = vunpack.c.h.b16 %v294
    %v1166 = vunpack.c.l.b16 %v295
    %v1167 = vunpack.c.h.b16 %v295
    %v1168 = vunpack.c.l.b16 %v296
    %v1169 = vunpack.c.h.b16 %v296
    %v1170 = vunpack.c.l.b16 %v297
    %v1171 = vunpack.c.h.b16 %v297
    %v1172 = vunpack.c.l.b16 %v298
    %v1173 = vunpack.c.h.b16 %v298
    %v1174 = vunpack.c.l.b16 %v299
    %v1175 = vunpack.c.h.b16 %v299
    %v1176 = vunpack.c.l.b16 %v300
    %v1177 = vunpack.c.h.b16 %v300
    %v1178 = vunpack.c.l.b16 %v301
    %v1179 = vunpack.c.h.b16 %v301
    %v1180 = vunpack.c.l.b16 %v302
    %v1181 = vunpack.c.h.b16 %v302
    %v1182 = vunpack.c.l.b16 %v303
    %v1183 = vunpack.c.h.b16 %v303
    %v1184 = vunpack.c.l.b16 %v304
    %v1185 = vunpack.c.h.b16 %v304
    %v1186 = vunpack.c.l.b16 %v305
    %v1187 = vunpack.c.h.b16 %v305
    %v1188 = vunpack.c.l.b16 %v306
    %v1189 = vunpack.c.h.b16 %v306
    %v1190 = vunpack.c.l.b16 %v307
    %v1191 = vunpack.c.h.b16 %v307
    %v1192 = vunpack.c.l.b16 %v308
    %v1193 = vunpack.c.h.b16 %v308
    %v1194 = vunpack.c.l.b16 %v309
    %v1195 = vunpack.c.h.b16 %v309
    %v1196 = vunpack.c.l.b16 %v310
    %v1197 = vunpack.c.h.b16 %v310
    %v1198 = vunpack.c.l.b16 %v311
    %v1199 = vunpack.c.h.b16 %v311
    %v1200 = vunpack.c.l.b16 %v312
    %v1201 = vunpack.c.h.b16 %v312
    %v1202 = vunpack.c.l.b16 %v313
    %v1203 = vunpack.c.h.b16 %v313
    %v1204 = vpack.c.b16 %v816, %v812
    %v1205 = vpack.c.b16 %v817, %v813
    %v1206 = vpack.c.b16 %v818, %v814
    %v1207 = vpack.c.b16 %v819, %v815
    %v1208 = vpack.c.b16 %v824, %v820
    %v1209 = vpack.c.b16 %v825, %v821
    %v1210 = vpack.c.b16 %v826, %v822
    %v1211 = vpack.c.b16 %v827, %v823
    %v1212 = vpack.c.b16 %v832, %v828
    %v1213 = vpack.c.b16 %v833, %v829
    %v1214 = vpack.c.b16 %v834, %v830
    %v1215 = vpack.c.b16 %v835, %v831
    %v1216 = vpack.c.b16 %v840, %v836
    %v1217 = vpack.c.b16 %v841, %v837
    %v1218 = vpack.c.b16 %v842, %v838
    %v1219 = vpack.c.b16 %v843, %v839
    %v1220 = vpack.c.b16 %v848, %v844
    %v1221 = vpack.c.b16 %v849, %v845
    %v1222 = vpack.c.b16 %v850, %v846
    %v1223 = vpack.c.b16 %v851, %v847
    %v1224 = vpack.c.b16 %v856, %v852
    %v1225 = vpack.c.b16 %v857, %v853
    %v1226 = vpack.c.b16 %v858, %v854
    %v1227 = vpack.c.b16 %v859, %v855
    %v1228 = vpack.c.b16 %v864, %v860
    %v1229 = vpack.c.b16 %v865, %v861
    %v1230 = vpack.c.b16 %v866, %v862
    %v1231 = vpack.c.b16 %v867, %v863
    %v1232 = vpack.c.b16 %v872, %v868
    %v1233 = vpack.c.b16 %v873, %v869
    %v1234 = vpack.c.b16 %v874, %v870
    %v1235 = vpack.c.b16 %v875, %v871
    %v1236 = vpack.c.b16 %v880, %v876
    %v1237 = vpack.c.b16 %v881, %v877
    %v1238 = vpack.c.b16 %v882, %v878
    %v1239 = vpack.c.b16 %v883, %v879
    %v1240 = vpack.c.b16 %v888, %v884
    %v1241 = vpack.c.b16 %v889, %v885
    %v1242 = vpack.c.b16 %v890, %v886
    %v1243 = vpack.c.b16 %v891, %v887
    %v1244 = vpack.c.b16 %v896, %v892
    %v1245 = vpack.c.b16 %v897, %v893
    %v1246 = vpack.c.b16 %v898, %v894
    %v1247 = vpack.c.b16 %v899, %v895
    %v1248 = vpack.c.b16 %v904, %v900
    %v1249 = vpack.c.b16 %v905, %v901
    %v1250 = vpack.c.b16 %v906, %v902
    %v1251 = vpack.c.b16 %v907, %v903
    %v1252 = vpack.c.b16 %v912, %v908
    %v1253 = vpack.c.b16 %v913, %v909
    %v1254 = vpack.c.b16 %v914, %v910
    %v1255 = vpack.c.b16 %v915, %v911
    %v1256 = vpack.c.b16 %v920, %v916
    %v1257 = vpack.c.b16 %v921, %v917
    %v1258 = vpack.c.b16 %v922, %v918
    %v1259 = vpack.c.b16 %v923, %v919
    %v1260 = vpack.c.b16 %v928, %v924
    %v1261 = vpack.c.b16 %v929, %v925
    %v1262 = vpack.c.b16 %v930, %v926
    %v1263 = vpack.c.b16 %v931, %v927
    %v1264 = vpack.c.b16 %v936, %v932
    %v1265 = vpack.c.b16 %v937, %v933
    %v1266 = vpack.c.b16 %v938, %v934
    %v1267 = vpack.c.b16 %v939, %v935
    %v1268 = vpack.c.b16 %v944, %v940
    %v1269 = vpack.c.b16 %v945, %v941
    %v1270 = vpack.c.b16 %v946, %v942
    %v1271 = vpack.c.b16 %v947, %v943
    %v1272 = vpack.c.b16 %v952, %v948
    %v1273 = vpack.c.b16 %v953, %v949
    %v1274 = vpack.c.b16 %v954, %v950
    %v1275 = vpack.c.b16 %v955, %v951
    %v1276 = vpack.c.b16 %v960, %v956
    %v1277 = vpack.c.b16 %v961, %v957
    %v1278 = vpack.c.b16 %v962, %v958
    %v1279 = vpack.c.b16 %v963, %v959
    %v1280 = vpack.c.b16 %v968, %v964
    %v1281 = vpack.c.b16 %v969, %v965
    %v1282 = vpack.c.b16 %v970, %v966
    %v1283 = vpack.c.b16 %v971, %v967
    %v1284 = vpack.c.b16 %v976, %v972
    %v1285 = vpack.c.b16 %v977, %v973
    %v1286 = vpack.c.b16 %v978, %v974
    %v1287 = vpack.c.b16 %v979, %v975
    %v1288 = vpack.c.b16 %v984, %v980
    %v1289 = vpack.c.b16 %v985, %v981
    %v1290 = vpack.c.b16 %v986, %v982
    %v1291 = vpack.c.b16 %v987, %v983
    %v1292 = vpack.c.b16 %v992, %v988
    %v1293 = vpack.c.b16 %v993, %v989
    %v1294 = vpack.c.b16 %v994, %v990
    %v1295 = vpack.c.b16 %v995, %v991
    %v1296 = vpack.c.b16 %v1000, %v996
    %v1297 = vpack.c.b16 %v1001, %v997
    %v1298 = vpack.c.b16 %v1002, %v998
    %v1299 = vpack.c.b16 %v1003, %v999
    %v1300 = vpack.c.b16 %v1008, %v1004
    %v1301 = vpack.c.b16 %v1009, %v1005
    %v1302 = vpack.c.b16 %v1010, %v1006
    %v1303 = vpack.c.b16 %v1011, %v1007
    %v1304 = vpack.c.b16 %v1016, %v1012
    %v1305 = vpack.c.b16 %v1017, %v1013
    %v1306 = vpack.c.b16 %v1018, %v1014
    %v1307 = vpack.c.b16 %v1019, %v1015
    %v1308 = vpack.c.b16 %v1024, %v1020
    %v1309 = vpack.c.b16 %v1025, %v1021
    %v1310 = vpack.c.b16 %v1026, %v1022
    %v1311 = vpack.c.b16 %v1027, %v1023
    %v1312 = vpack.c.b16 %v1032, %v1028
    %v1313 = vpack.c.b16 %v1033, %v1029
    %v1314 = vpack.c.b16 %v1034, %v1030
    %v1315 = vpack.c.b16 %v1035, %v1031
    %v1316 = vpack.c.b16 %v1040, %v1036
    %v1317 = vpack.c.b16 %v1041, %v1037
    %v1318 = vpack.c.b16 %v1042, %v1038
    %v1319 = vpack.c.b16 %v1043, %v1039
    %v1320 = vpack.c.b16 %v1048, %v1044
    %v1321 = vpack.c.b16 %v1049, %v1045
    %v1322 = vpack.c.b16 %v1050, %v1046
    %v1323 = vpack.c.b16 %v1051, %v1047
    %v1324 = vpack.c.b16 %v1056, %v1052
    %v1325 = vpack.c.b16 %v1057, %v1053
    %v1326 = vpack.c.b16 %v1058, %v1054
    %v1327 = vpack.c.b16 %v1059, %v1055
    %v1328 = vpack.c.b16 %v1064, %v1060
    %v1329 = vpack.c.b16 %v1065, %v1061
    %v1330 = vpack.c.b16 %v1066, %v1062
    %v1331 = vpack.c.b16 %v1067, %v1063
    %v1332 = vpack.c.b16 %v1072, %v1068
    %v1333 = vpack.c.b16 %v1073, %v1069
    %v1334 = vpack.c.b16 %v1074, %v1070
    %v1335 = vpack.c.b16 %v1075, %v1071
    %v1336 = vpack.c.b16 %v1080, %v1076
    %v1337 = vpack.c.b16 %v1081, %v1077
    %v1338 = vpack.c.b16 %v1082, %v1078
    %v1339 = vpack.c.b16 %v1083, %v1079
    %v1340 = vpack.c.b16 %v1088, %v1084
    %v1341 = vpack.c.b16 %v1089, %v1085
    %v1342 = vpack.c.b16 %v1090, %v1086
    %v1343 = vpack.c.b16 %v1091, %v1087
    %v1344 = vpack.c.b16 %v1096, %v1092
    %v1345 = vpack.c.b16 %v1097, %v1093
    %v1346 = vpack.c.b16 %v1098, %v1094
    %v1347 = vpack.c.b16 %v1099, %v1095
    %v1348 = vpack.c.b16 %v1104, %v1100
    %v1349 = vpack.c.b16 %v1105, %v1101
    %v1350 = vpack.c.b16 %v1106, %v1102
    %v1351 = vpack.c.b16 %v1107, %v1103
    %v1352 = vpack.c.b16 %v1112, %v1108
    %v1353 = vpack.c.b16 %v1113, %v1109
    %v1354 = vpack.c.b16 %v1114, %v1110
    %v1355 = vpack.c.b16 %v1115, %v1111
    %v1356 = vpack.c.b16 %v1120, %v1116
    %v1357 = vpack.c.b16 %v1121, %v1117
    %v1358 = vpack.c.b16 %v1122, %v1118
    %v1359 = vpack.c.b16 %v1123, %v1119
    %v1360 = vpack.c.b16 %v1128, %v1124
    %v1361 = vpack.c.b16 %v1129, %v1125
    %v1362 = vpack.c.b16 %v1130, %v1126
    %v1363 = vpack.c.b16 %v1131, %v1127
    %v1364 = vpack.c.b16 %v1136, %v1132
    %v1365 = vpack.c.b16 %v1137, %v1133
    %v1366 = vpack.c.b16 %v1138, %v1134
    %v1367 = vpack.c.b16 %v1139, %v1135
    %v1368 = vpack.c.b16 %v1144, %v1140
    %v1369 = vpack.c.b16 %v1145, %v1141
    %v1370 = vpack.c.b16 %v1146, %v1142
    %v1371 = vpack.c.b16 %v1147, %v1143
    %v1372 = vpack.c.b16 %v1152, %v1148
    %v1373 = vpack.c.b16 %v1153, %v1149
    %v1374 = vpack.c.b16 %v1154, %v1150
    %v1375 = vpack.c.b16 %v1155, %v1151
    %v1376 = vpack.c.b16 %v1160, %v1156
    %v1377 = vpack.c.b16 %v1161, %v1157
    %v1378 = vpack.c.b16 %v1162, %v1158
    %v1379 = vpack.c.b16 %v1163, %v1159
    %v1380 = vpack.c.b16 %v1168, %v1164
    %v1381 = vpack.c.b16 %v1169, %v1165
    %v1382 = vpack.c.b16 %v1170, %v1166
    %v1383 = vpack.c.b16 %v1171, %v1167
    %v1384 = vpack.c.b16 %v1176, %v1172
    %v1385 = vpack.c.b16 %v1177, %v1173
    %v1386 = vpack.c.b16 %v1178, %v1174
    %v1387 = vpack.c.b16 %v1179, %v1175
    %v1388 = vpack.c.b16 %v1184, %v1180
    %v1389 = vpack.c.b16 %v1185, %v1181
    %v1390 = vpack.c.b16 %v1186, %v1182
    %v1391 = vpack.c.b16 %v1187, %v1183
    %v1392 = vpack.c.b16 %v1192, %v1188
    %v1393 = vpack.c.b16 %v1193, %v1189
    %v1394 = vpack.c.b16 %v1194, %v1190
    %v1395 = vpack.c.b16 %v1195, %v1191
    %v1396 = vpack.c.b16 %v1200, %v1196
    %v1397 = vpack.c.b16 %v1201, %v1197
    %v1398 = vpack.c.b16 %v1202, %v1198
    %v1399 = vpack.c.b16 %v1203, %v1199
    %vm1596 = vcmask 130048
    %v1598 = vsel %vm1596, %v518, 0
    %v1601 = vsel %vm1596, %v525, 0
    %v1604 = vsel %vm1596, %v532, 0
    %v1607 = vsel %vm1596, %v539, 0
    %v1610 = vsel %vm1596, %v546, 0
    %v1613 = vsel %vm1596, %v553, 0
    %v1616 = vsel %vm1596, %v560, 0
    %v1619 = vsel %vm1596, %v567, 0
    %1621 = vmatprep.subr.bf16.mxu0 %v1205
    %1622 = vmatpush1.bf16.msra.mxu0 %v1204
    %1623 = vmatprep.subr.bf16.mxu0 %v1209
    %1624 = vmatpush1.bf16.msra.mxu0 %v1208
    %1625 = vmatprep.subr.bf16.mxu0 %v1213
    %1626 = vmatpush1.bf16.msra.mxu0 %v1212
    %1627 = vmatprep.subr.bf16.mxu0 %v1217
    %1628 = vmatpush1.bf16.msra.mxu0 %v1216
    %1629 = vmatprep.subr.bf16.mxu0 %v1221
    %1630 = vmatpush1.bf16.msra.mxu0 %v1220
    %1631 = vmatprep.subr.bf16.mxu0 %v1225
    %1632 = vmatpush1.bf16.msra.mxu0 %v1224
    %1633 = vmatprep.subr.bf16.mxu0 %v1229
    %1634 = vmatpush1.bf16.msra.mxu0 %v1228
    %1635 = vmatprep.subr.bf16.mxu0 %v1233
    %1636 = vmatpush1.bf16.msra.mxu0 %v1232
    %1637 = vmatprep.subr.bf16.mxu0 %v1237
    %1638 = vmatpush1.bf16.msra.mxu0 %v1236
    %1639 = vmatprep.subr.bf16.mxu0 %v1241
    %1640 = vmatpush1.bf16.msra.mxu0 %v1240
    %1641 = vmatprep.subr.bf16.mxu0 %v1245
    %1642 = vmatpush1.bf16.msra.mxu0 %v1244
    %1643 = vmatprep.subr.bf16.mxu0 %v1249
    %1644 = vmatpush1.bf16.msra.mxu0 %v1248
    %1645 = vmatprep.subr.bf16.mxu0 %v1253
    %1646 = vmatpush1.bf16.msra.mxu0 %v1252
    %1647 = vmatprep.subr.bf16.mxu0 %v1257
    %1648 = vmatpush1.bf16.msra.mxu0 %v1256
    %1649 = vmatprep.subr.bf16.mxu0 %v1261
    %1650 = vmatpush1.bf16.msra.mxu0 %v1260
    %1651 = vmatprep.subr.bf16.mxu0 %v1265
    %1652 = vmatpush1.bf16.msra.mxu0 %v1264
    %1653 = vmatprep.mubr.bf16.mxu0 %v513
    %1654 = vmatmul.mubr.bf16.gmra.mrb[0].mxu0 %v512
    %v1655 = vpop.f32.mrb[0].mxu0
    %v1656 = vadd.f32 %v319, %v1655
    %v1657 = vpop.f32.mrb[0].mxu0
    %v1658 = vadd.f32 %v323, %v1657
    %v1659 = vpop.f32.mrb[0].mxu0
    %v1660 = vadd.f32 %v319, %v1659
    %v1661 = vpop.f32.mrb[0].mxu0
    %v1662 = vadd.f32 %v323, %v1661
    %1663 = vmatprep.mubr.bf16.mxu0 %v520
    %1664 = vmatmul.mubr.bf16.gmra.mrb[0].mxu0 %v519
    %v1665 = vpop.f32.mrb[0].mxu0
    %v1666 = vadd.f32 %v319, %v1665
    %v1667 = vpop.f32.mrb[0].mxu0
    %v1668 = vadd.f32 %v323, %v1667
    %v1669 = vpop.f32.mrb[0].mxu0
    %v1670 = vadd.f32 %v319, %v1669
    %v1671 = vpop.f32.mrb[0].mxu0
    %v1672 = vadd.f32 %v323, %v1671
    %1673 = vmatprep.mubr.bf16.mxu0 %v527
    %1674 = vmatmul.mubr.bf16.gmra.mrb[0].mxu0 %v526
    %v1675 = vpop.f32.mrb[0].mxu0
    %v1676 = vadd.f32 %v319, %v1675
    %v1677 = vpop.f32.mrb[0].mxu0
    %v1678 = vadd.f32 %v323, %v1677
    %v1679 = vpop.f32.mrb[0].mxu0
    %v1680 = vadd.f32 %v319, %v1679
    %v1681 = vpop.f32.mrb[0].mxu0
    %v1682 = vadd.f32 %v323, %v1681
    %1683 = vmatprep.mubr.bf16.mxu0 %v534
    %1684 = vmatmul.mubr.bf16.gmra.mrb[0].mxu0 %v533
    %v1685 = vpop.f32.mrb[0].mxu0
    %v1686 = vadd.f32 %v319, %v1685
    %v1687 = vpop.f32.mrb[0].mxu0
    %v1688 = vadd.f32 %v323, %v1687
    %v1689 = vpop.f32.mrb[0].mxu0
    %v1690 = vadd.f32 %v319, %v1689
    %v1691 = vpop.f32.mrb[0].mxu0
    %v1692 = vadd.f32 %v323, %v1691
    %1693 = vmatprep.mubr.bf16.mxu0 %v541
    %1694 = vmatmul.mubr.bf16.gmra.mrb[0].mxu0 %v540
    %v1695 = vpop.f32.mrb[0].mxu0
    %v1696 = vadd.f32 %v319, %v1695
    %v1697 = vpop.f32.mrb[0].mxu0
    %v1698 = vadd.f32 %v323, %v1697
    %v1699 = vpop.f32.mrb[0].mxu0
    %v1700 = vadd.f32 %v319, %v1699
    %v1701 = vpop.f32.mrb[0].mxu0
    %v1702 = vadd.f32 %v323, %v1701
    %1703 = vmatprep.mubr.bf16.mxu0 %v548
    %1704 = vmatmul.mubr.bf16.gmra.mrb[0].mxu0 %v547
    %v1705 = vpop.f32.mrb[0].mxu0
    %v1706 = vadd.f32 %v319, %v1705
    %v1707 = vpop.f32.mrb[0].mxu0
    %v1708 = vadd.f32 %v323, %v1707
    %v1709 = vpop.f32.mrb[0].mxu0
    %v1710 = vadd.f32 %v319, %v1709
    %v1711 = vpop.f32.mrb[0].mxu0
    %v1712 = vadd.f32 %v323, %v1711
    %1713 = vmatprep.mubr.bf16.mxu0 %v555
    %1714 = vmatmul.mubr.bf16.gmra.mrb[0].mxu0 %v554
    %v1715 = vpop.f32.mrb[0].mxu0
    %v1716 = vadd.f32 %v319, %v1715
    %v1717 = vpop.f32.mrb[0].mxu0
    %v1718 = vadd.f32 %v323, %v1717
    %v1719 = vpop.f32.mrb[0].mxu0
    %v1720 = vadd.f32 %v319, %v1719
    %v1721 = vpop.f32.mrb[0].mxu0
    %v1722 = vadd.f32 %v323, %v1721
    %1723 = vmatprep.mubr.bf16.mxu0 %v562
    %1724 = vmatmul.mubr.bf16.gmra.mrb[0].mxu0 %v561
    %v1725 = vpop.f32.mrb[0].mxu0
    %v1726 = vadd.f32 %v319, %v1725
    %v1727 = vpop.f32.mrb[0].mxu0
    %v1728 = vadd.f32 %v323, %v1727
    %v1729 = vpop.f32.mrb[0].mxu0
    %v1730 = vadd.f32 %v319, %v1729
    %v1731 = vpop.f32.mrb[0].mxu0
    %v1732 = vadd.f32 %v323, %v1731
    %1733 = vdwg.mxu0
    %1734 = vmatprep.subr.bf16.mxu0 %v1269
    %1735 = vmatpush1.bf16.msra.mxu0 %v1268
    %1736 = vmatprep.subr.bf16.mxu0 %v1273
    %1737 = vmatpush1.bf16.msra.mxu0 %v1272
    %1738 = vmatprep.subr.bf16.mxu0 %v1277
    %1739 = vmatpush1.bf16.msra.mxu0 %v1276
    %1740 = vmatprep.subr.bf16.mxu0 %v1281
    %1741 = vmatpush1.bf16.msra.mxu0 %v1280
    %1742 = vmatprep.subr.bf16.mxu0 %v1285
    %1743 = vmatpush1.bf16.msra.mxu0 %v1284
    %1744 = vmatprep.subr.bf16.mxu0 %v1289
    %1745 = vmatpush1.bf16.msra.mxu0 %v1288
    %1746 = vmatprep.subr.bf16.mxu0 %v1293
    %1747 = vmatpush1.bf16.msra.mxu0 %v1292
    %1748 = vmatprep.subr.bf16.mxu0 %v1297
    %1749 = vmatpush1.bf16.msra.mxu0 %v1296
    %1750 = vmatprep.subr.bf16.mxu0 %v1301
    %1751 = vmatpush1.bf16.msra.mxu0 %v1300
    %1752 = vmatprep.subr.bf16.mxu0 %v1305
    %1753 = vmatpush1.bf16.msra.mxu0 %v1304
    %1754 = vmatprep.subr.bf16.mxu0 %v1309
    %1755 = vmatpush1.bf16.msra.mxu0 %v1308
    %1756 = vmatprep.subr.bf16.mxu0 %v1313
    %1757 = vmatpush1.bf16.msra.mxu0 %v1312
    %1758 = vmatprep.subr.bf16.mxu0 %v1317
    %1759 = vmatpush1.bf16.msra.mxu0 %v1316
    %1760 = vmatprep.subr.bf16.mxu0 %v1321
    %1761 = vmatpush1.bf16.msra.mxu0 %v1320
    %1762 = vmatprep.subr.bf16.mxu0 %v1325
    %1763 = vmatpush1.bf16.msra.mxu0 %v1324
    %1764 = vmatprep.subr.bf16.mxu0 %v1329
    %1765 = vmatpush1.bf16.msra.mxu0 %v1328
    %1766 = vmatprep.mubr.bf16.mxu0 %v515
    %1767 = vmatmul.mubr.bf16.gmra.mrb[0].mxu0 %v514
    %v1768 = vpop.f32.mrb[0].mxu0
    %v1769 = vadd.f32 %v1656, %v1768
    %v1770 = vpop.f32.mrb[0].mxu0
    %v1771 = vadd.f32 %v1658, %v1770
    %v1772 = vpop.f32.mrb[0].mxu0
    %v1773 = vadd.f32 %v1660, %v1772
    %v1774 = vpop.f32.mrb[0].mxu0
    %v1775 = vadd.f32 %v1662, %v1774
    %1776 = vmatprep.mubr.bf16.mxu0 %v522
    %1777 = vmatmul.mubr.bf16.gmra.mrb[0].mxu0 %v521
    %v1778 = vpop.f32.mrb[0].mxu0
    %v1779 = vadd.f32 %v1666, %v1778
    %v1780 = vpop.f32.mrb[0].mxu0
    %v1781 = vadd.f32 %v1668, %v1780
    %v1782 = vpop.f32.mrb[0].mxu0
    %v1783 = vadd.f32 %v1670, %v1782
    %v1784 = vpop.f32.mrb[0].mxu0
    %v1785 = vadd.f32 %v1672, %v1784
    %1786 = vmatprep.mubr.bf16.mxu0 %v529
    %1787 = vmatmul.mubr.bf16.gmra.mrb[0].mxu0 %v528
    %v1788 = vpop.f32.mrb[0].mxu0
    %v1789 = vadd.f32 %v1676, %v1788
    %v1790 = vpop.f32.mrb[0].mxu0
    %v1791 = vadd.f32 %v1678, %v1790
    %v1792 = vpop.f32.mrb[0].mxu0
    %v1793 = vadd.f32 %v1680, %v1792
    %v1794 = vpop.f32.mrb[0].mxu0
    %v1795 = vadd.f32 %v1682, %v1794
    %1796 = vmatprep.mubr.bf16.mxu0 %v536
    %1797 = vmatmul.mubr.bf16.gmra.mrb[0].mxu0 %v535
    %v1798 = vpop.f32.mrb[0].mxu0
    %v1799 = vadd.f32 %v1686, %v1798
    %v1800 = vpop.f32.mrb[0].mxu0
    %v1801 = vadd.f32 %v1688, %v1800
    %v1802 = vpop.f32.mrb[0].mxu0
    %v1803 = vadd.f32 %v1690, %v1802
    %v1804 = vpop.f32.mrb[0].mxu0
    %v1805 = vadd.f32 %v1692, %v1804
    %1806 = vmatprep.mubr.bf16.mxu0 %v543
    %1807 = vmatmul.mubr.bf16.gmra.mrb[0].mxu0 %v542
    %v1808 = vpop.f32.mrb[0].mxu0
    %v1809 = vadd.f32 %v1696, %v1808
    %v1810 = vpop.f32.mrb[0].mxu0
    %v1811 = vadd.f32 %v1698, %v1810
    %v1812 = vpop.f32.mrb[0].mxu0
    %v1813 = vadd.f32 %v1700, %v1812
    %v1814 = vpop.f32.mrb[0].mxu0
    %v1815 = vadd.f32 %v1702, %v1814
    %1816 = vmatprep.mubr.bf16.mxu0 %v550
    %1817 = vmatmul.mubr.bf16.gmra.mrb[0].mxu0 %v549
    %v1818 = vpop.f32.mrb[0].mxu0
    %v1819 = vadd.f32 %v1706, %v1818
    %v1820 = vpop.f32.mrb[0].mxu0
    %v1821 = vadd.f32 %v1708, %v1820
    %v1822 = vpop.f32.mrb[0].mxu0
    %v1823 = vadd.f32 %v1710, %v1822
    %v1824 = vpop.f32.mrb[0].mxu0
    %v1825 = vadd.f32 %v1712, %v1824
    %1826 = vmatprep.mubr.bf16.mxu0 %v557
    %1827 = vmatmul.mubr.bf16.gmra.mrb[0].mxu0 %v556
    %v1828 = vpop.f32.mrb[0].mxu0
    %v1829 = vadd.f32 %v1716, %v1828
    %v1830 = vpop.f32.mrb[0].mxu0
    %v1831 = vadd.f32 %v1718, %v1830
    %v1832 = vpop.f32.mrb[0].mxu0
    %v1833 = vadd.f32 %v1720, %v1832
    %v1834 = vpop.f32.mrb[0].mxu0
    %v1835 = vadd.f32 %v1722, %v1834
    %1836 = vmatprep.mubr.bf16.mxu0 %v564
    %1837 = vmatmul.mubr.bf16.gmra.mrb[0].mxu0 %v563
    %v1838 = vpop.f32.mrb[0].mxu0
    %v1839 = vadd.f32 %v1726, %v1838
    %v1840 = vpop.f32.mrb[0].mxu0
    %v1841 = vadd.f32 %v1728, %v1840
    %v1842 = vpop.f32.mrb[0].mxu0
    %v1843 = vadd.f32 %v1730, %v1842
    %v1844 = vpop.f32.mrb[0].mxu0
    %v1845 = vadd.f32 %v1732, %v1844
    %1846 = vdwg.mxu0
    %1847 = vmatprep.subr.bf16.mxu0 %v1333
    %1848 = vmatpush1.bf16.msra.mxu0 %v1332
    %1849 = vmatprep.subr.bf16.mxu0 %v1337
    %1850 = vmatpush1.bf16.msra.mxu0 %v1336
    %1851 = vmatprep.subr.bf16.mxu0 %v1341
    %1852 = vmatpush1.bf16.msra.mxu0 %v1340
    %1853 = vmatprep.subr.bf16.mxu0 %v1345
    %1854 = vmatpush1.bf16.msra.mxu0 %v1344
    %1855 = vmatprep.subr.bf16.mxu0 %v1349
    %1856 = vmatpush1.bf16.msra.mxu0 %v1348
    %1857 = vmatprep.subr.bf16.mxu0 %v1353
    %1858 = vmatpush1.bf16.msra.mxu0 %v1352
    %1859 = vmatprep.subr.bf16.mxu0 %v1357
    %1860 = vmatpush1.bf16.msra.mxu0 %v1356
    %1861 = vmatprep.subr.bf16.mxu0 %v1361
    %1862 = vmatpush1.bf16.msra.mxu0 %v1360
    %1863 = vmatprep.subr.bf16.mxu0 %v1365
    %1864 = vmatpush1.bf16.msra.mxu0 %v1364
    %1865 = vmatprep.subr.bf16.mxu0 %v1369
    %1866 = vmatpush1.bf16.msra.mxu0 %v1368
    %1867 = vmatprep.subr.bf16.mxu0 %v1373
    %1868 = vmatpush1.bf16.msra.mxu0 %v1372
    %1869 = vmatprep.subr.bf16.mxu0 %v1377
    %1870 = vmatpush1.bf16.msra.mxu0 %v1376
    %1871 = vmatprep.subr.bf16.mxu0 %v1381
    %1872 = vmatpush1.bf16.msra.mxu0 %v1380
    %1873 = vmatprep.subr.bf16.mxu0 %v1385
    %1874 = vmatpush1.bf16.msra.mxu0 %v1384
    %1875 = vmatprep.subr.bf16.mxu0 %v1389
    %1876 = vmatpush1.bf16.msra.mxu0 %v1388
    %1877 = vmatprep.subr.bf16.mxu0 %v1393
    %1878 = vmatpush1.bf16.msra.mxu0 %v1392
    %1879 = vmatprep.mubr.bf16.mxu0 %v517
    %1880 = vmatmul.mubr.bf16.gmra.mrb[0].mxu0 %v516
    %v1881 = vpop.f32.mrb[0].mxu0
    %v1882 = vadd.f32 %v1769, %v1881
    %v1883 = vpop.f32.mrb[0].mxu0
    %v1884 = vadd.f32 %v1771, %v1883
    %v1885 = vpop.f32.mrb[0].mxu0
    %v1886 = vadd.f32 %v1773, %v1885
    %v1887 = vpop.f32.mrb[0].mxu0
    %v1888 = vadd.f32 %v1775, %v1887
    %1889 = vmatprep.mubr.bf16.mxu0 %v524
    %1890 = vmatmul.mubr.bf16.gmra.mrb[0].mxu0 %v523
    %v1891 = vpop.f32.mrb[0].mxu0
    %v1892 = vadd.f32 %v1779, %v1891
    %v1893 = vpop.f32.mrb[0].mxu0
    %v1894 = vadd.f32 %v1781, %v1893
    %v1895 = vpop.f32.mrb[0].mxu0
    %v1896 = vadd.f32 %v1783, %v1895
    %v1897 = vpop.f32.mrb[0].mxu0
    %v1898 = vadd.f32 %v1785, %v1897
    %1899 = vmatprep.mubr.bf16.mxu0 %v531
    %1900 = vmatmul.mubr.bf16.gmra.mrb[0].mxu0 %v530
    %v1901 = vpop.f32.mrb[0].mxu0
    %v1902 = vadd.f32 %v1789, %v1901
    %v1903 = vpop.f32.mrb[0].mxu0
    %v1904 = vadd.f32 %v1791, %v1903
    %v1905 = vpop.f32.mrb[0].mxu0
    %v1906 = vadd.f32 %v1793, %v1905
    %v1907 = vpop.f32.mrb[0].mxu0
    %v1908 = vadd.f32 %v1795, %v1907
    %1909 = vmatprep.mubr.bf16.mxu0 %v538
    %1910 = vmatmul.mubr.bf16.gmra.mrb[0].mxu0 %v537
    %v1911 = vpop.f32.mrb[0].mxu0
    %v1912 = vadd.f32 %v1799, %v1911
    %v1913 = vpop.f32.mrb[0].mxu0
    %v1914 = vadd.f32 %v1801, %v1913
    %v1915 = vpop.f32.mrb[0].mxu0
    %v1916 = vadd.f32 %v1803, %v1915
    %v1917 = vpop.f32.mrb[0].mxu0
    %v1918 = vadd.f32 %v1805, %v1917
    %1919 = vmatprep.mubr.bf16.mxu0 %v545
    %1920 = vmatmul.mubr.bf16.gmra.mrb[0].mxu0 %v544
    %v1921 = vpop.f32.mrb[0].mxu0
    %v1922 = vadd.f32 %v1809, %v1921
    %v1923 = vpop.f32.mrb[0].mxu0
    %v1924 = vadd.f32 %v1811, %v1923
    %v1925 = vpop.f32.mrb[0].mxu0
    %v1926 = vadd.f32 %v1813, %v1925
    %v1927 = vpop.f32.mrb[0].mxu0
    %v1928 = vadd.f32 %v1815, %v1927
    %1929 = vmatprep.mubr.bf16.mxu0 %v552
    %1930 = vmatmul.mubr.bf16.gmra.mrb[0].mxu0 %v551
    %v1931 = vpop.f32.mrb[0].mxu0
    %v1932 = vadd.f32 %v1819, %v1931
    %v1933 = vpop.f32.mrb[0].mxu0
    %v1934 = vadd.f32 %v1821, %v1933
    %v1935 = vpop.f32.mrb[0].mxu0
    %v1936 = vadd.f32 %v1823, %v1935
    %v1937 = vpop.f32.mrb[0].mxu0
    %v1938 = vadd.f32 %v1825, %v1937
    %1939 = vmatprep.mubr.bf16.mxu0 %v559
    %1940 = vmatmul.mubr.bf16.gmra.mrb[0].mxu0 %v558
    %v1941 = vpop.f32.mrb[0].mxu0
    %v1942 = vadd.f32 %v1829, %v1941
    %v1943 = vpop.f32.mrb[0].mxu0
    %v1944 = vadd.f32 %v1831, %v1943
    %v1945 = vpop.f32.mrb[0].mxu0
    %v1946 = vadd.f32 %v1833, %v1945
    %v1947 = vpop.f32.mrb[0].mxu0
    %v1948 = vadd.f32 %v1835, %v1947
    %1949 = vmatprep.mubr.bf16.mxu0 %v566
    %1950 = vmatmul.mubr.bf16.gmra.mrb[0].mxu0 %v565
    %v1951 = vpop.f32.mrb[0].mxu0
    %v1952 = vadd.f32 %v1839, %v1951
    %v1953 = vpop.f32.mrb[0].mxu0
    %v1954 = vadd.f32 %v1841, %v1953
    %v1955 = vpop.f32.mrb[0].mxu0
    %v1956 = vadd.f32 %v1843, %v1955
    %v1957 = vpop.f32.mrb[0].mxu0
    %v1958 = vadd.f32 %v1845, %v1957
    %1959 = vdwg.mxu0
    %1960 = vmatprep.subr.bf16.mxu0 %v1397
    %1961 = vmatpush1.bf16.msra.mxu0 %v1396
    %1962 = vmatprep.subr.bf16.mxu0 0
    %1963 = vmatpush1.bf16.msra.mxu0 0
    %1964 = vmatprep.subr.bf16.mxu0 0
    %1965 = vmatpush1.bf16.msra.mxu0 0
    %1966 = vmatprep.subr.bf16.mxu0 0
    %1967 = vmatpush1.bf16.msra.mxu0 0
    %1968 = vmatprep.subr.bf16.mxu0 0
    %1969 = vmatpush1.bf16.msra.mxu0 0
    %1970 = vmatprep.subr.bf16.mxu0 0
    %1971 = vmatpush1.bf16.msra.mxu0 0
    %1972 = vmatprep.subr.bf16.mxu0 0
    %1973 = vmatpush1.bf16.msra.mxu0 0
    %1974 = vmatprep.subr.bf16.mxu0 0
    %1975 = vmatpush1.bf16.msra.mxu0 0
    %1976 = vmatprep.subr.bf16.mxu0 0
    %1977 = vmatpush1.bf16.msra.mxu0 0
    %1978 = vmatprep.subr.bf16.mxu0 0
    %1979 = vmatpush1.bf16.msra.mxu0 0
    %1980 = vmatprep.subr.bf16.mxu0 0
    %1981 = vmatpush1.bf16.msra.mxu0 0
    %1982 = vmatprep.subr.bf16.mxu0 0
    %1983 = vmatpush1.bf16.msra.mxu0 0
    %1984 = vmatprep.subr.bf16.mxu0 0
    %1985 = vmatpush1.bf16.msra.mxu0 0
    %1986 = vmatprep.subr.bf16.mxu0 0
    %1987 = vmatpush1.bf16.msra.mxu0 0
    %1988 = vmatprep.subr.bf16.mxu0 0
    %1989 = vmatpush1.bf16.msra.mxu0 0
    %1990 = vmatprep.subr.bf16.mxu0 0
    %1991 = vmatpush1.bf16.msra.mxu0 0
    %1992 = vmatprep.mubr.bf16.mxu0 0
    %1993 = vmatmul.mubr.bf16.gmra.mrb[0].mxu0 %v1598
    %v1994 = vpop.f32.mrb[0].mxu0
    %v1995 = vadd.f32 %v1882, %v1994
    %v1996 = vpop.f32.mrb[0].mxu0
    %v1997 = vadd.f32 %v1884, %v1996
    %v1998 = vpop.f32.mrb[0].mxu0
    %v1999 = vadd.f32 %v1886, %v1998
    %v2000 = vpop.f32.mrb[0].mxu0
    %v2001 = vadd.f32 %v1888, %v2000
    %2002 = vmatprep.mubr.bf16.mxu0 0
    %2003 = vmatmul.mubr.bf16.gmra.mrb[0].mxu0 %v1601
    %v2004 = vpop.f32.mrb[0].mxu0
    %v2005 = vadd.f32 %v1892, %v2004
    %v2006 = vpop.f32.mrb[0].mxu0
    %v2007 = vadd.f32 %v1894, %v2006
    %v2008 = vpop.f32.mrb[0].mxu0
    %v2009 = vadd.f32 %v1896, %v2008
    %v2010 = vpop.f32.mrb[0].mxu0
    %v2011 = vadd.f32 %v1898, %v2010
    %2012 = vmatprep.mubr.bf16.mxu0 0
    %2013 = vmatmul.mubr.bf16.gmra.mrb[0].mxu0 %v1604
    %v2014 = vpop.f32.mrb[0].mxu0
    %v2015 = vadd.f32 %v1902, %v2014
    %v2016 = vpop.f32.mrb[0].mxu0
    %v2017 = vadd.f32 %v1904, %v2016
    %v2018 = vpop.f32.mrb[0].mxu0
    %v2019 = vadd.f32 %v1906, %v2018
    %v2020 = vpop.f32.mrb[0].mxu0
    %v2021 = vadd.f32 %v1908, %v2020
    %2022 = vmatprep.mubr.bf16.mxu0 0
    %2023 = vmatmul.mubr.bf16.gmra.mrb[0].mxu0 %v1607
    %v2024 = vpop.f32.mrb[0].mxu0
    %v2025 = vadd.f32 %v1912, %v2024
    %v2026 = vpop.f32.mrb[0].mxu0
    %v2027 = vadd.f32 %v1914, %v2026
    %v2028 = vpop.f32.mrb[0].mxu0
    %v2029 = vadd.f32 %v1916, %v2028
    %v2030 = vpop.f32.mrb[0].mxu0
    %v2031 = vadd.f32 %v1918, %v2030
    %2032 = vmatprep.mubr.bf16.mxu0 0
    %2033 = vmatmul.mubr.bf16.gmra.mrb[0].mxu0 %v1610
    %v2034 = vpop.f32.mrb[0].mxu0
    %v2035 = vadd.f32 %v1922, %v2034
    %v2036 = vpop.f32.mrb[0].mxu0
    %v2037 = vadd.f32 %v1924, %v2036
    %v2038 = vpop.f32.mrb[0].mxu0
    %v2039 = vadd.f32 %v1926, %v2038
    %v2040 = vpop.f32.mrb[0].mxu0
    %v2041 = vadd.f32 %v1928, %v2040
    %2042 = vmatprep.mubr.bf16.mxu0 0
    %2043 = vmatmul.mubr.bf16.gmra.mrb[0].mxu0 %v1613
    %v2044 = vpop.f32.mrb[0].mxu0
    %v2045 = vadd.f32 %v1932, %v2044
    %v2046 = vpop.f32.mrb[0].mxu0
    %v2047 = vadd.f32 %v1934, %v2046
    %v2048 = vpop.f32.mrb[0].mxu0
    %v2049 = vadd.f32 %v1936, %v2048
    %v2050 = vpop.f32.mrb[0].mxu0
    %v2051 = vadd.f32 %v1938, %v2050
    %2052 = vmatprep.mubr.bf16.mxu0 0
    %2053 = vmatmul.mubr.bf16.gmra.mrb[0].mxu0 %v1616
    %v2054 = vpop.f32.mrb[0].mxu0
    %v2055 = vadd.f32 %v1942, %v2054
    %v2056 = vpop.f32.mrb[0].mxu0
    %v2057 = vadd.f32 %v1944, %v2056
    %v2058 = vpop.f32.mrb[0].mxu0
    %v2059 = vadd.f32 %v1946, %v2058
    %v2060 = vpop.f32.mrb[0].mxu0
    %v2061 = vadd.f32 %v1948, %v2060
    %2062 = vmatprep.mubr.bf16.mxu0 0
    %2063 = vmatmul.mubr.bf16.gmra.mrb[0].mxu0 %v1619
    %v2064 = vpop.f32.mrb[0].mxu0
    %v2065 = vadd.f32 %v1952, %v2064
    %v2066 = vpop.f32.mrb[0].mxu0
    %v2067 = vadd.f32 %v1954, %v2066
    %v2068 = vpop.f32.mrb[0].mxu0
    %v2069 = vadd.f32 %v1956, %v2068
    %v2070 = vpop.f32.mrb[0].mxu0
    %v2071 = vadd.f32 %v1958, %v2070
    %2072 = vdwg.mxu0
    %2073 = vmatprep.subr.bf16.mxu0 %v1207
    %2074 = vmatpush1.bf16.msra.mxu0 %v1206
    %2075 = vmatprep.subr.bf16.mxu0 %v1211
    %2076 = vmatpush1.bf16.msra.mxu0 %v1210
    %2077 = vmatprep.subr.bf16.mxu0 %v1215
    %2078 = vmatpush1.bf16.msra.mxu0 %v1214
    %2079 = vmatprep.subr.bf16.mxu0 %v1219
    %2080 = vmatpush1.bf16.msra.mxu0 %v1218
    %2081 = vmatprep.subr.bf16.mxu0 %v1223
    %2082 = vmatpush1.bf16.msra.mxu0 %v1222
    %2083 = vmatprep.subr.bf16.mxu0 %v1227
    %2084 = vmatpush1.bf16.msra.mxu0 %v1226
    %2085 = vmatprep.subr.bf16.mxu0 %v1231
    %2086 = vmatpush1.bf16.msra.mxu0 %v1230
    %2087 = vmatprep.subr.bf16.mxu0 %v1235
    %2088 = vmatpush1.bf16.msra.mxu0 %v1234
    %2089 = vmatprep.subr.bf16.mxu0 %v1239
    %2090 = vmatpush1.bf16.msra.mxu0 %v1238
    %2091 = vmatprep.subr.bf16.mxu0 %v1243
    %2092 = vmatpush1.bf16.msra.mxu0 %v1242
    %2093 = vmatprep.subr.bf16.mxu0 %v1247
    %2094 = vmatpush1.bf16.msra.mxu0 %v1246
    %2095 = vmatprep.subr.bf16.mxu0 %v1251
    %2096 = vmatpush1.bf16.msra.mxu0 %v1250
    %2097 = vmatprep.subr.bf16.mxu0 %v1255
    %2098 = vmatpush1.bf16.msra.mxu0 %v1254
    %2099 = vmatprep.subr.bf16.mxu0 %v1259
    %2100 = vmatpush1.bf16.msra.mxu0 %v1258
    %2101 = vmatprep.subr.bf16.mxu0 %v1263
    %2102 = vmatpush1.bf16.msra.mxu0 %v1262
    %2103 = vmatprep.subr.bf16.mxu0 %v1267
    %2104 = vmatpush1.bf16.msra.mxu0 %v1266
    %2105 = vmatprep.mubr.bf16.mxu0 %v513
    %2106 = vmatmul.mubr.bf16.gmra.mrb[0].mxu0 %v512
    %v2107 = vpop.f32.mrb[0].mxu0
    %v2108 = vadd.f32 %v327, %v2107
    %v2109 = vpop.f32.mrb[0].mxu0
    %v2110 = vadd.f32 %v331, %v2109
    %v2111 = vpop.f32.mrb[0].mxu0
    %v2112 = vadd.f32 %v327, %v2111
    %v2113 = vpop.f32.mrb[0].mxu0
    %v2114 = vadd.f32 %v331, %v2113
    %2115 = vmatprep.mubr.bf16.mxu0 %v520
    %2116 = vmatmul.mubr.bf16.gmra.mrb[0].mxu0 %v519
    %v2117 = vpop.f32.mrb[0].mxu0
    %v2118 = vadd.f32 %v327, %v2117
    %v2119 = vpop.f32.mrb[0].mxu0
    %v2120 = vadd.f32 %v331, %v2119
    %v2121 = vpop.f32.mrb[0].mxu0
    %v2122 = vadd.f32 %v327, %v2121
    %v2123 = vpop.f32.mrb[0].mxu0
    %v2124 = vadd.f32 %v331, %v2123
    %2125 = vmatprep.mubr.bf16.mxu0 %v527
    %2126 = vmatmul.mubr.bf16.gmra.mrb[0].mxu0 %v526
    %v2127 = vpop.f32.mrb[0].mxu0
    %v2128 = vadd.f32 %v327, %v2127
    %v2129 = vpop.f32.mrb[0].mxu0
    %v2130 = vadd.f32 %v331, %v2129
    %v2131 = vpop.f32.mrb[0].mxu0
    %v2132 = vadd.f32 %v327, %v2131
    %v2133 = vpop.f32.mrb[0].mxu0
    %v2134 = vadd.f32 %v331, %v2133
    %2135 = vmatprep.mubr.bf16.mxu0 %v534
    %2136 = vmatmul.mubr.bf16.gmra.mrb[0].mxu0 %v533
    %v2137 = vpop.f32.mrb[0].mxu0
    %v2138 = vadd.f32 %v327, %v2137
    %v2139 = vpop.f32.mrb[0].mxu0
    %v2140 = vadd.f32 %v331, %v2139
    %v2141 = vpop.f32.mrb[0].mxu0
    %v2142 = vadd.f32 %v327, %v2141
    %v2143 = vpop.f32.mrb[0].mxu0
    %v2144 = vadd.f32 %v331, %v2143
    %2145 = vmatprep.mubr.bf16.mxu0 %v541
    %2146 = vmatmul.mubr.bf16.gmra.mrb[0].mxu0 %v540
    %v2147 = vpop.f32.mrb[0].mxu0
    %v2148 = vadd.f32 %v327, %v2147
    %v2149 = vpop.f32.mrb[0].mxu0
    %v2150 = vadd.f32 %v331, %v2149
    %v2151 = vpop.f32.mrb[0].mxu0
    %v2152 = vadd.f32 %v327, %v2151
    %v2153 = vpop.f32.mrb[0].mxu0
    %v2154 = vadd.f32 %v331, %v2153
    %2155 = vmatprep.mubr.bf16.mxu0 %v548
    %2156 = vmatmul.mubr.bf16.gmra.mrb[0].mxu0 %v547
    %v2157 = vpop.f32.mrb[0].mxu0
    %v2158 = vadd.f32 %v327, %v2157
    %v2159 = vpop.f32.mrb[0].mxu0
    %v2160 = vadd.f32 %v331, %v2159
    %v2161 = vpop.f32.mrb[0].mxu0
    %v2162 = vadd.f32 %v327, %v2161
    %v2163 = vpop.f32.mrb[0].mxu0
    %v2164 = vadd.f32 %v331, %v2163
    %2165 = vmatprep.mubr.bf16.mxu0 %v555
    %2166 = vmatmul.mubr.bf16.gmra.mrb[0].mxu0 %v554
    %v2167 = vpop.f32.mrb[0].mxu0
    %v2168 = vadd.f32 %v327, %v2167
    %v2169 = vpop.f32.mrb[0].mxu0
    %v2170 = vadd.f32 %v331, %v2169
    %v2171 = vpop.f32.mrb[0].mxu0
    %v2172 = vadd.f32 %v327, %v2171
    %v2173 = vpop.f32.mrb[0].mxu0
    %v2174 = vadd.f32 %v331, %v2173
    %2175 = vmatprep.mubr.bf16.mxu0 %v562
    %2176 = vmatmul.mubr.bf16.gmra.mrb[0].mxu0 %v561
    %v2177 = vpop.f32.mrb[0].mxu0
    %v2178 = vadd.f32 %v327, %v2177
    %v2179 = vpop.f32.mrb[0].mxu0
    %v2180 = vadd.f32 %v331, %v2179
    %v2181 = vpop.f32.mrb[0].mxu0
    %v2182 = vadd.f32 %v327, %v2181
    %v2183 = vpop.f32.mrb[0].mxu0
    %v2184 = vadd.f32 %v331, %v2183
    %2185 = vdwg.mxu0
    %2186 = vmatprep.subr.bf16.mxu0 %v1271
    %2187 = vmatpush1.bf16.msra.mxu0 %v1270
    %2188 = vmatprep.subr.bf16.mxu0 %v1275
    %2189 = vmatpush1.bf16.msra.mxu0 %v1274
    %2190 = vmatprep.subr.bf16.mxu0 %v1279
    %2191 = vmatpush1.bf16.msra.mxu0 %v1278
    %2192 = vmatprep.subr.bf16.mxu0 %v1283
    %2193 = vmatpush1.bf16.msra.mxu0 %v1282
    %2194 = vmatprep.subr.bf16.mxu0 %v1287
    %2195 = vmatpush1.bf16.msra.mxu0 %v1286
    %2196 = vmatprep.subr.bf16.mxu0 %v1291
    %2197 = vmatpush1.bf16.msra.mxu0 %v1290
    %2198 = vmatprep.subr.bf16.mxu0 %v1295
    %2199 = vmatpush1.bf16.msra.mxu0 %v1294
    %2200 = vmatprep.subr.bf16.mxu0 %v1299
    %2201 = vmatpush1.bf16.msra.mxu0 %v1298
    %2202 = vmatprep.subr.bf16.mxu0 %v1303
    %2203 = vmatpush1.bf16.msra.mxu0 %v1302
    %2204 = vmatprep.subr.bf16.mxu0 %v1307
    %2205 = vmatpush1.bf16.msra.mxu0 %v1306
    %2206 = vmatprep.subr.bf16.mxu0 %v1311
    %2207 = vmatpush1.bf16.msra.mxu0 %v1310
    %2208 = vmatprep.subr.bf16.mxu0 %v1315
    %2209 = vmatpush1.bf16.msra.mxu0 %v1314
    %2210 = vmatprep.subr.bf16.mxu0 %v1319
    %2211 = vmatpush1.bf16.msra.mxu0 %v1318
    %2212 = vmatprep.subr.bf16.mxu0 %v1323
    %2213 = vmatpush1.bf16.msra.mxu0 %v1322
    %2214 = vmatprep.subr.bf16.mxu0 %v1327
    %2215 = vmatpush1.bf16.msra.mxu0 %v1326
    %2216 = vmatprep.subr.bf16.mxu0 %v1331
    %2217 = vmatpush1.bf16.msra.mxu0 %v1330
    %2218 = vmatprep.mubr.bf16.mxu0 %v515
    %2219 = vmatmul.mubr.bf16.gmra.mrb[0].mxu0 %v514
    %v2220 = vpop.f32.mrb[0].mxu0
    %v2221 = vadd.f32 %v2108, %v2220
    %v2222 = vpop.f32.mrb[0].mxu0
    %v2223 = vadd.f32 %v2110, %v2222
    %v2224 = vpop.f32.mrb[0].mxu0
    %v2225 = vadd.f32 %v2112, %v2224
    %v2226 = vpop.f32.mrb[0].mxu0
    %v2227 = vadd.f32 %v2114, %v2226
    %2228 = vmatprep.mubr.bf16.mxu0 %v522
    %2229 = vmatmul.mubr.bf16.gmra.mrb[0].mxu0 %v521
    %v2230 = vpop.f32.mrb[0].mxu0
    %v2231 = vadd.f32 %v2118, %v2230
    %v2232 = vpop.f32.mrb[0].mxu0
    %v2233 = vadd.f32 %v2120, %v2232
    %v2234 = vpop.f32.mrb[0].mxu0
    %v2235 = vadd.f32 %v2122, %v2234
    %v2236 = vpop.f32.mrb[0].mxu0
    %v2237 = vadd.f32 %v2124, %v2236
    %2238 = vmatprep.mubr.bf16.mxu0 %v529
    %2239 = vmatmul.mubr.bf16.gmra.mrb[0].mxu0 %v528
    %v2240 = vpop.f32.mrb[0].mxu0
    %v2241 = vadd.f32 %v2128, %v2240
    %v2242 = vpop.f32.mrb[0].mxu0
    %v2243 = vadd.f32 %v2130, %v2242
    %v2244 = vpop.f32.mrb[0].mxu0
    %v2245 = vadd.f32 %v2132, %v2244
    %v2246 = vpop.f32.mrb[0].mxu0
    %v2247 = vadd.f32 %v2134, %v2246
    %2248 = vmatprep.mubr.bf16.mxu0 %v536
    %2249 = vmatmul.mubr.bf16.gmra.mrb[0].mxu0 %v535
    %v2250 = vpop.f32.mrb[0].mxu0
    %v2251 = vadd.f32 %v2138, %v2250
    %v2252 = vpop.f32.mrb[0].mxu0
    %v2253 = vadd.f32 %v2140, %v2252
    %v2254 = vpop.f32.mrb[0].mxu0
    %v2255 = vadd.f32 %v2142, %v2254
    %v2256 = vpop.f32.mrb[0].mxu0
    %v2257 = vadd.f32 %v2144, %v2256
    %2258 = vmatprep.mubr.bf16.mxu0 %v543
    %2259 = vmatmul.mubr.bf16.gmra.mrb[0].mxu0 %v542
    %v2260 = vpop.f32.mrb[0].mxu0
    %v2261 = vadd.f32 %v2148, %v2260
    %v2262 = vpop.f32.mrb[0].mxu0
    %v2263 = vadd.f32 %v2150, %v2262
    %v2264 = vpop.f32.mrb[0].mxu0
    %v2265 = vadd.f32 %v2152, %v2264
    %v2266 = vpop.f32.mrb[0].mxu0
    %v2267 = vadd.f32 %v2154, %v2266
    %2268 = vmatprep.mubr.bf16.mxu0 %v550
    %2269 = vmatmul.mubr.bf16.gmra.mrb[0].mxu0 %v549
    %v2270 = vpop.f32.mrb[0].mxu0
    %v2271 = vadd.f32 %v2158, %v2270
    %v2272 = vpop.f32.mrb[0].mxu0
    %v2273 = vadd.f32 %v2160, %v2272
    %v2274 = vpop.f32.mrb[0].mxu0
    %v2275 = vadd.f32 %v2162, %v2274
    %v2276 = vpop.f32.mrb[0].mxu0
    %v2277 = vadd.f32 %v2164, %v2276
    %2278 = vmatprep.mubr.bf16.mxu0 %v557
    %2279 = vmatmul.mubr.bf16.gmra.mrb[0].mxu0 %v556
    %v2280 = vpop.f32.mrb[0].mxu0
    %v2281 = vadd.f32 %v2168, %v2280
    %v2282 = vpop.f32.mrb[0].mxu0
    %v2283 = vadd.f32 %v2170, %v2282
    %v2284 = vpop.f32.mrb[0].mxu0
    %v2285 = vadd.f32 %v2172, %v2284
    %v2286 = vpop.f32.mrb[0].mxu0
    %v2287 = vadd.f32 %v2174, %v2286
    %2288 = vmatprep.mubr.bf16.mxu0 %v564
    %2289 = vmatmul.mubr.bf16.gmra.mrb[0].mxu0 %v563
    %v2290 = vpop.f32.mrb[0].mxu0
    %v2291 = vadd.f32 %v2178, %v2290
    %v2292 = vpop.f32.mrb[0].mxu0
    %v2293 = vadd.f32 %v2180, %v2292
    %v2294 = vpop.f32.mrb[0].mxu0
    %v2295 = vadd.f32 %v2182, %v2294
    %v2296 = vpop.f32.mrb[0].mxu0
    %v2297 = vadd.f32 %v2184, %v2296
    %2298 = vdwg.mxu0
    %2299 = vmatprep.subr.bf16.mxu0 %v1335
    %2300 = vmatpush1.bf16.msra.mxu0 %v1334
    %2301 = vmatprep.subr.bf16.mxu0 %v1339
    %2302 = vmatpush1.bf16.msra.mxu0 %v1338
    %2303 = vmatprep.subr.bf16.mxu0 %v1343
    %2304 = vmatpush1.bf16.msra.mxu0 %v1342
    %2305 = vmatprep.subr.bf16.mxu0 %v1347
    %2306 = vmatpush1.bf16.msra.mxu0 %v1346
    %2307 = vmatprep.subr.bf16.mxu0 %v1351
    %2308 = vmatpush1.bf16.msra.mxu0 %v1350
    %2309 = vmatprep.subr.bf16.mxu0 %v1355
    %2310 = vmatpush1.bf16.msra.mxu0 %v1354
    %2311 = vmatprep.subr.bf16.mxu0 %v1359
    %2312 = vmatpush1.bf16.msra.mxu0 %v1358
    %2313 = vmatprep.subr.bf16.mxu0 %v1363
    %2314 = vmatpush1.bf16.msra.mxu0 %v1362
    %2315 = vmatprep.subr.bf16.mxu0 %v1367
    %2316 = vmatpush1.bf16.msra.mxu0 %v1366
    %2317 = vmatprep.subr.bf16.mxu0 %v1371
    %2318 = vmatpush1.bf16.msra.mxu0 %v1370
    %2319 = vmatprep.subr.bf16.mxu0 %v1375
    %2320 = vmatpush1.bf16.msra.mxu0 %v1374
    %2321 = vmatprep.subr.bf16.mxu0 %v1379
    %2322 = vmatpush1.bf16.msra.mxu0 %v1378
    %2323 = vmatprep.subr.bf16.mxu0 %v1383
    %2324 = vmatpush1.bf16.msra.mxu0 %v1382
    %2325 = vmatprep.subr.bf16.mxu0 %v1387
    %2326 = vmatpush1.bf16.msra.mxu0 %v1386
    %2327 = vmatprep.subr.bf16.mxu0 %v1391
    %2328 = vmatpush1.bf16.msra.mxu0 %v1390
    %2329 = vmatprep.subr.bf16.mxu0 %v1395
    %2330 = vmatpush1.bf16.msra.mxu0 %v1394
    %2331 = vmatprep.mubr.bf16.mxu0 %v517
    %2332 = vmatmul.mubr.bf16.gmra.mrb[0].mxu0 %v516
    %v2333 = vpop.f32.mrb[0].mxu0
    %v2334 = vadd.f32 %v2221, %v2333
    %v2335 = vpop.f32.mrb[0].mxu0
    %v2336 = vadd.f32 %v2223, %v2335
    %v2337 = vpop.f32.mrb[0].mxu0
    %v2338 = vadd.f32 %v2225, %v2337
    %v2339 = vpop.f32.mrb[0].mxu0
    %v2340 = vadd.f32 %v2227, %v2339
    %2341 = vmatprep.mubr.bf16.mxu0 %v524
    %2342 = vmatmul.mubr.bf16.gmra.mrb[0].mxu0 %v523
    %v2343 = vpop.f32.mrb[0].mxu0
    %v2344 = vadd.f32 %v2231, %v2343
    %v2345 = vpop.f32.mrb[0].mxu0
    %v2346 = vadd.f32 %v2233, %v2345
    %v2347 = vpop.f32.mrb[0].mxu0
    %v2348 = vadd.f32 %v2235, %v2347
    %v2349 = vpop.f32.mrb[0].mxu0
    %v2350 = vadd.f32 %v2237, %v2349
    %2351 = vmatprep.mubr.bf16.mxu0 %v531
    %2352 = vmatmul.mubr.bf16.gmra.mrb[0].mxu0 %v530
    %v2353 = vpop.f32.mrb[0].mxu0
    %v2354 = vadd.f32 %v2241, %v2353
    %v2355 = vpop.f32.mrb[0].mxu0
    %v2356 = vadd.f32 %v2243, %v2355
    %v2357 = vpop.f32.mrb[0].mxu0
    %v2358 = vadd.f32 %v2245, %v2357
    %v2359 = vpop.f32.mrb[0].mxu0
    %v2360 = vadd.f32 %v2247, %v2359
    %2361 = vmatprep.mubr.bf16.mxu0 %v538
    %2362 = vmatmul.mubr.bf16.gmra.mrb[0].mxu0 %v537
    %v2363 = vpop.f32.mrb[0].mxu0
    %v2364 = vadd.f32 %v2251, %v2363
    %v2365 = vpop.f32.mrb[0].mxu0
    %v2366 = vadd.f32 %v2253, %v2365
    %v2367 = vpop.f32.mrb[0].mxu0
    %v2368 = vadd.f32 %v2255, %v2367
    %v2369 = vpop.f32.mrb[0].mxu0
    %v2370 = vadd.f32 %v2257, %v2369
    %2371 = vmatprep.mubr.bf16.mxu0 %v545
    %2372 = vmatmul.mubr.bf16.gmra.mrb[0].mxu0 %v544
    %v2373 = vpop.f32.mrb[0].mxu0
    %v2374 = vadd.f32 %v2261, %v2373
    %v2375 = vpop.f32.mrb[0].mxu0
    %v2376 = vadd.f32 %v2263, %v2375
    %v2377 = vpop.f32.mrb[0].mxu0
    %v2378 = vadd.f32 %v2265, %v2377
    %v2379 = vpop.f32.mrb[0].mxu0
    %v2380 = vadd.f32 %v2267, %v2379
    %2381 = vmatprep.mubr.bf16.mxu0 %v552
    %2382 = vmatmul.mubr.bf16.gmra.mrb[0].mxu0 %v551
    %v2383 = vpop.f32.mrb[0].mxu0
    %v2384 = vadd.f32 %v2271, %v2383
    %v2385 = vpop.f32.mrb[0].mxu0
    %v2386 = vadd.f32 %v2273, %v2385
    %v2387 = vpop.f32.mrb[0].mxu0
    %v2388 = vadd.f32 %v2275, %v2387
    %v2389 = vpop.f32.mrb[0].mxu0
    %v2390 = vadd.f32 %v2277, %v2389
    %2391 = vmatprep.mubr.bf16.mxu0 %v559
    %2392 = vmatmul.mubr.bf16.gmra.mrb[0].mxu0 %v558
    %v2393 = vpop.f32.mrb[0].mxu0
    %v2394 = vadd.f32 %v2281, %v2393
    %v2395 = vpop.f32.mrb[0].mxu0
    %v2396 = vadd.f32 %v2283, %v2395
    %v2397 = vpop.f32.mrb[0].mxu0
    %v2398 = vadd.f32 %v2285, %v2397
    %v2399 = vpop.f32.mrb[0].mxu0
    %v2400 = vadd.f32 %v2287, %v2399
    %2401 = vmatprep.mubr.bf16.mxu0 %v566
    %2402 = vmatmul.mubr.bf16.gmra.mrb[0].mxu0 %v565
    %v2403 = vpop.f32.mrb[0].mxu0
    %v2404 = vadd.f32 %v2291, %v2403
    %v2405 = vpop.f32.mrb[0].mxu0
    %v2406 = vadd.f32 %v2293, %v2405
    %v2407 = vpop.f32.mrb[0].mxu0
    %v2408 = vadd.f32 %v2295, %v2407
    %v2409 = vpop.f32.mrb[0].mxu0
    %v2410 = vadd.f32 %v2297, %v2409
    %2411 = vdwg.mxu0
    %2412 = vmatprep.subr.bf16.mxu0 %v1399
    %2413 = vmatpush1.bf16.msra.mxu0 %v1398
    %2414 = vmatprep.subr.bf16.mxu0 0
    %2415 = vmatpush1.bf16.msra.mxu0 0
    %2416 = vmatprep.subr.bf16.mxu0 0
    %2417 = vmatpush1.bf16.msra.mxu0 0
    %2418 = vmatprep.subr.bf16.mxu0 0
    %2419 = vmatpush1.bf16.msra.mxu0 0
    %2420 = vmatprep.subr.bf16.mxu0 0
    %2421 = vmatpush1.bf16.msra.mxu0 0
    %2422 = vmatprep.subr.bf16.mxu0 0
    %2423 = vmatpush1.bf16.msra.mxu0 0
    %2424 = vmatprep.subr.bf16.mxu0 0
    %2425 = vmatpush1.bf16.msra.mxu0 0
    %2426 = vmatprep.subr.bf16.mxu0 0
    %2427 = vmatpush1.bf16.msra.mxu0 0
    %2428 = vmatprep.subr.bf16.mxu0 0
    %2429 = vmatpush1.bf16.msra.mxu0 0
    %2430 = vmatprep.subr.bf16.mxu0 0
    %2431 = vmatpush1.bf16.msra.mxu0 0
    %2432 = vmatprep.subr.bf16.mxu0 0
    %2433 = vmatpush1.bf16.msra.mxu0 0
    %2434 = vmatprep.subr.bf16.mxu0 0
    %2435 = vmatpush1.bf16.msra.mxu0 0
    %2436 = vmatprep.subr.bf16.mxu0 0
    %2437 = vmatpush1.bf16.msra.mxu0 0
    %2438 = vmatprep.subr.bf16.mxu0 0
    %2439 = vmatpush1.bf16.msra.mxu0 0
    %2440 = vmatprep.subr.bf16.mxu0 0
    %2441 = vmatpush1.bf16.msra.mxu0 0
    %2442 = vmatprep.subr.bf16.mxu0 0
    %2443 = vmatpush1.bf16.msra.mxu0 0
    %2444 = vmatprep.mubr.bf16.mxu0 0
    %2445 = vmatmul.mubr.bf16.gmra.mrb[0].mxu0 %v1598
    %v2446 = vpop.f32.mrb[0].mxu0
    %v2447 = vadd.f32 %v2334, %v2446
    %v2448 = vpop.f32.mrb[0].mxu0
    %v2449 = vadd.f32 %v2336, %v2448
    %v2450 = vpop.f32.mrb[0].mxu0
    %v2451 = vadd.f32 %v2338, %v2450
    %v2452 = vpop.f32.mrb[0].mxu0
    %v2453 = vadd.f32 %v2340, %v2452
    %2454 = vmatprep.mubr.bf16.mxu0 0
    %2455 = vmatmul.mubr.bf16.gmra.mrb[0].mxu0 %v1601
    %v2456 = vpop.f32.mrb[0].mxu0
    %v2457 = vadd.f32 %v2344, %v2456
    %v2458 = vpop.f32.mrb[0].mxu0
    %v2459 = vadd.f32 %v2346, %v2458
    %v2460 = vpop.f32.mrb[0].mxu0
    %v2461 = vadd.f32 %v2348, %v2460
    %v2462 = vpop.f32.mrb[0].mxu0
    %v2463 = vadd.f32 %v2350, %v2462
    %2464 = vmatprep.mubr.bf16.mxu0 0
    %2465 = vmatmul.mubr.bf16.gmra.mrb[0].mxu0 %v1604
    %v2466 = vpop.f32.mrb[0].mxu0
    %v2467 = vadd.f32 %v2354, %v2466
    %v2468 = vpop.f32.mrb[0].mxu0
    %v2469 = vadd.f32 %v2356, %v2468
    %v2470 = vpop.f32.mrb[0].mxu0
    %v2471 = vadd.f32 %v2358, %v2470
    %v2472 = vpop.f32.mrb[0].mxu0
    %v2473 = vadd.f32 %v2360, %v2472
    %2474 = vmatprep.mubr.bf16.mxu0 0
    %2475 = vmatmul.mubr.bf16.gmra.mrb[0].mxu0 %v1607
    %v2476 = vpop.f32.mrb[0].mxu0
    %v2477 = vadd.f32 %v2364, %v2476
    %v2478 = vpop.f32.mrb[0].mxu0
    %v2479 = vadd.f32 %v2366, %v2478
    %v2480 = vpop.f32.mrb[0].mxu0
    %v2481 = vadd.f32 %v2368, %v2480
    %v2482 = vpop.f32.mrb[0].mxu0
    %v2483 = vadd.f32 %v2370, %v2482
    %2484 = vmatprep.mubr.bf16.mxu0 0
    %2485 = vmatmul.mubr.bf16.gmra.mrb[0].mxu0 %v1610
    %v2486 = vpop.f32.mrb[0].mxu0
    %v2487 = vadd.f32 %v2374, %v2486
    %v2488 = vpop.f32.mrb[0].mxu0
    %v2489 = vadd.f32 %v2376, %v2488
    %v2490 = vpop.f32.mrb[0].mxu0
    %v2491 = vadd.f32 %v2378, %v2490
    %v2492 = vpop.f32.mrb[0].mxu0
    %v2493 = vadd.f32 %v2380, %v2492
    %2494 = vmatprep.mubr.bf16.mxu0 0
    %2495 = vmatmul.mubr.bf16.gmra.mrb[0].mxu0 %v1613
    %v2496 = vpop.f32.mrb[0].mxu0
    %v2497 = vadd.f32 %v2384, %v2496
    %v2498 = vpop.f32.mrb[0].mxu0
    %v2499 = vadd.f32 %v2386, %v2498
    %v2500 = vpop.f32.mrb[0].mxu0
    %v2501 = vadd.f32 %v2388, %v2500
    %v2502 = vpop.f32.mrb[0].mxu0
    %v2503 = vadd.f32 %v2390, %v2502
    %2504 = vmatprep.mubr.bf16.mxu0 0
    %2505 = vmatmul.mubr.bf16.gmra.mrb[0].mxu0 %v1616
    %v2506 = vpop.f32.mrb[0].mxu0
    %v2507 = vadd.f32 %v2394, %v2506
    %v2508 = vpop.f32.mrb[0].mxu0
    %v2509 = vadd.f32 %v2396, %v2508
    %v2510 = vpop.f32.mrb[0].mxu0
    %v2511 = vadd.f32 %v2398, %v2510
    %v2512 = vpop.f32.mrb[0].mxu0
    %v2513 = vadd.f32 %v2400, %v2512
    %2514 = vmatprep.mubr.bf16.mxu0 0
    %2515 = vmatmul.mubr.bf16.gmra.mrb[0].mxu0 %v1619
    %v2516 = vpop.f32.mrb[0].mxu0
    %v2517 = vadd.f32 %v2404, %v2516
    %v2518 = vpop.f32.mrb[0].mxu0
    %v2519 = vadd.f32 %v2406, %v2518
    %v2520 = vpop.f32.mrb[0].mxu0
    %v2521 = vadd.f32 %v2408, %v2520
    %v2522 = vpop.f32.mrb[0].mxu0
    %v2523 = vadd.f32 %v2410, %v2522
    %2524 = vdwg.mxu0
    %v2525 = vmax.f32 %v1995, 0.0
    %v2526 = vmax.f32 %v1997, 0.0
    %v2527 = vmax.f32 %v2447, 0.0
    %v2528 = vmax.f32 %v2449, 0.0
    %v2529 = vmax.f32 %v1999, 0.0
    %v2530 = vmax.f32 %v2001, 0.0
    %v2531 = vmax.f32 %v2451, 0.0
    %v2532 = vmax.f32 %v2453, 0.0
    %v2533 = vmax.f32 %v2005, 0.0
    %v2534 = vmax.f32 %v2007, 0.0
    %v2535 = vmax.f32 %v2457, 0.0
    %v2536 = vmax.f32 %v2459, 0.0
    %v2537 = vmax.f32 %v2009, 0.0
    %v2538 = vmax.f32 %v2011, 0.0
    %v2539 = vmax.f32 %v2461, 0.0
    %v2540 = vmax.f32 %v2463, 0.0
    %v2541 = vmax.f32 %v2015, 0.0
    %v2542 = vmax.f32 %v2017, 0.0
    %v2543 = vmax.f32 %v2467, 0.0
    %v2544 = vmax.f32 %v2469, 0.0
    %v2545 = vmax.f32 %v2019, 0.0
    %v2546 = vmax.f32 %v2021, 0.0
    %v2547 = vmax.f32 %v2471, 0.0
    %v2548 = vmax.f32 %v2473, 0.0
    %v2549 = vmax.f32 %v2025, 0.0
    %v2550 = vmax.f32 %v2027, 0.0
    %v2551 = vmax.f32 %v2477, 0.0
    %v2552 = vmax.f32 %v2479, 0.0
    %v2553 = vmax.f32 %v2029, 0.0
    %v2554 = vmax.f32 %v2031, 0.0
    %v2555 = vmax.f32 %v2481, 0.0
    %v2556 = vmax.f32 %v2483, 0.0
    %v2557 = vmax.f32 %v2035, 0.0
    %v2558 = vmax.f32 %v2037, 0.0
    %v2559 = vmax.f32 %v2487, 0.0
    %v2560 = vmax.f32 %v2489, 0.0
    %v2561 = vmax.f32 %v2039, 0.0
    %v2562 = vmax.f32 %v2041, 0.0
    %v2563 = vmax.f32 %v2491, 0.0
    %v2564 = vmax.f32 %v2493, 0.0
    %v2565 = vmax.f32 %v2045, 0.0
    %v2566 = vmax.f32 %v2047, 0.0
    %v2567 = vmax.f32 %v2497, 0.0
    %v2568 = vmax.f32 %v2499, 0.0
    %v2569 = vmax.f32 %v2049, 0.0
    %v2570 = vmax.f32 %v2051, 0.0
    %v2571 = vmax.f32 %v2501, 0.0
    %v2572 = vmax.f32 %v2503, 0.0
    %v2573 = vmax.f32 %v2055, 0.0
    %v2574 = vmax.f32 %v2057, 0.0
    %v2575 = vmax.f32 %v2507, 0.0
    %v2576 = vmax.f32 %v2509, 0.0
    %v2577 = vmax.f32 %v2059, 0.0
    %v2578 = vmax.f32 %v2061, 0.0
    %v2579 = vmax.f32 %v2511, 0.0
    %v2580 = vmax.f32 %v2513, 0.0
    %v2581 = vmax.f32 %v2065, 0.0
    %v2582 = vmax.f32 %v2067, 0.0
    %v2583 = vmax.f32 %v2517, 0.0
    %v2584 = vmax.f32 %v2519, 0.0
    %v2585 = vmax.f32 %v2069, 0.0
    %v2586 = vmax.f32 %v2071, 0.0
    %v2587 = vmax.f32 %v2521, 0.0
    %v2588 = vmax.f32 %v2523, 0.0
    %v2589 = vpack.c.bf16 %v2529, %v2525
    %v2590 = vpack.c.bf16 %v2530, %v2526
    %v2591 = vpack.c.bf16 %v2531, %v2527
    %v2592 = vpack.c.bf16 %v2532, %v2528
    %v2593 = vpack.c.bf16 %v2537, %v2533
    %v2594 = vpack.c.bf16 %v2538, %v2534
    %v2595 = vpack.c.bf16 %v2539, %v2535
    %v2596 = vpack.c.bf16 %v2540, %v2536
    %v2597 = vpack.c.bf16 %v2545, %v2541
    %v2598 = vpack.c.bf16 %v2546, %v2542
    %v2599 = vpack.c.bf16 %v2547, %v2543
    %v2600 = vpack.c.bf16 %v2548, %v2544
    %v2601 = vpack.c.bf16 %v2553, %v2549
    %v2602 = vpack.c.bf16 %v2554, %v2550
    %v2603 = vpack.c.bf16 %v2555, %v2551
    %v2604 = vpack.c.bf16 %v2556, %v2552
    %v2605 = vpack.c.bf16 %v2561, %v2557
    %v2606 = vpack.c.bf16 %v2562, %v2558
    %v2607 = vpack.c.bf16 %v2563, %v2559
    %v2608 = vpack.c.bf16 %v2564, %v2560
    %v2609 = vpack.c.bf16 %v2569, %v2565
    %v2610 = vpack.c.bf16 %v2570, %v2566
    %v2611 = vpack.c.bf16 %v2571, %v2567
    %v2612 = vpack.c.bf16 %v2572, %v2568
    %v2613 = vpack.c.bf16 %v2577, %v2573
    %v2614 = vpack.c.bf16 %v2578, %v2574
    %v2615 = vpack.c.bf16 %v2579, %v2575
    %v2616 = vpack.c.bf16 %v2580, %v2576
    %v2617 = vpack.c.bf16 %v2585, %v2581
    %v2618 = vpack.c.bf16 %v2586, %v2582
    %v2619 = vpack.c.bf16 %v2587, %v2583
    %v2620 = vpack.c.bf16 %v2588, %v2584
    %v2621 = vld [vmem:[%s3] sm:$0xff]
    %v2622 = vld [vmem:[%s3 + $0x8] sm:$0xff]
    %v2623 = vld [vmem:[%s3 + $0x10] sm:$0xff]
    %v2624 = vld [vmem:[%s3 + $0x18] sm:$0xff]
    %v2625 = vld [vmem:[%s3 + $0x20] sm:$0xff]
    %v2626 = vld [vmem:[%s3 + $0x28] sm:$0xff]
    %v2627 = vld [vmem:[%s3 + $0x30] sm:$0xff]
    %v2628 = vld [vmem:[%s3 + $0x38] sm:$0xff]
    %v2629 = vld [vmem:[%s3 + $0x40] sm:$0xff]
    %v2630 = vld [vmem:[%s3 + $0x48] sm:$0xff]
    %v2631 = vld [vmem:[%s3 + $0x50] sm:$0xff]
    %v2632 = vld [vmem:[%s3 + $0x58] sm:$0xff]
    %v2633 = vld [vmem:[%s3 + $0x60] sm:$0xff]
    %v2634 = vld [vmem:[%s3 + $0x68] sm:$0xff]
    %v2635 = vld [vmem:[%s3 + $0x70] sm:$0xff]
    %v2636 = vld [vmem:[%s3 + $0x78] sm:$0xff]
    %v2637 = vld [vmem:[%s3 + $0x80] sm:$0xff]
    %v2638 = vld [vmem:[%s3 + $0x88] sm:$0xff]
    %v2639 = vld [vmem:[%s3 + $0x90] sm:$0xff]
    %v2640 = vld [vmem:[%s3 + $0x98] sm:$0xff]
    %v2641 = vld [vmem:[%s3 + $0xa0] sm:$0xff]
    %v2642 = vld [vmem:[%s3 + $0xa8] sm:$0xff]
    %v2643 = vld [vmem:[%s3 + $0xb0] sm:$0xff]
    %v2644 = vld [vmem:[%s3 + $0xb8] sm:$0xff]
    %v2645 = vld [vmem:[%s3 + $0xc0] sm:$0xff]
    %v2646 = vld [vmem:[%s3 + $0xc8] sm:$0xff]
    %v2647 = vld [vmem:[%s3 + $0xd0] sm:$0xff]
    %v2648 = vld [vmem:[%s3 + $0xd8] sm:$0xff]
    %v2649 = vld [vmem:[%s3 + $0xe0] sm:$0xff]
    %v2650 = vld [vmem:[%s3 + $0xe8] sm:$0xff]
    %v2651 = vld [vmem:[%s3 + $0xf0] sm:$0xff]
    %v2652 = vld [vmem:[%s3 + $0xf8] sm:$0xff]
    %v2653 = vld [vmem:[%s3 + $0x100] sm:$0xff]
    %v2654 = vld [vmem:[%s3 + $0x108] sm:$0xff]
    %v2655 = vld [vmem:[%s3 + $0x110] sm:$0xff]
    %v2656 = vld [vmem:[%s3 + $0x118] sm:$0xff]
    %v2657 = vld [vmem:[%s3 + $0x120] sm:$0xff]
    %v2658 = vld [vmem:[%s3 + $0x128] sm:$0xff]
    %v2659 = vld [vmem:[%s3 + $0x130] sm:$0xff]
    %v2660 = vld [vmem:[%s3 + $0x138] sm:$0xff]
    %v2661 = vld [vmem:[%s3 + $0x140] sm:$0xff]
    %v2662 = vld [vmem:[%s3 + $0x148] sm:$0xff]
    %v2663 = vld [vmem:[%s3 + $0x150] sm:$0xff]
    %v2664 = vld [vmem:[%s3 + $0x158] sm:$0xff]
    %v2665 = vld [vmem:[%s3 + $0x160] sm:$0xff]
    %v2666 = vld [vmem:[%s3 + $0x168] sm:$0xff]
    %v2667 = vld [vmem:[%s3 + $0x170] sm:$0xff]
    %v2668 = vld [vmem:[%s3 + $0x178] sm:$0xff]
    %v2669 = vld [vmem:[%s3 + $0x180] sm:$0xff]
    %v2670 = vld [vmem:[%s3 + $0x188] sm:$0xff]
    %v2671 = vld [vmem:[%s3 + $0x190] sm:$0xff]
    %v2672 = vld [vmem:[%s3 + $0x198] sm:$0xff]
    %v2673 = vld [vmem:[%s3 + $0x1a0] sm:$0xff]
    %v2674 = vld [vmem:[%s3 + $0x1a8] sm:$0xff]
    %v2675 = vld [vmem:[%s3 + $0x1b0] sm:$0xff]
    %v2676 = vld [vmem:[%s3 + $0x1b8] sm:$0xff]
    %v2677 = vld [vmem:[%s3 + $0x1c0] sm:$0xff]
    %v2678 = vld [vmem:[%s3 + $0x1c8] sm:$0xff]
    %v2679 = vld [vmem:[%s3 + $0x1d0] sm:$0xff]
    %v2680 = vld [vmem:[%s3 + $0x1d8] sm:$0xff]
    %v2681 = vld [vmem:[%s3 + $0x1e0] sm:$0xff]
    %v2682 = vld [vmem:[%s3 + $0x1e8] sm:$0xff]
    %v2683 = vld [vmem:[%s3 + $0x1f0] sm:$0xff]
    %v2684 = vld [vmem:[%s3 + $0x1f8] sm:$0xff]
    %v2685 = vld [vmem:[%s4] sm:$0x3]
    %v2687 = vlaneseq
    %v2688 = vshrl.u32 %v2687, 7
    %v2689 = vsub.s32 0, %v2688
    %v2690 = vrot.slane %v2685, %v2689
    %v2691 = vlaneseq
    %v2692 = vshrl.u32 %v2691, 7
    %v2693 = vsub.s32 1, %v2692
    %v2694 = vrot.slane %v2685, %v2693
    %v2761 = vunpack.c.l.b16 %v2621
    %v2762 = vunpack.c.h.b16 %v2621
    %v2763 = vunpack.c.l.b16 %v2622
    %v2764 = vunpack.c.h.b16 %v2622
    %v2765 = vunpack.c.l.b16 %v2623
    %v2766 = vunpack.c.h.b16 %v2623
    %v2767 = vunpack.c.l.b16 %v2624
    %v2768 = vunpack.c.h.b16 %v2624
    %v2769 = vunpack.c.l.b16 %v2625
    %v2770 = vunpack.c.h.b16 %v2625
    %v2771 = vunpack.c.l.b16 %v2626
    %v2772 = vunpack.c.h.b16 %v2626
    %v2773 = vunpack.c.l.b16 %v2627
    %v2774 = vunpack.c.h.b16 %v2627
    %v2775 = vunpack.c.l.b16 %v2628
    %v2776 = vunpack.c.h.b16 %v2628
    %v2777 = vunpack.c.l.b16 %v2629
    %v2778 = vunpack.c.h.b16 %v2629
    %v2779 = vunpack.c.l.b16 %v2630
    %v2780 = vunpack.c.h.b16 %v2630
    %v2781 = vunpack.c.l.b16 %v2631
    %v2782 = vunpack.c.h.b16 %v2631
    %v2783 = vunpack.c.l.b16 %v2632
    %v2784 = vunpack.c.h.b16 %v2632
    %v2785 = vunpack.c.l.b16 %v2633
    %v2786 = vunpack.c.h.b16 %v2633
    %v2787 = vunpack.c.l.b16 %v2634
    %v2788 = vunpack.c.h.b16 %v2634
    %v2789 = vunpack.c.l.b16 %v2635
    %v2790 = vunpack.c.h.b16 %v2635
    %v2791 = vunpack.c.l.b16 %v2636
    %v2792 = vunpack.c.h.b16 %v2636
    %v2793 = vunpack.c.l.b16 %v2637
    %v2794 = vunpack.c.h.b16 %v2637
    %v2795 = vunpack.c.l.b16 %v2638
    %v2796 = vunpack.c.h.b16 %v2638
    %v2797 = vunpack.c.l.b16 %v2639
    %v2798 = vunpack.c.h.b16 %v2639
    %v2799 = vunpack.c.l.b16 %v2640
    %v2800 = vunpack.c.h.b16 %v2640
    %v2801 = vunpack.c.l.b16 %v2641
    %v2802 = vunpack.c.h.b16 %v2641
    %v2803 = vunpack.c.l.b16 %v2642
    %v2804 = vunpack.c.h.b16 %v2642
    %v2805 = vunpack.c.l.b16 %v2643
    %v2806 = vunpack.c.h.b16 %v2643
    %v2807 = vunpack.c.l.b16 %v2644
    %v2808 = vunpack.c.h.b16 %v2644
    %v2809 = vunpack.c.l.b16 %v2645
    %v2810 = vunpack.c.h.b16 %v2645
    %v2811 = vunpack.c.l.b16 %v2646
    %v2812 = vunpack.c.h.b16 %v2646
    %v2813 = vunpack.c.l.b16 %v2647
    %v2814 = vunpack.c.h.b16 %v2647
    %v2815 = vunpack.c.l.b16 %v2648
    %v2816 = vunpack.c.h.b16 %v2648
    %v2817 = vunpack.c.l.b16 %v2649
    %v2818 = vunpack.c.h.b16 %v2649
    %v2819 = vunpack.c.l.b16 %v2650
    %v2820 = vunpack.c.h.b16 %v2650
    %v2821 = vunpack.c.l.b16 %v2651
    %v2822 = vunpack.c.h.b16 %v2651
    %v2823 = vunpack.c.l.b16 %v2652
    %v2824 = vunpack.c.h.b16 %v2652
    %v2825 = vunpack.c.l.b16 %v2653
    %v2826 = vunpack.c.h.b16 %v2653
    %v2827 = vunpack.c.l.b16 %v2654
    %v2828 = vunpack.c.h.b16 %v2654
    %v2829 = vunpack.c.l.b16 %v2655
    %v2830 = vunpack.c.h.b16 %v2655
    %v2831 = vunpack.c.l.b16 %v2656
    %v2832 = vunpack.c.h.b16 %v2656
    %v2833 = vunpack.c.l.b16 %v2657
    %v2834 = vunpack.c.h.b16 %v2657
    %v2835 = vunpack.c.l.b16 %v2658
    %v2836 = vunpack.c.h.b16 %v2658
    %v2837 = vunpack.c.l.b16 %v2659
    %v2838 = vunpack.c.h.b16 %v2659
    %v2839 = vunpack.c.l.b16 %v2660
    %v2840 = vunpack.c.h.b16 %v2660
    %v2841 = vunpack.c.l.b16 %v2661
    %v2842 = vunpack.c.h.b16 %v2661
    %v2843 = vunpack.c.l.b16 %v2662
    %v2844 = vunpack.c.h.b16 %v2662
    %v2845 = vunpack.c.l.b16 %v2663
    %v2846 = vunpack.c.h.b16 %v2663
    %v2847 = vunpack.c.l.b16 %v2664
    %v2848 = vunpack.c.h.b16 %v2664
    %v2849 = vunpack.c.l.b16 %v2665
    %v2850 = vunpack.c.h.b16 %v2665
    %v2851 = vunpack.c.l.b16 %v2666
    %v2852 = vunpack.c.h.b16 %v2666
    %v2853 = vunpack.c.l.b16 %v2667
    %v2854 = vunpack.c.h.b16 %v2667
    %v2855 = vunpack.c.l.b16 %v2668
    %v2856 = vunpack.c.h.b16 %v2668
    %v2857 = vunpack.c.l.b16 %v2669
    %v2858 = vunpack.c.h.b16 %v2669
    %v2859 = vunpack.c.l.b16 %v2670
    %v2860 = vunpack.c.h.b16 %v2670
    %v2861 = vunpack.c.l.b16 %v2671
    %v2862 = vunpack.c.h.b16 %v2671
    %v2863 = vunpack.c.l.b16 %v2672
    %v2864 = vunpack.c.h.b16 %v2672
    %v2865 = vunpack.c.l.b16 %v2673
    %v2866 = vunpack.c.h.b16 %v2673
    %v2867 = vunpack.c.l.b16 %v2674
    %v2868 = vunpack.c.h.b16 %v2674
    %v2869 = vunpack.c.l.b16 %v2675
    %v2870 = vunpack.c.h.b16 %v2675
    %v2871 = vunpack.c.l.b16 %v2676
    %v2872 = vunpack.c.h.b16 %v2676
    %v2873 = vunpack.c.l.b16 %v2677
    %v2874 = vunpack.c.h.b16 %v2677
    %v2875 = vunpack.c.l.b16 %v2678
    %v2876 = vunpack.c.h.b16 %v2678
    %v2877 = vunpack.c.l.b16 %v2679
    %v2878 = vunpack.c.h.b16 %v2679
    %v2879 = vunpack.c.l.b16 %v2680
    %v2880 = vunpack.c.h.b16 %v2680
    %v2881 = vunpack.c.l.b16 %v2681
    %v2882 = vunpack.c.h.b16 %v2681
    %v2883 = vunpack.c.l.b16 %v2682
    %v2884 = vunpack.c.h.b16 %v2682
    %v2885 = vunpack.c.l.b16 %v2683
    %v2886 = vunpack.c.h.b16 %v2683
    %v2887 = vunpack.c.l.b16 %v2684
    %v2888 = vunpack.c.h.b16 %v2684
    %v2889 = vpack.c.b16 %v2763, %v2761
    %v2890 = vpack.c.b16 %v2764, %v2762
    %v2891 = vpack.c.b16 %v2767, %v2765
    %v2892 = vpack.c.b16 %v2768, %v2766
    %v2893 = vpack.c.b16 %v2771, %v2769
    %v2894 = vpack.c.b16 %v2772, %v2770
    %v2895 = vpack.c.b16 %v2775, %v2773
    %v2896 = vpack.c.b16 %v2776, %v2774
    %v2897 = vpack.c.b16 %v2779, %v2777
    %v2898 = vpack.c.b16 %v2780, %v2778
    %v2899 = vpack.c.b16 %v2783, %v2781
    %v2900 = vpack.c.b16 %v2784, %v2782
    %v2901 = vpack.c.b16 %v2787, %v2785
    %v2902 = vpack.c.b16 %v2788, %v2786
    %v2903 = vpack.c.b16 %v2791, %v2789
    %v2904 = vpack.c.b16 %v2792, %v2790
    %v2905 = vpack.c.b16 %v2795, %v2793
    %v2906 = vpack.c.b16 %v2796, %v2794
    %v2907 = vpack.c.b16 %v2799, %v2797
    %v2908 = vpack.c.b16 %v2800, %v2798
    %v2909 = vpack.c.b16 %v2803, %v2801
    %v2910 = vpack.c.b16 %v2804, %v2802
    %v2911 = vpack.c.b16 %v2807, %v2805
    %v2912 = vpack.c.b16 %v2808, %v2806
    %v2913 = vpack.c.b16 %v2811, %v2809
    %v2914 = vpack.c.b16 %v2812, %v2810
    %v2915 = vpack.c.b16 %v2815, %v2813
    %v2916 = vpack.c.b16 %v2816, %v2814
    %v2917 = vpack.c.b16 %v2819, %v2817
    %v2918 = vpack.c.b16 %v2820, %v2818
    %v2919 = vpack.c.b16 %v2823, %v2821
    %v2920 = vpack.c.b16 %v2824, %v2822
    %v2921 = vpack.c.b16 %v2827, %v2825
    %v2922 = vpack.c.b16 %v2828, %v2826
    %v2923 = vpack.c.b16 %v2831, %v2829
    %v2924 = vpack.c.b16 %v2832, %v2830
    %v2925 = vpack.c.b16 %v2835, %v2833
    %v2926 = vpack.c.b16 %v2836, %v2834
    %v2927 = vpack.c.b16 %v2839, %v2837
    %v2928 = vpack.c.b16 %v2840, %v2838
    %v2929 = vpack.c.b16 %v2843, %v2841
    %v2930 = vpack.c.b16 %v2844, %v2842
    %v2931 = vpack.c.b16 %v2847, %v2845
    %v2932 = vpack.c.b16 %v2848, %v2846
    %v2933 = vpack.c.b16 %v2851, %v2849
    %v2934 = vpack.c.b16 %v2852, %v2850
    %v2935 = vpack.c.b16 %v2855, %v2853
    %v2936 = vpack.c.b16 %v2856, %v2854
    %v2937 = vpack.c.b16 %v2859, %v2857
    %v2938 = vpack.c.b16 %v2860, %v2858
    %v2939 = vpack.c.b16 %v2863, %v2861
    %v2940 = vpack.c.b16 %v2864, %v2862
    %v2941 = vpack.c.b16 %v2867, %v2865
    %v2942 = vpack.c.b16 %v2868, %v2866
    %v2943 = vpack.c.b16 %v2871, %v2869
    %v2944 = vpack.c.b16 %v2872, %v2870
    %v2945 = vpack.c.b16 %v2875, %v2873
    %v2946 = vpack.c.b16 %v2876, %v2874
    %v2947 = vpack.c.b16 %v2879, %v2877
    %v2948 = vpack.c.b16 %v2880, %v2878
    %v2949 = vpack.c.b16 %v2883, %v2881
    %v2950 = vpack.c.b16 %v2884, %v2882
    %v2951 = vpack.c.b16 %v2887, %v2885
    %v2952 = vpack.c.b16 %v2888, %v2886
    %3017 = vmatprep.subr.bf16.mxu0 %v2890
    %3018 = vmatpush1.bf16.msra.mxu0 %v2889
    %3019 = vmatprep.subr.bf16.mxu0 %v2892
    %3020 = vmatpush1.bf16.msra.mxu0 %v2891
    %3021 = vmatprep.subr.bf16.mxu0 %v2894
    %3022 = vmatpush1.bf16.msra.mxu0 %v2893
    %3023 = vmatprep.subr.bf16.mxu0 %v2896
    %3024 = vmatpush1.bf16.msra.mxu0 %v2895
    %3025 = vmatprep.subr.bf16.mxu0 %v2898
    %3026 = vmatpush1.bf16.msra.mxu0 %v2897
    %3027 = vmatprep.subr.bf16.mxu0 %v2900
    %3028 = vmatpush1.bf16.msra.mxu0 %v2899
    %3029 = vmatprep.subr.bf16.mxu0 %v2902
    %3030 = vmatpush1.bf16.msra.mxu0 %v2901
    %3031 = vmatprep.subr.bf16.mxu0 %v2904
    %3032 = vmatpush1.bf16.msra.mxu0 %v2903
    %3033 = vmatprep.subr.bf16.mxu0 %v2906
    %3034 = vmatpush1.bf16.msra.mxu0 %v2905
    %3035 = vmatprep.subr.bf16.mxu0 %v2908
    %3036 = vmatpush1.bf16.msra.mxu0 %v2907
    %3037 = vmatprep.subr.bf16.mxu0 %v2910
    %3038 = vmatpush1.bf16.msra.mxu0 %v2909
    %3039 = vmatprep.subr.bf16.mxu0 %v2912
    %3040 = vmatpush1.bf16.msra.mxu0 %v2911
    %3041 = vmatprep.subr.bf16.mxu0 %v2914
    %3042 = vmatpush1.bf16.msra.mxu0 %v2913
    %3043 = vmatprep.subr.bf16.mxu0 %v2916
    %3044 = vmatpush1.bf16.msra.mxu0 %v2915
    %3045 = vmatprep.subr.bf16.mxu0 %v2918
    %3046 = vmatpush1.bf16.msra.mxu0 %v2917
    %3047 = vmatprep.subr.bf16.mxu0 %v2920
    %3048 = vmatpush1.bf16.msra.mxu0 %v2919
    %3049 = vmatprep.mubr.bf16.mxu0 %v2590
    %3050 = vmatmul.mubr.bf16.gmra.mrb[0].mxu0 %v2589
    %v3051 = vpop.f32.mrb[0].mxu0
    %v3052 = vadd.f32 %v2690, %v3051
    %v3053 = vpop.f32.mrb[0].mxu0
    %v3054 = vadd.f32 %v2694, %v3053
    %v3055 = vpop.f32.mrb[0].mxu0
    %v3056 = vadd.f32 %v2690, %v3055
    %v3057 = vpop.f32.mrb[0].mxu0
    %v3058 = vadd.f32 %v2694, %v3057
    %3059 = vmatprep.mubr.bf16.mxu0 %v2594
    %3060 = vmatmul.mubr.bf16.gmra.mrb[0].mxu0 %v2593
    %v3061 = vpop.f32.mrb[0].mxu0
    %v3062 = vadd.f32 %v2690, %v3061
    %v3063 = vpop.f32.mrb[0].mxu0
    %v3064 = vadd.f32 %v2694, %v3063
    %v3065 = vpop.f32.mrb[0].mxu0
    %v3066 = vadd.f32 %v2690, %v3065
    %v3067 = vpop.f32.mrb[0].mxu0
    %v3068 = vadd.f32 %v2694, %v3067
    %3069 = vmatprep.mubr.bf16.mxu0 %v2598
    %3070 = vmatmul.mubr.bf16.gmra.mrb[0].mxu0 %v2597
    %v3071 = vpop.f32.mrb[0].mxu0
    %v3072 = vadd.f32 %v2690, %v3071
    %v3073 = vpop.f32.mrb[0].mxu0
    %v3074 = vadd.f32 %v2694, %v3073
    %v3075 = vpop.f32.mrb[0].mxu0
    %v3076 = vadd.f32 %v2690, %v3075
    %v3077 = vpop.f32.mrb[0].mxu0
    %v3078 = vadd.f32 %v2694, %v3077
    %3079 = vmatprep.mubr.bf16.mxu0 %v2602
    %3080 = vmatmul.mubr.bf16.gmra.mrb[0].mxu0 %v2601
    %v3081 = vpop.f32.mrb[0].mxu0
    %v3082 = vadd.f32 %v2690, %v3081
    %v3083 = vpop.f32.mrb[0].mxu0
    %v3084 = vadd.f32 %v2694, %v3083
    %v3085 = vpop.f32.mrb[0].mxu0
    %v3086 = vadd.f32 %v2690, %v3085
    %v3087 = vpop.f32.mrb[0].mxu0
    %v3088 = vadd.f32 %v2694, %v3087
    %3089 = vmatprep.mubr.bf16.mxu0 %v2606
    %3090 = vmatmul.mubr.bf16.gmra.mrb[0].mxu0 %v2605
    %v3091 = vpop.f32.mrb[0].mxu0
    %v3092 = vadd.f32 %v2690, %v3091
    %v3093 = vpop.f32.mrb[0].mxu0
    %v3094 = vadd.f32 %v2694, %v3093
    %v3095 = vpop.f32.mrb[0].mxu0
    %v3096 = vadd.f32 %v2690, %v3095
    %v3097 = vpop.f32.mrb[0].mxu0
    %v3098 = vadd.f32 %v2694, %v3097
    %3099 = vmatprep.mubr.bf16.mxu0 %v2610
    %3100 = vmatmul.mubr.bf16.gmra.mrb[0].mxu0 %v2609
    %v3101 = vpop.f32.mrb[0].mxu0
    %v3102 = vadd.f32 %v2690, %v3101
    %v3103 = vpop.f32.mrb[0].mxu0
    %v3104 = vadd.f32 %v2694, %v3103
    %v3105 = vpop.f32.mrb[0].mxu0
    %v3106 = vadd.f32 %v2690, %v3105
    %v3107 = vpop.f32.mrb[0].mxu0
    %v3108 = vadd.f32 %v2694, %v3107
    %3109 = vmatprep.mubr.bf16.mxu0 %v2614
    %3110 = vmatmul.mubr.bf16.gmra.mrb[0].mxu0 %v2613
    %v3111 = vpop.f32.mrb[0].mxu0
    %v3112 = vadd.f32 %v2690, %v3111
    %v3113 = vpop.f32.mrb[0].mxu0
    %v3114 = vadd.f32 %v2694, %v3113
    %v3115 = vpop.f32.mrb[0].mxu0
    %v3116 = vadd.f32 %v2690, %v3115
    %v3117 = vpop.f32.mrb[0].mxu0
    %v3118 = vadd.f32 %v2694, %v3117
    %3119 = vmatprep.mubr.bf16.mxu0 %v2618
    %3120 = vmatmul.mubr.bf16.gmra.mrb[0].mxu0 %v2617
    %v3121 = vpop.f32.mrb[0].mxu0
    %v3122 = vadd.f32 %v2690, %v3121
    %v3123 = vpop.f32.mrb[0].mxu0
    %v3124 = vadd.f32 %v2694, %v3123
    %v3125 = vpop.f32.mrb[0].mxu0
    %v3126 = vadd.f32 %v2690, %v3125
    %v3127 = vpop.f32.mrb[0].mxu0
    %v3128 = vadd.f32 %v2694, %v3127
    %3129 = vdwg.mxu0
    %3130 = vmatprep.subr.bf16.mxu0 %v2922
    %3131 = vmatpush1.bf16.msra.mxu0 %v2921
    %3132 = vmatprep.subr.bf16.mxu0 %v2924
    %3133 = vmatpush1.bf16.msra.mxu0 %v2923
    %3134 = vmatprep.subr.bf16.mxu0 %v2926
    %3135 = vmatpush1.bf16.msra.mxu0 %v2925
    %3136 = vmatprep.subr.bf16.mxu0 %v2928
    %3137 = vmatpush1.bf16.msra.mxu0 %v2927
    %3138 = vmatprep.subr.bf16.mxu0 %v2930
    %3139 = vmatpush1.bf16.msra.mxu0 %v2929
    %3140 = vmatprep.subr.bf16.mxu0 %v2932
    %3141 = vmatpush1.bf16.msra.mxu0 %v2931
    %3142 = vmatprep.subr.bf16.mxu0 %v2934
    %3143 = vmatpush1.bf16.msra.mxu0 %v2933
    %3144 = vmatprep.subr.bf16.mxu0 %v2936
    %3145 = vmatpush1.bf16.msra.mxu0 %v2935
    %3146 = vmatprep.subr.bf16.mxu0 %v2938
    %3147 = vmatpush1.bf16.msra.mxu0 %v2937
    %3148 = vmatprep.subr.bf16.mxu0 %v2940
    %3149 = vmatpush1.bf16.msra.mxu0 %v2939
    %3150 = vmatprep.subr.bf16.mxu0 %v2942
    %3151 = vmatpush1.bf16.msra.mxu0 %v2941
    %3152 = vmatprep.subr.bf16.mxu0 %v2944
    %3153 = vmatpush1.bf16.msra.mxu0 %v2943
    %3154 = vmatprep.subr.bf16.mxu0 %v2946
    %3155 = vmatpush1.bf16.msra.mxu0 %v2945
    %3156 = vmatprep.subr.bf16.mxu0 %v2948
    %3157 = vmatpush1.bf16.msra.mxu0 %v2947
    %3158 = vmatprep.subr.bf16.mxu0 %v2950
    %3159 = vmatpush1.bf16.msra.mxu0 %v2949
    %3160 = vmatprep.subr.bf16.mxu0 %v2952
    %3161 = vmatpush1.bf16.msra.mxu0 %v2951
    %3162 = vmatprep.mubr.bf16.mxu0 %v2592
    %3163 = vmatmul.mubr.bf16.gmra.mrb[0].mxu0 %v2591
    %v3164 = vpop.f32.mrb[0].mxu0
    %v3165 = vadd.f32 %v3052, %v3164
    %v3166 = vpop.f32.mrb[0].mxu0
    %v3167 = vadd.f32 %v3054, %v3166
    %v3168 = vpop.f32.mrb[0].mxu0
    %v3169 = vadd.f32 %v3056, %v3168
    %v3170 = vpop.f32.mrb[0].mxu0
    %v3171 = vadd.f32 %v3058, %v3170
    %3172 = vmatprep.mubr.bf16.mxu0 %v2596
    %3173 = vmatmul.mubr.bf16.gmra.mrb[0].mxu0 %v2595
    %v3174 = vpop.f32.mrb[0].mxu0
    %v3175 = vadd.f32 %v3062, %v3174
    %v3176 = vpop.f32.mrb[0].mxu0
    %v3177 = vadd.f32 %v3064, %v3176
    %v3178 = vpop.f32.mrb[0].mxu0
    %v3179 = vadd.f32 %v3066, %v3178
    %v3180 = vpop.f32.mrb[0].mxu0
    %v3181 = vadd.f32 %v3068, %v3180
    %3182 = vmatprep.mubr.bf16.mxu0 %v2600
    %3183 = vmatmul.mubr.bf16.gmra.mrb[0].mxu0 %v2599
    %v3184 = vpop.f32.mrb[0].mxu0
    %v3185 = vadd.f32 %v3072, %v3184
    %v3186 = vpop.f32.mrb[0].mxu0
    %v3187 = vadd.f32 %v3074, %v3186
    %v3188 = vpop.f32.mrb[0].mxu0
    %v3189 = vadd.f32 %v3076, %v3188
    %v3190 = vpop.f32.mrb[0].mxu0
    %v3191 = vadd.f32 %v3078, %v3190
    %3192 = vmatprep.mubr.bf16.mxu0 %v2604
    %3193 = vmatmul.mubr.bf16.gmra.mrb[0].mxu0 %v2603
    %v3194 = vpop.f32.mrb[0].mxu0
    %v3195 = vadd.f32 %v3082, %v3194
    %v3196 = vpop.f32.mrb[0].mxu0
    %v3197 = vadd.f32 %v3084, %v3196
    %v3198 = vpop.f32.mrb[0].mxu0
    %v3199 = vadd.f32 %v3086, %v3198
    %v3200 = vpop.f32.mrb[0].mxu0
    %v3201 = vadd.f32 %v3088, %v3200
    %3202 = vmatprep.mubr.bf16.mxu0 %v2608
    %3203 = vmatmul.mubr.bf16.gmra.mrb[0].mxu0 %v2607
    %v3204 = vpop.f32.mrb[0].mxu0
    %v3205 = vadd.f32 %v3092, %v3204
    %v3206 = vpop.f32.mrb[0].mxu0
    %v3207 = vadd.f32 %v3094, %v3206
    %v3208 = vpop.f32.mrb[0].mxu0
    %v3209 = vadd.f32 %v3096, %v3208
    %v3210 = vpop.f32.mrb[0].mxu0
    %v3211 = vadd.f32 %v3098, %v3210
    %3212 = vmatprep.mubr.bf16.mxu0 %v2612
    %3213 = vmatmul.mubr.bf16.gmra.mrb[0].mxu0 %v2611
    %v3214 = vpop.f32.mrb[0].mxu0
    %v3215 = vadd.f32 %v3102, %v3214
    %v3216 = vpop.f32.mrb[0].mxu0
    %v3217 = vadd.f32 %v3104, %v3216
    %v3218 = vpop.f32.mrb[0].mxu0
    %v3219 = vadd.f32 %v3106, %v3218
    %v3220 = vpop.f32.mrb[0].mxu0
    %v3221 = vadd.f32 %v3108, %v3220
    %3222 = vmatprep.mubr.bf16.mxu0 %v2616
    %3223 = vmatmul.mubr.bf16.gmra.mrb[0].mxu0 %v2615
    %v3224 = vpop.f32.mrb[0].mxu0
    %v3225 = vadd.f32 %v3112, %v3224
    %v3226 = vpop.f32.mrb[0].mxu0
    %v3227 = vadd.f32 %v3114, %v3226
    %v3228 = vpop.f32.mrb[0].mxu0
    %v3229 = vadd.f32 %v3116, %v3228
    %v3230 = vpop.f32.mrb[0].mxu0
    %v3231 = vadd.f32 %v3118, %v3230
    %3232 = vmatprep.mubr.bf16.mxu0 %v2620
    %3233 = vmatmul.mubr.bf16.gmra.mrb[0].mxu0 %v2619
    %v3234 = vpop.f32.mrb[0].mxu0
    %v3235 = vadd.f32 %v3122, %v3234
    %v3236 = vpop.f32.mrb[0].mxu0
    %v3237 = vadd.f32 %v3124, %v3236
    %v3238 = vpop.f32.mrb[0].mxu0
    %v3239 = vadd.f32 %v3126, %v3238
    %v3240 = vpop.f32.mrb[0].mxu0
    %v3241 = vadd.f32 %v3128, %v3240
    %3242 = vdwg.mxu0
    %v3243 = vmax.f32 %v3165, 0.0
    %v3244 = vmax.f32 %v3167, 0.0
    %v3245 = vmax.f32 %v3169, 0.0
    %v3246 = vmax.f32 %v3171, 0.0
    %v3247 = vmax.f32 %v3175, 0.0
    %v3248 = vmax.f32 %v3177, 0.0
    %v3249 = vmax.f32 %v3179, 0.0
    %v3250 = vmax.f32 %v3181, 0.0
    %v3251 = vmax.f32 %v3185, 0.0
    %v3252 = vmax.f32 %v3187, 0.0
    %v3253 = vmax.f32 %v3189, 0.0
    %v3254 = vmax.f32 %v3191, 0.0
    %v3255 = vmax.f32 %v3195, 0.0
    %v3256 = vmax.f32 %v3197, 0.0
    %v3257 = vmax.f32 %v3199, 0.0
    %v3258 = vmax.f32 %v3201, 0.0
    %v3259 = vmax.f32 %v3205, 0.0
    %v3260 = vmax.f32 %v3207, 0.0
    %v3261 = vmax.f32 %v3209, 0.0
    %v3262 = vmax.f32 %v3211, 0.0
    %v3263 = vmax.f32 %v3215, 0.0
    %v3264 = vmax.f32 %v3217, 0.0
    %v3265 = vmax.f32 %v3219, 0.0
    %v3266 = vmax.f32 %v3221, 0.0
    %v3267 = vmax.f32 %v3225, 0.0
    %v3268 = vmax.f32 %v3227, 0.0
    %v3269 = vmax.f32 %v3229, 0.0
    %v3270 = vmax.f32 %v3231, 0.0
    %v3271 = vmax.f32 %v3235, 0.0
    %v3272 = vmax.f32 %v3237, 0.0
    %v3273 = vmax.f32 %v3239, 0.0
    %v3274 = vmax.f32 %v3241, 0.0
    %v3275 = vpack.c.bf16 %v3245, %v3243
    %v3276 = vpack.c.bf16 %v3246, %v3244
    %v3277 = vpack.c.bf16 %v3249, %v3247
    %v3278 = vpack.c.bf16 %v3250, %v3248
    %v3279 = vpack.c.bf16 %v3253, %v3251
    %v3280 = vpack.c.bf16 %v3254, %v3252
    %v3281 = vpack.c.bf16 %v3257, %v3255
    %v3282 = vpack.c.bf16 %v3258, %v3256
    %v3283 = vpack.c.bf16 %v3261, %v3259
    %v3284 = vpack.c.bf16 %v3262, %v3260
    %v3285 = vpack.c.bf16 %v3265, %v3263
    %v3286 = vpack.c.bf16 %v3266, %v3264
    %v3287 = vpack.c.bf16 %v3269, %v3267
    %v3288 = vpack.c.bf16 %v3270, %v3268
    %v3289 = vpack.c.bf16 %v3273, %v3271
    %v3290 = vpack.c.bf16 %v3274, %v3272
    %v3291 = vld [vmem:[%s5] sm:$0xf]
    %v3292 = vld [vmem:[%s5 + $0x4] sm:$0xf]
    %v3293 = vld [vmem:[%s5 + $0x8] sm:$0xf]
    %v3294 = vld [vmem:[%s5 + $0xc] sm:$0xf]
    %v3295 = vld [vmem:[%s5 + $0x10] sm:$0xf]
    %v3296 = vld [vmem:[%s5 + $0x14] sm:$0xf]
    %v3297 = vld [vmem:[%s5 + $0x18] sm:$0xf]
    %v3298 = vld [vmem:[%s5 + $0x1c] sm:$0xf]
    %v3299 = vld [vmem:[%s5 + $0x20] sm:$0xf]
    %v3300 = vld [vmem:[%s5 + $0x24] sm:$0xf]
    %v3301 = vld [vmem:[%s5 + $0x28] sm:$0xf]
    %v3302 = vld [vmem:[%s5 + $0x2c] sm:$0xf]
    %v3303 = vld [vmem:[%s5 + $0x30] sm:$0xf]
    %v3304 = vld [vmem:[%s5 + $0x34] sm:$0xf]
    %v3305 = vld [vmem:[%s5 + $0x38] sm:$0xf]
    %v3306 = vld [vmem:[%s5 + $0x3c] sm:$0xf]
    %v3307 = vld [vmem:[%s5 + $0x40] sm:$0xf]
    %v3308 = vld [vmem:[%s5 + $0x44] sm:$0xf]
    %v3309 = vld [vmem:[%s5 + $0x48] sm:$0xf]
    %v3310 = vld [vmem:[%s5 + $0x4c] sm:$0xf]
    %v3311 = vld [vmem:[%s5 + $0x50] sm:$0xf]
    %v3312 = vld [vmem:[%s5 + $0x54] sm:$0xf]
    %v3313 = vld [vmem:[%s5 + $0x58] sm:$0xf]
    %v3314 = vld [vmem:[%s5 + $0x5c] sm:$0xf]
    %v3315 = vld [vmem:[%s5 + $0x60] sm:$0xf]
    %v3316 = vld [vmem:[%s5 + $0x64] sm:$0xf]
    %v3317 = vld [vmem:[%s5 + $0x68] sm:$0xf]
    %v3318 = vld [vmem:[%s5 + $0x6c] sm:$0xf]
    %v3319 = vld [vmem:[%s5 + $0x70] sm:$0xf]
    %v3320 = vld [vmem:[%s5 + $0x74] sm:$0xf]
    %v3321 = vld [vmem:[%s5 + $0x78] sm:$0xf]
    %v3322 = vld [vmem:[%s5 + $0x7c] sm:$0xf]
    %v3323 = vld [vmem:[%s6] sm:$0x1]
    %v3325 = vlaneseq
    %v3326 = vshrl.u32 %v3325, 7
    %v3327 = vsub.s32 0, %v3326
    %v3328 = vrot.slane %v3323, %v3327
    %v3362 = vunpack.c.l.b16 %v3291
    %v3363 = vunpack.c.l.b16 %v3292
    %v3364 = vunpack.c.l.b16 %v3293
    %v3365 = vunpack.c.l.b16 %v3294
    %v3366 = vunpack.c.l.b16 %v3295
    %v3367 = vunpack.c.l.b16 %v3296
    %v3368 = vunpack.c.l.b16 %v3297
    %v3369 = vunpack.c.l.b16 %v3298
    %v3370 = vunpack.c.l.b16 %v3299
    %v3371 = vunpack.c.l.b16 %v3300
    %v3372 = vunpack.c.l.b16 %v3301
    %v3373 = vunpack.c.l.b16 %v3302
    %v3374 = vunpack.c.l.b16 %v3303
    %v3375 = vunpack.c.l.b16 %v3304
    %v3376 = vunpack.c.l.b16 %v3305
    %v3377 = vunpack.c.l.b16 %v3306
    %v3378 = vunpack.c.l.b16 %v3307
    %v3379 = vunpack.c.l.b16 %v3308
    %v3380 = vunpack.c.l.b16 %v3309
    %v3381 = vunpack.c.l.b16 %v3310
    %v3382 = vunpack.c.l.b16 %v3311
    %v3383 = vunpack.c.l.b16 %v3312
    %v3384 = vunpack.c.l.b16 %v3313
    %v3385 = vunpack.c.l.b16 %v3314
    %v3386 = vunpack.c.l.b16 %v3315
    %v3387 = vunpack.c.l.b16 %v3316
    %v3388 = vunpack.c.l.b16 %v3317
    %v3389 = vunpack.c.l.b16 %v3318
    %v3390 = vunpack.c.l.b16 %v3319
    %v3391 = vunpack.c.l.b16 %v3320
    %v3392 = vunpack.c.l.b16 %v3321
    %v3393 = vunpack.c.l.b16 %v3322
    %v3394 = vpack.c.b16 %v3363, %v3362
    %v3395 = vpack.c.b16 %v3365, %v3364
    %v3396 = vpack.c.b16 %v3367, %v3366
    %v3397 = vpack.c.b16 %v3369, %v3368
    %v3398 = vpack.c.b16 %v3371, %v3370
    %v3399 = vpack.c.b16 %v3373, %v3372
    %v3400 = vpack.c.b16 %v3375, %v3374
    %v3401 = vpack.c.b16 %v3377, %v3376
    %v3402 = vpack.c.b16 %v3379, %v3378
    %v3403 = vpack.c.b16 %v3381, %v3380
    %v3404 = vpack.c.b16 %v3383, %v3382
    %v3405 = vpack.c.b16 %v3385, %v3384
    %v3406 = vpack.c.b16 %v3387, %v3386
    %v3407 = vpack.c.b16 %v3389, %v3388
    %v3408 = vpack.c.b16 %v3391, %v3390
    %v3409 = vpack.c.b16 %v3393, %v3392
    %3426 = vmatprep.subr.bf16.mxu0 0
    %3427 = vmatpush1.bf16.msra.mxu0 %v3394
    %3428 = vmatprep.subr.bf16.mxu0 0
    %3429 = vmatpush1.bf16.msra.mxu0 %v3395
    %3430 = vmatprep.subr.bf16.mxu0 0
    %3431 = vmatpush1.bf16.msra.mxu0 %v3396
    %3432 = vmatprep.subr.bf16.mxu0 0
    %3433 = vmatpush1.bf16.msra.mxu0 %v3397
    %3434 = vmatprep.subr.bf16.mxu0 0
    %3435 = vmatpush1.bf16.msra.mxu0 %v3398
    %3436 = vmatprep.subr.bf16.mxu0 0
    %3437 = vmatpush1.bf16.msra.mxu0 %v3399
    %3438 = vmatprep.subr.bf16.mxu0 0
    %3439 = vmatpush1.bf16.msra.mxu0 %v3400
    %3440 = vmatprep.subr.bf16.mxu0 0
    %3441 = vmatpush1.bf16.msra.mxu0 %v3401
    %3442 = vmatprep.subr.bf16.mxu0 0
    %3443 = vmatpush1.bf16.msra.mxu0 %v3402
    %3444 = vmatprep.subr.bf16.mxu0 0
    %3445 = vmatpush1.bf16.msra.mxu0 %v3403
    %3446 = vmatprep.subr.bf16.mxu0 0
    %3447 = vmatpush1.bf16.msra.mxu0 %v3404
    %3448 = vmatprep.subr.bf16.mxu0 0
    %3449 = vmatpush1.bf16.msra.mxu0 %v3405
    %3450 = vmatprep.subr.bf16.mxu0 0
    %3451 = vmatpush1.bf16.msra.mxu0 %v3406
    %3452 = vmatprep.subr.bf16.mxu0 0
    %3453 = vmatpush1.bf16.msra.mxu0 %v3407
    %3454 = vmatprep.subr.bf16.mxu0 0
    %3455 = vmatpush1.bf16.msra.mxu0 %v3408
    %3456 = vmatprep.subr.bf16.mxu0 0
    %3457 = vmatpush1.bf16.msra.mxu0 %v3409
    %3458 = vmatprep.mubr.bf16.mxu0 %v3276
    %3459 = vmatmul.mubr.bf16.gmra.mrb[0].mxu0 %v3275
    %v3460 = vpop.f32.mrb[0].mxu0
    %v3461 = vadd.f32 %v3328, %v3460
    %v3462 = vpop.f32.mrb[0].mxu0
    %v3463 = vpop.f32.mrb[0].mxu0
    %v3464 = vadd.f32 %v3328, %v3463
    %v3465 = vpop.f32.mrb[0].mxu0
    %3466 = vmatprep.mubr.bf16.mxu0 %v3278
    %3467 = vmatmul.mubr.bf16.gmra.mrb[0].mxu0 %v3277
    %v3468 = vpop.f32.mrb[0].mxu0
    %v3469 = vadd.f32 %v3328, %v3468
    %v3470 = vpop.f32.mrb[0].mxu0
    %v3471 = vpop.f32.mrb[0].mxu0
    %v3472 = vadd.f32 %v3328, %v3471
    %v3473 = vpop.f32.mrb[0].mxu0
    %3474 = vmatprep.mubr.bf16.mxu0 %v3280
    %3475 = vmatmul.mubr.bf16.gmra.mrb[0].mxu0 %v3279
    %v3476 = vpop.f32.mrb[0].mxu0
    %v3477 = vadd.f32 %v3328, %v3476
    %v3478 = vpop.f32.mrb[0].mxu0
    %v3479 = vpop.f32.mrb[0].mxu0
    %v3480 = vadd.f32 %v3328, %v3479
    %v3481 = vpop.f32.mrb[0].mxu0
    %3482 = vmatprep.mubr.bf16.mxu0 %v3282
    %3483 = vmatmul.mubr.bf16.gmra.mrb[0].mxu0 %v3281
    %v3484 = vpop.f32.mrb[0].mxu0
    %v3485 = vadd.f32 %v3328, %v3484
    %v3486 = vpop.f32.mrb[0].mxu0
    %v3487 = vpop.f32.mrb[0].mxu0
    %v3488 = vadd.f32 %v3328, %v3487
    %v3489 = vpop.f32.mrb[0].mxu0
    %3490 = vmatprep.mubr.bf16.mxu0 %v3284
    %3491 = vmatmul.mubr.bf16.gmra.mrb[0].mxu0 %v3283
    %v3492 = vpop.f32.mrb[0].mxu0
    %v3493 = vadd.f32 %v3328, %v3492
    %v3494 = vpop.f32.mrb[0].mxu0
    %v3495 = vpop.f32.mrb[0].mxu0
    %v3496 = vadd.f32 %v3328, %v3495
    %v3497 = vpop.f32.mrb[0].mxu0
    %3498 = vmatprep.mubr.bf16.mxu0 %v3286
    %3499 = vmatmul.mubr.bf16.gmra.mrb[0].mxu0 %v3285
    %v3500 = vpop.f32.mrb[0].mxu0
    %v3501 = vadd.f32 %v3328, %v3500
    %v3502 = vpop.f32.mrb[0].mxu0
    %v3503 = vpop.f32.mrb[0].mxu0
    %v3504 = vadd.f32 %v3328, %v3503
    %v3505 = vpop.f32.mrb[0].mxu0
    %3506 = vmatprep.mubr.bf16.mxu0 %v3288
    %3507 = vmatmul.mubr.bf16.gmra.mrb[0].mxu0 %v3287
    %v3508 = vpop.f32.mrb[0].mxu0
    %v3509 = vadd.f32 %v3328, %v3508
    %v3510 = vpop.f32.mrb[0].mxu0
    %v3511 = vpop.f32.mrb[0].mxu0
    %v3512 = vadd.f32 %v3328, %v3511
    %v3513 = vpop.f32.mrb[0].mxu0
    %3514 = vmatprep.mubr.bf16.mxu0 %v3290
    %3515 = vmatmul.mubr.bf16.gmra.mrb[0].mxu0 %v3289
    %v3516 = vpop.f32.mrb[0].mxu0
    %v3517 = vadd.f32 %v3328, %v3516
    %v3518 = vpop.f32.mrb[0].mxu0
    %v3519 = vpop.f32.mrb[0].mxu0
    %v3520 = vadd.f32 %v3328, %v3519
    %v3521 = vpop.f32.mrb[0].mxu0
    %3522 = vdwg.mxu0
    %v3523 = vmax.f32 %v3461, 0.0
    %v3524 = vmax.f32 %v3464, 0.0
    %v3525 = vmax.f32 %v3469, 0.0
    %v3526 = vmax.f32 %v3472, 0.0
    %v3527 = vmax.f32 %v3477, 0.0
    %v3528 = vmax.f32 %v3480, 0.0
    %v3529 = vmax.f32 %v3485, 0.0
    %v3530 = vmax.f32 %v3488, 0.0
    %v3531 = vmax.f32 %v3493, 0.0
    %v3532 = vmax.f32 %v3496, 0.0
    %v3533 = vmax.f32 %v3501, 0.0
    %v3534 = vmax.f32 %v3504, 0.0
    %v3535 = vmax.f32 %v3509, 0.0
    %v3536 = vmax.f32 %v3512, 0.0
    %v3537 = vmax.f32 %v3517, 0.0
    %v3538 = vmax.f32 %v3520, 0.0
    %v3539 = vpack.c.bf16 %v3524, %v3523
    %v3540 = vpack.c.bf16 %v3526, %v3525
    %v3541 = vpack.c.bf16 %v3528, %v3527
    %v3542 = vpack.c.bf16 %v3530, %v3529
    %v3543 = vpack.c.bf16 %v3532, %v3531
    %v3544 = vpack.c.bf16 %v3534, %v3533
    %v3545 = vpack.c.bf16 %v3536, %v3535
    %v3546 = vpack.c.bf16 %v3538, %v3537
    %v3547 = vld [vmem:[%s7] sm:$0xf]
    %v3548 = vld [vmem:[%s7 + $0x4] sm:$0xf]
    %v3549 = vld [vmem:[%s7 + $0x8] sm:$0xf]
    %v3550 = vld [vmem:[%s7 + $0xc] sm:$0xf]
    %v3551 = vld [vmem:[%s7 + $0x10] sm:$0xf]
    %v3552 = vld [vmem:[%s7 + $0x14] sm:$0xf]
    %v3553 = vld [vmem:[%s7 + $0x18] sm:$0xf]
    %v3554 = vld [vmem:[%s7 + $0x1c] sm:$0xf]
    %v3555 = vld [vmem:[%s7 + $0x20] sm:$0xf]
    %v3556 = vld [vmem:[%s7 + $0x24] sm:$0xf]
    %v3557 = vld [vmem:[%s7 + $0x28] sm:$0xf]
    %v3558 = vld [vmem:[%s7 + $0x2c] sm:$0xf]
    %v3559 = vld [vmem:[%s7 + $0x30] sm:$0xf]
    %v3560 = vld [vmem:[%s7 + $0x34] sm:$0xf]
    %v3561 = vld [vmem:[%s7 + $0x38] sm:$0xf]
    %v3562 = vld [vmem:[%s7 + $0x3c] sm:$0xf]
    %v3563 = vld [vmem:[%s8] sm:$0x1]
    %v3565 = vlaneseq
    %v3566 = vshrl.u32 %v3565, 7
    %v3567 = vsub.s32 0, %v3566
    %v3568 = vrot.slane %v3563, %v3567
    %v3586 = vunpack.c.l.b16 %v3547
    %v3587 = vunpack.c.l.b16 %v3548
    %v3588 = vunpack.c.l.b16 %v3549
    %v3589 = vunpack.c.l.b16 %v3550
    %v3590 = vunpack.c.l.b16 %v3551
    %v3591 = vunpack.c.l.b16 %v3552
    %v3592 = vunpack.c.l.b16 %v3553
    %v3593 = vunpack.c.l.b16 %v3554
    %v3594 = vunpack.c.l.b16 %v3555
    %v3595 = vunpack.c.l.b16 %v3556
    %v3596 = vunpack.c.l.b16 %v3557
    %v3597 = vunpack.c.l.b16 %v3558
    %v3598 = vunpack.c.l.b16 %v3559
    %v3599 = vunpack.c.l.b16 %v3560
    %v3600 = vunpack.c.l.b16 %v3561
    %v3601 = vunpack.c.l.b16 %v3562
    %v3602 = vpack.c.b16 %v3587, %v3586
    %v3603 = vpack.c.b16 %v3589, %v3588
    %v3604 = vpack.c.b16 %v3591, %v3590
    %v3605 = vpack.c.b16 %v3593, %v3592
    %v3606 = vpack.c.b16 %v3595, %v3594
    %v3607 = vpack.c.b16 %v3597, %v3596
    %v3608 = vpack.c.b16 %v3599, %v3598
    %v3609 = vpack.c.b16 %v3601, %v3600
    %3618 = vmatprep.subr.bf16.mxu0 0
    %3619 = vmatpush1.bf16.msra.mxu0 %v3602
    %3620 = vmatprep.subr.bf16.mxu0 0
    %3621 = vmatpush1.bf16.msra.mxu0 %v3603
    %3622 = vmatprep.subr.bf16.mxu0 0
    %3623 = vmatpush1.bf16.msra.mxu0 %v3604
    %3624 = vmatprep.subr.bf16.mxu0 0
    %3625 = vmatpush1.bf16.msra.mxu0 %v3605
    %3626 = vmatprep.subr.bf16.mxu0 0
    %3627 = vmatpush1.bf16.msra.mxu0 %v3606
    %3628 = vmatprep.subr.bf16.mxu0 0
    %3629 = vmatpush1.bf16.msra.mxu0 %v3607
    %3630 = vmatprep.subr.bf16.mxu0 0
    %3631 = vmatpush1.bf16.msra.mxu0 %v3608
    %3632 = vmatprep.subr.bf16.mxu0 0
    %3633 = vmatpush1.bf16.msra.mxu0 %v3609
    %3634 = vmatprep.subr.bf16.mxu0 0
    %3635 = vmatpush1.bf16.msra.mxu0 0
    %3636 = vmatprep.subr.bf16.mxu0 0
    %3637 = vmatpush1.bf16.msra.mxu0 0
    %3638 = vmatprep.subr.bf16.mxu0 0
    %3639 = vmatpush1.bf16.msra.mxu0 0
    %3640 = vmatprep.subr.bf16.mxu0 0
    %3641 = vmatpush1.bf16.msra.mxu0 0
    %3642 = vmatprep.subr.bf16.mxu0 0
    %3643 = vmatpush1.bf16.msra.mxu0 0
    %3644 = vmatprep.subr.bf16.mxu0 0
    %3645 = vmatpush1.bf16.msra.mxu0 0
    %3646 = vmatprep.subr.bf16.mxu0 0
    %3647 = vmatpush1.bf16.msra.mxu0 0
    %3648 = vmatprep.subr.bf16.mxu0 0
    %3649 = vmatpush1.bf16.msra.mxu0 0
    %3650 = vmatprep.mubr.bf16.mxu0 0
    %3651 = vmatmul.mubr.bf16.gmra.mrb[0].mxu0 %v3539
    %v3652 = vpop.f32.mrb[0].mxu0
    %v3653 = vadd.f32 %v3568, %v3652
    %v3654 = vpop.f32.mrb[0].mxu0
    %v3655 = vpop.f32.mrb[0].mxu0
    %v3656 = vadd.f32 %v3568, %v3655
    %v3657 = vpop.f32.mrb[0].mxu0
    %3658 = vmatprep.mubr.bf16.mxu0 0
    %3659 = vmatmul.mubr.bf16.gmra.mrb[0].mxu0 %v3540
    %v3660 = vpop.f32.mrb[0].mxu0
    %v3661 = vadd.f32 %v3568, %v3660
    %v3662 = vpop.f32.mrb[0].mxu0
    %v3663 = vpop.f32.mrb[0].mxu0
    %v3664 = vadd.f32 %v3568, %v3663
    %v3665 = vpop.f32.mrb[0].mxu0
    %3666 = vmatprep.mubr.bf16.mxu0 0
    %3667 = vmatmul.mubr.bf16.gmra.mrb[0].mxu0 %v3541
    %v3668 = vpop.f32.mrb[0].mxu0
    %v3669 = vadd.f32 %v3568, %v3668
    %v3670 = vpop.f32.mrb[0].mxu0
    %v3671 = vpop.f32.mrb[0].mxu0
    %v3672 = vadd.f32 %v3568, %v3671
    %v3673 = vpop.f32.mrb[0].mxu0
    %3674 = vmatprep.mubr.bf16.mxu0 0
    %3675 = vmatmul.mubr.bf16.gmra.mrb[0].mxu0 %v3542
    %v3676 = vpop.f32.mrb[0].mxu0
    %v3677 = vadd.f32 %v3568, %v3676
    %v3678 = vpop.f32.mrb[0].mxu0
    %v3679 = vpop.f32.mrb[0].mxu0
    %v3680 = vadd.f32 %v3568, %v3679
    %v3681 = vpop.f32.mrb[0].mxu0
    %3682 = vmatprep.mubr.bf16.mxu0 0
    %3683 = vmatmul.mubr.bf16.gmra.mrb[0].mxu0 %v3543
    %v3684 = vpop.f32.mrb[0].mxu0
    %v3685 = vadd.f32 %v3568, %v3684
    %v3686 = vpop.f32.mrb[0].mxu0
    %v3687 = vpop.f32.mrb[0].mxu0
    %v3688 = vadd.f32 %v3568, %v3687
    %v3689 = vpop.f32.mrb[0].mxu0
    %3690 = vmatprep.mubr.bf16.mxu0 0
    %3691 = vmatmul.mubr.bf16.gmra.mrb[0].mxu0 %v3544
    %v3692 = vpop.f32.mrb[0].mxu0
    %v3693 = vadd.f32 %v3568, %v3692
    %v3694 = vpop.f32.mrb[0].mxu0
    %v3695 = vpop.f32.mrb[0].mxu0
    %v3696 = vadd.f32 %v3568, %v3695
    %v3697 = vpop.f32.mrb[0].mxu0
    %3698 = vmatprep.mubr.bf16.mxu0 0
    %3699 = vmatmul.mubr.bf16.gmra.mrb[0].mxu0 %v3545
    %v3700 = vpop.f32.mrb[0].mxu0
    %v3701 = vadd.f32 %v3568, %v3700
    %v3702 = vpop.f32.mrb[0].mxu0
    %v3703 = vpop.f32.mrb[0].mxu0
    %v3704 = vadd.f32 %v3568, %v3703
    %v3705 = vpop.f32.mrb[0].mxu0
    %3706 = vmatprep.mubr.bf16.mxu0 0
    %3707 = vmatmul.mubr.bf16.gmra.mrb[0].mxu0 %v3546
    %v3708 = vpop.f32.mrb[0].mxu0
    %v3709 = vadd.f32 %v3568, %v3708
    %v3710 = vpop.f32.mrb[0].mxu0
    %v3711 = vpop.f32.mrb[0].mxu0
    %v3712 = vadd.f32 %v3568, %v3711
    %v3713 = vpop.f32.mrb[0].mxu0
    %3714 = vdwg.mxu0
    %v3715 = vmax.f32 %v3653, 0.0
    %v3716 = vmax.f32 %v3656, 0.0
    %v3717 = vmax.f32 %v3661, 0.0
    %v3718 = vmax.f32 %v3664, 0.0
    %v3719 = vmax.f32 %v3669, 0.0
    %v3720 = vmax.f32 %v3672, 0.0
    %v3721 = vmax.f32 %v3677, 0.0
    %v3722 = vmax.f32 %v3680, 0.0
    %v3723 = vmax.f32 %v3685, 0.0
    %v3724 = vmax.f32 %v3688, 0.0
    %v3725 = vmax.f32 %v3693, 0.0
    %v3726 = vmax.f32 %v3696, 0.0
    %v3727 = vmax.f32 %v3701, 0.0
    %v3728 = vmax.f32 %v3704, 0.0
    %v3729 = vmax.f32 %v3709, 0.0
    %v3730 = vmax.f32 %v3712, 0.0
    %v3731 = vpack.c.bf16 %v3716, %v3715
    %v3732 = vpack.c.bf16 %v3718, %v3717
    %v3733 = vpack.c.bf16 %v3720, %v3719
    %v3734 = vpack.c.bf16 %v3722, %v3721
    %v3735 = vpack.c.bf16 %v3724, %v3723
    %v3736 = vpack.c.bf16 %v3726, %v3725
    %v3737 = vpack.c.bf16 %v3728, %v3727
    %v3738 = vpack.c.bf16 %v3730, %v3729
    %v3739 = vld [vmem:[%s9] sm:$0xf]
    %v3740 = vld [vmem:[%s9 + $0x4] sm:$0xf]
    %v3741 = vld [vmem:[%s9 + $0x8] sm:$0xf]
    %v3742 = vld [vmem:[%s9 + $0xc] sm:$0xf]
    %v3743 = vld [vmem:[%s9 + $0x10] sm:$0xf]
    %v3744 = vld [vmem:[%s9 + $0x14] sm:$0xf]
    %v3745 = vld [vmem:[%s9 + $0x18] sm:$0xf]
    %v3746 = vld [vmem:[%s9 + $0x1c] sm:$0xf]
    %v3747 = vld [vmem:[%s9 + $0x20] sm:$0xf]
    %v3748 = vld [vmem:[%s9 + $0x24] sm:$0xf]
    %v3749 = vld [vmem:[%s9 + $0x28] sm:$0xf]
    %v3750 = vld [vmem:[%s9 + $0x2c] sm:$0xf]
    %v3751 = vld [vmem:[%s9 + $0x30] sm:$0xf]
    %v3752 = vld [vmem:[%s9 + $0x34] sm:$0xf]
    %v3753 = vld [vmem:[%s9 + $0x38] sm:$0xf]
    %v3754 = vld [vmem:[%s9 + $0x3c] sm:$0xf]
    %v3755 = vld [vmem:[%s10] sm:$0x1]
    %v3757 = vlaneseq
    %v3758 = vshrl.u32 %v3757, 7
    %v3759 = vsub.s32 0, %v3758
    %v3760 = vrot.slane %v3755, %v3759
    %v3778 = vunpack.c.l.b16 %v3739
    %v3779 = vunpack.c.l.b16 %v3740
    %v3780 = vunpack.c.l.b16 %v3741
    %v3781 = vunpack.c.l.b16 %v3742
    %v3782 = vunpack.c.l.b16 %v3743
    %v3783 = vunpack.c.l.b16 %v3744
    %v3784 = vunpack.c.l.b16 %v3745
    %v3785 = vunpack.c.l.b16 %v3746
    %v3786 = vunpack.c.l.b16 %v3747
    %v3787 = vunpack.c.l.b16 %v3748
    %v3788 = vunpack.c.l.b16 %v3749
    %v3789 = vunpack.c.l.b16 %v3750
    %v3790 = vunpack.c.l.b16 %v3751
    %v3791 = vunpack.c.l.b16 %v3752
    %v3792 = vunpack.c.l.b16 %v3753
    %v3793 = vunpack.c.l.b16 %v3754
    %v3794 = vpack.c.b16 %v3779, %v3778
    %v3795 = vpack.c.b16 %v3781, %v3780
    %v3796 = vpack.c.b16 %v3783, %v3782
    %v3797 = vpack.c.b16 %v3785, %v3784
    %v3798 = vpack.c.b16 %v3787, %v3786
    %v3799 = vpack.c.b16 %v3789, %v3788
    %v3800 = vpack.c.b16 %v3791, %v3790
    %v3801 = vpack.c.b16 %v3793, %v3792
    %3810 = vmatprep.subr.bf16.mxu0 0
    %3811 = vmatpush1.bf16.msra.mxu0 %v3794
    %3812 = vmatprep.subr.bf16.mxu0 0
    %3813 = vmatpush1.bf16.msra.mxu0 %v3795
    %3814 = vmatprep.subr.bf16.mxu0 0
    %3815 = vmatpush1.bf16.msra.mxu0 %v3796
    %3816 = vmatprep.subr.bf16.mxu0 0
    %3817 = vmatpush1.bf16.msra.mxu0 %v3797
    %3818 = vmatprep.subr.bf16.mxu0 0
    %3819 = vmatpush1.bf16.msra.mxu0 %v3798
    %3820 = vmatprep.subr.bf16.mxu0 0
    %3821 = vmatpush1.bf16.msra.mxu0 %v3799
    %3822 = vmatprep.subr.bf16.mxu0 0
    %3823 = vmatpush1.bf16.msra.mxu0 %v3800
    %3824 = vmatprep.subr.bf16.mxu0 0
    %3825 = vmatpush1.bf16.msra.mxu0 %v3801
    %3826 = vmatprep.subr.bf16.mxu0 0
    %3827 = vmatpush1.bf16.msra.mxu0 0
    %3828 = vmatprep.subr.bf16.mxu0 0
    %3829 = vmatpush1.bf16.msra.mxu0 0
    %3830 = vmatprep.subr.bf16.mxu0 0
    %3831 = vmatpush1.bf16.msra.mxu0 0
    %3832 = vmatprep.subr.bf16.mxu0 0
    %3833 = vmatpush1.bf16.msra.mxu0 0
    %3834 = vmatprep.subr.bf16.mxu0 0
    %3835 = vmatpush1.bf16.msra.mxu0 0
    %3836 = vmatprep.subr.bf16.mxu0 0
    %3837 = vmatpush1.bf16.msra.mxu0 0
    %3838 = vmatprep.subr.bf16.mxu0 0
    %3839 = vmatpush1.bf16.msra.mxu0 0
    %3840 = vmatprep.subr.bf16.mxu0 0
    %3841 = vmatpush1.bf16.msra.mxu0 0
    %3842 = vmatprep.mubr.bf16.mxu0 0
    %3843 = vmatmul.mubr.bf16.gmra.mrb[0].mxu0 %v3731
    %v3844 = vpop.f32.mrb[0].mxu0
    %v3845 = vadd.f32 %v3760, %v3844
    %v3846 = vpop.f32.mrb[0].mxu0
    %v3847 = vpop.f32.mrb[0].mxu0
    %v3848 = vadd.f32 %v3760, %v3847
    %v3849 = vpop.f32.mrb[0].mxu0
    %3850 = vmatprep.mubr.bf16.mxu0 0
    %3851 = vmatmul.mubr.bf16.gmra.mrb[0].mxu0 %v3732
    %v3852 = vpop.f32.mrb[0].mxu0
    %v3853 = vadd.f32 %v3760, %v3852
    %v3854 = vpop.f32.mrb[0].mxu0
    %v3855 = vpop.f32.mrb[0].mxu0
    %v3856 = vadd.f32 %v3760, %v3855
    %v3857 = vpop.f32.mrb[0].mxu0
    %3858 = vmatprep.mubr.bf16.mxu0 0
    %3859 = vmatmul.mubr.bf16.gmra.mrb[0].mxu0 %v3733
    %v3860 = vpop.f32.mrb[0].mxu0
    %v3861 = vadd.f32 %v3760, %v3860
    %v3862 = vpop.f32.mrb[0].mxu0
    %v3863 = vpop.f32.mrb[0].mxu0
    %v3864 = vadd.f32 %v3760, %v3863
    %v3865 = vpop.f32.mrb[0].mxu0
    %3866 = vmatprep.mubr.bf16.mxu0 0
    %3867 = vmatmul.mubr.bf16.gmra.mrb[0].mxu0 %v3734
    %v3868 = vpop.f32.mrb[0].mxu0
    %v3869 = vadd.f32 %v3760, %v3868
    %v3870 = vpop.f32.mrb[0].mxu0
    %v3871 = vpop.f32.mrb[0].mxu0
    %v3872 = vadd.f32 %v3760, %v3871
    %v3873 = vpop.f32.mrb[0].mxu0
    %3874 = vmatprep.mubr.bf16.mxu0 0
    %3875 = vmatmul.mubr.bf16.gmra.mrb[0].mxu0 %v3735
    %v3876 = vpop.f32.mrb[0].mxu0
    %v3877 = vadd.f32 %v3760, %v3876
    %v3878 = vpop.f32.mrb[0].mxu0
    %v3879 = vpop.f32.mrb[0].mxu0
    %v3880 = vadd.f32 %v3760, %v3879
    %v3881 = vpop.f32.mrb[0].mxu0
    %3882 = vmatprep.mubr.bf16.mxu0 0
    %3883 = vmatmul.mubr.bf16.gmra.mrb[0].mxu0 %v3736
    %v3884 = vpop.f32.mrb[0].mxu0
    %v3885 = vadd.f32 %v3760, %v3884
    %v3886 = vpop.f32.mrb[0].mxu0
    %v3887 = vpop.f32.mrb[0].mxu0
    %v3888 = vadd.f32 %v3760, %v3887
    %v3889 = vpop.f32.mrb[0].mxu0
    %3890 = vmatprep.mubr.bf16.mxu0 0
    %3891 = vmatmul.mubr.bf16.gmra.mrb[0].mxu0 %v3737
    %v3892 = vpop.f32.mrb[0].mxu0
    %v3893 = vadd.f32 %v3760, %v3892
    %v3894 = vpop.f32.mrb[0].mxu0
    %v3895 = vpop.f32.mrb[0].mxu0
    %v3896 = vadd.f32 %v3760, %v3895
    %v3897 = vpop.f32.mrb[0].mxu0
    %3898 = vmatprep.mubr.bf16.mxu0 0
    %3899 = vmatmul.mubr.bf16.gmra.mrb[0].mxu0 %v3738
    %v3900 = vpop.f32.mrb[0].mxu0
    %v3901 = vadd.f32 %v3760, %v3900
    %v3902 = vpop.f32.mrb[0].mxu0
    %v3903 = vpop.f32.mrb[0].mxu0
    %v3904 = vadd.f32 %v3760, %v3903
    %v3905 = vpop.f32.mrb[0].mxu0
    %3906 = vdwg.mxu0
    %3907 = vmax.xlane.f32.xlu0 %v3845
    %v3908 = vpop.xlane.xlu0 %3907
    %3909 = vmax.xlane.f32.xlu0 %v3848
    %v3910 = vpop.xlane.xlu0 %3909
    %3911 = vmax.xlane.f32.xlu0 %v3853
    %v3912 = vpop.xlane.xlu0 %3911
    %3913 = vmax.xlane.f32.xlu0 %v3856
    %v3914 = vpop.xlane.xlu0 %3913
    %3915 = vmax.xlane.f32.xlu0 %v3861
    %v3916 = vpop.xlane.xlu0 %3915
    %3917 = vmax.xlane.f32.xlu0 %v3864
    %v3918 = vpop.xlane.xlu0 %3917
    %3919 = vmax.xlane.f32.xlu0 %v3869
    %v3920 = vpop.xlane.xlu0 %3919
    %3921 = vmax.xlane.f32.xlu0 %v3872
    %v3922 = vpop.xlane.xlu0 %3921
    %3923 = vmax.xlane.f32.xlu0 %v3877
    %v3924 = vpop.xlane.xlu0 %3923
    %3925 = vmax.xlane.f32.xlu0 %v3880
    %v3926 = vpop.xlane.xlu0 %3925
    %3927 = vmax.xlane.f32.xlu0 %v3885
    %v3928 = vpop.xlane.xlu0 %3927
    %3929 = vmax.xlane.f32.xlu0 %v3888
    %v3930 = vpop.xlane.xlu0 %3929
    %3931 = vmax.xlane.f32.xlu0 %v3893
    %v3932 = vpop.xlane.xlu0 %3931
    %3933 = vmax.xlane.f32.xlu0 %v3896
    %v3934 = vpop.xlane.xlu0 %3933
    %3935 = vmax.xlane.f32.xlu0 %v3901
    %v3936 = vpop.xlane.xlu0 %3935
    %3937 = vmax.xlane.f32.xlu0 %v3904
    %v3938 = vpop.xlane.xlu0 %3937
    %v3939 = vsub.f32 %v3845, %v3908
    %v3940 = vsub.f32 %v3848, %v3910
    %v3941 = vsub.f32 %v3853, %v3912
    %v3942 = vsub.f32 %v3856, %v3914
    %v3943 = vsub.f32 %v3861, %v3916
    %v3944 = vsub.f32 %v3864, %v3918
    %v3945 = vsub.f32 %v3869, %v3920
    %v3946 = vsub.f32 %v3872, %v3922
    %v3947 = vsub.f32 %v3877, %v3924
    %v3948 = vsub.f32 %v3880, %v3926
    %v3949 = vsub.f32 %v3885, %v3928
    %v3950 = vsub.f32 %v3888, %v3930
    %v3951 = vsub.f32 %v3893, %v3932
    %v3952 = vsub.f32 %v3896, %v3934
    %v3953 = vsub.f32 %v3901, %v3936
    %v3954 = vsub.f32 %v3904, %v3938
    %v3955 = vmul.f32 %v3939, 1.442695
    %v3956 = vpow.pop %v3955
    %v3957 = vmul.f32 %v3940, 1.442695
    %v3958 = vpow.pop %v3957
    %v3959 = vmul.f32 %v3941, 1.442695
    %v3960 = vpow.pop %v3959
    %v3961 = vmul.f32 %v3942, 1.442695
    %v3962 = vpow.pop %v3961
    %v3963 = vmul.f32 %v3943, 1.442695
    %v3964 = vpow.pop %v3963
    %v3965 = vmul.f32 %v3944, 1.442695
    %v3966 = vpow.pop %v3965
    %v3967 = vmul.f32 %v3945, 1.442695
    %v3968 = vpow.pop %v3967
    %v3969 = vmul.f32 %v3946, 1.442695
    %v3970 = vpow.pop %v3969
    %v3971 = vmul.f32 %v3947, 1.442695
    %v3972 = vpow.pop %v3971
    %v3973 = vmul.f32 %v3948, 1.442695
    %v3974 = vpow.pop %v3973
    %v3975 = vmul.f32 %v3949, 1.442695
    %v3976 = vpow.pop %v3975
    %v3977 = vmul.f32 %v3950, 1.442695
    %v3978 = vpow.pop %v3977
    %v3979 = vmul.f32 %v3951, 1.442695
    %v3980 = vpow.pop %v3979
    %v3981 = vmul.f32 %v3952, 1.442695
    %v3982 = vpow.pop %v3981
    %v3983 = vmul.f32 %v3953, 1.442695
    %v3984 = vpow.pop %v3983
    %v3985 = vmul.f32 %v3954, 1.442695
    %v3986 = vpow.pop %v3985
    %3987 = vadd.xlane.f32.xlu0 %v3956
    %v3988 = vpop.xlane.xlu0 %3987
    %3989 = vadd.xlane.f32.xlu0 %v3958
    %v3990 = vpop.xlane.xlu0 %3989
    %3991 = vadd.xlane.f32.xlu0 %v3960
    %v3992 = vpop.xlane.xlu0 %3991
    %3993 = vadd.xlane.f32.xlu0 %v3962
    %v3994 = vpop.xlane.xlu0 %3993
    %3995 = vadd.xlane.f32.xlu0 %v3964
    %v3996 = vpop.xlane.xlu0 %3995
    %3997 = vadd.xlane.f32.xlu0 %v3966
    %v3998 = vpop.xlane.xlu0 %3997
    %3999 = vadd.xlane.f32.xlu0 %v3968
    %v4000 = vpop.xlane.xlu0 %3999
    %4001 = vadd.xlane.f32.xlu0 %v3970
    %v4002 = vpop.xlane.xlu0 %4001
    %4003 = vadd.xlane.f32.xlu0 %v3972
    %v4004 = vpop.xlane.xlu0 %4003
    %4005 = vadd.xlane.f32.xlu0 %v3974
    %v4006 = vpop.xlane.xlu0 %4005
    %4007 = vadd.xlane.f32.xlu0 %v3976
    %v4008 = vpop.xlane.xlu0 %4007
    %4009 = vadd.xlane.f32.xlu0 %v3978
    %v4010 = vpop.xlane.xlu0 %4009
    %4011 = vadd.xlane.f32.xlu0 %v3980
    %v4012 = vpop.xlane.xlu0 %4011
    %4013 = vadd.xlane.f32.xlu0 %v3982
    %v4014 = vpop.xlane.xlu0 %4013
    %4015 = vadd.xlane.f32.xlu0 %v3984
    %v4016 = vpop.xlane.xlu0 %4015
    %4017 = vadd.xlane.f32.xlu0 %v3986
    %v4018 = vpop.xlane.xlu0 %4017
    %v4019 = vlog2.pop %v3988
    %v4020 = vmul.f32 %v4019, 0.6931472
    %v4021 = vlog2.pop %v3990
    %v4022 = vmul.f32 %v4021, 0.6931472
    %v4023 = vlog2.pop %v3992
    %v4024 = vmul.f32 %v4023, 0.6931472
    %v4025 = vlog2.pop %v3994
    %v4026 = vmul.f32 %v4025, 0.6931472
    %v4027 = vlog2.pop %v3996
    %v4028 = vmul.f32 %v4027, 0.6931472
    %v4029 = vlog2.pop %v3998
    %v4030 = vmul.f32 %v4029, 0.6931472
    %v4031 = vlog2.pop %v4000
    %v4032 = vmul.f32 %v4031, 0.6931472
    %v4033 = vlog2.pop %v4002
    %v4034 = vmul.f32 %v4033, 0.6931472
    %v4035 = vlog2.pop %v4004
    %v4036 = vmul.f32 %v4035, 0.6931472
    %v4037 = vlog2.pop %v4006
    %v4038 = vmul.f32 %v4037, 0.6931472
    %v4039 = vlog2.pop %v4008
    %v4040 = vmul.f32 %v4039, 0.6931472
    %v4041 = vlog2.pop %v4010
    %v4042 = vmul.f32 %v4041, 0.6931472
    %v4043 = vlog2.pop %v4012
    %v4044 = vmul.f32 %v4043, 0.6931472
    %v4045 = vlog2.pop %v4014
    %v4046 = vmul.f32 %v4045, 0.6931472
    %v4047 = vlog2.pop %v4016
    %v4048 = vmul.f32 %v4047, 0.6931472
    %v4049 = vlog2.pop %v4018
    %v4050 = vmul.f32 %v4049, 0.6931472
    %v4051 = vsub.f32 %v3939, %v4020
    %v4052 = vsub.f32 %v3940, %v4022
    %v4053 = vsub.f32 %v3941, %v4024
    %v4054 = vsub.f32 %v3942, %v4026
    %v4055 = vsub.f32 %v3943, %v4028
    %v4056 = vsub.f32 %v3944, %v4030
    %v4057 = vsub.f32 %v3945, %v4032
    %v4058 = vsub.f32 %v3946, %v4034
    %v4059 = vsub.f32 %v3947, %v4036
    %v4060 = vsub.f32 %v3948, %v4038
    %v4061 = vsub.f32 %v3949, %v4040
    %v4062 = vsub.f32 %v3950, %v4042
    %v4063 = vsub.f32 %v3951, %v4044
    %v4064 = vsub.f32 %v3952, %v4046
    %v4065 = vsub.f32 %v3953, %v4048
    %v4066 = vsub.f32 %v3954, %v4050
    %4067 = vst [vmem:[#allocation5] sm:$0xff] %v4051
    %4068 = vst [vmem:[#allocation5 + $0x8] sm:$0xff] %v4052
    %4069 = vst [vmem:[#allocation5 + $0x10] sm:$0xff] %v4053
    %4070 = vst [vmem:[#allocation5 + $0x18] sm:$0xff] %v4054
    %4071 = vst [vmem:[#allocation5 + $0x20] sm:$0xff] %v4055
    %4072 = vst [vmem:[#allocation5 + $0x28] sm:$0xff] %v4056
    %4073 = vst [vmem:[#allocation5 + $0x30] sm:$0xff] %v4057
    %4074 = vst [vmem:[#allocation5 + $0x38] sm:$0xff] %v4058
    %4075 = vst [vmem:[#allocation5 + $0x40] sm:$0xff] %v4059
    %4076 = vst [vmem:[#allocation5 + $0x48] sm:$0xff] %v4060
    %4077 = vst [vmem:[#allocation5 + $0x50] sm:$0xff] %v4061
    %4078 = vst [vmem:[#allocation5 + $0x58] sm:$0xff] %v4062
    %4079 = vst [vmem:[#allocation5 + $0x60] sm:$0xff] %v4063
    %4080 = vst [vmem:[#allocation5 + $0x68] sm:$0xff] %v4064
    %4081 = vst [vmem:[#allocation5 + $0x70] sm:$0xff] %v4065
    %4082 = vst [vmem:[#allocation5 + $0x78] sm:$0xff] %v4066
    // Predicated region
    $region50: #{tpu_custom_call.1} parent=1 // pred_check
      _
    $region51: #{tpu_custom_call.1} parent=1 // pred_check_branch
      %4084 = sbr.rel (0) target = $region53
    $region52: #{tpu_custom_call.1} parent=1 // pred_region
      %s4086 = ssub.s32 2048, 2048
      %4087 = vsyncadd [#allocation4], %s4086
      %s4088 = sshll.u32 [#allocation5], 4
      %s4089 = int_to_ptr.vmem [resolvable:$true] %s4088
      %4094 = dma.vmem_to_hbm [thread:$0]  %s4089, 2048, %s11, [#allocation4], 128, 128, 8
    $region53: #{tpu_custom_call.1} parent=1 // pred_fallthru
      _
    // Predicated region
    $region54: #{tpu_custom_call.1} parent=1 // pred_check
      _
    $region55: #{tpu_custom_call.1} parent=1 // pred_check_branch
      %4096 = sbr.rel (0) target = $region57
    $region56: #{tpu_custom_call.1} parent=1 // pred_region
      %4097 = dma.done [#allocation4], 2048
    $region57: #{tpu_custom_call.1} parent=1 // pred_fallthru
      _
    %4098 = vsyncpa [#allocation3], 1
    %4099 = vsyncpa [#allocation4], 1

</llo_original>
